<compile_context>
chip_gen: v7x
topology: tpu7x:2x2x1
jax: 0.10.0
libtpu: 0.0.40
codegen_flags: <defaults>
</compile_context>

<pallas_src>
import functools

import jax
import jax.numpy as jnp
from jax.experimental import pallas as pl
from jax.experimental.pallas import tpu as pltpu


# Per-step row budget for the streamed (points) axis.  Keeps the live f32 activations
# (the (rows, 1024) conv3 slab dominates) around ~11 MiB, which fits comfortably within
# the scoped VMEM of every generation (v5e/v6e: 128 MiB physical, v7x: 64 MiB per core)
# while still giving the MXU >= 2048-row streamed matmuls per step.
_ROWS_PER_STEP = 2048


def _stn2d_kernel(x_ref, w1_ref, b1_ref, w2_ref, b2_ref, w3_ref, b3_ref,
                  wf1_ref, bf1_ref, wf2_ref, bf2_ref, wf3_ref, bf3_ref,
                  out_ref, gmax_ref, *, nb, chunk_p, matmul_dtype):
    c = pl.program_id(1)                                        # point-chunk (reduction) axis

    # (nb, chunk_p, 2) -> (nb*chunk_p, 2): fuse this batch block's point chunk into the
    # matmul-streamed (sublane) axis.  Channel-last everywhere -> lane-dense loads/stores.
    x = x_ref[0].reshape(nb * chunk_p, 2)

    # conv1: Conv2d(1, 64, (1, 2)) == per-point affine 2 -> 64.  K = 2, so two broadcast
    # MACs on the VPU instead of wasting an MXU pass.  Kept in f32 (raw coordinates).
    w1 = w1_ref[...]                                            # (2, 64)
    h = b1_ref[...] + x[:, 0:1] * w1[0:1, :] + x[:, 1:2] * w1[1:2, :]
    h = jnp.maximum(h, 0.0)                                     # (M, 64) f32

    # conv2 / conv3: 1x1 convs == streamed MXU matmuls; low-precision operands
    # (bf16 by default), f32 accumulation, biases added in f32.
    h = jnp.dot(h.astype(matmul_dtype), w2_ref[...],
                preferred_element_type=jnp.float32) + b2_ref[...]
    h = jnp.maximum(h, 0.0)                                     # (M, 128) f32
    h = jnp.dot(h.astype(matmul_dtype), w3_ref[...],
                preferred_element_type=jnp.float32) + b3_ref[...]
    h = jnp.maximum(h, 0.0)                                     # (M, 1024) f32

    # Fused MaxPool2d((num_points, 1)): per-sample running max over point chunks, held in
    # a (nb, 1024) VMEM accumulator so the big slab never outlives one chunk.
    chunk_max = jnp.max(h.reshape(nb, chunk_p, 1024), axis=1)   # (nb, 1024)

    @pl.when(c == 0)
    def _():
        gmax_ref[...] = chunk_max

    @pl.when(c > 0)
    def _():
        gmax_ref[...] = jnp.maximum(gmax_ref[...], chunk_max)

    # FC head: once per batch block, on the last point-chunk step.
    @pl.when(c == pl.num_programs(1) - 1)
    def _():
        g = gmax_ref[...]
        f = jnp.dot(g.astype(matmul_dtype), wf1_ref[...],
                    preferred_element_type=jnp.float32) + bf1_ref[...]
        f = jnp.maximum(f, 0.0)                                 # (nb, 512)
        f = jnp.dot(f.astype(matmul_dtype), wf2_ref[...],
                    preferred_element_type=jnp.float32) + bf2_ref[...]
        f = jnp.maximum(f, 0.0)                                 # (nb, 256)
        # fc3 stays f32; the k x k identity is pre-folded into bf3 in the wrapper, which
        # protects the exact-identity output under the module's zero fc3 init.
        f = jnp.dot(f, wf3_ref[...], preferred_element_type=jnp.float32) + bf3_ref[...]
        out_ref[0] = f.astype(out_ref.dtype)


def _tile_bytes(a):
    """Crude (8, 128)-tile-padded VMEM footprint of a 2-D array."""
    r, c = a.shape
    return (-(-r // 8) * 8) * (-(-c // 128) * 128) * a.dtype.itemsize


def stn2d_forward(x, params, *, num_points=256, k=2, matmul_dtype=jnp.bfloat16,
                  block_n=None, chunk_p=None):
    """STN2d forward (use_bn=False path) as one fused Pallas kernel.

    x: (B, 1, num_points, 2) float32 (the default k == 2 configuration).
    params: dict of PyTorch-layout parameters (see _init_params).
    matmul_dtype: operand dtype for the conv2/conv3/fc1/fc2 MXU matmuls (accumulation is
      always f32).  bf16 (default) is ~3x MXU throughput; pass jnp.float32 for a
      bit-tighter match to the f32 PyTorch module.
    Returns: (B, k, k) float32 transform matrices.
    """
    assert k == 2, "only the default k == 2 (kernel_size=2, channels=1) config is implemented"
    B = x.shape[0]
    P = num_points
    assert x.shape == (B, 1, P, 2)
    k2 = k * k
    f32 = jnp.float32
    mmdt = jnp.dtype(matmul_dtype)

    # ---- Tiling: batch blocks ("parallel") x point chunks ("arbitrary" reduction axis).
    # block_n: amortize grid overhead / fill FC sublanes, but keep >= 2 parallel steps when
    # B >= 2 so both v7x TensorCores get work.
    if block_n is None:
        block_n = max(1, min(32, pl.cdiv(B, 2))) if B >= 2 else 1
    G = pl.cdiv(B, block_n)
    B_pad = G * block_n
    # chunk_p: chunk the point axis so per-step streamed rows stay within the VMEM budget.
    if chunk_p is None:
        chunk_p = min(P, max(8, (_ROWS_PER_STEP // block_n) // 8 * 8))
    C = pl.cdiv(P, chunk_p)
    P_pad = C * chunk_p

    # ---- Input prep: (B, 1, P, 2) -> (G, block_n, P_pad, 2), channel-last.
    x_pts = x.reshape(B, P, 2).astype(f32)
    if B_pad != B:   # zero-pad extra samples; their outputs are sliced off below.
        x_pts = jnp.concatenate([x_pts, jnp.zeros((B_pad - B, P, 2), f32)], axis=0)
    if P_pad != P:   # edge-replicate the last point: copies can never change the max-pool.
        pad = jnp.broadcast_to(x_pts[:, P - 1:P, :], (B_pad, P_pad - P, 2))
        x_pts = jnp.concatenate([x_pts, pad], axis=1)
    x_blocked = x_pts.reshape(G, block_n, P_pad, 2)

    # ---- Weights: channel-last (in, out) layout; MXU operands in matmul_dtype, biases and
    # the conv1 / fc3 epilogue in f32.  The k x k identity is folded into the fc3 bias.
    w1 = params["conv1_w"].reshape(64, 2).T.astype(f32)          # (2, 64)   VPU
    b1 = params["conv1_b"].reshape(1, 64).astype(f32)
    w2 = params["conv2_w"].reshape(128, 64).T.astype(mmdt)       # (64, 128)
    b2 = params["conv2_b"].reshape(1, 128).astype(f32)
    w3 = params["conv3_w"].reshape(1024, 128).T.astype(mmdt)     # (128, 1024)
    b3 = params["conv3_b"].reshape(1, 1024).astype(f32)
    wf1 = params["fc1_w"].T.astype(mmdt)                         # (1024, 512)
    bf1 = params["fc1_b"].reshape(1, 512).astype(f32)
    wf2 = params["fc2_w"].T.astype(mmdt)                         # (512, 256)
    bf2 = params["fc2_b"].reshape(1, 256).astype(f32)
    wf3 = params["fc3_w"].T.astype(f32)                          # (256, k*k)
    bf3 = (params["fc3_b"].reshape(1, k2).astype(f32)
           + jnp.eye(k, dtype=f32).reshape(1, k2))               # identity folded in
    weights = (w1, b1, w2, b2, w3, b3, wf1, bf1, wf2, bf2, wf3, bf3)

    # ---- Explicit scoped-VMEM limit (v5e's default is only 16 MiB); conservative estimate.
    rows = block_n * chunk_p
    act_bytes = rows * ((64 + 128 + 1024) * 4 + (64 + 128) * mmdt.itemsize + 2 * 4)
    io_bytes = 2 * rows * 2 * 4 + 2 * max(8, block_n) * 128 * 4
    scratch_bytes = max(8, block_n) * 1024 * 4
    weight_bytes = 2 * sum(_tile_bytes(w) for w in weights)      # worst case: double-buffered
    vmem_est = act_bytes + io_bytes + scratch_bytes + weight_bytes
    vmem_limit = int(min(48 * 2**20, max(32 * 2**20, int(1.5 * vmem_est))))

    kernel = functools.partial(_stn2d_kernel, nb=block_n, chunk_p=chunk_p,
                               matmul_dtype=mmdt)

    def build_and_run(single_buffer):
        def const_spec(shape):
            zeros = (0,) * len(shape)

            def idx(g, c):
                return zeros

            if single_buffer:
                # Grid-invariant operand: fetched once; request a single VMEM buffer.
                return pl.BlockSpec(shape, idx, pipeline_mode=pl.Buffered(1))
            return pl.BlockSpec(shape, idx)

        grid_spec = pltpu.PrefetchScalarGridSpec(
            num_scalar_prefetch=0,
            grid=(G, C),
            in_specs=[
                pl.BlockSpec((1, block_n, chunk_p, 2), lambda g, c: (g, 0, c, 0)),
                const_spec((2, 64)), const_spec((1, 64)),
                const_spec((64, 128)), const_spec((1, 128)),
                const_spec((128, 1024)), const_spec((1, 1024)),
                const_spec((1024, 512)), const_spec((1, 512)),
                const_spec((512, 256)), const_spec((1, 256)),
                const_spec((256, k2)), const_spec((1, k2)),
            ],
            out_specs=pl.BlockSpec((1, block_n, k2), lambda g, c: (g, 0, 0)),
            scratch_shapes=[pltpu.VMEM((block_n, 1024), jnp.float32)],
        )
        return pl.pallas_call(
            kernel,
            out_shape=jax.ShapeDtypeStruct((G, block_n, k2), jnp.float32),
            grid_spec=grid_spec,
            compiler_params=pltpu.CompilerParams(
                dimension_semantics=("parallel", "arbitrary"),
                vmem_limit_bytes=vmem_limit),
        )(x_blocked, *weights)

    if hasattr(pl, "Buffered"):
        try:
            out = build_and_run(True)
        except Exception:
            # Installed JAX/Mosaic rejects single-buffered pipeline_mode: use the default.
            out = build_and_run(False)
    else:
        out = build_and_run(False)

    return out.reshape(B_pad, k2)[:B].reshape(B, k, k)


def stn2d_ref(x, params, *, k=2):
    """Pure-JAX reference mirroring the PyTorch forward (use_bn=False path)."""
    hp = jax.lax.Precision.HIGHEST
    B, _, P, _ = x.shape
    xp = x.reshape(B, P, 2)
    h = jax.nn.relu(jnp.einsum('bpc,oc->bpo', xp, params["conv1_w"].reshape(64, 2),
                               precision=hp) + params["conv1_b"])
    h = jax.nn.relu(jnp.einsum('bpo,no->bpn', h, params["conv2_w"].reshape(128, 64),
                               precision=hp) + params["conv2_b"])
    h = jax.nn.relu(jnp.einsum('bpn,mn->bpm', h, params["conv3_w"].reshape(1024, 128),
                               precision=hp) + params["conv3_b"])
    g = jnp.max(h, axis=1)                                      # MaxPool2d((P, 1)) -> (B, 1024)
    f = jax.nn.relu(jnp.dot(g, params["fc1_w"].T, precision=hp) + params["fc1_b"])
    f = jax.nn.relu(jnp.dot(f, params["fc2_w"].T, precision=hp) + params["fc2_b"])
    f = jnp.dot(f, params["fc3_w"].T, precision=hp) + params["fc3_b"]
    f = f + jnp.eye(k, dtype=f.dtype).reshape(1, k * k)
    return f.reshape(B, k, k)


def _init_params(key, *, k=2):
    """PyTorch-layout parameters with Conv/Linear default-style init."""
    k2 = k * k
    keys = jax.random.split(key, 12)

    def u(kk, shape, fan_in):
        bound = 1.0 / jnp.sqrt(jnp.float32(fan_in))
        return jax.random.uniform(kk, shape, jnp.float32, -bound, bound)

    return {
        "conv1_w": u(keys[0], (64, 1, 1, 2), 2.0),
        "conv1_b": u(keys[1], (64,), 2.0),
        "conv2_w": u(keys[2], (128, 64, 1, 1), 64.0),
        "conv2_b": u(keys[3], (128,), 64.0),
        "conv3_w": u(keys[4], (1024, 128, 1, 1), 128.0),
        "conv3_b": u(keys[5], (1024,), 128.0),
        "fc1_w": u(keys[6], (512, 1024), 1024.0),
        "fc1_b": u(keys[7], (512,), 1024.0),
        "fc2_w": u(keys[8], (256, 512), 512.0),
        "fc2_b": u(keys[9], (256,), 512.0),
        # NOTE: STN2d.__init__ zero-initializes fc3 (output == identity).  Small random
        # values here exercise the full fc3 + identity path; the zero-init case is checked
        # separately below.
        "fc3_w": u(keys[10], (k2, 256), 256.0),
        "fc3_b": u(keys[11], (k2,), 256.0),
    }


if __name__ == "__main__":
    # Module defaults: num_points=256, k=2 -> input (B, 1, 256, 2).
    NUM_POINTS, K, B = 256, 2, 2
    key = jax.random.PRNGKey(0)
    kx, kp = jax.random.split(key)
    x = jax.random.normal(kx, (B, 1, NUM_POINTS, K), dtype=jnp.float32)
    params = _init_params(kp, k=K)
    ref = stn2d_ref(x, params, k=K)

    # Default path: bf16 MXU operands with f32 accumulation.
    out = jax.block_until_ready(stn2d_forward(x, params, num_points=NUM_POINTS, k=K))
    assert out.shape == (B, K, K)
    err = float(jnp.max(jnp.abs(out - ref)))
    assert jnp.allclose(out, ref, rtol=1e-2, atol=1e-2), (
        f"bf16-matmul path mismatch vs reference: max abs err = {err}")

    # Full-f32 matmul path must match the HIGHEST-precision reference tightly.
    out32 = jax.block_until_ready(
        stn2d_forward(x, params, num_points=NUM_POINTS, k=K, matmul_dtype=jnp.float32))
    err32 = float(jnp.max(jnp.abs(out32 - ref)))
    assert jnp.allclose(out32, ref, rtol=1e-3, atol=1e-3), (
        f"f32-matmul path mismatch vs reference: max abs err = {err32}")

    # With the module's actual init (fc3 weight/bias zeroed) every sample must map to the
    # exact k x k identity transform.
    params_zero = dict(params,
                       fc3_w=jnp.zeros_like(params["fc3_w"]),
                       fc3_b=jnp.zeros_like(params["fc3_b"]))
    out_id = jax.block_until_ready(
        stn2d_forward(x, params_zero, num_points=NUM_POINTS, k=K))
    assert jnp.allclose(out_id,
                        jnp.broadcast_to(jnp.eye(K, dtype=jnp.float32), (B, K, K)),
                        atol=1e-5)

    # Exercise the fused point-chunking path (C > 1), point edge-padding and batch padding.
    B2, P2 = 3, 1200
    x2 = jax.random.normal(jax.random.PRNGKey(1), (B2, 1, P2, K), dtype=jnp.float32)
    out2 = jax.block_until_ready(
        stn2d_forward(x2, params, num_points=P2, k=K, matmul_dtype=jnp.float32))
    ref2 = stn2d_ref(x2, params, k=K)
    err2 = float(jnp.max(jnp.abs(out2 - ref2)))
    assert jnp.allclose(out2, ref2, rtol=1e-3, atol=1e-3), (
        f"chunked-pool path mismatch vs reference: max abs err = {err2}")

    print("KERNEL_OK")
</pallas_src>

<mosaic_0001>
module attributes {stable_mosaic.version = 11 : i64} {
  func.func @_stn2d_kernel(%arg0: i32, %arg1: i32, %arg2: memref<1x1x256x2xf32, #tpu.memory_space<vmem>>, %arg3: memref<2x64xf32, #tpu.memory_space<vmem>>, %arg4: memref<1x64xf32, #tpu.memory_space<vmem>>, %arg5: memref<64x128xbf16, #tpu.memory_space<vmem>>, %arg6: memref<1x128xf32, #tpu.memory_space<vmem>>, %arg7: memref<128x1024xbf16, #tpu.memory_space<vmem>>, %arg8: memref<1x1024xf32, #tpu.memory_space<vmem>>, %arg9: memref<1024x512xbf16, #tpu.memory_space<vmem>>, %arg10: memref<1x512xf32, #tpu.memory_space<vmem>>, %arg11: memref<512x256xbf16, #tpu.memory_space<vmem>>, %arg12: memref<1x256xf32, #tpu.memory_space<vmem>>, %arg13: memref<256x4xf32, #tpu.memory_space<vmem>>, %arg14: memref<1x4xf32, #tpu.memory_space<vmem>>, %arg15: memref<1x1x4xf32, #tpu.memory_space<vmem>>, %arg16: memref<1x1024xf32, #tpu.memory_space<vmem>>) attributes {dimension_semantics = [#tpu.dimension_semantics<parallel>, #tpu.dimension_semantics<arbitrary>], iteration_bounds = array<i64: 2, 1>, scalar_prefetch = 0 : i64, scratch_operands = 1 : i64, tpu.core_type = #tpu.core_type<tc>, window_params = [{transform_indices = @transform_0, window_bounds = array<i64: 1, 1, 256, 2>}, {pipeline_mode = #tpu.pipeline_mode<synchronous>, transform_indices = @transform_1, window_bounds = array<i64: 2, 64>}, {pipeline_mode = #tpu.pipeline_mode<synchronous>, transform_indices = @transform_2, window_bounds = array<i64: 1, 64>}, {pipeline_mode = #tpu.pipeline_mode<synchronous>, transform_indices = @transform_3, window_bounds = array<i64: 64, 128>}, {pipeline_mode = #tpu.pipeline_mode<synchronous>, transform_indices = @transform_4, window_bounds = array<i64: 1, 128>}, {pipeline_mode = #tpu.pipeline_mode<synchronous>, transform_indices = @transform_5, window_bounds = array<i64: 128, 1024>}, {pipeline_mode = #tpu.pipeline_mode<synchronous>, transform_indices = @transform_6, window_bounds = array<i64: 1, 1024>}, {pipeline_mode = #tpu.pipeline_mode<synchronous>, transform_indices = @transform_7, window_bounds = array<i64: 1024, 512>}, {pipeline_mode = #tpu.pipeline_mode<synchronous>, transform_indices = @transform_8, window_bounds = array<i64: 1, 512>}, {pipeline_mode = #tpu.pipeline_mode<synchronous>, transform_indices = @transform_9, window_bounds = array<i64: 512, 256>}, {pipeline_mode = #tpu.pipeline_mode<synchronous>, transform_indices = @transform_10, window_bounds = array<i64: 1, 256>}, {pipeline_mode = #tpu.pipeline_mode<synchronous>, transform_indices = @transform_11, window_bounds = array<i64: 256, 4>}, {pipeline_mode = #tpu.pipeline_mode<synchronous>, transform_indices = @transform_12, window_bounds = array<i64: 1, 4>}, {transform_indices = @transform_13, window_bounds = array<i64: 1, 1, 4>}]} {
    %c0 = arith.constant 0 : index
    %c0_0 = arith.constant 0 : index
    %c0_1 = arith.constant 0 : index
    %c0_2 = arith.constant 0 : index
    %0 = vector.load %arg2[%c0, %c0_0, %c0_1, %c0_2] : memref<1x1x256x2xf32, #tpu.memory_space<vmem>>, vector<1x1x256x2xf32>
    %1 = vector.shape_cast %0 : vector<1x1x256x2xf32> to vector<1x256x2xf32>
    %2 = vector.shape_cast %1 : vector<1x256x2xf32> to vector<256x2xf32>
    %c0_3 = arith.constant 0 : index
    %c0_4 = arith.constant 0 : index
    %3 = vector.load %arg3[%c0_3, %c0_4] : memref<2x64xf32, #tpu.memory_space<vmem>>, vector<2x64xf32>
    %c0_5 = arith.constant 0 : index
    %c0_6 = arith.constant 0 : index
    %4 = vector.load %arg4[%c0_5, %c0_6] : memref<1x64xf32, #tpu.memory_space<vmem>>, vector<1x64xf32>
    %5 = vector.extract_strided_slice %2 {offsets = [0, 0], sizes = [256, 1], strides = [1, 1]} : vector<256x2xf32> to vector<256x1xf32>
    %6 = vector.extract_strided_slice %3 {offsets = [0, 0], sizes = [1, 64], strides = [1, 1]} : vector<2x64xf32> to vector<1x64xf32>
    %7 = vector.broadcast %5 : vector<256x1xf32> to vector<256x64xf32>
    %8 = vector.broadcast %6 : vector<1x64xf32> to vector<256x64xf32>
    %9 = arith.mulf %7, %8 : vector<256x64xf32>
    %10 = vector.broadcast %4 : vector<1x64xf32> to vector<256x64xf32>
    %11 = arith.addf %10, %9 : vector<256x64xf32>
    %12 = vector.extract_strided_slice %2 {offsets = [0, 1], sizes = [256, 1], strides = [1, 1]} : vector<256x2xf32> to vector<256x1xf32>
    %13 = vector.extract_strided_slice %3 {offsets = [1, 0], sizes = [1, 64], strides = [1, 1]} : vector<2x64xf32> to vector<1x64xf32>
    %14 = vector.broadcast %12 : vector<256x1xf32> to vector<256x64xf32>
    %15 = vector.broadcast %13 : vector<1x64xf32> to vector<256x64xf32>
    %16 = arith.mulf %14, %15 : vector<256x64xf32>
    %17 = arith.addf %11, %16 : vector<256x64xf32>
    %cst = arith.constant 0.000000e+00 : f32
    %18 = vector.broadcast %cst : f32 to vector<256x64xf32>
    %19 = arith.maximumf %17, %18 : vector<256x64xf32>
    %20 = arith.truncf %19 : vector<256x64xf32> to vector<256x64xbf16>
    %c0_7 = arith.constant 0 : index
    %c0_8 = arith.constant 0 : index
    %21 = vector.load %arg5[%c0_7, %c0_8] : memref<64x128xbf16, #tpu.memory_space<vmem>>, vector<64x128xbf16>
    %cst_9 = arith.constant dense<0.000000e+00> : vector<256x128xf32>
    %22 = tpu.matmul %20, %21, %cst_9 {dimension_numbers = #tpu.dot_dimension_numbers<[1], [0], [0], [1], [0, 0, 1, 1], [], []>} : vector<256x64xbf16>, vector<64x128xbf16>, vector<256x128xf32> -> vector<256x128xf32>
    %c0_10 = arith.constant 0 : index
    %c0_11 = arith.constant 0 : index
    %23 = vector.load %arg6[%c0_10, %c0_11] : memref<1x128xf32, #tpu.memory_space<vmem>>, vector<1x128xf32>
    %24 = vector.broadcast %23 : vector<1x128xf32> to vector<256x128xf32>
    %25 = arith.addf %22, %24 : vector<256x128xf32>
    %cst_12 = arith.constant 0.000000e+00 : f32
    %26 = vector.broadcast %cst_12 : f32 to vector<256x128xf32>
    %27 = arith.maximumf %25, %26 : vector<256x128xf32>
    %28 = arith.truncf %27 : vector<256x128xf32> to vector<256x128xbf16>
    %c0_13 = arith.constant 0 : index
    %c0_14 = arith.constant 0 : index
    %29 = vector.load %arg7[%c0_13, %c0_14] : memref<128x1024xbf16, #tpu.memory_space<vmem>>, vector<128x1024xbf16>
    %cst_15 = arith.constant dense<0.000000e+00> : vector<256x1024xf32>
    %30 = tpu.matmul %28, %29, %cst_15 {dimension_numbers = #tpu.dot_dimension_numbers<[1], [0], [0], [1], [0, 0, 1, 1], [], []>} : vector<256x128xbf16>, vector<128x1024xbf16>, vector<256x1024xf32> -> vector<256x1024xf32>
    %c0_16 = arith.constant 0 : index
    %c0_17 = arith.constant 0 : index
    %31 = vector.load %arg8[%c0_16, %c0_17] : memref<1x1024xf32, #tpu.memory_space<vmem>>, vector<1x1024xf32>
    %32 = vector.broadcast %31 : vector<1x1024xf32> to vector<256x1024xf32>
    %33 = arith.addf %30, %32 : vector<256x1024xf32>
    %cst_18 = arith.constant 0.000000e+00 : f32
    %34 = vector.broadcast %cst_18 : f32 to vector<256x1024xf32>
    %35 = arith.maximumf %33, %34 : vector<256x1024xf32>
    %36 = vector.shape_cast %35 : vector<256x1024xf32> to vector<1x256x1024xf32>
    %cst_19 = arith.constant dense<0xFF800000> : vector<1x1024xf32>
    %37 = vector.multi_reduction <maximumf>, %36, %cst_19 [1] : vector<1x256x1024xf32> to vector<1x1024xf32>
    %c0_i32 = arith.constant 0 : i32
    %38 = arith.cmpi eq, %arg1, %c0_i32 : i32
    %39 = arith.extui %38 : i1 to i32
    %c0_i32_20 = arith.constant 0 : i32
    %40 = arith.cmpi ne, %39, %c0_i32_20 : i32
    scf.if %40 {
      %c0_25 = arith.constant 0 : index
      %c0_26 = arith.constant 0 : index
      %47 = vector.load %arg16[%c0_25, %c0_26] : memref<1x1024xf32, #tpu.memory_space<vmem>>, vector<1x1024xf32>
      tpu.vector_store %arg16[%c0_25, %c0_26], %37 {strides = array<i32>} : memref<1x1024xf32, #tpu.memory_space<vmem>>, vector<1x1024xf32>,
    } else {
    }
    %c0_i32_21 = arith.constant 0 : i32
    %41 = arith.cmpi sgt, %arg1, %c0_i32_21 : i32
    %42 = arith.extui %41 : i1 to i32
    %c0_i32_22 = arith.constant 0 : i32
    %43 = arith.cmpi ne, %42, %c0_i32_22 : i32
    scf.if %43 {
      %c0_25 = arith.constant 0 : index
      %c0_26 = arith.constant 0 : index
      %47 = vector.load %arg16[%c0_25, %c0_26] : memref<1x1024xf32, #tpu.memory_space<vmem>>, vector<1x1024xf32>
      %48 = arith.maximumf %47, %37 : vector<1x1024xf32>
      %c0_27 = arith.constant 0 : index
      %c0_28 = arith.constant 0 : index
      %49 = vector.load %arg16[%c0_27, %c0_28] : memref<1x1024xf32, #tpu.memory_space<vmem>>, vector<1x1024xf32>
      tpu.vector_store %arg16[%c0_27, %c0_28], %48 {strides = array<i32>} : memref<1x1024xf32, #tpu.memory_space<vmem>>, vector<1x1024xf32>,
    } else {
    }
    %c0_i32_23 = arith.constant 0 : i32
    %44 = arith.cmpi eq, %arg1, %c0_i32_23 : i32
    %45 = arith.extui %44 : i1 to i32
    %c0_i32_24 = arith.constant 0 : i32
    %46 = arith.cmpi ne, %45, %c0_i32_24 : i32
    scf.if %46 {
      %c0_25 = arith.constant 0 : index
      %c0_26 = arith.constant 0 : index
      %47 = vector.load %arg16[%c0_25, %c0_26] : memref<1x1024xf32, #tpu.memory_space<vmem>>, vector<1x1024xf32>
      %48 = arith.truncf %47 : vector<1x1024xf32> to vector<1x1024xbf16>
      %c0_27 = arith.constant 0 : index
      %c0_28 = arith.constant 0 : index
      %49 = vector.load %arg9[%c0_27, %c0_28] : memref<1024x512xbf16, #tpu.memory_space<vmem>>, vector<1024x512xbf16>
      %cst_29 = arith.constant dense<0.000000e+00> : vector<1x512xf32>
      %50 = tpu.matmul %48, %49, %cst_29 {dimension_numbers = #tpu.dot_dimension_numbers<[1], [0], [0], [1], [0, 0, 1, 1], [], []>} : vector<1x1024xbf16>, vector<1024x512xbf16>, vector<1x512xf32> -> vector<1x512xf32>
      %c0_30 = arith.constant 0 : index
      %c0_31 = arith.constant 0 : index
      %51 = vector.load %arg10[%c0_30, %c0_31] : memref<1x512xf32, #tpu.memory_space<vmem>>, vector<1x512xf32>
      %52 = arith.addf %50, %51 : vector<1x512xf32>
      %cst_32 = arith.constant 0.000000e+00 : f32
      %53 = vector.broadcast %cst_32 : f32 to vector<1x512xf32>
      %54 = arith.maximumf %52, %53 : vector<1x512xf32>
      %55 = arith.truncf %54 : vector<1x512xf32> to vector<1x512xbf16>
      %c0_33 = arith.constant 0 : index
      %c0_34 = arith.constant 0 : index
      %56 = vector.load %arg11[%c0_33, %c0_34] : memref<512x256xbf16, #tpu.memory_space<vmem>>, vector<512x256xbf16>
      %cst_35 = arith.constant dense<0.000000e+00> : vector<1x256xf32>
      %57 = tpu.matmul %55, %56, %cst_35 {dimension_numbers = #tpu.dot_dimension_numbers<[1], [0], [0], [1], [0, 0, 1, 1], [], []>} : vector<1x512xbf16>, vector<512x256xbf16>, vector<1x256xf32> -> vector<1x256xf32>
      %c0_36 = arith.constant 0 : index
      %c0_37 = arith.constant 0 : index
      %58 = vector.load %arg12[%c0_36, %c0_37] : memref<1x256xf32, #tpu.memory_space<vmem>>, vector<1x256xf32>
      %59 = arith.addf %57, %58 : vector<1x256xf32>
      %cst_38 = arith.constant 0.000000e+00 : f32
      %60 = vector.broadcast %cst_38 : f32 to vector<1x256xf32>
      %61 = arith.maximumf %59, %60 : vector<1x256xf32>
      %c0_39 = arith.constant 0 : index
      %c0_40 = arith.constant 0 : index
      %62 = vector.load %arg13[%c0_39, %c0_40] : memref<256x4xf32, #tpu.memory_space<vmem>>, vector<256x4xf32>
      %cst_41 = arith.constant dense<0.000000e+00> : vector<1x4xf32>
      %63 = tpu.matmul %61, %62, %cst_41 {dimension_numbers = #tpu.dot_dimension_numbers<[1], [0], [0], [1], [0, 0, 1, 1], [], []>} : vector<1x256xf32>, vector<256x4xf32>, vector<1x4xf32> -> vector<1x4xf32>
      %c0_42 = arith.constant 0 : index
      %c0_43 = arith.constant 0 : index
      %64 = vector.load %arg14[%c0_42, %c0_43] : memref<1x4xf32, #tpu.memory_space<vmem>>, vector<1x4xf32>
      %65 = arith.addf %63, %64 : vector<1x4xf32>
      %c0_44 = arith.constant 0 : index
      %c0_45 = arith.constant 0 : index
      %c0_46 = arith.constant 0 : index
      %66 = vector.load %arg15[%c0_44, %c0_45, %c0_46] : memref<1x1x4xf32, #tpu.memory_space<vmem>>, vector<1x1x4xf32>
      %67 = vector.shape_cast %66 : vector<1x1x4xf32> to vector<1x4xf32>
      %68 = vector.shape_cast %65 : vector<1x4xf32> to vector<1x1x4xf32>
      tpu.vector_store %arg15[%c0_44, %c0_45, %c0_46], %68 {strides = array<i32>} : memref<1x1x4xf32, #tpu.memory_space<vmem>>, vector<1x1x4xf32>,
    } else {
    }
    return
  }
  func.func @transform_0(%arg0: i32, %arg1: i32) -> (i32, i32, i32, i32) {
    %c0_i32 = arith.constant 0 : i32
    %c0_i32_0 = arith.constant 0 : i32
    %c0_i32_1 = arith.constant 0 : i32
    return %arg0, %c0_i32, %arg1, %c0_i32_0 : i32, i32, i32, i32
  }
  func.func @transform_1(%arg0: i32, %arg1: i32) -> (i32, i32) {
    %c0_i32 = arith.constant 0 : i32
    %c0_i32_0 = arith.constant 0 : i32
    %c0_i32_1 = arith.constant 0 : i32
    return %c0_i32, %c0_i32_0 : i32, i32
  }
  func.func @transform_2(%arg0: i32, %arg1: i32) -> (i32, i32) {
    %c0_i32 = arith.constant 0 : i32
    %c0_i32_0 = arith.constant 0 : i32
    %c0_i32_1 = arith.constant 0 : i32
    return %c0_i32, %c0_i32_0 : i32, i32
  }
  func.func @transform_3(%arg0: i32, %arg1: i32) -> (i32, i32) {
    %c0_i32 = arith.constant 0 : i32
    %c0_i32_0 = arith.constant 0 : i32
    %c0_i32_1 = arith.constant 0 : i32
    return %c0_i32, %c0_i32_0 : i32, i32
  }
  func.func @transform_4(%arg0: i32, %arg1: i32) -> (i32, i32) {
    %c0_i32 = arith.constant 0 : i32
    %c0_i32_0 = arith.constant 0 : i32
    %c0_i32_1 = arith.constant 0 : i32
    return %c0_i32, %c0_i32_0 : i32, i32
  }
  func.func @transform_5(%arg0: i32, %arg1: i32) -> (i32, i32) {
    %c0_i32 = arith.constant 0 : i32
    %c0_i32_0 = arith.constant 0 : i32
    %c0_i32_1 = arith.constant 0 : i32
    return %c0_i32, %c0_i32_0 : i32, i32
  }
  func.func @transform_6(%arg0: i32, %arg1: i32) -> (i32, i32) {
    %c0_i32 = arith.constant 0 : i32
    %c0_i32_0 = arith.constant 0 : i32
    %c0_i32_1 = arith.constant 0 : i32
    return %c0_i32, %c0_i32_0 : i32, i32
  }
  func.func @transform_7(%arg0: i32, %arg1: i32) -> (i32, i32) {
    %c0_i32 = arith.constant 0 : i32
    %c0_i32_0 = arith.constant 0 : i32
    %c0_i32_1 = arith.constant 0 : i32
    return %c0_i32, %c0_i32_0 : i32, i32
  }
  func.func @transform_8(%arg0: i32, %arg1: i32) -> (i32, i32) {
    %c0_i32 = arith.constant 0 : i32
    %c0_i32_0 = arith.constant 0 : i32
    %c0_i32_1 = arith.constant 0 : i32
    return %c0_i32, %c0_i32_0 : i32, i32
  }
  func.func @transform_9(%arg0: i32, %arg1: i32) -> (i32, i32) {
    %c0_i32 = arith.constant 0 : i32
    %c0_i32_0 = arith.constant 0 : i32
    %c0_i32_1 = arith.constant 0 : i32
    return %c0_i32, %c0_i32_0 : i32, i32
  }
  func.func @transform_10(%arg0: i32, %arg1: i32) -> (i32, i32) {
    %c0_i32 = arith.constant 0 : i32
    %c0_i32_0 = arith.constant 0 : i32
    %c0_i32_1 = arith.constant 0 : i32
    return %c0_i32, %c0_i32_0 : i32, i32
  }
  func.func @transform_11(%arg0: i32, %arg1: i32) -> (i32, i32) {
    %c0_i32 = arith.constant 0 : i32
    %c0_i32_0 = arith.constant 0 : i32
    %c0_i32_1 = arith.constant 0 : i32
    return %c0_i32, %c0_i32_0 : i32, i32
  }
  func.func @transform_12(%arg0: i32, %arg1: i32) -> (i32, i32) {
    %c0_i32 = arith.constant 0 : i32
    %c0_i32_0 = arith.constant 0 : i32
    %c0_i32_1 = arith.constant 0 : i32
    return %c0_i32, %c0_i32_0 : i32, i32
  }
  func.func @transform_13(%arg0: i32, %arg1: i32) -> (i32, i32, i32) {
    %c0_i32 = arith.constant 0 : i32
    %c0_i32_0 = arith.constant 0 : i32
    %c0_i32_1 = arith.constant 0 : i32
    return %arg0, %c0_i32, %c0_i32_0 : i32, i32, i32
  }
}

module attributes {stable_mosaic.version = 11 : i64} {
  func.func @_stn2d_kernel(%arg0: i32, %arg1: i32, %arg2: memref<1x1x256x2xf32, #tpu.memory_space<vmem>>, %arg3: memref<2x64xf32, #tpu.memory_space<vmem>>, %arg4: memref<1x64xf32, #tpu.memory_space<vmem>>, %arg5: memref<64x128xbf16, #tpu.memory_space<vmem>>, %arg6: memref<1x128xf32, #tpu.memory_space<vmem>>, %arg7: memref<128x1024xbf16, #tpu.memory_space<vmem>>, %arg8: memref<1x1024xf32, #tpu.memory_space<vmem>>, %arg9: memref<1024x512xbf16, #tpu.memory_space<vmem>>, %arg10: memref<1x512xf32, #tpu.memory_space<vmem>>, %arg11: memref<512x256xbf16, #tpu.memory_space<vmem>>, %arg12: memref<1x256xf32, #tpu.memory_space<vmem>>, %arg13: memref<256x4xf32, #tpu.memory_space<vmem>>, %arg14: memref<1x4xf32, #tpu.memory_space<vmem>>, %arg15: memref<1x1x4xf32, #tpu.memory_space<vmem>>, %arg16: memref<1x1024xf32, #tpu.memory_space<vmem>>) attributes {dimension_semantics = [#tpu.dimension_semantics<parallel>, #tpu.dimension_semantics<arbitrary>], iteration_bounds = array<i64: 2, 1>, scalar_prefetch = 0 : i64, scratch_operands = 1 : i64, tpu.core_type = #tpu.core_type<tc>, window_params = [{transform_indices = @transform_0, window_bounds = array<i64: 1, 1, 256, 2>}, {pipeline_mode = #tpu.pipeline_mode<synchronous>, transform_indices = @transform_1, window_bounds = array<i64: 2, 64>}, {pipeline_mode = #tpu.pipeline_mode<synchronous>, transform_indices = @transform_2, window_bounds = array<i64: 1, 64>}, {pipeline_mode = #tpu.pipeline_mode<synchronous>, transform_indices = @transform_3, window_bounds = array<i64: 64, 128>}, {pipeline_mode = #tpu.pipeline_mode<synchronous>, transform_indices = @transform_4, window_bounds = array<i64: 1, 128>}, {pipeline_mode = #tpu.pipeline_mode<synchronous>, transform_indices = @transform_5, window_bounds = array<i64: 128, 1024>}, {pipeline_mode = #tpu.pipeline_mode<synchronous>, transform_indices = @transform_6, window_bounds = array<i64: 1, 1024>}, {pipeline_mode = #tpu.pipeline_mode<synchronous>, transform_indices = @transform_7, window_bounds = array<i64: 1024, 512>}, {pipeline_mode = #tpu.pipeline_mode<synchronous>, transform_indices = @transform_8, window_bounds = array<i64: 1, 512>}, {pipeline_mode = #tpu.pipeline_mode<synchronous>, transform_indices = @transform_9, window_bounds = array<i64: 512, 256>}, {pipeline_mode = #tpu.pipeline_mode<synchronous>, transform_indices = @transform_10, window_bounds = array<i64: 1, 256>}, {pipeline_mode = #tpu.pipeline_mode<synchronous>, transform_indices = @transform_11, window_bounds = array<i64: 256, 4>}, {pipeline_mode = #tpu.pipeline_mode<synchronous>, transform_indices = @transform_12, window_bounds = array<i64: 1, 4>}, {transform_indices = @transform_13, window_bounds = array<i64: 1, 1, 4>}]} {
    %c0 = arith.constant 0 : index
    %c0_0 = arith.constant 0 : index
    %c0_1 = arith.constant 0 : index
    %c0_2 = arith.constant 0 : index
    %0 = vector.load %arg2[%c0, %c0_0, %c0_1, %c0_2] : memref<1x1x256x2xf32, #tpu.memory_space<vmem>>, vector<1x1x256x2xf32>
    %1 = vector.shape_cast %0 : vector<1x1x256x2xf32> to vector<1x256x2xf32>
    %2 = vector.shape_cast %1 : vector<1x256x2xf32> to vector<256x2xf32>
    %c0_3 = arith.constant 0 : index
    %c0_4 = arith.constant 0 : index
    %3 = vector.load %arg3[%c0_3, %c0_4] : memref<2x64xf32, #tpu.memory_space<vmem>>, vector<2x64xf32>
    %c0_5 = arith.constant 0 : index
    %c0_6 = arith.constant 0 : index
    %4 = vector.load %arg4[%c0_5, %c0_6] : memref<1x64xf32, #tpu.memory_space<vmem>>, vector<1x64xf32>
    %5 = vector.extract_strided_slice %2 {offsets = [0, 0], sizes = [256, 1], strides = [1, 1]} : vector<256x2xf32> to vector<256x1xf32>
    %6 = vector.extract_strided_slice %3 {offsets = [0, 0], sizes = [1, 64], strides = [1, 1]} : vector<2x64xf32> to vector<1x64xf32>
    %7 = vector.broadcast %5 : vector<256x1xf32> to vector<256x64xf32>
    %8 = vector.broadcast %6 : vector<1x64xf32> to vector<256x64xf32>
    %9 = arith.mulf %7, %8 : vector<256x64xf32>
    %10 = vector.broadcast %4 : vector<1x64xf32> to vector<256x64xf32>
    %11 = arith.addf %10, %9 : vector<256x64xf32>
    %12 = vector.extract_strided_slice %2 {offsets = [0, 1], sizes = [256, 1], strides = [1, 1]} : vector<256x2xf32> to vector<256x1xf32>
    %13 = vector.extract_strided_slice %3 {offsets = [1, 0], sizes = [1, 64], strides = [1, 1]} : vector<2x64xf32> to vector<1x64xf32>
    %14 = vector.broadcast %12 : vector<256x1xf32> to vector<256x64xf32>
    %15 = vector.broadcast %13 : vector<1x64xf32> to vector<256x64xf32>
    %16 = arith.mulf %14, %15 : vector<256x64xf32>
    %17 = arith.addf %11, %16 : vector<256x64xf32>
    %cst = arith.constant 0.000000e+00 : f32
    %18 = vector.broadcast %cst : f32 to vector<256x64xf32>
    %19 = arith.maximumf %17, %18 : vector<256x64xf32>
    %20 = arith.truncf %19 : vector<256x64xf32> to vector<256x64xbf16>
    %c0_7 = arith.constant 0 : index
    %c0_8 = arith.constant 0 : index
    %21 = vector.load %arg5[%c0_7, %c0_8] : memref<64x128xbf16, #tpu.memory_space<vmem>>, vector<64x128xbf16>
    %cst_9 = arith.constant dense<0.000000e+00> : vector<256x128xf32>
    %22 = tpu.matmul %20, %21, %cst_9 {dimension_numbers = #tpu.dot_dimension_numbers<[1], [0], [0], [1], [0, 0, 1, 1], [], []>} : vector<256x64xbf16>, vector<64x128xbf16>, vector<256x128xf32> -> vector<256x128xf32>
    %c0_10 = arith.constant 0 : index
    %c0_11 = arith.constant 0 : index
    %23 = vector.load %arg6[%c0_10, %c0_11] : memref<1x128xf32, #tpu.memory_space<vmem>>, vector<1x128xf32>
    %24 = vector.broadcast %23 : vector<1x128xf32> to vector<256x128xf32>
    %25 = arith.addf %22, %24 : vector<256x128xf32>
    %cst_12 = arith.constant 0.000000e+00 : f32
    %26 = vector.broadcast %cst_12 : f32 to vector<256x128xf32>
    %27 = arith.maximumf %25, %26 : vector<256x128xf32>
    %28 = arith.truncf %27 : vector<256x128xf32> to vector<256x128xbf16>
    %c0_13 = arith.constant 0 : index
    %c0_14 = arith.constant 0 : index
    %29 = vector.load %arg7[%c0_13, %c0_14] : memref<128x1024xbf16, #tpu.memory_space<vmem>>, vector<128x1024xbf16>
    %cst_15 = arith.constant dense<0.000000e+00> : vector<256x1024xf32>
    %30 = tpu.matmul %28, %29, %cst_15 {dimension_numbers = #tpu.dot_dimension_numbers<[1], [0], [0], [1], [0, 0, 1, 1], [], []>} : vector<256x128xbf16>, vector<128x1024xbf16>, vector<256x1024xf32> -> vector<256x1024xf32>
    %c0_16 = arith.constant 0 : index
    %c0_17 = arith.constant 0 : index
    %31 = vector.load %arg8[%c0_16, %c0_17] : memref<1x1024xf32, #tpu.memory_space<vmem>>, vector<1x1024xf32>
    %32 = vector.broadcast %31 : vector<1x1024xf32> to vector<256x1024xf32>
    %33 = arith.addf %30, %32 : vector<256x1024xf32>
    %cst_18 = arith.constant 0.000000e+00 : f32
    %34 = vector.broadcast %cst_18 : f32 to vector<256x1024xf32>
    %35 = arith.maximumf %33, %34 : vector<256x1024xf32>
    %36 = vector.shape_cast %35 : vector<256x1024xf32> to vector<1x256x1024xf32>
    %cst_19 = arith.constant dense<0xFF800000> : vector<1x1024xf32>
    %37 = vector.multi_reduction <maximumf>, %36, %cst_19 [1] : vector<1x256x1024xf32> to vector<1x1024xf32>
    %c0_i32 = arith.constant 0 : i32
    %38 = arith.cmpi eq, %arg1, %c0_i32 : i32
    %39 = arith.extui %38 : i1 to i32
    %c0_i32_20 = arith.constant 0 : i32
    %40 = arith.cmpi ne, %39, %c0_i32_20 : i32
    scf.if %40 {
      %c0_25 = arith.constant 0 : index
      %c0_26 = arith.constant 0 : index
      %47 = vector.load %arg16[%c0_25, %c0_26] : memref<1x1024xf32, #tpu.memory_space<vmem>>, vector<1x1024xf32>
      tpu.vector_store %arg16[%c0_25, %c0_26], %37 {strides = array<i32>} : memref<1x1024xf32, #tpu.memory_space<vmem>>, vector<1x1024xf32>,
    } else {
    }
    %c0_i32_21 = arith.constant 0 : i32
    %41 = arith.cmpi sgt, %arg1, %c0_i32_21 : i32
    %42 = arith.extui %41 : i1 to i32
    %c0_i32_22 = arith.constant 0 : i32
    %43 = arith.cmpi ne, %42, %c0_i32_22 : i32
    scf.if %43 {
      %c0_25 = arith.constant 0 : index
      %c0_26 = arith.constant 0 : index
      %47 = vector.load %arg16[%c0_25, %c0_26] : memref<1x1024xf32, #tpu.memory_space<vmem>>, vector<1x1024xf32>
      %48 = arith.maximumf %47, %37 : vector<1x1024xf32>
      %c0_27 = arith.constant 0 : index
      %c0_28 = arith.constant 0 : index
      %49 = vector.load %arg16[%c0_27, %c0_28] : memref<1x1024xf32, #tpu.memory_space<vmem>>, vector<1x1024xf32>
      tpu.vector_store %arg16[%c0_27, %c0_28], %48 {strides = array<i32>} : memref<1x1024xf32, #tpu.memory_space<vmem>>, vector<1x1024xf32>,
    } else {
    }
    %c0_i32_23 = arith.constant 0 : i32
    %44 = arith.cmpi eq, %arg1, %c0_i32_23 : i32
    %45 = arith.extui %44 : i1 to i32
    %c0_i32_24 = arith.constant 0 : i32
    %46 = arith.cmpi ne, %45, %c0_i32_24 : i32
    scf.if %46 {
      %c0_25 = arith.constant 0 : index
      %c0_26 = arith.constant 0 : index
      %47 = vector.load %arg16[%c0_25, %c0_26] : memref<1x1024xf32, #tpu.memory_space<vmem>>, vector<1x1024xf32>
      %48 = arith.truncf %47 : vector<1x1024xf32> to vector<1x1024xbf16>
      %c0_27 = arith.constant 0 : index
      %c0_28 = arith.constant 0 : index
      %49 = vector.load %arg9[%c0_27, %c0_28] : memref<1024x512xbf16, #tpu.memory_space<vmem>>, vector<1024x512xbf16>
      %cst_29 = arith.constant dense<0.000000e+00> : vector<1x512xf32>
      %50 = tpu.matmul %48, %49, %cst_29 {dimension_numbers = #tpu.dot_dimension_numbers<[1], [0], [0], [1], [0, 0, 1, 1], [], []>} : vector<1x1024xbf16>, vector<1024x512xbf16>, vector<1x512xf32> -> vector<1x512xf32>
      %c0_30 = arith.constant 0 : index
      %c0_31 = arith.constant 0 : index
      %51 = vector.load %arg10[%c0_30, %c0_31] : memref<1x512xf32, #tpu.memory_space<vmem>>, vector<1x512xf32>
      %52 = arith.addf %50, %51 : vector<1x512xf32>
      %cst_32 = arith.constant 0.000000e+00 : f32
      %53 = vector.broadcast %cst_32 : f32 to vector<1x512xf32>
      %54 = arith.maximumf %52, %53 : vector<1x512xf32>
      %55 = arith.truncf %54 : vector<1x512xf32> to vector<1x512xbf16>
      %c0_33 = arith.constant 0 : index
      %c0_34 = arith.constant 0 : index
      %56 = vector.load %arg11[%c0_33, %c0_34] : memref<512x256xbf16, #tpu.memory_space<vmem>>, vector<512x256xbf16>
      %cst_35 = arith.constant dense<0.000000e+00> : vector<1x256xf32>
      %57 = tpu.matmul %55, %56, %cst_35 {dimension_numbers = #tpu.dot_dimension_numbers<[1], [0], [0], [1], [0, 0, 1, 1], [], []>} : vector<1x512xbf16>, vector<512x256xbf16>, vector<1x256xf32> -> vector<1x256xf32>
      %c0_36 = arith.constant 0 : index
      %c0_37 = arith.constant 0 : index
      %58 = vector.load %arg12[%c0_36, %c0_37] : memref<1x256xf32, #tpu.memory_space<vmem>>, vector<1x256xf32>
      %59 = arith.addf %57, %58 : vector<1x256xf32>
      %cst_38 = arith.constant 0.000000e+00 : f32
      %60 = vector.broadcast %cst_38 : f32 to vector<1x256xf32>
      %61 = arith.maximumf %59, %60 : vector<1x256xf32>
      %c0_39 = arith.constant 0 : index
      %c0_40 = arith.constant 0 : index
      %62 = vector.load %arg13[%c0_39, %c0_40] : memref<256x4xf32, #tpu.memory_space<vmem>>, vector<256x4xf32>
      %cst_41 = arith.constant dense<0.000000e+00> : vector<1x4xf32>
      %63 = tpu.matmul %61, %62, %cst_41 {dimension_numbers = #tpu.dot_dimension_numbers<[1], [0], [0], [1], [0, 0, 1, 1], [], []>} : vector<1x256xf32>, vector<256x4xf32>, vector<1x4xf32> -> vector<1x4xf32>
      %c0_42 = arith.constant 0 : index
      %c0_43 = arith.constant 0 : index
      %64 = vector.load %arg14[%c0_42, %c0_43] : memref<1x4xf32, #tpu.memory_space<vmem>>, vector<1x4xf32>
      %65 = arith.addf %63, %64 : vector<1x4xf32>
      %c0_44 = arith.constant 0 : index
      %c0_45 = arith.constant 0 : index
      %c0_46 = arith.constant 0 : index
      %66 = vector.load %arg15[%c0_44, %c0_45, %c0_46] : memref<1x1x4xf32, #tpu.memory_space<vmem>>, vector<1x1x4xf32>
      %67 = vector.shape_cast %66 : vector<1x1x4xf32> to vector<1x4xf32>
      %68 = vector.shape_cast %65 : vector<1x4xf32> to vector<1x1x4xf32>
      tpu.vector_store %arg15[%c0_44, %c0_45, %c0_46], %68 {strides = array<i32>} : memref<1x1x4xf32, #tpu.memory_space<vmem>>, vector<1x1x4xf32>,
    } else {
    }
    return
  }
  func.func @transform_0(%arg0: i32, %arg1: i32) -> (i32, i32, i32, i32) {
    %c0_i32 = arith.constant 0 : i32
    %c0_i32_0 = arith.constant 0 : i32
    %c0_i32_1 = arith.constant 0 : i32
    return %arg0, %c0_i32, %arg1, %c0_i32_0 : i32, i32, i32, i32
  }
  func.func @transform_1(%arg0: i32, %arg1: i32) -> (i32, i32) {
    %c0_i32 = arith.constant 0 : i32
    %c0_i32_0 = arith.constant 0 : i32
    %c0_i32_1 = arith.constant 0 : i32
    return %c0_i32, %c0_i32_0 : i32, i32
  }
  func.func @transform_2(%arg0: i32, %arg1: i32) -> (i32, i32) {
    %c0_i32 = arith.constant 0 : i32
    %c0_i32_0 = arith.constant 0 : i32
    %c0_i32_1 = arith.constant 0 : i32
    return %c0_i32, %c0_i32_0 : i32, i32
  }
  func.func @transform_3(%arg0: i32, %arg1: i32) -> (i32, i32) {
    %c0_i32 = arith.constant 0 : i32
    %c0_i32_0 = arith.constant 0 : i32
    %c0_i32_1 = arith.constant 0 : i32
    return %c0_i32, %c0_i32_0 : i32, i32
  }
  func.func @transform_4(%arg0: i32, %arg1: i32) -> (i32, i32) {
    %c0_i32 = arith.constant 0 : i32
    %c0_i32_0 = arith.constant 0 : i32
    %c0_i32_1 = arith.constant 0 : i32
    return %c0_i32, %c0_i32_0 : i32, i32
  }
  func.func @transform_5(%arg0: i32, %arg1: i32) -> (i32, i32) {
    %c0_i32 = arith.constant 0 : i32
    %c0_i32_0 = arith.constant 0 : i32
    %c0_i32_1 = arith.constant 0 : i32
    return %c0_i32, %c0_i32_0 : i32, i32
  }
  func.func @transform_6(%arg0: i32, %arg1: i32) -> (i32, i32) {
    %c0_i32 = arith.constant 0 : i32
    %c0_i32_0 = arith.constant 0 : i32
    %c0_i32_1 = arith.constant 0 : i32
    return %c0_i32, %c0_i32_0 : i32, i32
  }
  func.func @transform_7(%arg0: i32, %arg1: i32) -> (i32, i32) {
    %c0_i32 = arith.constant 0 : i32
    %c0_i32_0 = arith.constant 0 : i32
    %c0_i32_1 = arith.constant 0 : i32
    return %c0_i32, %c0_i32_0 : i32, i32
  }
  func.func @transform_8(%arg0: i32, %arg1: i32) -> (i32, i32) {
    %c0_i32 = arith.constant 0 : i32
    %c0_i32_0 = arith.constant 0 : i32
    %c0_i32_1 = arith.constant 0 : i32
    return %c0_i32, %c0_i32_0 : i32, i32
  }
  func.func @transform_9(%arg0: i32, %arg1: i32) -> (i32, i32) {
    %c0_i32 = arith.constant 0 : i32
    %c0_i32_0 = arith.constant 0 : i32
    %c0_i32_1 = arith.constant 0 : i32
    return %c0_i32, %c0_i32_0 : i32, i32
  }
  func.func @transform_10(%arg0: i32, %arg1: i32) -> (i32, i32) {
    %c0_i32 = arith.constant 0 : i32
    %c0_i32_0 = arith.constant 0 : i32
    %c0_i32_1 = arith.constant 0 : i32
    return %c0_i32, %c0_i32_0 : i32, i32
  }
  func.func @transform_11(%arg0: i32, %arg1: i32) -> (i32, i32) {
    %c0_i32 = arith.constant 0 : i32
    %c0_i32_0 = arith.constant 0 : i32
    %c0_i32_1 = arith.constant 0 : i32
    return %c0_i32, %c0_i32_0 : i32, i32
  }
  func.func @transform_12(%arg0: i32, %arg1: i32) -> (i32, i32) {
    %c0_i32 = arith.constant 0 : i32
    %c0_i32_0 = arith.constant 0 : i32
    %c0_i32_1 = arith.constant 0 : i32
    return %c0_i32, %c0_i32_0 : i32, i32
  }
  func.func @transform_13(%arg0: i32, %arg1: i32) -> (i32, i32, i32) {
    %c0_i32 = arith.constant 0 : i32
    %c0_i32_0 = arith.constant 0 : i32
    %c0_i32_1 = arith.constant 0 : i32
    return %arg0, %c0_i32, %c0_i32_0 : i32, i32, i32
  }
}

</mosaic_0001>

<llo_original>
// kernel: tpu_custom_call.1
$region0: #{tpu_custom_call.1}
  #allocation0 [shape = 'u32[]', space=smem, size = 0x4, offset = 0x4, fixed_abs, tag = 'smem constant byte address 0x4 - core index']
  #allocation1 [shape = 'u32[144,128]{1,0:T(1,128)}', space=vmem, size = 0x12000, scoped, tag = 'internal scratch']
  #allocation2 [shape = 'f32[1,1024]{1,0:T(1,128)}', space=vmem, size = 0x1000, scoped, tag = 'scratch operand']
  %s0 = inlined_call_operand.vmem [shape: f32[2,1,256,2], index: 0, kind: input, shape index: {}]
  %s1 = inlined_call_operand.vmem [shape: f32[2,64], index: 1, kind: input, shape index: {}]
  %s2 = inlined_call_operand.vmem [shape: f32[1,64], index: 2, kind: input, shape index: {}]
  %s3 = inlined_call_operand.vmem [shape: bf16[64,128], index: 3, kind: input, shape index: {}]
  %s4 = inlined_call_operand.vmem [shape: f32[1,128], index: 4, kind: input, shape index: {}]
  %s5 = inlined_call_operand.vmem [shape: bf16[128,1024], index: 5, kind: input, shape index: {}]
  %s6 = inlined_call_operand.vmem [shape: f32[1,1024], index: 6, kind: input, shape index: {}]
  %s7 = inlined_call_operand.hbm [shape: bf16[1024,512], index: 7, kind: input, shape index: {}]
  %s8 = inlined_call_operand.vmem [shape: f32[1,512], index: 8, kind: input, shape index: {}]
  %s9 = inlined_call_operand.hbm [shape: bf16[512,256], index: 9, kind: input, shape index: {}]
  %s10 = inlined_call_operand.vmem [shape: f32[1,256], index: 10, kind: input, shape index: {}]
  %s11 = inlined_call_operand.vmem [shape: f32[256,4], index: 11, kind: input, shape index: {}]
  %s12 = inlined_call_operand.vmem [shape: f32[1,4], index: 12, kind: input, shape index: {}]
  %s13 = inlined_call_operand.hbm [shape: f32[2,1,4], index: 13, kind: output, shape index: {}]
  %s14 = sld [smem:[#allocation0]]
  $region105: #{tpu_custom_call.1} parent=0
    _
  %s16 = ssub.s32 1, %s14
  %s17 = scalar_select 0, %s16, %s14
  $region1: #{tpu_custom_call.1} parent=0
    #allocation3 [shape = 'u8[1048576]{0}', space=vmem, size = 0x100000, scoped, tag = 'input window, operand 7, single buffered']
    #allocation4 [shape = 's32[2]{0}', space=sflag, size = 0x8, scoped, tag = 'scoped memory for tpu_custom_call.1']
    #allocation5 [shape = 's32[2]{0}', space=sflag, size = 0x8, scoped, tag = 'scoped memory for tpu_custom_call.1']
    #allocation6 [shape = 'u8[262144]{0}', space=vmem, size = 0x40000, scoped, tag = 'input window, operand 9, single buffered']
    #allocation7 [shape = 's32[1]{0}', space=sflag, size = 0x4, scoped, tag = 'scoped memory for tpu_custom_call.1']
    #allocation8 [shape = 'u8[1024]{0}', space=vmem, size = 0x400, scoped, tag = 'output window, operand 0']
    %18 = vsyncpa [#allocation4], 0
    %19 = vsyncpa [#allocation7], 0
    %20 = vsyncpa [#allocation5], 0
    %s21 = scalar_lea.sflag [#allocation5], 1
    %22 = vsyncpa %s21, 0
    loop: start=0, step=1, limit=4
    $region2: #{tpu_custom_call.1} parent=1 // loop_pre_header
      _
    $region3: #{tpu_custom_call.1} parent=1 // loop_header
      %s24 = sphi 0, %s28
      %p25 = scmp.ge.s32.totalorder %s24, 4
      %s31 = sphi 0, %s43
      %s32 = sphi 0, %s39
      %s33 = sphi 0, %s31
      %s34 = sphi 0, %s32
      %s35 = sphi 0, %s33
      %s36 = sphi 0, %s34
      %s48 = sphi 0, %s50
      %s51 = sphi 0, %s48
      %s52 = sphi 0, %s51
      %s68 = sphi 0, %s52
      %s72 = sphi 0, %s72
      %s74 = sphi 0, %s72
      %s75 = sphi 0, %s74
      %s89 = sphi 0, %s75
      %s93 = sphi 0, %s93
      %s95 = sphi 0, %s93
      %s96 = sphi 0, %s95
      %s110 = sphi 0, %s96
      %s114 = sphi 0, %s114
      %s116 = sphi 0, %s114
      %s117 = sphi 0, %s116
      %s131 = sphi 0, %s117
      %s135 = sphi 0, %s135
      %s137 = sphi 0, %s135
      %s138 = sphi 0, %s137
      %s152 = sphi 0, %s138
      %s156 = sphi 0, %s156
      %s158 = sphi 0, %s156
      %s159 = sphi 0, %s158
      %s173 = sphi 0, %s159
      %s177 = sphi 0, %s177
      %s179 = sphi 0, %s177
      %s180 = sphi 0, %s179
      %s194 = sphi 0, %s180
      %s198 = sphi 0, %s198
      %s200 = sphi 0, %s198
      %s201 = sphi 0, %s200
      %s215 = sphi 0, %s201
      %s219 = sphi 0, %s219
      %s221 = sphi 0, %s219
      %s222 = sphi 0, %s221
      %s236 = sphi 0, %s222
      %s240 = sphi 0, %s240
      %s242 = sphi 0, %s240
      %s243 = sphi 0, %s242
      %s257 = sphi 0, %s243
      %s261 = sphi 0, %s261
      %s263 = sphi 0, %s261
      %s264 = sphi 0, %s263
      %s278 = sphi 0, %s264
      %s282 = sphi 0, %s282
      %s284 = sphi 0, %s282
      %s285 = sphi 0, %s284
      %s299 = sphi 0, %s285
      %s303 = sphi 0, %s303
      %s305 = sphi 0, %s303
      %s306 = sphi 0, %s305
      %s320 = sphi 0, %s306
      %s326 = sphi 0, %s328
      %s329 = sphi 0, %s326
      %s330 = sphi 0, %s329
      %s346 = sphi 0, %s330
    $region4: #{tpu_custom_call.1} parent=1 // loop_header_branch
      %27 = sbr.rel (%p25) target = $region8
    $region5: #{tpu_custom_call.1} parent=1 // loop_body
      %s29 = ssub.s32 %s24, 1
      %s30 = ssub.s32 %s24, 2
      %s37 = sadd.s32 1, %s32
      %p38 = scmp.ge.s32.totalorder %s37, 1
      %s39 = scalar_select %p38, 0, %s37
      %s40 = sadd.s32 1, %s31
      %s41 = scalar_select %p38, %s40, %s31
      %p42 = scmp.ge.s32.totalorder %s41, 2
      %s43 = scalar_select %p42, 0, %s41
      %s44 = ssub.s32 %s31, %s43
      %s45 = ssub.s32 %s32, %s39
      %s46 = sor.u32 %s44, %s45
      %p47 = scmp.eq.s32.totalorder %s46, 0
      %s49 = sadd.s32 %s48, 1
      %s50 = scalar_select %p47, %s48, %s49
      %p53 = pneg %p47
      %p54 = scmp.eq.s32.totalorder %s24, 1
      %p55 = por %p53, %p54
      %p56 = scmp.ne.s32.totalorder %s48, %s51
      %p57 = scmp.eq.s32.totalorder %s24, 0
      %p58 = por %p56, %p57
      %p59 = scmp.ne.s32.totalorder %s48, %s51
      %p60 = scmp.eq.s32.totalorder %s29, 1
      %p61 = por %p59, %p60
      %p62 = scmp.ne.s32.totalorder %s51, %s52
      %p63 = scmp.eq.s32.totalorder %s29, 0
      %p64 = por %p62, %p63
      %p65 = scmp.ne.s32.totalorder %s51, %s52
      %p66 = scmp.eq.s32.totalorder %s30, 1
      %p67 = por %p65, %p66
      %p69 = scmp.ne.s32.totalorder %s52, %s68
      %p70 = scmp.eq.s32.totalorder %s30, 0
      %p71 = por %p69, %p70
      %s73 = sadd.s32 %s72, 1
      %p76 = scmp.eq.s32.totalorder %s24, 1
      %p77 = scmp.ne.s32.totalorder %s72, %s74
      %p78 = scmp.eq.s32.totalorder %s24, 0
      %p79 = por %p77, %p78
      %p80 = scmp.ne.s32.totalorder %s72, %s74
      %p81 = scmp.eq.s32.totalorder %s29, 1
      %p82 = por %p80, %p81
      %p83 = scmp.ne.s32.totalorder %s74, %s75
      %p84 = scmp.eq.s32.totalorder %s29, 0
      %p85 = por %p83, %p84
      %p86 = scmp.ne.s32.totalorder %s74, %s75
      %p87 = scmp.eq.s32.totalorder %s30, 1
      %p88 = por %p86, %p87
      %p90 = scmp.ne.s32.totalorder %s75, %s89
      %p91 = scmp.eq.s32.totalorder %s30, 0
      %p92 = por %p90, %p91
      %s94 = sadd.s32 %s93, 1
      %p97 = scmp.eq.s32.totalorder %s24, 1
      %p98 = scmp.ne.s32.totalorder %s93, %s95
      %p99 = scmp.eq.s32.totalorder %s24, 0
      %p100 = por %p98, %p99
      %p101 = scmp.ne.s32.totalorder %s93, %s95
      %p102 = scmp.eq.s32.totalorder %s29, 1
      %p103 = por %p101, %p102
      %p104 = scmp.ne.s32.totalorder %s95, %s96
      %p105 = scmp.eq.s32.totalorder %s29, 0
      %p106 = por %p104, %p105
      %p107 = scmp.ne.s32.totalorder %s95, %s96
      %p108 = scmp.eq.s32.totalorder %s30, 1
      %p109 = por %p107, %p108
      %p111 = scmp.ne.s32.totalorder %s96, %s110
      %p112 = scmp.eq.s32.totalorder %s30, 0
      %p113 = por %p111, %p112
      %s115 = sadd.s32 %s114, 1
      %p118 = scmp.eq.s32.totalorder %s24, 1
      %p119 = scmp.ne.s32.totalorder %s114, %s116
      %p120 = scmp.eq.s32.totalorder %s24, 0
      %p121 = por %p119, %p120
      %p122 = scmp.ne.s32.totalorder %s114, %s116
      %p123 = scmp.eq.s32.totalorder %s29, 1
      %p124 = por %p122, %p123
      %p125 = scmp.ne.s32.totalorder %s116, %s117
      %p126 = scmp.eq.s32.totalorder %s29, 0
      %p127 = por %p125, %p126
      %p128 = scmp.ne.s32.totalorder %s116, %s117
      %p129 = scmp.eq.s32.totalorder %s30, 1
      %p130 = por %p128, %p129
      %p132 = scmp.ne.s32.totalorder %s117, %s131
      %p133 = scmp.eq.s32.totalorder %s30, 0
      %p134 = por %p132, %p133
      %s136 = sadd.s32 %s135, 1
      %p139 = scmp.eq.s32.totalorder %s24, 1
      %p140 = scmp.ne.s32.totalorder %s135, %s137
      %p141 = scmp.eq.s32.totalorder %s24, 0
      %p142 = por %p140, %p141
      %p143 = scmp.ne.s32.totalorder %s135, %s137
      %p144 = scmp.eq.s32.totalorder %s29, 1
      %p145 = por %p143, %p144
      %p146 = scmp.ne.s32.totalorder %s137, %s138
      %p147 = scmp.eq.s32.totalorder %s29, 0
      %p148 = por %p146, %p147
      %p149 = scmp.ne.s32.totalorder %s137, %s138
      %p150 = scmp.eq.s32.totalorder %s30, 1
      %p151 = por %p149, %p150
      %p153 = scmp.ne.s32.totalorder %s138, %s152
      %p154 = scmp.eq.s32.totalorder %s30, 0
      %p155 = por %p153, %p154
      %s157 = sadd.s32 %s156, 1
      %p160 = scmp.eq.s32.totalorder %s24, 1
      %p161 = scmp.ne.s32.totalorder %s156, %s158
      %p162 = scmp.eq.s32.totalorder %s24, 0
      %p163 = por %p161, %p162
      %p164 = scmp.ne.s32.totalorder %s156, %s158
      %p165 = scmp.eq.s32.totalorder %s29, 1
      %p166 = por %p164, %p165
      %p167 = scmp.ne.s32.totalorder %s158, %s159
      %p168 = scmp.eq.s32.totalorder %s29, 0
      %p169 = por %p167, %p168
      %p170 = scmp.ne.s32.totalorder %s158, %s159
      %p171 = scmp.eq.s32.totalorder %s30, 1
      %p172 = por %p170, %p171
      %p174 = scmp.ne.s32.totalorder %s159, %s173
      %p175 = scmp.eq.s32.totalorder %s30, 0
      %p176 = por %p174, %p175
      %s178 = sadd.s32 %s177, 1
      %p181 = scmp.eq.s32.totalorder %s24, 1
      %p182 = scmp.ne.s32.totalorder %s177, %s179
      %p183 = scmp.eq.s32.totalorder %s24, 0
      %p184 = por %p182, %p183
      %p185 = scmp.ne.s32.totalorder %s177, %s179
      %p186 = scmp.eq.s32.totalorder %s29, 1
      %p187 = por %p185, %p186
      %p188 = scmp.ne.s32.totalorder %s179, %s180
      %p189 = scmp.eq.s32.totalorder %s29, 0
      %p190 = por %p188, %p189
      %p191 = scmp.ne.s32.totalorder %s179, %s180
      %p192 = scmp.eq.s32.totalorder %s30, 1
      %p193 = por %p191, %p192
      %p195 = scmp.ne.s32.totalorder %s180, %s194
      %p196 = scmp.eq.s32.totalorder %s30, 0
      %p197 = por %p195, %p196
      %s199 = sadd.s32 %s198, 1
      %p202 = scmp.eq.s32.totalorder %s24, 1
      %p203 = scmp.ne.s32.totalorder %s198, %s200
      %p204 = scmp.eq.s32.totalorder %s24, 0
      %p205 = por %p203, %p204
      %p206 = scmp.ne.s32.totalorder %s198, %s200
      %p207 = scmp.eq.s32.totalorder %s29, 1
      %p208 = por %p206, %p207
      %p209 = scmp.ne.s32.totalorder %s200, %s201
      %p210 = scmp.eq.s32.totalorder %s29, 0
      %p211 = por %p209, %p210
      %p212 = scmp.ne.s32.totalorder %s200, %s201
      %p213 = scmp.eq.s32.totalorder %s30, 1
      %p214 = por %p212, %p213
      %p216 = scmp.ne.s32.totalorder %s201, %s215
      %p217 = scmp.eq.s32.totalorder %s30, 0
      %p218 = por %p216, %p217
      %s220 = sadd.s32 %s219, 1
      %p223 = scmp.eq.s32.totalorder %s24, 1
      %p224 = scmp.ne.s32.totalorder %s219, %s221
      %p225 = scmp.eq.s32.totalorder %s24, 0
      %p226 = por %p224, %p225
      %p227 = scmp.ne.s32.totalorder %s219, %s221
      %p228 = scmp.eq.s32.totalorder %s29, 1
      %p229 = por %p227, %p228
      %p230 = scmp.ne.s32.totalorder %s221, %s222
      %p231 = scmp.eq.s32.totalorder %s29, 0
      %p232 = por %p230, %p231
      %p233 = scmp.ne.s32.totalorder %s221, %s222
      %p234 = scmp.eq.s32.totalorder %s30, 1
      %p235 = por %p233, %p234
      %p237 = scmp.ne.s32.totalorder %s222, %s236
      %p238 = scmp.eq.s32.totalorder %s30, 0
      %p239 = por %p237, %p238
      %s241 = sadd.s32 %s240, 1
      %p244 = scmp.eq.s32.totalorder %s24, 1
      %p245 = scmp.ne.s32.totalorder %s240, %s242
      %p246 = scmp.eq.s32.totalorder %s24, 0
      %p247 = por %p245, %p246
      %p248 = scmp.ne.s32.totalorder %s240, %s242
      %p249 = scmp.eq.s32.totalorder %s29, 1
      %p250 = por %p248, %p249
      %p251 = scmp.ne.s32.totalorder %s242, %s243
      %p252 = scmp.eq.s32.totalorder %s29, 0
      %p253 = por %p251, %p252
      %p254 = scmp.ne.s32.totalorder %s242, %s243
      %p255 = scmp.eq.s32.totalorder %s30, 1
      %p256 = por %p254, %p255
      %p258 = scmp.ne.s32.totalorder %s243, %s257
      %p259 = scmp.eq.s32.totalorder %s30, 0
      %p260 = por %p258, %p259
      %s262 = sadd.s32 %s261, 1
      %p265 = scmp.eq.s32.totalorder %s24, 1
      %p266 = scmp.ne.s32.totalorder %s261, %s263
      %p267 = scmp.eq.s32.totalorder %s24, 0
      %p268 = por %p266, %p267
      %p269 = scmp.ne.s32.totalorder %s261, %s263
      %p270 = scmp.eq.s32.totalorder %s29, 1
      %p271 = por %p269, %p270
      %p272 = scmp.ne.s32.totalorder %s263, %s264
      %p273 = scmp.eq.s32.totalorder %s29, 0
      %p274 = por %p272, %p273
      %p275 = scmp.ne.s32.totalorder %s263, %s264
      %p276 = scmp.eq.s32.totalorder %s30, 1
      %p277 = por %p275, %p276
      %p279 = scmp.ne.s32.totalorder %s264, %s278
      %p280 = scmp.eq.s32.totalorder %s30, 0
      %p281 = por %p279, %p280
      %s283 = sadd.s32 %s282, 1
      %p286 = scmp.eq.s32.totalorder %s24, 1
      %p287 = scmp.ne.s32.totalorder %s282, %s284
      %p288 = scmp.eq.s32.totalorder %s24, 0
      %p289 = por %p287, %p288
      %p290 = scmp.ne.s32.totalorder %s282, %s284
      %p291 = scmp.eq.s32.totalorder %s29, 1
      %p292 = por %p290, %p291
      %p293 = scmp.ne.s32.totalorder %s284, %s285
      %p294 = scmp.eq.s32.totalorder %s29, 0
      %p295 = por %p293, %p294
      %p296 = scmp.ne.s32.totalorder %s284, %s285
      %p297 = scmp.eq.s32.totalorder %s30, 1
      %p298 = por %p296, %p297
      %p300 = scmp.ne.s32.totalorder %s285, %s299
      %p301 = scmp.eq.s32.totalorder %s30, 0
      %p302 = por %p300, %p301
      %s304 = sadd.s32 %s303, 1
      %p307 = scmp.eq.s32.totalorder %s24, 1
      %p308 = scmp.ne.s32.totalorder %s303, %s305
      %p309 = scmp.eq.s32.totalorder %s24, 0
      %p310 = por %p308, %p309
      %p311 = scmp.ne.s32.totalorder %s303, %s305
      %p312 = scmp.eq.s32.totalorder %s29, 1
      %p313 = por %p311, %p312
      %p314 = scmp.ne.s32.totalorder %s305, %s306
      %p315 = scmp.eq.s32.totalorder %s29, 0
      %p316 = por %p314, %p315
      %p317 = scmp.ne.s32.totalorder %s305, %s306
      %p318 = scmp.eq.s32.totalorder %s30, 1
      %p319 = por %p317, %p318
      %p321 = scmp.ne.s32.totalorder %s306, %s320
      %p322 = scmp.eq.s32.totalorder %s30, 0
      %p323 = por %p321, %p322
      %s324 = ssub.s32 %s31, %s43
      %p325 = scmp.eq.s32.totalorder %s324, 0
      %s327 = sadd.s32 %s326, 1
      %s328 = scalar_select %p325, %s326, %s327
      %p331 = pneg %p325
      %p332 = scmp.eq.s32.totalorder %s24, 1
      %p333 = por %p331, %p332
      %p334 = scmp.ne.s32.totalorder %s326, %s329
      %p335 = scmp.eq.s32.totalorder %s24, 0
      %p336 = por %p334, %p335
      %p337 = scmp.ne.s32.totalorder %s326, %s329
      %p338 = scmp.eq.s32.totalorder %s29, 1
      %p339 = por %p337, %p338
      %p340 = scmp.ne.s32.totalorder %s329, %s330
      %p341 = scmp.eq.s32.totalorder %s29, 0
      %p342 = por %p340, %p341
      %p343 = scmp.ne.s32.totalorder %s329, %s330
      %p344 = scmp.eq.s32.totalorder %s30, 1
      %p345 = por %p343, %p344
      %p347 = scmp.ne.s32.totalorder %s330, %s346
      %p348 = scmp.eq.s32.totalorder %s30, 0
      %p349 = por %p347, %p348
      %p350 = scmp.le.s32.totalorder 1, %s24
      %p351 = scmp.lt.s32.totalorder %s24, 3
      %p352 = pnand %p350, %p351
      %p353 = pneg %p352
      // Predicated region
      $region9: #{tpu_custom_call.1} parent=5 // pred_check
        _
      $region10: #{tpu_custom_call.1} parent=5 // pred_check_branch
        %355 = sbr.rel (%p352) target = $region12
      $region11: #{tpu_custom_call.1} parent=5 // pred_region
        %s356 = ssub.s32 %s24, 1
        // Predicated region
        $region13: #{tpu_custom_call.1} parent=11 // pred_check
          %p357 = pneg %p85
        $region14: #{tpu_custom_call.1} parent=11 // pred_check_branch
          %359 = sbr.rel (%p357) target = $region16
        $region15: #{tpu_custom_call.1} parent=11 // pred_region
          _
        $region16: #{tpu_custom_call.1} parent=11 // pred_fallthru
          _
        // Predicated region
        $region17: #{tpu_custom_call.1} parent=11 // pred_check
          %p360 = pneg %p106
        $region18: #{tpu_custom_call.1} parent=11 // pred_check_branch
          %362 = sbr.rel (%p360) target = $region20
        $region19: #{tpu_custom_call.1} parent=11 // pred_region
          _
        $region20: #{tpu_custom_call.1} parent=11 // pred_fallthru
          _
        // Predicated region
        $region21: #{tpu_custom_call.1} parent=11 // pred_check
          %p363 = pneg %p127
        $region22: #{tpu_custom_call.1} parent=11 // pred_check_branch
          %365 = sbr.rel (%p363) target = $region24
        $region23: #{tpu_custom_call.1} parent=11 // pred_region
          _
        $region24: #{tpu_custom_call.1} parent=11 // pred_fallthru
          _
        // Predicated region
        $region25: #{tpu_custom_call.1} parent=11 // pred_check
          %p366 = pneg %p148
        $region26: #{tpu_custom_call.1} parent=11 // pred_check_branch
          %368 = sbr.rel (%p366) target = $region28
        $region27: #{tpu_custom_call.1} parent=11 // pred_region
          _
        $region28: #{tpu_custom_call.1} parent=11 // pred_fallthru
          _
        // Predicated region
        $region29: #{tpu_custom_call.1} parent=11 // pred_check
          %p369 = pneg %p169
        $region30: #{tpu_custom_call.1} parent=11 // pred_check_branch
          %371 = sbr.rel (%p369) target = $region32
        $region31: #{tpu_custom_call.1} parent=11 // pred_region
          _
        $region32: #{tpu_custom_call.1} parent=11 // pred_fallthru
          _
        // Predicated region
        $region33: #{tpu_custom_call.1} parent=11 // pred_check
          %p372 = pneg %p190
        $region34: #{tpu_custom_call.1} parent=11 // pred_check_branch
          %374 = sbr.rel (%p372) target = $region36
        $region35: #{tpu_custom_call.1} parent=11 // pred_region
          _
        $region36: #{tpu_custom_call.1} parent=11 // pred_fallthru
          _
        // Predicated region
        $region37: #{tpu_custom_call.1} parent=11 // pred_check
          %p375 = pneg %p211
        $region38: #{tpu_custom_call.1} parent=11 // pred_check_branch
          %377 = sbr.rel (%p375) target = $region40
        $region39: #{tpu_custom_call.1} parent=11 // pred_region
          %s379 = ssub.s32 32768, 32768
          %380 = vsyncadd [#allocation4], %s379
          %s381 = sshll.u32 [#allocation3], 4
          %s382 = int_to_ptr.vmem [resolvable:$true] %s381
          %387 = dma.hbm_to_vmem [thread:$0]  %s7, 32768, %s382, [#allocation4], 256, 256, 16
        $region40: #{tpu_custom_call.1} parent=11 // pred_fallthru
          _
        // Predicated region
        $region41: #{tpu_custom_call.1} parent=11 // pred_check
          %p388 = pneg %p232
        $region42: #{tpu_custom_call.1} parent=11 // pred_check_branch
          %390 = sbr.rel (%p388) target = $region44
        $region43: #{tpu_custom_call.1} parent=11 // pred_region
          _
        $region44: #{tpu_custom_call.1} parent=11 // pred_fallthru
          _
        // Predicated region
        $region45: #{tpu_custom_call.1} parent=11 // pred_check
          %p391 = pneg %p253
        $region46: #{tpu_custom_call.1} parent=11 // pred_check_branch
          %393 = sbr.rel (%p391) target = $region48
        $region47: #{tpu_custom_call.1} parent=11 // pred_region
          %s395 = ssub.s32 8192, 8192
          %396 = vsyncadd [#allocation7], %s395
          %s397 = sshll.u32 [#allocation6], 4
          %s398 = int_to_ptr.vmem [resolvable:$true] %s397
          %403 = dma.hbm_to_vmem [thread:$0]  %s9, 8192, %s398, [#allocation7], 128, 128, 8
        $region48: #{tpu_custom_call.1} parent=11 // pred_fallthru
          _
        // Predicated region
        $region49: #{tpu_custom_call.1} parent=11 // pred_check
          %p404 = pneg %p274
        $region50: #{tpu_custom_call.1} parent=11 // pred_check_branch
          %406 = sbr.rel (%p404) target = $region52
        $region51: #{tpu_custom_call.1} parent=11 // pred_region
          _
        $region52: #{tpu_custom_call.1} parent=11 // pred_fallthru
          _
        // Predicated region
        $region53: #{tpu_custom_call.1} parent=11 // pred_check
          %p407 = pneg %p295
        $region54: #{tpu_custom_call.1} parent=11 // pred_check_branch
          %409 = sbr.rel (%p407) target = $region56
        $region55: #{tpu_custom_call.1} parent=11 // pred_region
          _
        $region56: #{tpu_custom_call.1} parent=11 // pred_fallthru
          _
        // Predicated region
        $region57: #{tpu_custom_call.1} parent=11 // pred_check
          %p410 = pneg %p316
        $region58: #{tpu_custom_call.1} parent=11 // pred_check_branch
          %412 = sbr.rel (%p410) target = $region60
        $region59: #{tpu_custom_call.1} parent=11 // pred_region
          _
        $region60: #{tpu_custom_call.1} parent=11 // pred_fallthru
          _
      $region12: #{tpu_custom_call.1} parent=5 // pred_fallthru
        _
      %p413 = scmp.lt.s32.totalorder %s24, 2
      // Predicated region
      $region61: #{tpu_custom_call.1} parent=5 // pred_check
        %p414 = pneg %p413
      $region62: #{tpu_custom_call.1} parent=5 // pred_check_branch
        %416 = sbr.rel (%p414) target = $region64
      $region63: #{tpu_custom_call.1} parent=5 // pred_region
        // Predicated region
        $region65: #{tpu_custom_call.1} parent=63 // pred_check
          %p417 = pneg %p58
        $region66: #{tpu_custom_call.1} parent=63 // pred_check_branch
          %419 = sbr.rel (%p417) target = $region68
        $region67: #{tpu_custom_call.1} parent=63 // pred_region
          %s420 = smul.u32 32, %s32
          %p421 = scmp.lt.s32.totalorder %s31, 1
          %s422 = scalar_select %p421, %s31, 1
          %p423 = scmp.lt.s32.totalorder %s420, 31
          %s424 = scalar_select %p423, %s420, 31
          %s425 = smul.addr %s422, 32
          %s426 = sadd.s32 %s424, %s425
          %s427 = smul.addr %s426, 8
          %s428 = scalar_lea.vmem %s0, %s427
          %s429 = smul.u32 32, %s32
        $region68: #{tpu_custom_call.1} parent=63 // pred_fallthru
          _
      $region64: #{tpu_custom_call.1} parent=5 // pred_fallthru
        _
      %p430 = scmp.le.s32.totalorder 1, %s24
      %p431 = scmp.lt.s32.totalorder %s24, 3
      %p432 = pnand %p430, %p431
      %p433 = pneg %p432
      // Predicated region
      $region69: #{tpu_custom_call.1} parent=5 // pred_check
        _
      $region70: #{tpu_custom_call.1} parent=5 // pred_check_branch
        %435 = sbr.rel (%p432) target = $region72
      $region71: #{tpu_custom_call.1} parent=5 // pred_region
        %s436 = ssub.s32 %s24, 1
        // Predicated region
        $region73: #{tpu_custom_call.1} parent=71 // pred_check
          %p437 = pneg %p211
        $region74: #{tpu_custom_call.1} parent=71 // pred_check_branch
          %439 = sbr.rel (%p437) target = $region76
        $region75: #{tpu_custom_call.1} parent=71 // pred_region
          %440 = dma.done [#allocation4], 32768
        $region76: #{tpu_custom_call.1} parent=71 // pred_fallthru
          _
        // Predicated region
        $region77: #{tpu_custom_call.1} parent=71 // pred_check
          %p441 = pneg %p253
        $region78: #{tpu_custom_call.1} parent=71 // pred_check_branch
          %443 = sbr.rel (%p441) target = $region80
        $region79: #{tpu_custom_call.1} parent=71 // pred_region
          %444 = dma.done [#allocation7], 8192
        $region80: #{tpu_custom_call.1} parent=71 // pred_fallthru
          _
        %s445 = smul.u32 32, %s34
        %p446 = scmp.lt.s32.totalorder %s33, 1
        %s447 = scalar_select %p446, %s33, 1
        %p448 = scmp.lt.s32.totalorder %s445, 31
        %s449 = scalar_select %p448, %s445, 31
        %s450 = smul.addr %s447, 32
        %s451 = sadd.s32 %s449, %s450
        %s452 = smul.addr %s451, 8
        %s453 = scalar_lea.vmem %s0, %s452
        %p454 = pneg %p64
        %p455 = pneg %p61
        %p456 = pneg %p85
        %p457 = pneg %p82
        %p458 = pneg %p106
        %p459 = pneg %p103
        %p460 = pneg %p127
        %p461 = pneg %p124
        %p462 = pneg %p148
        %p463 = pneg %p145
        %p464 = pneg %p169
        %p465 = pneg %p166
        %p466 = pneg %p190
        %p467 = pneg %p187
        %p468 = pneg %p211
        %p469 = pneg %p208
        %p470 = pneg %p232
        %p471 = pneg %p229
        %p472 = pneg %p253
        %p473 = pneg %p250
        %p474 = pneg %p274
        %p475 = pneg %p271
        %p476 = pneg %p295
        %p477 = pneg %p292
        %p478 = pneg %p316
        %p479 = pneg %p313
        %p480 = pneg %p342
        %p481 = pneg %p339
        %s482 = sand.u32 %s329, 1
        %s483 = scalar_lea.sflag [#allocation5], %s482
        %s484 = sand.u32 %s329, 1
        %s485 = scalar_lea.vmem [#allocation8], %s484
        %s486 = smul.u32 32, %s34
        %p487 = scmp.lt.s32.totalorder %s33, 1
        %s488 = scalar_select %p487, %s33, 1
        %p489 = scmp.lt.s32.totalorder %s486, 31
        %s490 = scalar_select %p489, %s486, 31
        %s491 = smul.addr %s488, 32
        %s492 = sadd.s32 %s490, %s491
        %s493 = smul.addr %s492, 8
        %s494 = scalar_lea.vmem %s0, %s493
        %s495 = smul.u32 32, %s34
        %v497 = vld [vmem:[%s494] sm:$0xff]
        %v498 = vld [vmem:[%s494 + $0x8] sm:$0xff]
        %v499 = vld [vmem:[%s494 + $0x10] sm:$0xff]
        %v500 = vld [vmem:[%s494 + $0x18] sm:$0xff]
        %v501 = vld [vmem:[%s494 + $0x20] sm:$0xff]
        %v502 = vld [vmem:[%s494 + $0x28] sm:$0xff]
        %v503 = vld [vmem:[%s494 + $0x30] sm:$0xff]
        %v504 = vld [vmem:[%s494 + $0x38] sm:$0xff]
        %v505 = vld [vmem:[%s494 + $0x40] sm:$0xff]
        %v506 = vld [vmem:[%s494 + $0x48] sm:$0xff]
        %v507 = vld [vmem:[%s494 + $0x50] sm:$0xff]
        %v508 = vld [vmem:[%s494 + $0x58] sm:$0xff]
        %v509 = vld [vmem:[%s494 + $0x60] sm:$0xff]
        %v510 = vld [vmem:[%s494 + $0x68] sm:$0xff]
        %v511 = vld [vmem:[%s494 + $0x70] sm:$0xff]
        %v512 = vld [vmem:[%s494 + $0x78] sm:$0xff]
        %v513 = vld [vmem:[%s494 + $0x80] sm:$0xff]
        %v514 = vld [vmem:[%s494 + $0x88] sm:$0xff]
        %v515 = vld [vmem:[%s494 + $0x90] sm:$0xff]
        %v516 = vld [vmem:[%s494 + $0x98] sm:$0xff]
        %v517 = vld [vmem:[%s494 + $0xa0] sm:$0xff]
        %v518 = vld [vmem:[%s494 + $0xa8] sm:$0xff]
        %v519 = vld [vmem:[%s494 + $0xb0] sm:$0xff]
        %v520 = vld [vmem:[%s494 + $0xb8] sm:$0xff]
        %v521 = vld [vmem:[%s494 + $0xc0] sm:$0xff]
        %v522 = vld [vmem:[%s494 + $0xc8] sm:$0xff]
        %v523 = vld [vmem:[%s494 + $0xd0] sm:$0xff]
        %v524 = vld [vmem:[%s494 + $0xd8] sm:$0xff]
        %v525 = vld [vmem:[%s494 + $0xe0] sm:$0xff]
        %v526 = vld [vmem:[%s494 + $0xe8] sm:$0xff]
        %v527 = vld [vmem:[%s494 + $0xf0] sm:$0xff]
        %v528 = vld [vmem:[%s494 + $0xf8] sm:$0xff]
        %v529 = vld [vmem:[%s1] sm:$0x3]
        %v530 = vld [vmem:[%s2] sm:$0x1]
        %532 = vset.pattern.permute.xlu0 0
        %533 = vperm.xlu0 %532, %v497
        %v534 = vpop.permute.xlu0 %533
        %537 = vset.pattern.permute.xlu0 0
        %538 = vperm.xlu0 %537, %v498
        %v539 = vpop.permute.xlu0 %538
        %542 = vset.pattern.permute.xlu0 0
        %543 = vperm.xlu0 %542, %v499
        %v544 = vpop.permute.xlu0 %543
        %547 = vset.pattern.permute.xlu0 0
        %548 = vperm.xlu0 %547, %v500
        %v549 = vpop.permute.xlu0 %548
        %552 = vset.pattern.permute.xlu0 0
        %553 = vperm.xlu0 %552, %v501
        %v554 = vpop.permute.xlu0 %553
        %557 = vset.pattern.permute.xlu0 0
        %558 = vperm.xlu0 %557, %v502
        %v559 = vpop.permute.xlu0 %558
        %562 = vset.pattern.permute.xlu0 0
        %563 = vperm.xlu0 %562, %v503
        %v564 = vpop.permute.xlu0 %563
        %567 = vset.pattern.permute.xlu0 0
        %568 = vperm.xlu0 %567, %v504
        %v569 = vpop.permute.xlu0 %568
        %572 = vset.pattern.permute.xlu0 0
        %573 = vperm.xlu0 %572, %v505
        %v574 = vpop.permute.xlu0 %573
        %577 = vset.pattern.permute.xlu0 0
        %578 = vperm.xlu0 %577, %v506
        %v579 = vpop.permute.xlu0 %578
        %582 = vset.pattern.permute.xlu0 0
        %583 = vperm.xlu0 %582, %v507
        %v584 = vpop.permute.xlu0 %583
        %587 = vset.pattern.permute.xlu0 0
        %588 = vperm.xlu0 %587, %v508
        %v589 = vpop.permute.xlu0 %588
        %592 = vset.pattern.permute.xlu0 0
        %593 = vperm.xlu0 %592, %v509
        %v594 = vpop.permute.xlu0 %593
        %597 = vset.pattern.permute.xlu0 0
        %598 = vperm.xlu0 %597, %v510
        %v599 = vpop.permute.xlu0 %598
        %602 = vset.pattern.permute.xlu0 0
        %603 = vperm.xlu0 %602, %v511
        %v604 = vpop.permute.xlu0 %603
        %607 = vset.pattern.permute.xlu0 0
        %608 = vperm.xlu0 %607, %v512
        %v609 = vpop.permute.xlu0 %608
        %612 = vset.pattern.permute.xlu0 0
        %613 = vperm.xlu0 %612, %v513
        %v614 = vpop.permute.xlu0 %613
        %617 = vset.pattern.permute.xlu0 0
        %618 = vperm.xlu0 %617, %v514
        %v619 = vpop.permute.xlu0 %618
        %622 = vset.pattern.permute.xlu0 0
        %623 = vperm.xlu0 %622, %v515
        %v624 = vpop.permute.xlu0 %623
        %627 = vset.pattern.permute.xlu0 0
        %628 = vperm.xlu0 %627, %v516
        %v629 = vpop.permute.xlu0 %628
        %632 = vset.pattern.permute.xlu0 0
        %633 = vperm.xlu0 %632, %v517
        %v634 = vpop.permute.xlu0 %633
        %637 = vset.pattern.permute.xlu0 0
        %638 = vperm.xlu0 %637, %v518
        %v639 = vpop.permute.xlu0 %638
        %642 = vset.pattern.permute.xlu0 0
        %643 = vperm.xlu0 %642, %v519
        %v644 = vpop.permute.xlu0 %643
        %647 = vset.pattern.permute.xlu0 0
        %648 = vperm.xlu0 %647, %v520
        %v649 = vpop.permute.xlu0 %648
        %652 = vset.pattern.permute.xlu0 0
        %653 = vperm.xlu0 %652, %v521
        %v654 = vpop.permute.xlu0 %653
        %657 = vset.pattern.permute.xlu0 0
        %658 = vperm.xlu0 %657, %v522
        %v659 = vpop.permute.xlu0 %658
        %662 = vset.pattern.permute.xlu0 0
        %663 = vperm.xlu0 %662, %v523
        %v664 = vpop.permute.xlu0 %663
        %667 = vset.pattern.permute.xlu0 0
        %668 = vperm.xlu0 %667, %v524
        %v669 = vpop.permute.xlu0 %668
        %672 = vset.pattern.permute.xlu0 0
        %673 = vperm.xlu0 %672, %v525
        %v674 = vpop.permute.xlu0 %673
        %677 = vset.pattern.permute.xlu0 0
        %678 = vperm.xlu0 %677, %v526
        %v679 = vpop.permute.xlu0 %678
        %682 = vset.pattern.permute.xlu0 0
        %683 = vperm.xlu0 %682, %v527
        %v684 = vpop.permute.xlu0 %683
        %687 = vset.pattern.permute.xlu0 0
        %688 = vperm.xlu0 %687, %v528
        %v689 = vpop.permute.xlu0 %688
        %v691 = vlaneseq
        %v692 = vshrl.u32 %v691, 7
        %v693 = vsub.s32 0, %v692
        %v694 = vrot.slane %v529, %v693
        %v695 = vmul.f32 %v534, %v694
        %v696 = vmul.f32 %v539, %v694
        %v697 = vmul.f32 %v544, %v694
        %v698 = vmul.f32 %v549, %v694
        %v699 = vmul.f32 %v554, %v694
        %v700 = vmul.f32 %v559, %v694
        %v701 = vmul.f32 %v564, %v694
        %v702 = vmul.f32 %v569, %v694
        %v703 = vmul.f32 %v574, %v694
        %v704 = vmul.f32 %v579, %v694
        %v705 = vmul.f32 %v584, %v694
        %v706 = vmul.f32 %v589, %v694
        %v707 = vmul.f32 %v594, %v694
        %v708 = vmul.f32 %v599, %v694
        %v709 = vmul.f32 %v604, %v694
        %v710 = vmul.f32 %v609, %v694
        %v711 = vmul.f32 %v614, %v694
        %v712 = vmul.f32 %v619, %v694
        %v713 = vmul.f32 %v624, %v694
        %v714 = vmul.f32 %v629, %v694
        %v715 = vmul.f32 %v634, %v694
        %v716 = vmul.f32 %v639, %v694
        %v717 = vmul.f32 %v644, %v694
        %v718 = vmul.f32 %v649, %v694
        %v719 = vmul.f32 %v654, %v694
        %v720 = vmul.f32 %v659, %v694
        %v721 = vmul.f32 %v664, %v694
        %v722 = vmul.f32 %v669, %v694
        %v723 = vmul.f32 %v674, %v694
        %v724 = vmul.f32 %v679, %v694
        %v725 = vmul.f32 %v684, %v694
        %v726 = vmul.f32 %v689, %v694
        %v728 = vlaneseq
        %v729 = vshrl.u32 %v728, 7
        %v730 = vsub.s32 0, %v729
        %v731 = vrot.slane %v530, %v730
        %v733 = vadd.f32 %v731, %v695
        %v734 = vadd.f32 %v731, %v696
        %v735 = vadd.f32 %v731, %v697
        %v736 = vadd.f32 %v731, %v698
        %v737 = vadd.f32 %v731, %v699
        %v738 = vadd.f32 %v731, %v700
        %v739 = vadd.f32 %v731, %v701
        %v740 = vadd.f32 %v731, %v702
        %v741 = vadd.f32 %v731, %v703
        %v742 = vadd.f32 %v731, %v704
        %v743 = vadd.f32 %v731, %v705
        %v744 = vadd.f32 %v731, %v706
        %v745 = vadd.f32 %v731, %v707
        %v746 = vadd.f32 %v731, %v708
        %v747 = vadd.f32 %v731, %v709
        %v748 = vadd.f32 %v731, %v710
        %v749 = vadd.f32 %v731, %v711
        %v750 = vadd.f32 %v731, %v712
        %v751 = vadd.f32 %v731, %v713
        %v752 = vadd.f32 %v731, %v714
        %v753 = vadd.f32 %v731, %v715
        %v754 = vadd.f32 %v731, %v716
        %v755 = vadd.f32 %v731, %v717
        %v756 = vadd.f32 %v731, %v718
        %v757 = vadd.f32 %v731, %v719
        %v758 = vadd.f32 %v731, %v720
        %v759 = vadd.f32 %v731, %v721
        %v760 = vadd.f32 %v731, %v722
        %v761 = vadd.f32 %v731, %v723
        %v762 = vadd.f32 %v731, %v724
        %v763 = vadd.f32 %v731, %v725
        %v764 = vadd.f32 %v731, %v726
        %765 = vset.pattern.permute.xlu0 1
        %766 = vperm.xlu0 %765, %v497
        %v767 = vpop.permute.xlu0 %766
        %769 = vset.pattern.permute.xlu0 1
        %770 = vperm.xlu0 %769, %v498
        %v771 = vpop.permute.xlu0 %770
        %773 = vset.pattern.permute.xlu0 1
        %774 = vperm.xlu0 %773, %v499
        %v775 = vpop.permute.xlu0 %774
        %777 = vset.pattern.permute.xlu0 1
        %778 = vperm.xlu0 %777, %v500
        %v779 = vpop.permute.xlu0 %778
        %781 = vset.pattern.permute.xlu0 1
        %782 = vperm.xlu0 %781, %v501
        %v783 = vpop.permute.xlu0 %782
        %785 = vset.pattern.permute.xlu0 1
        %786 = vperm.xlu0 %785, %v502
        %v787 = vpop.permute.xlu0 %786
        %789 = vset.pattern.permute.xlu0 1
        %790 = vperm.xlu0 %789, %v503
        %v791 = vpop.permute.xlu0 %790
        %793 = vset.pattern.permute.xlu0 1
        %794 = vperm.xlu0 %793, %v504
        %v795 = vpop.permute.xlu0 %794
        %797 = vset.pattern.permute.xlu0 1
        %798 = vperm.xlu0 %797, %v505
        %v799 = vpop.permute.xlu0 %798
        %801 = vset.pattern.permute.xlu0 1
        %802 = vperm.xlu0 %801, %v506
        %v803 = vpop.permute.xlu0 %802
        %805 = vset.pattern.permute.xlu0 1
        %806 = vperm.xlu0 %805, %v507
        %v807 = vpop.permute.xlu0 %806
        %809 = vset.pattern.permute.xlu0 1
        %810 = vperm.xlu0 %809, %v508
        %v811 = vpop.permute.xlu0 %810
        %813 = vset.pattern.permute.xlu0 1
        %814 = vperm.xlu0 %813, %v509
        %v815 = vpop.permute.xlu0 %814
        %817 = vset.pattern.permute.xlu0 1
        %818 = vperm.xlu0 %817, %v510
        %v819 = vpop.permute.xlu0 %818
        %821 = vset.pattern.permute.xlu0 1
        %822 = vperm.xlu0 %821, %v511
        %v823 = vpop.permute.xlu0 %822
        %825 = vset.pattern.permute.xlu0 1
        %826 = vperm.xlu0 %825, %v512
        %v827 = vpop.permute.xlu0 %826
        %829 = vset.pattern.permute.xlu0 1
        %830 = vperm.xlu0 %829, %v513
        %v831 = vpop.permute.xlu0 %830
        %833 = vset.pattern.permute.xlu0 1
        %834 = vperm.xlu0 %833, %v514
        %v835 = vpop.permute.xlu0 %834
        %837 = vset.pattern.permute.xlu0 1
        %838 = vperm.xlu0 %837, %v515
        %v839 = vpop.permute.xlu0 %838
        %841 = vset.pattern.permute.xlu0 1
        %842 = vperm.xlu0 %841, %v516
        %v843 = vpop.permute.xlu0 %842
        %845 = vset.pattern.permute.xlu0 1
        %846 = vperm.xlu0 %845, %v517
        %v847 = vpop.permute.xlu0 %846
        %849 = vset.pattern.permute.xlu0 1
        %850 = vperm.xlu0 %849, %v518
        %v851 = vpop.permute.xlu0 %850
        %853 = vset.pattern.permute.xlu0 1
        %854 = vperm.xlu0 %853, %v519
        %v855 = vpop.permute.xlu0 %854
        %857 = vset.pattern.permute.xlu0 1
        %858 = vperm.xlu0 %857, %v520
        %v859 = vpop.permute.xlu0 %858
        %861 = vset.pattern.permute.xlu0 1
        %862 = vperm.xlu0 %861, %v521
        %v863 = vpop.permute.xlu0 %862
        %865 = vset.pattern.permute.xlu0 1
        %866 = vperm.xlu0 %865, %v522
        %v867 = vpop.permute.xlu0 %866
        %869 = vset.pattern.permute.xlu0 1
        %870 = vperm.xlu0 %869, %v523
        %v871 = vpop.permute.xlu0 %870
        %873 = vset.pattern.permute.xlu0 1
        %874 = vperm.xlu0 %873, %v524
        %v875 = vpop.permute.xlu0 %874
        %877 = vset.pattern.permute.xlu0 1
        %878 = vperm.xlu0 %877, %v525
        %v879 = vpop.permute.xlu0 %878
        %881 = vset.pattern.permute.xlu0 1
        %882 = vperm.xlu0 %881, %v526
        %v883 = vpop.permute.xlu0 %882
        %885 = vset.pattern.permute.xlu0 1
        %886 = vperm.xlu0 %885, %v527
        %v887 = vpop.permute.xlu0 %886
        %889 = vset.pattern.permute.xlu0 1
        %890 = vperm.xlu0 %889, %v528
        %v891 = vpop.permute.xlu0 %890
        %v893 = vlaneseq
        %v894 = vshrl.u32 %v893, 7
        %v895 = vsub.s32 1, %v894
        %v896 = vrot.slane %v529, %v895
        %v897 = vmul.f32 %v767, %v896
        %v898 = vmul.f32 %v771, %v896
        %v899 = vmul.f32 %v775, %v896
        %v900 = vmul.f32 %v779, %v896
        %v901 = vmul.f32 %v783, %v896
        %v902 = vmul.f32 %v787, %v896
        %v903 = vmul.f32 %v791, %v896
        %v904 = vmul.f32 %v795, %v896
        %v905 = vmul.f32 %v799, %v896
        %v906 = vmul.f32 %v803, %v896
        %v907 = vmul.f32 %v807, %v896
        %v908 = vmul.f32 %v811, %v896
        %v909 = vmul.f32 %v815, %v896
        %v910 = vmul.f32 %v819, %v896
        %v911 = vmul.f32 %v823, %v896
        %v912 = vmul.f32 %v827, %v896
        %v913 = vmul.f32 %v831, %v896
        %v914 = vmul.f32 %v835, %v896
        %v915 = vmul.f32 %v839, %v896
        %v916 = vmul.f32 %v843, %v896
        %v917 = vmul.f32 %v847, %v896
        %v918 = vmul.f32 %v851, %v896
        %v919 = vmul.f32 %v855, %v896
        %v920 = vmul.f32 %v859, %v896
        %v921 = vmul.f32 %v863, %v896
        %v922 = vmul.f32 %v867, %v896
        %v923 = vmul.f32 %v871, %v896
        %v924 = vmul.f32 %v875, %v896
        %v925 = vmul.f32 %v879, %v896
        %v926 = vmul.f32 %v883, %v896
        %v927 = vmul.f32 %v887, %v896
        %v928 = vmul.f32 %v891, %v896
        %v929 = vadd.f32 %v733, %v897
        %v930 = vadd.f32 %v734, %v898
        %v931 = vadd.f32 %v735, %v899
        %v932 = vadd.f32 %v736, %v900
        %v933 = vadd.f32 %v737, %v901
        %v934 = vadd.f32 %v738, %v902
        %v935 = vadd.f32 %v739, %v903
        %v936 = vadd.f32 %v740, %v904
        %v937 = vadd.f32 %v741, %v905
        %v938 = vadd.f32 %v742, %v906
        %v939 = vadd.f32 %v743, %v907
        %v940 = vadd.f32 %v744, %v908
        %v941 = vadd.f32 %v745, %v909
        %v942 = vadd.f32 %v746, %v910
        %v943 = vadd.f32 %v747, %v911
        %v944 = vadd.f32 %v748, %v912
        %v945 = vadd.f32 %v749, %v913
        %v946 = vadd.f32 %v750, %v914
        %v947 = vadd.f32 %v751, %v915
        %v948 = vadd.f32 %v752, %v916
        %v949 = vadd.f32 %v753, %v917
        %v950 = vadd.f32 %v754, %v918
        %v951 = vadd.f32 %v755, %v919
        %v952 = vadd.f32 %v756, %v920
        %v953 = vadd.f32 %v757, %v921
        %v954 = vadd.f32 %v758, %v922
        %v955 = vadd.f32 %v759, %v923
        %v956 = vadd.f32 %v760, %v924
        %v957 = vadd.f32 %v761, %v925
        %v958 = vadd.f32 %v762, %v926
        %v959 = vadd.f32 %v763, %v927
        %v960 = vadd.f32 %v764, %v928
        %v961 = vmax.f32 %v929, 0.0
        %v962 = vmax.f32 %v930, 0.0
        %v963 = vmax.f32 %v931, 0.0
        %v964 = vmax.f32 %v932, 0.0
        %v965 = vmax.f32 %v933, 0.0
        %v966 = vmax.f32 %v934, 0.0
        %v967 = vmax.f32 %v935, 0.0
        %v968 = vmax.f32 %v936, 0.0
        %v969 = vmax.f32 %v937, 0.0
        %v970 = vmax.f32 %v938, 0.0
        %v971 = vmax.f32 %v939, 0.0
        %v972 = vmax.f32 %v940, 0.0
        %v973 = vmax.f32 %v941, 0.0
        %v974 = vmax.f32 %v942, 0.0
        %v975 = vmax.f32 %v943, 0.0
        %v976 = vmax.f32 %v944, 0.0
        %v977 = vmax.f32 %v945, 0.0
        %v978 = vmax.f32 %v946, 0.0
        %v979 = vmax.f32 %v947, 0.0
        %v980 = vmax.f32 %v948, 0.0
        %v981 = vmax.f32 %v949, 0.0
        %v982 = vmax.f32 %v950, 0.0
        %v983 = vmax.f32 %v951, 0.0
        %v984 = vmax.f32 %v952, 0.0
        %v985 = vmax.f32 %v953, 0.0
        %v986 = vmax.f32 %v954, 0.0
        %v987 = vmax.f32 %v955, 0.0
        %v988 = vmax.f32 %v956, 0.0
        %v989 = vmax.f32 %v957, 0.0
        %v990 = vmax.f32 %v958, 0.0
        %v991 = vmax.f32 %v959, 0.0
        %v992 = vmax.f32 %v960, 0.0
        %v993 = vpack.c.bf16 %v962, %v961
        %v994 = vpack.c.bf16 %v964, %v963
        %v995 = vpack.c.bf16 %v966, %v965
        %v996 = vpack.c.bf16 %v968, %v967
        %v997 = vpack.c.bf16 %v970, %v969
        %v998 = vpack.c.bf16 %v972, %v971
        %v999 = vpack.c.bf16 %v974, %v973
        %v1000 = vpack.c.bf16 %v976, %v975
        %v1001 = vpack.c.bf16 %v978, %v977
        %v1002 = vpack.c.bf16 %v980, %v979
        %v1003 = vpack.c.bf16 %v982, %v981
        %v1004 = vpack.c.bf16 %v984, %v983
        %v1005 = vpack.c.bf16 %v986, %v985
        %v1006 = vpack.c.bf16 %v988, %v987
        %v1007 = vpack.c.bf16 %v990, %v989
        %v1008 = vpack.c.bf16 %v992, %v991
        %v1009 = vld [vmem:[%s3] sm:$0xf]
        %v1010 = vld [vmem:[%s3 + $0x4] sm:$0xf]
        %v1011 = vld [vmem:[%s3 + $0x8] sm:$0xf]
        %v1012 = vld [vmem:[%s3 + $0xc] sm:$0xf]
        %v1013 = vld [vmem:[%s3 + $0x10] sm:$0xf]
        %v1014 = vld [vmem:[%s3 + $0x14] sm:$0xf]
        %v1015 = vld [vmem:[%s3 + $0x18] sm:$0xf]
        %v1016 = vld [vmem:[%s3 + $0x1c] sm:$0xf]
        %v1017 = vld [vmem:[%s4] sm:$0x1]
        %v1019 = vlaneseq
        %v1020 = vshrl.u32 %v1019, 7
        %v1021 = vsub.s32 0, %v1020
        %v1022 = vrot.slane %v1017, %v1021
        %v1032 = vunpack.c.l.b16 %v1009
        %v1033 = vunpack.c.l.b16 %v1010
        %v1034 = vunpack.c.l.b16 %v1011
        %v1035 = vunpack.c.l.b16 %v1012
        %v1036 = vunpack.c.l.b16 %v1013
        %v1037 = vunpack.c.l.b16 %v1014
        %v1038 = vunpack.c.l.b16 %v1015
        %v1039 = vunpack.c.l.b16 %v1016
        %v1040 = vpack.c.b16 %v1033, %v1032
        %v1041 = vpack.c.b16 %v1035, %v1034
        %v1042 = vpack.c.b16 %v1037, %v1036
        %v1043 = vpack.c.b16 %v1039, %v1038
        %vm1048 = vcmask 523264
        %v1050 = vsel %vm1048, %v993, 0
        %v1053 = vsel %vm1048, %v994, 0
        %v1056 = vsel %vm1048, %v995, 0
        %v1059 = vsel %vm1048, %v996, 0
        %v1062 = vsel %vm1048, %v997, 0
        %v1065 = vsel %vm1048, %v998, 0
        %v1068 = vsel %vm1048, %v999, 0
        %v1071 = vsel %vm1048, %v1000, 0
        %v1074 = vsel %vm1048, %v1001, 0
        %v1077 = vsel %vm1048, %v1002, 0
        %v1080 = vsel %vm1048, %v1003, 0
        %v1083 = vsel %vm1048, %v1004, 0
        %v1086 = vsel %vm1048, %v1005, 0
        %v1089 = vsel %vm1048, %v1006, 0
        %v1092 = vsel %vm1048, %v1007, 0
        %v1095 = vsel %vm1048, %v1008, 0
        %1097 = vmatprep.subr.bf16.mxu0 0
        %1098 = vmatpush1.bf16.msra.mxu0 %v1040
        %1099 = vmatprep.subr.bf16.mxu0 0
        %1100 = vmatpush1.bf16.msra.mxu0 %v1041
        %1101 = vmatprep.subr.bf16.mxu0 0
        %1102 = vmatpush1.bf16.msra.mxu0 %v1042
        %1103 = vmatprep.subr.bf16.mxu0 0
        %1104 = vmatpush1.bf16.msra.mxu0 %v1043
        %1105 = vmatprep.subr.bf16.mxu0 0
        %1106 = vmatpush1.bf16.msra.mxu0 0
        %1107 = vmatprep.subr.bf16.mxu0 0
        %1108 = vmatpush1.bf16.msra.mxu0 0
        %1109 = vmatprep.subr.bf16.mxu0 0
        %1110 = vmatpush1.bf16.msra.mxu0 0
        %1111 = vmatprep.subr.bf16.mxu0 0
        %1112 = vmatpush1.bf16.msra.mxu0 0
        %1113 = vmatprep.subr.bf16.mxu0 0
        %1114 = vmatpush1.bf16.msra.mxu0 0
        %1115 = vmatprep.subr.bf16.mxu0 0
        %1116 = vmatpush1.bf16.msra.mxu0 0
        %1117 = vmatprep.subr.bf16.mxu0 0
        %1118 = vmatpush1.bf16.msra.mxu0 0
        %1119 = vmatprep.subr.bf16.mxu0 0
        %1120 = vmatpush1.bf16.msra.mxu0 0
        %1121 = vmatprep.subr.bf16.mxu0 0
        %1122 = vmatpush1.bf16.msra.mxu0 0
        %1123 = vmatprep.subr.bf16.mxu0 0
        %1124 = vmatpush1.bf16.msra.mxu0 0
        %1125 = vmatprep.subr.bf16.mxu0 0
        %1126 = vmatpush1.bf16.msra.mxu0 0
        %1127 = vmatprep.subr.bf16.mxu0 0
        %1128 = vmatpush1.bf16.msra.mxu0 0
        %1129 = vmatprep.mubr.bf16.mxu0 0
        %1130 = vmatmul.mubr.bf16.gmra.mrb[0].mxu0 %v1050
        %v1131 = vpop.f32.mrb[0].mxu0
        %v1132 = vadd.f32 %v1022, %v1131
        %v1133 = vpop.f32.mrb[0].mxu0
        %v1134 = vpop.f32.mrb[0].mxu0
        %v1135 = vadd.f32 %v1022, %v1134
        %v1136 = vpop.f32.mrb[0].mxu0
        %1137 = vmatprep.mubr.bf16.mxu0 0
        %1138 = vmatmul.mubr.bf16.gmra.mrb[0].mxu0 %v1053
        %v1139 = vpop.f32.mrb[0].mxu0
        %v1140 = vadd.f32 %v1022, %v1139
        %v1141 = vpop.f32.mrb[0].mxu0
        %v1142 = vpop.f32.mrb[0].mxu0
        %v1143 = vadd.f32 %v1022, %v1142
        %v1144 = vpop.f32.mrb[0].mxu0
        %1145 = vmatprep.mubr.bf16.mxu0 0
        %1146 = vmatmul.mubr.bf16.gmra.mrb[0].mxu0 %v1056
        %v1147 = vpop.f32.mrb[0].mxu0
        %v1148 = vadd.f32 %v1022, %v1147
        %v1149 = vpop.f32.mrb[0].mxu0
        %v1150 = vpop.f32.mrb[0].mxu0
        %v1151 = vadd.f32 %v1022, %v1150
        %v1152 = vpop.f32.mrb[0].mxu0
        %1153 = vmatprep.mubr.bf16.mxu0 0
        %1154 = vmatmul.mubr.bf16.gmra.mrb[0].mxu0 %v1059
        %v1155 = vpop.f32.mrb[0].mxu0
        %v1156 = vadd.f32 %v1022, %v1155
        %v1157 = vpop.f32.mrb[0].mxu0
        %v1158 = vpop.f32.mrb[0].mxu0
        %v1159 = vadd.f32 %v1022, %v1158
        %v1160 = vpop.f32.mrb[0].mxu0
        %1161 = vmatprep.mubr.bf16.mxu0 0
        %1162 = vmatmul.mubr.bf16.gmra.mrb[0].mxu0 %v1062
        %v1163 = vpop.f32.mrb[0].mxu0
        %v1164 = vadd.f32 %v1022, %v1163
        %v1165 = vpop.f32.mrb[0].mxu0
        %v1166 = vpop.f32.mrb[0].mxu0
        %v1167 = vadd.f32 %v1022, %v1166
        %v1168 = vpop.f32.mrb[0].mxu0
        %1169 = vmatprep.mubr.bf16.mxu0 0
        %1170 = vmatmul.mubr.bf16.gmra.mrb[0].mxu0 %v1065
        %v1171 = vpop.f32.mrb[0].mxu0
        %v1172 = vadd.f32 %v1022, %v1171
        %v1173 = vpop.f32.mrb[0].mxu0
        %v1174 = vpop.f32.mrb[0].mxu0
        %v1175 = vadd.f32 %v1022, %v1174
        %v1176 = vpop.f32.mrb[0].mxu0
        %1177 = vmatprep.mubr.bf16.mxu0 0
        %1178 = vmatmul.mubr.bf16.gmra.mrb[0].mxu0 %v1068
        %v1179 = vpop.f32.mrb[0].mxu0
        %v1180 = vadd.f32 %v1022, %v1179
        %v1181 = vpop.f32.mrb[0].mxu0
        %v1182 = vpop.f32.mrb[0].mxu0
        %v1183 = vadd.f32 %v1022, %v1182
        %v1184 = vpop.f32.mrb[0].mxu0
        %1185 = vmatprep.mubr.bf16.mxu0 0
        %1186 = vmatmul.mubr.bf16.gmra.mrb[0].mxu0 %v1071
        %v1187 = vpop.f32.mrb[0].mxu0
        %v1188 = vadd.f32 %v1022, %v1187
        %v1189 = vpop.f32.mrb[0].mxu0
        %v1190 = vpop.f32.mrb[0].mxu0
        %v1191 = vadd.f32 %v1022, %v1190
        %v1192 = vpop.f32.mrb[0].mxu0
        %1193 = vmatprep.mubr.bf16.mxu0 0
        %1194 = vmatmul.mubr.bf16.gmra.mrb[0].mxu0 %v1074
        %v1195 = vpop.f32.mrb[0].mxu0
        %v1196 = vadd.f32 %v1022, %v1195
        %v1197 = vpop.f32.mrb[0].mxu0
        %v1198 = vpop.f32.mrb[0].mxu0
        %v1199 = vadd.f32 %v1022, %v1198
        %v1200 = vpop.f32.mrb[0].mxu0
        %1201 = vmatprep.mubr.bf16.mxu0 0
        %1202 = vmatmul.mubr.bf16.gmra.mrb[0].mxu0 %v1077
        %v1203 = vpop.f32.mrb[0].mxu0
        %v1204 = vadd.f32 %v1022, %v1203
        %v1205 = vpop.f32.mrb[0].mxu0
        %v1206 = vpop.f32.mrb[0].mxu0
        %v1207 = vadd.f32 %v1022, %v1206
        %v1208 = vpop.f32.mrb[0].mxu0
        %1209 = vmatprep.mubr.bf16.mxu0 0
        %1210 = vmatmul.mubr.bf16.gmra.mrb[0].mxu0 %v1080
        %v1211 = vpop.f32.mrb[0].mxu0
        %v1212 = vadd.f32 %v1022, %v1211
        %v1213 = vpop.f32.mrb[0].mxu0
        %v1214 = vpop.f32.mrb[0].mxu0
        %v1215 = vadd.f32 %v1022, %v1214
        %v1216 = vpop.f32.mrb[0].mxu0
        %1217 = vmatprep.mubr.bf16.mxu0 0
        %1218 = vmatmul.mubr.bf16.gmra.mrb[0].mxu0 %v1083
        %v1219 = vpop.f32.mrb[0].mxu0
        %v1220 = vadd.f32 %v1022, %v1219
        %v1221 = vpop.f32.mrb[0].mxu0
        %v1222 = vpop.f32.mrb[0].mxu0
        %v1223 = vadd.f32 %v1022, %v1222
        %v1224 = vpop.f32.mrb[0].mxu0
        %1225 = vmatprep.mubr.bf16.mxu0 0
        %1226 = vmatmul.mubr.bf16.gmra.mrb[0].mxu0 %v1086
        %v1227 = vpop.f32.mrb[0].mxu0
        %v1228 = vadd.f32 %v1022, %v1227
        %v1229 = vpop.f32.mrb[0].mxu0
        %v1230 = vpop.f32.mrb[0].mxu0
        %v1231 = vadd.f32 %v1022, %v1230
        %v1232 = vpop.f32.mrb[0].mxu0
        %1233 = vmatprep.mubr.bf16.mxu0 0
        %1234 = vmatmul.mubr.bf16.gmra.mrb[0].mxu0 %v1089
        %v1235 = vpop.f32.mrb[0].mxu0
        %v1236 = vadd.f32 %v1022, %v1235
        %v1237 = vpop.f32.mrb[0].mxu0
        %v1238 = vpop.f32.mrb[0].mxu0
        %v1239 = vadd.f32 %v1022, %v1238
        %v1240 = vpop.f32.mrb[0].mxu0
        %1241 = vmatprep.mubr.bf16.mxu0 0
        %1242 = vmatmul.mubr.bf16.gmra.mrb[0].mxu0 %v1092
        %v1243 = vpop.f32.mrb[0].mxu0
        %v1244 = vadd.f32 %v1022, %v1243
        %v1245 = vpop.f32.mrb[0].mxu0
        %v1246 = vpop.f32.mrb[0].mxu0
        %v1247 = vadd.f32 %v1022, %v1246
        %v1248 = vpop.f32.mrb[0].mxu0
        %1249 = vmatprep.mubr.bf16.mxu0 0
        %1250 = vmatmul.mubr.bf16.gmra.mrb[0].mxu0 %v1095
        %v1251 = vpop.f32.mrb[0].mxu0
        %v1252 = vadd.f32 %v1022, %v1251
        %v1253 = vpop.f32.mrb[0].mxu0
        %v1254 = vpop.f32.mrb[0].mxu0
        %v1255 = vadd.f32 %v1022, %v1254
        %v1256 = vpop.f32.mrb[0].mxu0
        %1257 = vdwg.mxu0
        %v1258 = vmax.f32 %v1132, 0.0
        %v1259 = vmax.f32 %v1135, 0.0
        %v1260 = vmax.f32 %v1140, 0.0
        %v1261 = vmax.f32 %v1143, 0.0
        %v1262 = vmax.f32 %v1148, 0.0
        %v1263 = vmax.f32 %v1151, 0.0
        %v1264 = vmax.f32 %v1156, 0.0
        %v1265 = vmax.f32 %v1159, 0.0
        %v1266 = vmax.f32 %v1164, 0.0
        %v1267 = vmax.f32 %v1167, 0.0
        %v1268 = vmax.f32 %v1172, 0.0
        %v1269 = vmax.f32 %v1175, 0.0
        %v1270 = vmax.f32 %v1180, 0.0
        %v1271 = vmax.f32 %v1183, 0.0
        %v1272 = vmax.f32 %v1188, 0.0
        %v1273 = vmax.f32 %v1191, 0.0
        %v1274 = vmax.f32 %v1196, 0.0
        %v1275 = vmax.f32 %v1199, 0.0
        %v1276 = vmax.f32 %v1204, 0.0
        %v1277 = vmax.f32 %v1207, 0.0
        %v1278 = vmax.f32 %v1212, 0.0
        %v1279 = vmax.f32 %v1215, 0.0
        %v1280 = vmax.f32 %v1220, 0.0
        %v1281 = vmax.f32 %v1223, 0.0
        %v1282 = vmax.f32 %v1228, 0.0
        %v1283 = vmax.f32 %v1231, 0.0
        %v1284 = vmax.f32 %v1236, 0.0
        %v1285 = vmax.f32 %v1239, 0.0
        %v1286 = vmax.f32 %v1244, 0.0
        %v1287 = vmax.f32 %v1247, 0.0
        %v1288 = vmax.f32 %v1252, 0.0
        %v1289 = vmax.f32 %v1255, 0.0
        %v1290 = vpack.c.bf16 %v1259, %v1258
        %v1291 = vpack.c.bf16 %v1261, %v1260
        %v1292 = vpack.c.bf16 %v1263, %v1262
        %v1293 = vpack.c.bf16 %v1265, %v1264
        %v1294 = vpack.c.bf16 %v1267, %v1266
        %v1295 = vpack.c.bf16 %v1269, %v1268
        %v1296 = vpack.c.bf16 %v1271, %v1270
        %v1297 = vpack.c.bf16 %v1273, %v1272
        %v1298 = vpack.c.bf16 %v1275, %v1274
        %v1299 = vpack.c.bf16 %v1277, %v1276
        %v1300 = vpack.c.bf16 %v1279, %v1278
        %v1301 = vpack.c.bf16 %v1281, %v1280
        %v1302 = vpack.c.bf16 %v1283, %v1282
        %v1303 = vpack.c.bf16 %v1285, %v1284
        %v1304 = vpack.c.bf16 %v1287, %v1286
        %v1305 = vpack.c.bf16 %v1289, %v1288
        %v1306 = vld [vmem:[%s5] sm:$0xff]
        %v1307 = vld [vmem:[%s5 + $0x8] sm:$0xff]
        %v1308 = vld [vmem:[%s5 + $0x10] sm:$0xff]
        %v1309 = vld [vmem:[%s5 + $0x18] sm:$0xff]
        %v1310 = vld [vmem:[%s5 + $0x20] sm:$0xff]
        %v1311 = vld [vmem:[%s5 + $0x28] sm:$0xff]
        %v1312 = vld [vmem:[%s5 + $0x30] sm:$0xff]
        %v1313 = vld [vmem:[%s5 + $0x38] sm:$0xff]
        %v1314 = vld [vmem:[%s5 + $0x40] sm:$0xff]
        %v1315 = vld [vmem:[%s5 + $0x48] sm:$0xff]
        %v1316 = vld [vmem:[%s5 + $0x50] sm:$0xff]
        %v1317 = vld [vmem:[%s5 + $0x58] sm:$0xff]
        %v1318 = vld [vmem:[%s5 + $0x60] sm:$0xff]
        %v1319 = vld [vmem:[%s5 + $0x68] sm:$0xff]
        %v1320 = vld [vmem:[%s5 + $0x70] sm:$0xff]
        %v1321 = vld [vmem:[%s5 + $0x78] sm:$0xff]
        %v1322 = vld [vmem:[%s5 + $0x80] sm:$0xff]
        %v1323 = vld [vmem:[%s5 + $0x88] sm:$0xff]
        %v1324 = vld [vmem:[%s5 + $0x90] sm:$0xff]
        %v1325 = vld [vmem:[%s5 + $0x98] sm:$0xff]
        %v1326 = vld [vmem:[%s5 + $0xa0] sm:$0xff]
        %v1327 = vld [vmem:[%s5 + $0xa8] sm:$0xff]
        %v1328 = vld [vmem:[%s5 + $0xb0] sm:$0xff]
        %v1329 = vld [vmem:[%s5 + $0xb8] sm:$0xff]
        %v1330 = vld [vmem:[%s5 + $0xc0] sm:$0xff]
        %v1331 = vld [vmem:[%s5 + $0xc8] sm:$0xff]
        %v1332 = vld [vmem:[%s5 + $0xd0] sm:$0xff]
        %v1333 = vld [vmem:[%s5 + $0xd8] sm:$0xff]
        %v1334 = vld [vmem:[%s5 + $0xe0] sm:$0xff]
        %v1335 = vld [vmem:[%s5 + $0xe8] sm:$0xff]
        %v1336 = vld [vmem:[%s5 + $0xf0] sm:$0xff]
        %v1337 = vld [vmem:[%s5 + $0xf8] sm:$0xff]
        %v1338 = vld [vmem:[%s5 + $0x100] sm:$0xff]
        %v1339 = vld [vmem:[%s5 + $0x108] sm:$0xff]
        %v1340 = vld [vmem:[%s5 + $0x110] sm:$0xff]
        %v1341 = vld [vmem:[%s5 + $0x118] sm:$0xff]
        %v1342 = vld [vmem:[%s5 + $0x120] sm:$0xff]
        %v1343 = vld [vmem:[%s5 + $0x128] sm:$0xff]
        %v1344 = vld [vmem:[%s5 + $0x130] sm:$0xff]
        %v1345 = vld [vmem:[%s5 + $0x138] sm:$0xff]
        %v1346 = vld [vmem:[%s5 + $0x140] sm:$0xff]
        %v1347 = vld [vmem:[%s5 + $0x148] sm:$0xff]
        %v1348 = vld [vmem:[%s5 + $0x150] sm:$0xff]
        %v1349 = vld [vmem:[%s5 + $0x158] sm:$0xff]
        %v1350 = vld [vmem:[%s5 + $0x160] sm:$0xff]
        %v1351 = vld [vmem:[%s5 + $0x168] sm:$0xff]
        %v1352 = vld [vmem:[%s5 + $0x170] sm:$0xff]
        %v1353 = vld [vmem:[%s5 + $0x178] sm:$0xff]
        %v1354 = vld [vmem:[%s5 + $0x180] sm:$0xff]
        %v1355 = vld [vmem:[%s5 + $0x188] sm:$0xff]
        %v1356 = vld [vmem:[%s5 + $0x190] sm:$0xff]
        %v1357 = vld [vmem:[%s5 + $0x198] sm:$0xff]
        %v1358 = vld [vmem:[%s5 + $0x1a0] sm:$0xff]
        %v1359 = vld [vmem:[%s5 + $0x1a8] sm:$0xff]
        %v1360 = vld [vmem:[%s5 + $0x1b0] sm:$0xff]
        %v1361 = vld [vmem:[%s5 + $0x1b8] sm:$0xff]
        %v1362 = vld [vmem:[%s5 + $0x1c0] sm:$0xff]
        %v1363 = vld [vmem:[%s5 + $0x1c8] sm:$0xff]
        %v1364 = vld [vmem:[%s5 + $0x1d0] sm:$0xff]
        %v1365 = vld [vmem:[%s5 + $0x1d8] sm:$0xff]
        %v1366 = vld [vmem:[%s5 + $0x1e0] sm:$0xff]
        %v1367 = vld [vmem:[%s5 + $0x1e8] sm:$0xff]
        %v1368 = vld [vmem:[%s5 + $0x1f0] sm:$0xff]
        %v1369 = vld [vmem:[%s5 + $0x1f8] sm:$0xff]
        %v1370 = vld [vmem:[%s6] sm:$0xff]
        %v1372 = vlaneseq
        %v1373 = vshrl.u32 %v1372, 7
        %v1374 = vsub.s32 0, %v1373
        %v1375 = vrot.slane %v1370, %v1374
        %v1376 = vlaneseq
        %v1377 = vshrl.u32 %v1376, 7
        %v1378 = vsub.s32 1, %v1377
        %v1379 = vrot.slane %v1370, %v1378
        %v1380 = vlaneseq
        %v1381 = vshrl.u32 %v1380, 7
        %v1382 = vsub.s32 2, %v1381
        %v1383 = vrot.slane %v1370, %v1382
        %v1384 = vlaneseq
        %v1385 = vshrl.u32 %v1384, 7
        %v1386 = vsub.s32 3, %v1385
        %v1387 = vrot.slane %v1370, %v1386
        %v1388 = vlaneseq
        %v1389 = vshrl.u32 %v1388, 7
        %v1390 = vsub.s32 4, %v1389
        %v1391 = vrot.slane %v1370, %v1390
        %v1392 = vlaneseq
        %v1393 = vshrl.u32 %v1392, 7
        %v1394 = vsub.s32 5, %v1393
        %v1395 = vrot.slane %v1370, %v1394
        %v1396 = vlaneseq
        %v1397 = vshrl.u32 %v1396, 7
        %v1398 = vsub.s32 6, %v1397
        %v1399 = vrot.slane %v1370, %v1398
        %v1400 = vlaneseq
        %v1401 = vshrl.u32 %v1400, 7
        %v1402 = vsub.s32 7, %v1401
        %v1403 = vrot.slane %v1370, %v1402
        %v1476 = vunpack.c.l.b16 %v1306
        %v1477 = vunpack.c.h.b16 %v1306
        %v1478 = vunpack.c.l.b16 %v1307
        %v1479 = vunpack.c.h.b16 %v1307
        %v1480 = vunpack.c.l.b16 %v1308
        %v1481 = vunpack.c.h.b16 %v1308
        %v1482 = vunpack.c.l.b16 %v1309
        %v1483 = vunpack.c.h.b16 %v1309
        %v1484 = vunpack.c.l.b16 %v1310
        %v1485 = vunpack.c.h.b16 %v1310
        %v1486 = vunpack.c.l.b16 %v1311
        %v1487 = vunpack.c.h.b16 %v1311
        %v1488 = vunpack.c.l.b16 %v1312
        %v1489 = vunpack.c.h.b16 %v1312
        %v1490 = vunpack.c.l.b16 %v1313
        %v1491 = vunpack.c.h.b16 %v1313
        %v1492 = vunpack.c.l.b16 %v1314
        %v1493 = vunpack.c.h.b16 %v1314
        %v1494 = vunpack.c.l.b16 %v1315
        %v1495 = vunpack.c.h.b16 %v1315
        %v1496 = vunpack.c.l.b16 %v1316
        %v1497 = vunpack.c.h.b16 %v1316
        %v1498 = vunpack.c.l.b16 %v1317
        %v1499 = vunpack.c.h.b16 %v1317
        %v1500 = vunpack.c.l.b16 %v1318
        %v1501 = vunpack.c.h.b16 %v1318
        %v1502 = vunpack.c.l.b16 %v1319
        %v1503 = vunpack.c.h.b16 %v1319
        %v1504 = vunpack.c.l.b16 %v1320
        %v1505 = vunpack.c.h.b16 %v1320
        %v1506 = vunpack.c.l.b16 %v1321
        %v1507 = vunpack.c.h.b16 %v1321
        %v1508 = vunpack.c.l.b16 %v1322
        %v1509 = vunpack.c.h.b16 %v1322
        %v1510 = vunpack.c.l.b16 %v1323
        %v1511 = vunpack.c.h.b16 %v1323
        %v1512 = vunpack.c.l.b16 %v1324
        %v1513 = vunpack.c.h.b16 %v1324
        %v1514 = vunpack.c.l.b16 %v1325
        %v1515 = vunpack.c.h.b16 %v1325
        %v1516 = vunpack.c.l.b16 %v1326
        %v1517 = vunpack.c.h.b16 %v1326
        %v1518 = vunpack.c.l.b16 %v1327
        %v1519 = vunpack.c.h.b16 %v1327
        %v1520 = vunpack.c.l.b16 %v1328
        %v1521 = vunpack.c.h.b16 %v1328
        %v1522 = vunpack.c.l.b16 %v1329
        %v1523 = vunpack.c.h.b16 %v1329
        %v1524 = vunpack.c.l.b16 %v1330
        %v1525 = vunpack.c.h.b16 %v1330
        %v1526 = vunpack.c.l.b16 %v1331
        %v1527 = vunpack.c.h.b16 %v1331
        %v1528 = vunpack.c.l.b16 %v1332
        %v1529 = vunpack.c.h.b16 %v1332
        %v1530 = vunpack.c.l.b16 %v1333
        %v1531 = vunpack.c.h.b16 %v1333
        %v1532 = vunpack.c.l.b16 %v1334
        %v1533 = vunpack.c.h.b16 %v1334
        %v1534 = vunpack.c.l.b16 %v1335
        %v1535 = vunpack.c.h.b16 %v1335
        %v1536 = vunpack.c.l.b16 %v1336
        %v1537 = vunpack.c.h.b16 %v1336
        %v1538 = vunpack.c.l.b16 %v1337
        %v1539 = vunpack.c.h.b16 %v1337
        %v1540 = vunpack.c.l.b16 %v1338
        %v1541 = vunpack.c.h.b16 %v1338
        %v1542 = vunpack.c.l.b16 %v1339
        %v1543 = vunpack.c.h.b16 %v1339
        %v1544 = vunpack.c.l.b16 %v1340
        %v1545 = vunpack.c.h.b16 %v1340
        %v1546 = vunpack.c.l.b16 %v1341
        %v1547 = vunpack.c.h.b16 %v1341
        %v1548 = vunpack.c.l.b16 %v1342
        %v1549 = vunpack.c.h.b16 %v1342
        %v1550 = vunpack.c.l.b16 %v1343
        %v1551 = vunpack.c.h.b16 %v1343
        %v1552 = vunpack.c.l.b16 %v1344
        %v1553 = vunpack.c.h.b16 %v1344
        %v1554 = vunpack.c.l.b16 %v1345
        %v1555 = vunpack.c.h.b16 %v1345
        %v1556 = vunpack.c.l.b16 %v1346
        %v1557 = vunpack.c.h.b16 %v1346
        %v1558 = vunpack.c.l.b16 %v1347
        %v1559 = vunpack.c.h.b16 %v1347
        %v1560 = vunpack.c.l.b16 %v1348
        %v1561 = vunpack.c.h.b16 %v1348
        %v1562 = vunpack.c.l.b16 %v1349
        %v1563 = vunpack.c.h.b16 %v1349
        %v1564 = vunpack.c.l.b16 %v1350
        %v1565 = vunpack.c.h.b16 %v1350
        %v1566 = vunpack.c.l.b16 %v1351
        %v1567 = vunpack.c.h.b16 %v1351
        %v1568 = vunpack.c.l.b16 %v1352
        %v1569 = vunpack.c.h.b16 %v1352
        %v1570 = vunpack.c.l.b16 %v1353
        %v1571 = vunpack.c.h.b16 %v1353
        %v1572 = vunpack.c.l.b16 %v1354
        %v1573 = vunpack.c.h.b16 %v1354
        %v1574 = vunpack.c.l.b16 %v1355
        %v1575 = vunpack.c.h.b16 %v1355
        %v1576 = vunpack.c.l.b16 %v1356
        %v1577 = vunpack.c.h.b16 %v1356
        %v1578 = vunpack.c.l.b16 %v1357
        %v1579 = vunpack.c.h.b16 %v1357
        %v1580 = vunpack.c.l.b16 %v1358
        %v1581 = vunpack.c.h.b16 %v1358
        %v1582 = vunpack.c.l.b16 %v1359
        %v1583 = vunpack.c.h.b16 %v1359
        %v1584 = vunpack.c.l.b16 %v1360
        %v1585 = vunpack.c.h.b16 %v1360
        %v1586 = vunpack.c.l.b16 %v1361
        %v1587 = vunpack.c.h.b16 %v1361
        %v1588 = vunpack.c.l.b16 %v1362
        %v1589 = vunpack.c.h.b16 %v1362
        %v1590 = vunpack.c.l.b16 %v1363
        %v1591 = vunpack.c.h.b16 %v1363
        %v1592 = vunpack.c.l.b16 %v1364
        %v1593 = vunpack.c.h.b16 %v1364
        %v1594 = vunpack.c.l.b16 %v1365
        %v1595 = vunpack.c.h.b16 %v1365
        %v1596 = vunpack.c.l.b16 %v1366
        %v1597 = vunpack.c.h.b16 %v1366
        %v1598 = vunpack.c.l.b16 %v1367
        %v1599 = vunpack.c.h.b16 %v1367
        %v1600 = vunpack.c.l.b16 %v1368
        %v1601 = vunpack.c.h.b16 %v1368
        %v1602 = vunpack.c.l.b16 %v1369
        %v1603 = vunpack.c.h.b16 %v1369
        %v1604 = vpack.c.b16 %v1484, %v1476
        %v1605 = vpack.c.b16 %v1485, %v1477
        %v1606 = vpack.c.b16 %v1486, %v1478
        %v1607 = vpack.c.b16 %v1487, %v1479
        %v1608 = vpack.c.b16 %v1488, %v1480
        %v1609 = vpack.c.b16 %v1489, %v1481
        %v1610 = vpack.c.b16 %v1490, %v1482
        %v1611 = vpack.c.b16 %v1491, %v1483
        %v1612 = vpack.c.b16 %v1500, %v1492
        %v1613 = vpack.c.b16 %v1501, %v1493
        %v1614 = vpack.c.b16 %v1502, %v1494
        %v1615 = vpack.c.b16 %v1503, %v1495
        %v1616 = vpack.c.b16 %v1504, %v1496
        %v1617 = vpack.c.b16 %v1505, %v1497
        %v1618 = vpack.c.b16 %v1506, %v1498
        %v1619 = vpack.c.b16 %v1507, %v1499
        %v1620 = vpack.c.b16 %v1516, %v1508
        %v1621 = vpack.c.b16 %v1517, %v1509
        %v1622 = vpack.c.b16 %v1518, %v1510
        %v1623 = vpack.c.b16 %v1519, %v1511
        %v1624 = vpack.c.b16 %v1520, %v1512
        %v1625 = vpack.c.b16 %v1521, %v1513
        %v1626 = vpack.c.b16 %v1522, %v1514
        %v1627 = vpack.c.b16 %v1523, %v1515
        %v1628 = vpack.c.b16 %v1532, %v1524
        %v1629 = vpack.c.b16 %v1533, %v1525
        %v1630 = vpack.c.b16 %v1534, %v1526
        %v1631 = vpack.c.b16 %v1535, %v1527
        %v1632 = vpack.c.b16 %v1536, %v1528
        %v1633 = vpack.c.b16 %v1537, %v1529
        %v1634 = vpack.c.b16 %v1538, %v1530
        %v1635 = vpack.c.b16 %v1539, %v1531
        %v1636 = vpack.c.b16 %v1548, %v1540
        %v1637 = vpack.c.b16 %v1549, %v1541
        %v1638 = vpack.c.b16 %v1550, %v1542
        %v1639 = vpack.c.b16 %v1551, %v1543
        %v1640 = vpack.c.b16 %v1552, %v1544
        %v1641 = vpack.c.b16 %v1553, %v1545
        %v1642 = vpack.c.b16 %v1554, %v1546
        %v1643 = vpack.c.b16 %v1555, %v1547
        %v1644 = vpack.c.b16 %v1564, %v1556
        %v1645 = vpack.c.b16 %v1565, %v1557
        %v1646 = vpack.c.b16 %v1566, %v1558
        %v1647 = vpack.c.b16 %v1567, %v1559
        %v1648 = vpack.c.b16 %v1568, %v1560
        %v1649 = vpack.c.b16 %v1569, %v1561
        %v1650 = vpack.c.b16 %v1570, %v1562
        %v1651 = vpack.c.b16 %v1571, %v1563
        %v1652 = vpack.c.b16 %v1580, %v1572
        %v1653 = vpack.c.b16 %v1581, %v1573
        %v1654 = vpack.c.b16 %v1582, %v1574
        %v1655 = vpack.c.b16 %v1583, %v1575
        %v1656 = vpack.c.b16 %v1584, %v1576
        %v1657 = vpack.c.b16 %v1585, %v1577
        %v1658 = vpack.c.b16 %v1586, %v1578
        %v1659 = vpack.c.b16 %v1587, %v1579
        %v1660 = vpack.c.b16 %v1596, %v1588
        %v1661 = vpack.c.b16 %v1597, %v1589
        %v1662 = vpack.c.b16 %v1598, %v1590
        %v1663 = vpack.c.b16 %v1599, %v1591
        %v1664 = vpack.c.b16 %v1600, %v1592
        %v1665 = vpack.c.b16 %v1601, %v1593
        %v1666 = vpack.c.b16 %v1602, %v1594
        %v1667 = vpack.c.b16 %v1603, %v1595
        %1732 = vmatprep.subr.bf16.mxu0 %v1605
        %1733 = vmatpush1.bf16.msra.mxu0 %v1604
        %1734 = vmatprep.subr.bf16.mxu0 %v1613
        %1735 = vmatpush1.bf16.msra.mxu0 %v1612
        %1736 = vmatprep.subr.bf16.mxu0 %v1621
        %1737 = vmatpush1.bf16.msra.mxu0 %v1620
        %1738 = vmatprep.subr.bf16.mxu0 %v1629
        %1739 = vmatpush1.bf16.msra.mxu0 %v1628
        %1740 = vmatprep.subr.bf16.mxu0 %v1637
        %1741 = vmatpush1.bf16.msra.mxu0 %v1636
        %1742 = vmatprep.subr.bf16.mxu0 %v1645
        %1743 = vmatpush1.bf16.msra.mxu0 %v1644
        %1744 = vmatprep.subr.bf16.mxu0 %v1653
        %1745 = vmatpush1.bf16.msra.mxu0 %v1652
        %1746 = vmatprep.subr.bf16.mxu0 %v1661
        %1747 = vmatpush1.bf16.msra.mxu0 %v1660
        %1748 = vmatprep.subr.bf16.mxu0 0
        %1749 = vmatpush1.bf16.msra.mxu0 0
        %1750 = vmatprep.subr.bf16.mxu0 0
        %1751 = vmatpush1.bf16.msra.mxu0 0
        %1752 = vmatprep.subr.bf16.mxu0 0
        %1753 = vmatpush1.bf16.msra.mxu0 0
        %1754 = vmatprep.subr.bf16.mxu0 0
        %1755 = vmatpush1.bf16.msra.mxu0 0
        %1756 = vmatprep.subr.bf16.mxu0 0
        %1757 = vmatpush1.bf16.msra.mxu0 0
        %1758 = vmatprep.subr.bf16.mxu0 0
        %1759 = vmatpush1.bf16.msra.mxu0 0
        %1760 = vmatprep.subr.bf16.mxu0 0
        %1761 = vmatpush1.bf16.msra.mxu0 0
        %1762 = vmatprep.subr.bf16.mxu0 0
        %1763 = vmatpush1.bf16.msra.mxu0 0
        %1764 = vmatprep.mubr.bf16.mxu0 0
        %1765 = vmatmul.mubr.bf16.gmra.mrb[0].mxu0 %v1290
        %v1766 = vpop.f32.mrb[0].mxu0
        %v1767 = vadd.f32 %v1375, %v1766
        %v1768 = vpop.f32.mrb[0].mxu0
        %v1769 = vadd.f32 %v1379, %v1768
        %v1770 = vpop.f32.mrb[0].mxu0
        %v1771 = vadd.f32 %v1375, %v1770
        %v1772 = vpop.f32.mrb[0].mxu0
        %v1773 = vadd.f32 %v1379, %v1772
        %1774 = vmatprep.mubr.bf16.mxu0 0
        %1775 = vmatmul.mubr.bf16.gmra.mrb[0].mxu0 %v1291
        %v1776 = vpop.f32.mrb[0].mxu0
        %v1777 = vadd.f32 %v1375, %v1776
        %v1778 = vpop.f32.mrb[0].mxu0
        %v1779 = vadd.f32 %v1379, %v1778
        %v1780 = vpop.f32.mrb[0].mxu0
        %v1781 = vadd.f32 %v1375, %v1780
        %v1782 = vpop.f32.mrb[0].mxu0
        %v1783 = vadd.f32 %v1379, %v1782
        %1784 = vmatprep.mubr.bf16.mxu0 0
        %1785 = vmatmul.mubr.bf16.gmra.mrb[0].mxu0 %v1292
        %v1786 = vpop.f32.mrb[0].mxu0
        %v1787 = vadd.f32 %v1375, %v1786
        %v1788 = vpop.f32.mrb[0].mxu0
        %v1789 = vadd.f32 %v1379, %v1788
        %v1790 = vpop.f32.mrb[0].mxu0
        %v1791 = vadd.f32 %v1375, %v1790
        %v1792 = vpop.f32.mrb[0].mxu0
        %v1793 = vadd.f32 %v1379, %v1792
        %1794 = vmatprep.mubr.bf16.mxu0 0
        %1795 = vmatmul.mubr.bf16.gmra.mrb[0].mxu0 %v1293
        %v1796 = vpop.f32.mrb[0].mxu0
        %v1797 = vadd.f32 %v1375, %v1796
        %v1798 = vpop.f32.mrb[0].mxu0
        %v1799 = vadd.f32 %v1379, %v1798
        %v1800 = vpop.f32.mrb[0].mxu0
        %v1801 = vadd.f32 %v1375, %v1800
        %v1802 = vpop.f32.mrb[0].mxu0
        %v1803 = vadd.f32 %v1379, %v1802
        %1804 = vmatprep.mubr.bf16.mxu0 0
        %1805 = vmatmul.mubr.bf16.gmra.mrb[0].mxu0 %v1294
        %v1806 = vpop.f32.mrb[0].mxu0
        %v1807 = vadd.f32 %v1375, %v1806
        %v1808 = vpop.f32.mrb[0].mxu0
        %v1809 = vadd.f32 %v1379, %v1808
        %v1810 = vpop.f32.mrb[0].mxu0
        %v1811 = vadd.f32 %v1375, %v1810
        %v1812 = vpop.f32.mrb[0].mxu0
        %v1813 = vadd.f32 %v1379, %v1812
        %1814 = vmatprep.mubr.bf16.mxu0 0
        %1815 = vmatmul.mubr.bf16.gmra.mrb[0].mxu0 %v1295
        %v1816 = vpop.f32.mrb[0].mxu0
        %v1817 = vadd.f32 %v1375, %v1816
        %v1818 = vpop.f32.mrb[0].mxu0
        %v1819 = vadd.f32 %v1379, %v1818
        %v1820 = vpop.f32.mrb[0].mxu0
        %v1821 = vadd.f32 %v1375, %v1820
        %v1822 = vpop.f32.mrb[0].mxu0
        %v1823 = vadd.f32 %v1379, %v1822
        %1824 = vmatprep.mubr.bf16.mxu0 0
        %1825 = vmatmul.mubr.bf16.gmra.mrb[0].mxu0 %v1296
        %v1826 = vpop.f32.mrb[0].mxu0
        %v1827 = vadd.f32 %v1375, %v1826
        %v1828 = vpop.f32.mrb[0].mxu0
        %v1829 = vadd.f32 %v1379, %v1828
        %v1830 = vpop.f32.mrb[0].mxu0
        %v1831 = vadd.f32 %v1375, %v1830
        %v1832 = vpop.f32.mrb[0].mxu0
        %v1833 = vadd.f32 %v1379, %v1832
        %1834 = vmatprep.mubr.bf16.mxu0 0
        %1835 = vmatmul.mubr.bf16.gmra.mrb[0].mxu0 %v1297
        %v1836 = vpop.f32.mrb[0].mxu0
        %v1837 = vadd.f32 %v1375, %v1836
        %v1838 = vpop.f32.mrb[0].mxu0
        %v1839 = vadd.f32 %v1379, %v1838
        %v1840 = vpop.f32.mrb[0].mxu0
        %v1841 = vadd.f32 %v1375, %v1840
        %v1842 = vpop.f32.mrb[0].mxu0
        %v1843 = vadd.f32 %v1379, %v1842
        %1844 = vmatprep.mubr.bf16.mxu0 0
        %1845 = vmatmul.mubr.bf16.gmra.mrb[0].mxu0 %v1298
        %v1846 = vpop.f32.mrb[0].mxu0
        %v1847 = vadd.f32 %v1375, %v1846
        %v1848 = vpop.f32.mrb[0].mxu0
        %v1849 = vadd.f32 %v1379, %v1848
        %v1850 = vpop.f32.mrb[0].mxu0
        %v1851 = vadd.f32 %v1375, %v1850
        %v1852 = vpop.f32.mrb[0].mxu0
        %v1853 = vadd.f32 %v1379, %v1852
        %1854 = vmatprep.mubr.bf16.mxu0 0
        %1855 = vmatmul.mubr.bf16.gmra.mrb[0].mxu0 %v1299
        %v1856 = vpop.f32.mrb[0].mxu0
        %v1857 = vadd.f32 %v1375, %v1856
        %v1858 = vpop.f32.mrb[0].mxu0
        %v1859 = vadd.f32 %v1379, %v1858
        %v1860 = vpop.f32.mrb[0].mxu0
        %v1861 = vadd.f32 %v1375, %v1860
        %v1862 = vpop.f32.mrb[0].mxu0
        %v1863 = vadd.f32 %v1379, %v1862
        %1864 = vmatprep.mubr.bf16.mxu0 0
        %1865 = vmatmul.mubr.bf16.gmra.mrb[0].mxu0 %v1300
        %v1866 = vpop.f32.mrb[0].mxu0
        %v1867 = vadd.f32 %v1375, %v1866
        %v1868 = vpop.f32.mrb[0].mxu0
        %v1869 = vadd.f32 %v1379, %v1868
        %v1870 = vpop.f32.mrb[0].mxu0
        %v1871 = vadd.f32 %v1375, %v1870
        %v1872 = vpop.f32.mrb[0].mxu0
        %v1873 = vadd.f32 %v1379, %v1872
        %1874 = vmatprep.mubr.bf16.mxu0 0
        %1875 = vmatmul.mubr.bf16.gmra.mrb[0].mxu0 %v1301
        %v1876 = vpop.f32.mrb[0].mxu0
        %v1877 = vadd.f32 %v1375, %v1876
        %v1878 = vpop.f32.mrb[0].mxu0
        %v1879 = vadd.f32 %v1379, %v1878
        %v1880 = vpop.f32.mrb[0].mxu0
        %v1881 = vadd.f32 %v1375, %v1880
        %v1882 = vpop.f32.mrb[0].mxu0
        %v1883 = vadd.f32 %v1379, %v1882
        %1884 = vmatprep.mubr.bf16.mxu0 0
        %1885 = vmatmul.mubr.bf16.gmra.mrb[0].mxu0 %v1302
        %v1886 = vpop.f32.mrb[0].mxu0
        %v1887 = vadd.f32 %v1375, %v1886
        %v1888 = vpop.f32.mrb[0].mxu0
        %v1889 = vadd.f32 %v1379, %v1888
        %v1890 = vpop.f32.mrb[0].mxu0
        %v1891 = vadd.f32 %v1375, %v1890
        %v1892 = vpop.f32.mrb[0].mxu0
        %v1893 = vadd.f32 %v1379, %v1892
        %1894 = vmatprep.mubr.bf16.mxu0 0
        %1895 = vmatmul.mubr.bf16.gmra.mrb[0].mxu0 %v1303
        %v1896 = vpop.f32.mrb[0].mxu0
        %v1897 = vadd.f32 %v1375, %v1896
        %v1898 = vpop.f32.mrb[0].mxu0
        %v1899 = vadd.f32 %v1379, %v1898
        %v1900 = vpop.f32.mrb[0].mxu0
        %v1901 = vadd.f32 %v1375, %v1900
        %v1902 = vpop.f32.mrb[0].mxu0
        %v1903 = vadd.f32 %v1379, %v1902
        %1904 = vmatprep.mubr.bf16.mxu0 0
        %1905 = vmatmul.mubr.bf16.gmra.mrb[0].mxu0 %v1304
        %v1906 = vpop.f32.mrb[0].mxu0
        %v1907 = vadd.f32 %v1375, %v1906
        %v1908 = vpop.f32.mrb[0].mxu0
        %v1909 = vadd.f32 %v1379, %v1908
        %v1910 = vpop.f32.mrb[0].mxu0
        %v1911 = vadd.f32 %v1375, %v1910
        %v1912 = vpop.f32.mrb[0].mxu0
        %v1913 = vadd.f32 %v1379, %v1912
        %1914 = vmatprep.mubr.bf16.mxu0 0
        %1915 = vmatmul.mubr.bf16.gmra.mrb[0].mxu0 %v1305
        %v1916 = vpop.f32.mrb[0].mxu0
        %v1917 = vadd.f32 %v1375, %v1916
        %v1918 = vpop.f32.mrb[0].mxu0
        %v1919 = vadd.f32 %v1379, %v1918
        %v1920 = vpop.f32.mrb[0].mxu0
        %v1921 = vadd.f32 %v1375, %v1920
        %v1922 = vpop.f32.mrb[0].mxu0
        %v1923 = vadd.f32 %v1379, %v1922
        %1924 = vdwg.mxu0
        %1925 = vmatprep.subr.bf16.mxu0 %v1607
        %1926 = vmatpush1.bf16.msra.mxu0 %v1606
        %1927 = vmatprep.subr.bf16.mxu0 %v1615
        %1928 = vmatpush1.bf16.msra.mxu0 %v1614
        %1929 = vmatprep.subr.bf16.mxu0 %v1623
        %1930 = vmatpush1.bf16.msra.mxu0 %v1622
        %1931 = vmatprep.subr.bf16.mxu0 %v1631
        %1932 = vmatpush1.bf16.msra.mxu0 %v1630
        %1933 = vmatprep.subr.bf16.mxu0 %v1639
        %1934 = vmatpush1.bf16.msra.mxu0 %v1638
        %1935 = vmatprep.subr.bf16.mxu0 %v1647
        %1936 = vmatpush1.bf16.msra.mxu0 %v1646
        %1937 = vmatprep.subr.bf16.mxu0 %v1655
        %1938 = vmatpush1.bf16.msra.mxu0 %v1654
        %1939 = vmatprep.subr.bf16.mxu0 %v1663
        %1940 = vmatpush1.bf16.msra.mxu0 %v1662
        %1941 = vmatprep.subr.bf16.mxu0 0
        %1942 = vmatpush1.bf16.msra.mxu0 0
        %1943 = vmatprep.subr.bf16.mxu0 0
        %1944 = vmatpush1.bf16.msra.mxu0 0
        %1945 = vmatprep.subr.bf16.mxu0 0
        %1946 = vmatpush1.bf16.msra.mxu0 0
        %1947 = vmatprep.subr.bf16.mxu0 0
        %1948 = vmatpush1.bf16.msra.mxu0 0
        %1949 = vmatprep.subr.bf16.mxu0 0
        %1950 = vmatpush1.bf16.msra.mxu0 0
        %1951 = vmatprep.subr.bf16.mxu0 0
        %1952 = vmatpush1.bf16.msra.mxu0 0
        %1953 = vmatprep.subr.bf16.mxu0 0
        %1954 = vmatpush1.bf16.msra.mxu0 0
        %1955 = vmatprep.subr.bf16.mxu0 0
        %1956 = vmatpush1.bf16.msra.mxu0 0
        %1957 = vmatprep.mubr.bf16.mxu0 0
        %1958 = vmatmul.mubr.bf16.gmra.mrb[0].mxu0 %v1290
        %v1959 = vpop.f32.mrb[0].mxu0
        %v1960 = vadd.f32 %v1383, %v1959
        %v1961 = vpop.f32.mrb[0].mxu0
        %v1962 = vadd.f32 %v1387, %v1961
        %v1963 = vpop.f32.mrb[0].mxu0
        %v1964 = vadd.f32 %v1383, %v1963
        %v1965 = vpop.f32.mrb[0].mxu0
        %v1966 = vadd.f32 %v1387, %v1965
        %1967 = vmatprep.mubr.bf16.mxu0 0
        %1968 = vmatmul.mubr.bf16.gmra.mrb[0].mxu0 %v1291
        %v1969 = vpop.f32.mrb[0].mxu0
        %v1970 = vadd.f32 %v1383, %v1969
        %v1971 = vpop.f32.mrb[0].mxu0
        %v1972 = vadd.f32 %v1387, %v1971
        %v1973 = vpop.f32.mrb[0].mxu0
        %v1974 = vadd.f32 %v1383, %v1973
        %v1975 = vpop.f32.mrb[0].mxu0
        %v1976 = vadd.f32 %v1387, %v1975
        %1977 = vmatprep.mubr.bf16.mxu0 0
        %1978 = vmatmul.mubr.bf16.gmra.mrb[0].mxu0 %v1292
        %v1979 = vpop.f32.mrb[0].mxu0
        %v1980 = vadd.f32 %v1383, %v1979
        %v1981 = vpop.f32.mrb[0].mxu0
        %v1982 = vadd.f32 %v1387, %v1981
        %v1983 = vpop.f32.mrb[0].mxu0
        %v1984 = vadd.f32 %v1383, %v1983
        %v1985 = vpop.f32.mrb[0].mxu0
        %v1986 = vadd.f32 %v1387, %v1985
        %1987 = vmatprep.mubr.bf16.mxu0 0
        %1988 = vmatmul.mubr.bf16.gmra.mrb[0].mxu0 %v1293
        %v1989 = vpop.f32.mrb[0].mxu0
        %v1990 = vadd.f32 %v1383, %v1989
        %v1991 = vpop.f32.mrb[0].mxu0
        %v1992 = vadd.f32 %v1387, %v1991
        %v1993 = vpop.f32.mrb[0].mxu0
        %v1994 = vadd.f32 %v1383, %v1993
        %v1995 = vpop.f32.mrb[0].mxu0
        %v1996 = vadd.f32 %v1387, %v1995
        %1997 = vmatprep.mubr.bf16.mxu0 0
        %1998 = vmatmul.mubr.bf16.gmra.mrb[0].mxu0 %v1294
        %v1999 = vpop.f32.mrb[0].mxu0
        %v2000 = vadd.f32 %v1383, %v1999
        %v2001 = vpop.f32.mrb[0].mxu0
        %v2002 = vadd.f32 %v1387, %v2001
        %v2003 = vpop.f32.mrb[0].mxu0
        %v2004 = vadd.f32 %v1383, %v2003
        %v2005 = vpop.f32.mrb[0].mxu0
        %v2006 = vadd.f32 %v1387, %v2005
        %2007 = vmatprep.mubr.bf16.mxu0 0
        %2008 = vmatmul.mubr.bf16.gmra.mrb[0].mxu0 %v1295
        %v2009 = vpop.f32.mrb[0].mxu0
        %v2010 = vadd.f32 %v1383, %v2009
        %v2011 = vpop.f32.mrb[0].mxu0
        %v2012 = vadd.f32 %v1387, %v2011
        %v2013 = vpop.f32.mrb[0].mxu0
        %v2014 = vadd.f32 %v1383, %v2013
        %v2015 = vpop.f32.mrb[0].mxu0
        %v2016 = vadd.f32 %v1387, %v2015
        %2017 = vmatprep.mubr.bf16.mxu0 0
        %2018 = vmatmul.mubr.bf16.gmra.mrb[0].mxu0 %v1296
        %v2019 = vpop.f32.mrb[0].mxu0
        %v2020 = vadd.f32 %v1383, %v2019
        %v2021 = vpop.f32.mrb[0].mxu0
        %v2022 = vadd.f32 %v1387, %v2021
        %v2023 = vpop.f32.mrb[0].mxu0
        %v2024 = vadd.f32 %v1383, %v2023
        %v2025 = vpop.f32.mrb[0].mxu0
        %v2026 = vadd.f32 %v1387, %v2025
        %2027 = vmatprep.mubr.bf16.mxu0 0
        %2028 = vmatmul.mubr.bf16.gmra.mrb[0].mxu0 %v1297
        %v2029 = vpop.f32.mrb[0].mxu0
        %v2030 = vadd.f32 %v1383, %v2029
        %v2031 = vpop.f32.mrb[0].mxu0
        %v2032 = vadd.f32 %v1387, %v2031
        %v2033 = vpop.f32.mrb[0].mxu0
        %v2034 = vadd.f32 %v1383, %v2033
        %v2035 = vpop.f32.mrb[0].mxu0
        %v2036 = vadd.f32 %v1387, %v2035
        %2037 = vmatprep.mubr.bf16.mxu0 0
        %2038 = vmatmul.mubr.bf16.gmra.mrb[0].mxu0 %v1298
        %v2039 = vpop.f32.mrb[0].mxu0
        %v2040 = vadd.f32 %v1383, %v2039
        %v2041 = vpop.f32.mrb[0].mxu0
        %v2042 = vadd.f32 %v1387, %v2041
        %v2043 = vpop.f32.mrb[0].mxu0
        %v2044 = vadd.f32 %v1383, %v2043
        %v2045 = vpop.f32.mrb[0].mxu0
        %v2046 = vadd.f32 %v1387, %v2045
        %2047 = vmatprep.mubr.bf16.mxu0 0
        %2048 = vmatmul.mubr.bf16.gmra.mrb[0].mxu0 %v1299
        %v2049 = vpop.f32.mrb[0].mxu0
        %v2050 = vadd.f32 %v1383, %v2049
        %v2051 = vpop.f32.mrb[0].mxu0
        %v2052 = vadd.f32 %v1387, %v2051
        %v2053 = vpop.f32.mrb[0].mxu0
        %v2054 = vadd.f32 %v1383, %v2053
        %v2055 = vpop.f32.mrb[0].mxu0
        %v2056 = vadd.f32 %v1387, %v2055
        %2057 = vmatprep.mubr.bf16.mxu0 0
        %2058 = vmatmul.mubr.bf16.gmra.mrb[0].mxu0 %v1300
        %v2059 = vpop.f32.mrb[0].mxu0
        %v2060 = vadd.f32 %v1383, %v2059
        %v2061 = vpop.f32.mrb[0].mxu0
        %v2062 = vadd.f32 %v1387, %v2061
        %v2063 = vpop.f32.mrb[0].mxu0
        %v2064 = vadd.f32 %v1383, %v2063
        %v2065 = vpop.f32.mrb[0].mxu0
        %v2066 = vadd.f32 %v1387, %v2065
        %2067 = vmatprep.mubr.bf16.mxu0 0
        %2068 = vmatmul.mubr.bf16.gmra.mrb[0].mxu0 %v1301
        %v2069 = vpop.f32.mrb[0].mxu0
        %v2070 = vadd.f32 %v1383, %v2069
        %v2071 = vpop.f32.mrb[0].mxu0
        %v2072 = vadd.f32 %v1387, %v2071
        %v2073 = vpop.f32.mrb[0].mxu0
        %v2074 = vadd.f32 %v1383, %v2073
        %v2075 = vpop.f32.mrb[0].mxu0
        %v2076 = vadd.f32 %v1387, %v2075
        %2077 = vmatprep.mubr.bf16.mxu0 0
        %2078 = vmatmul.mubr.bf16.gmra.mrb[0].mxu0 %v1302
        %v2079 = vpop.f32.mrb[0].mxu0
        %v2080 = vadd.f32 %v1383, %v2079
        %v2081 = vpop.f32.mrb[0].mxu0
        %v2082 = vadd.f32 %v1387, %v2081
        %v2083 = vpop.f32.mrb[0].mxu0
        %v2084 = vadd.f32 %v1383, %v2083
        %v2085 = vpop.f32.mrb[0].mxu0
        %v2086 = vadd.f32 %v1387, %v2085
        %2087 = vmatprep.mubr.bf16.mxu0 0
        %2088 = vmatmul.mubr.bf16.gmra.mrb[0].mxu0 %v1303
        %v2089 = vpop.f32.mrb[0].mxu0
        %v2090 = vadd.f32 %v1383, %v2089
        %v2091 = vpop.f32.mrb[0].mxu0
        %v2092 = vadd.f32 %v1387, %v2091
        %v2093 = vpop.f32.mrb[0].mxu0
        %v2094 = vadd.f32 %v1383, %v2093
        %v2095 = vpop.f32.mrb[0].mxu0
        %v2096 = vadd.f32 %v1387, %v2095
        %2097 = vmatprep.mubr.bf16.mxu0 0
        %2098 = vmatmul.mubr.bf16.gmra.mrb[0].mxu0 %v1304
        %v2099 = vpop.f32.mrb[0].mxu0
        %v2100 = vadd.f32 %v1383, %v2099
        %v2101 = vpop.f32.mrb[0].mxu0
        %v2102 = vadd.f32 %v1387, %v2101
        %v2103 = vpop.f32.mrb[0].mxu0
        %v2104 = vadd.f32 %v1383, %v2103
        %v2105 = vpop.f32.mrb[0].mxu0
        %v2106 = vadd.f32 %v1387, %v2105
        %2107 = vmatprep.mubr.bf16.mxu0 0
        %2108 = vmatmul.mubr.bf16.gmra.mrb[0].mxu0 %v1305
        %v2109 = vpop.f32.mrb[0].mxu0
        %v2110 = vadd.f32 %v1383, %v2109
        %v2111 = vpop.f32.mrb[0].mxu0
        %v2112 = vadd.f32 %v1387, %v2111
        %v2113 = vpop.f32.mrb[0].mxu0
        %v2114 = vadd.f32 %v1383, %v2113
        %v2115 = vpop.f32.mrb[0].mxu0
        %v2116 = vadd.f32 %v1387, %v2115
        %2117 = vdwg.mxu0
        %2118 = vmatprep.subr.bf16.mxu0 %v1609
        %2119 = vmatpush1.bf16.msra.mxu0 %v1608
        %2120 = vmatprep.subr.bf16.mxu0 %v1617
        %2121 = vmatpush1.bf16.msra.mxu0 %v1616
        %2122 = vmatprep.subr.bf16.mxu0 %v1625
        %2123 = vmatpush1.bf16.msra.mxu0 %v1624
        %2124 = vmatprep.subr.bf16.mxu0 %v1633
        %2125 = vmatpush1.bf16.msra.mxu0 %v1632
        %2126 = vmatprep.subr.bf16.mxu0 %v1641
        %2127 = vmatpush1.bf16.msra.mxu0 %v1640
        %2128 = vmatprep.subr.bf16.mxu0 %v1649
        %2129 = vmatpush1.bf16.msra.mxu0 %v1648
        %2130 = vmatprep.subr.bf16.mxu0 %v1657
        %2131 = vmatpush1.bf16.msra.mxu0 %v1656
        %2132 = vmatprep.subr.bf16.mxu0 %v1665
        %2133 = vmatpush1.bf16.msra.mxu0 %v1664
        %2134 = vmatprep.subr.bf16.mxu0 0
        %2135 = vmatpush1.bf16.msra.mxu0 0
        %2136 = vmatprep.subr.bf16.mxu0 0
        %2137 = vmatpush1.bf16.msra.mxu0 0
        %2138 = vmatprep.subr.bf16.mxu0 0
        %2139 = vmatpush1.bf16.msra.mxu0 0
        %2140 = vmatprep.subr.bf16.mxu0 0
        %2141 = vmatpush1.bf16.msra.mxu0 0
        %2142 = vmatprep.subr.bf16.mxu0 0
        %2143 = vmatpush1.bf16.msra.mxu0 0
        %2144 = vmatprep.subr.bf16.mxu0 0
        %2145 = vmatpush1.bf16.msra.mxu0 0
        %2146 = vmatprep.subr.bf16.mxu0 0
        %2147 = vmatpush1.bf16.msra.mxu0 0
        %2148 = vmatprep.subr.bf16.mxu0 0
        %2149 = vmatpush1.bf16.msra.mxu0 0
        %2150 = vmatprep.mubr.bf16.mxu0 0
        %2151 = vmatmul.mubr.bf16.gmra.mrb[0].mxu0 %v1290
        %v2152 = vpop.f32.mrb[0].mxu0
        %v2153 = vadd.f32 %v1391, %v2152
        %v2154 = vpop.f32.mrb[0].mxu0
        %v2155 = vadd.f32 %v1395, %v2154
        %v2156 = vpop.f32.mrb[0].mxu0
        %v2157 = vadd.f32 %v1391, %v2156
        %v2158 = vpop.f32.mrb[0].mxu0
        %v2159 = vadd.f32 %v1395, %v2158
        %2160 = vmatprep.mubr.bf16.mxu0 0
        %2161 = vmatmul.mubr.bf16.gmra.mrb[0].mxu0 %v1291
        %v2162 = vpop.f32.mrb[0].mxu0
        %v2163 = vadd.f32 %v1391, %v2162
        %v2164 = vpop.f32.mrb[0].mxu0
        %v2165 = vadd.f32 %v1395, %v2164
        %v2166 = vpop.f32.mrb[0].mxu0
        %v2167 = vadd.f32 %v1391, %v2166
        %v2168 = vpop.f32.mrb[0].mxu0
        %v2169 = vadd.f32 %v1395, %v2168
        %2170 = vmatprep.mubr.bf16.mxu0 0
        %2171 = vmatmul.mubr.bf16.gmra.mrb[0].mxu0 %v1292
        %v2172 = vpop.f32.mrb[0].mxu0
        %v2173 = vadd.f32 %v1391, %v2172
        %v2174 = vpop.f32.mrb[0].mxu0
        %v2175 = vadd.f32 %v1395, %v2174
        %v2176 = vpop.f32.mrb[0].mxu0
        %v2177 = vadd.f32 %v1391, %v2176
        %v2178 = vpop.f32.mrb[0].mxu0
        %v2179 = vadd.f32 %v1395, %v2178
        %2180 = vmatprep.mubr.bf16.mxu0 0
        %2181 = vmatmul.mubr.bf16.gmra.mrb[0].mxu0 %v1293
        %v2182 = vpop.f32.mrb[0].mxu0
        %v2183 = vadd.f32 %v1391, %v2182
        %v2184 = vpop.f32.mrb[0].mxu0
        %v2185 = vadd.f32 %v1395, %v2184
        %v2186 = vpop.f32.mrb[0].mxu0
        %v2187 = vadd.f32 %v1391, %v2186
        %v2188 = vpop.f32.mrb[0].mxu0
        %v2189 = vadd.f32 %v1395, %v2188
        %2190 = vmatprep.mubr.bf16.mxu0 0
        %2191 = vmatmul.mubr.bf16.gmra.mrb[0].mxu0 %v1294
        %v2192 = vpop.f32.mrb[0].mxu0
        %v2193 = vadd.f32 %v1391, %v2192
        %v2194 = vpop.f32.mrb[0].mxu0
        %v2195 = vadd.f32 %v1395, %v2194
        %v2196 = vpop.f32.mrb[0].mxu0
        %v2197 = vadd.f32 %v1391, %v2196
        %v2198 = vpop.f32.mrb[0].mxu0
        %v2199 = vadd.f32 %v1395, %v2198
        %2200 = vmatprep.mubr.bf16.mxu0 0
        %2201 = vmatmul.mubr.bf16.gmra.mrb[0].mxu0 %v1295
        %v2202 = vpop.f32.mrb[0].mxu0
        %v2203 = vadd.f32 %v1391, %v2202
        %v2204 = vpop.f32.mrb[0].mxu0
        %v2205 = vadd.f32 %v1395, %v2204
        %v2206 = vpop.f32.mrb[0].mxu0
        %v2207 = vadd.f32 %v1391, %v2206
        %v2208 = vpop.f32.mrb[0].mxu0
        %v2209 = vadd.f32 %v1395, %v2208
        %2210 = vmatprep.mubr.bf16.mxu0 0
        %2211 = vmatmul.mubr.bf16.gmra.mrb[0].mxu0 %v1296
        %v2212 = vpop.f32.mrb[0].mxu0
        %v2213 = vadd.f32 %v1391, %v2212
        %v2214 = vpop.f32.mrb[0].mxu0
        %v2215 = vadd.f32 %v1395, %v2214
        %v2216 = vpop.f32.mrb[0].mxu0
        %v2217 = vadd.f32 %v1391, %v2216
        %v2218 = vpop.f32.mrb[0].mxu0
        %v2219 = vadd.f32 %v1395, %v2218
        %2220 = vmatprep.mubr.bf16.mxu0 0
        %2221 = vmatmul.mubr.bf16.gmra.mrb[0].mxu0 %v1297
        %v2222 = vpop.f32.mrb[0].mxu0
        %v2223 = vadd.f32 %v1391, %v2222
        %v2224 = vpop.f32.mrb[0].mxu0
        %v2225 = vadd.f32 %v1395, %v2224
        %v2226 = vpop.f32.mrb[0].mxu0
        %v2227 = vadd.f32 %v1391, %v2226
        %v2228 = vpop.f32.mrb[0].mxu0
        %v2229 = vadd.f32 %v1395, %v2228
        %2230 = vmatprep.mubr.bf16.mxu0 0
        %2231 = vmatmul.mubr.bf16.gmra.mrb[0].mxu0 %v1298
        %v2232 = vpop.f32.mrb[0].mxu0
        %v2233 = vadd.f32 %v1391, %v2232
        %v2234 = vpop.f32.mrb[0].mxu0
        %v2235 = vadd.f32 %v1395, %v2234
        %v2236 = vpop.f32.mrb[0].mxu0
        %v2237 = vadd.f32 %v1391, %v2236
        %v2238 = vpop.f32.mrb[0].mxu0
        %v2239 = vadd.f32 %v1395, %v2238
        %2240 = vmatprep.mubr.bf16.mxu0 0
        %2241 = vmatmul.mubr.bf16.gmra.mrb[0].mxu0 %v1299
        %v2242 = vpop.f32.mrb[0].mxu0
        %v2243 = vadd.f32 %v1391, %v2242
        %v2244 = vpop.f32.mrb[0].mxu0
        %v2245 = vadd.f32 %v1395, %v2244
        %v2246 = vpop.f32.mrb[0].mxu0
        %v2247 = vadd.f32 %v1391, %v2246
        %v2248 = vpop.f32.mrb[0].mxu0
        %v2249 = vadd.f32 %v1395, %v2248
        %2250 = vmatprep.mubr.bf16.mxu0 0
        %2251 = vmatmul.mubr.bf16.gmra.mrb[0].mxu0 %v1300
        %v2252 = vpop.f32.mrb[0].mxu0
        %v2253 = vadd.f32 %v1391, %v2252
        %v2254 = vpop.f32.mrb[0].mxu0
        %v2255 = vadd.f32 %v1395, %v2254
        %v2256 = vpop.f32.mrb[0].mxu0
        %v2257 = vadd.f32 %v1391, %v2256
        %v2258 = vpop.f32.mrb[0].mxu0
        %v2259 = vadd.f32 %v1395, %v2258
        %2260 = vmatprep.mubr.bf16.mxu0 0
        %2261 = vmatmul.mubr.bf16.gmra.mrb[0].mxu0 %v1301
        %v2262 = vpop.f32.mrb[0].mxu0
        %v2263 = vadd.f32 %v1391, %v2262
        %v2264 = vpop.f32.mrb[0].mxu0
        %v2265 = vadd.f32 %v1395, %v2264
        %v2266 = vpop.f32.mrb[0].mxu0
        %v2267 = vadd.f32 %v1391, %v2266
        %v2268 = vpop.f32.mrb[0].mxu0
        %v2269 = vadd.f32 %v1395, %v2268
        %2270 = vmatprep.mubr.bf16.mxu0 0
        %2271 = vmatmul.mubr.bf16.gmra.mrb[0].mxu0 %v1302
        %v2272 = vpop.f32.mrb[0].mxu0
        %v2273 = vadd.f32 %v1391, %v2272
        %v2274 = vpop.f32.mrb[0].mxu0
        %v2275 = vadd.f32 %v1395, %v2274
        %v2276 = vpop.f32.mrb[0].mxu0
        %v2277 = vadd.f32 %v1391, %v2276
        %v2278 = vpop.f32.mrb[0].mxu0
        %v2279 = vadd.f32 %v1395, %v2278
        %2280 = vmatprep.mubr.bf16.mxu0 0
        %2281 = vmatmul.mubr.bf16.gmra.mrb[0].mxu0 %v1303
        %v2282 = vpop.f32.mrb[0].mxu0
        %v2283 = vadd.f32 %v1391, %v2282
        %v2284 = vpop.f32.mrb[0].mxu0
        %v2285 = vadd.f32 %v1395, %v2284
        %v2286 = vpop.f32.mrb[0].mxu0
        %v2287 = vadd.f32 %v1391, %v2286
        %v2288 = vpop.f32.mrb[0].mxu0
        %v2289 = vadd.f32 %v1395, %v2288
        %2290 = vmatprep.mubr.bf16.mxu0 0
        %2291 = vmatmul.mubr.bf16.gmra.mrb[0].mxu0 %v1304
        %v2292 = vpop.f32.mrb[0].mxu0
        %v2293 = vadd.f32 %v1391, %v2292
        %v2294 = vpop.f32.mrb[0].mxu0
        %v2295 = vadd.f32 %v1395, %v2294
        %v2296 = vpop.f32.mrb[0].mxu0
        %v2297 = vadd.f32 %v1391, %v2296
        %v2298 = vpop.f32.mrb[0].mxu0
        %v2299 = vadd.f32 %v1395, %v2298
        %2300 = vmatprep.mubr.bf16.mxu0 0
        %2301 = vmatmul.mubr.bf16.gmra.mrb[0].mxu0 %v1305
        %v2302 = vpop.f32.mrb[0].mxu0
        %v2303 = vadd.f32 %v1391, %v2302
        %v2304 = vpop.f32.mrb[0].mxu0
        %v2305 = vadd.f32 %v1395, %v2304
        %v2306 = vpop.f32.mrb[0].mxu0
        %v2307 = vadd.f32 %v1391, %v2306
        %v2308 = vpop.f32.mrb[0].mxu0
        %v2309 = vadd.f32 %v1395, %v2308
        %2310 = vdwg.mxu0
        %2311 = vmatprep.subr.bf16.mxu0 %v1611
        %2312 = vmatpush1.bf16.msra.mxu0 %v1610
        %2313 = vmatprep.subr.bf16.mxu0 %v1619
        %2314 = vmatpush1.bf16.msra.mxu0 %v1618
        %2315 = vmatprep.subr.bf16.mxu0 %v1627
        %2316 = vmatpush1.bf16.msra.mxu0 %v1626
        %2317 = vmatprep.subr.bf16.mxu0 %v1635
        %2318 = vmatpush1.bf16.msra.mxu0 %v1634
        %2319 = vmatprep.subr.bf16.mxu0 %v1643
        %2320 = vmatpush1.bf16.msra.mxu0 %v1642
        %2321 = vmatprep.subr.bf16.mxu0 %v1651
        %2322 = vmatpush1.bf16.msra.mxu0 %v1650
        %2323 = vmatprep.subr.bf16.mxu0 %v1659
        %2324 = vmatpush1.bf16.msra.mxu0 %v1658
        %2325 = vmatprep.subr.bf16.mxu0 %v1667
        %2326 = vmatpush1.bf16.msra.mxu0 %v1666
        %2327 = vmatprep.subr.bf16.mxu0 0
        %2328 = vmatpush1.bf16.msra.mxu0 0
        %2329 = vmatprep.subr.bf16.mxu0 0
        %2330 = vmatpush1.bf16.msra.mxu0 0
        %2331 = vmatprep.subr.bf16.mxu0 0
        %2332 = vmatpush1.bf16.msra.mxu0 0
        %2333 = vmatprep.subr.bf16.mxu0 0
        %2334 = vmatpush1.bf16.msra.mxu0 0
        %2335 = vmatprep.subr.bf16.mxu0 0
        %2336 = vmatpush1.bf16.msra.mxu0 0
        %2337 = vmatprep.subr.bf16.mxu0 0
        %2338 = vmatpush1.bf16.msra.mxu0 0
        %2339 = vmatprep.subr.bf16.mxu0 0
        %2340 = vmatpush1.bf16.msra.mxu0 0
        %2341 = vmatprep.subr.bf16.mxu0 0
        %2342 = vmatpush1.bf16.msra.mxu0 0
        %2343 = vmatprep.mubr.bf16.mxu0 0
        %2344 = vmatmul.mubr.bf16.gmra.mrb[0].mxu0 %v1290
        %v2345 = vpop.f32.mrb[0].mxu0
        %v2346 = vadd.f32 %v1399, %v2345
        %v2347 = vpop.f32.mrb[0].mxu0
        %v2348 = vadd.f32 %v1403, %v2347
        %v2349 = vpop.f32.mrb[0].mxu0
        %v2350 = vadd.f32 %v1399, %v2349
        %v2351 = vpop.f32.mrb[0].mxu0
        %v2352 = vadd.f32 %v1403, %v2351
        %2353 = vmatprep.mubr.bf16.mxu0 0
        %2354 = vmatmul.mubr.bf16.gmra.mrb[0].mxu0 %v1291
        %v2355 = vpop.f32.mrb[0].mxu0
        %v2356 = vadd.f32 %v1399, %v2355
        %v2357 = vpop.f32.mrb[0].mxu0
        %v2358 = vadd.f32 %v1403, %v2357
        %v2359 = vpop.f32.mrb[0].mxu0
        %v2360 = vadd.f32 %v1399, %v2359
        %v2361 = vpop.f32.mrb[0].mxu0
        %v2362 = vadd.f32 %v1403, %v2361
        %2363 = vmatprep.mubr.bf16.mxu0 0
        %2364 = vmatmul.mubr.bf16.gmra.mrb[0].mxu0 %v1292
        %v2365 = vpop.f32.mrb[0].mxu0
        %v2366 = vadd.f32 %v1399, %v2365
        %v2367 = vpop.f32.mrb[0].mxu0
        %v2368 = vadd.f32 %v1403, %v2367
        %v2369 = vpop.f32.mrb[0].mxu0
        %v2370 = vadd.f32 %v1399, %v2369
        %v2371 = vpop.f32.mrb[0].mxu0
        %v2372 = vadd.f32 %v1403, %v2371
        %2373 = vmatprep.mubr.bf16.mxu0 0
        %2374 = vmatmul.mubr.bf16.gmra.mrb[0].mxu0 %v1293
        %v2375 = vpop.f32.mrb[0].mxu0
        %v2376 = vadd.f32 %v1399, %v2375
        %v2377 = vpop.f32.mrb[0].mxu0
        %v2378 = vadd.f32 %v1403, %v2377
        %v2379 = vpop.f32.mrb[0].mxu0
        %v2380 = vadd.f32 %v1399, %v2379
        %v2381 = vpop.f32.mrb[0].mxu0
        %v2382 = vadd.f32 %v1403, %v2381
        %2383 = vmatprep.mubr.bf16.mxu0 0
        %2384 = vmatmul.mubr.bf16.gmra.mrb[0].mxu0 %v1294
        %v2385 = vpop.f32.mrb[0].mxu0
        %v2386 = vadd.f32 %v1399, %v2385
        %v2387 = vpop.f32.mrb[0].mxu0
        %v2388 = vadd.f32 %v1403, %v2387
        %v2389 = vpop.f32.mrb[0].mxu0
        %v2390 = vadd.f32 %v1399, %v2389
        %v2391 = vpop.f32.mrb[0].mxu0
        %v2392 = vadd.f32 %v1403, %v2391
        %2393 = vmatprep.mubr.bf16.mxu0 0
        %2394 = vmatmul.mubr.bf16.gmra.mrb[0].mxu0 %v1295
        %v2395 = vpop.f32.mrb[0].mxu0
        %v2396 = vadd.f32 %v1399, %v2395
        %v2397 = vpop.f32.mrb[0].mxu0
        %v2398 = vadd.f32 %v1403, %v2397
        %v2399 = vpop.f32.mrb[0].mxu0
        %v2400 = vadd.f32 %v1399, %v2399
        %v2401 = vpop.f32.mrb[0].mxu0
        %v2402 = vadd.f32 %v1403, %v2401
        %2403 = vmatprep.mubr.bf16.mxu0 0
        %2404 = vmatmul.mubr.bf16.gmra.mrb[0].mxu0 %v1296
        %v2405 = vpop.f32.mrb[0].mxu0
        %v2406 = vadd.f32 %v1399, %v2405
        %v2407 = vpop.f32.mrb[0].mxu0
        %v2408 = vadd.f32 %v1403, %v2407
        %v2409 = vpop.f32.mrb[0].mxu0
        %v2410 = vadd.f32 %v1399, %v2409
        %v2411 = vpop.f32.mrb[0].mxu0
        %v2412 = vadd.f32 %v1403, %v2411
        %2413 = vmatprep.mubr.bf16.mxu0 0
        %2414 = vmatmul.mubr.bf16.gmra.mrb[0].mxu0 %v1297
        %v2415 = vpop.f32.mrb[0].mxu0
        %v2416 = vadd.f32 %v1399, %v2415
        %v2417 = vpop.f32.mrb[0].mxu0
        %v2418 = vadd.f32 %v1403, %v2417
        %v2419 = vpop.f32.mrb[0].mxu0
        %v2420 = vadd.f32 %v1399, %v2419
        %v2421 = vpop.f32.mrb[0].mxu0
        %v2422 = vadd.f32 %v1403, %v2421
        %2423 = vmatprep.mubr.bf16.mxu0 0
        %2424 = vmatmul.mubr.bf16.gmra.mrb[0].mxu0 %v1298
        %v2425 = vpop.f32.mrb[0].mxu0
        %v2426 = vadd.f32 %v1399, %v2425
        %v2427 = vpop.f32.mrb[0].mxu0
        %v2428 = vadd.f32 %v1403, %v2427
        %v2429 = vpop.f32.mrb[0].mxu0
        %v2430 = vadd.f32 %v1399, %v2429
        %v2431 = vpop.f32.mrb[0].mxu0
        %v2432 = vadd.f32 %v1403, %v2431
        %2433 = vmatprep.mubr.bf16.mxu0 0
        %2434 = vmatmul.mubr.bf16.gmra.mrb[0].mxu0 %v1299
        %v2435 = vpop.f32.mrb[0].mxu0
        %v2436 = vadd.f32 %v1399, %v2435
        %v2437 = vpop.f32.mrb[0].mxu0
        %v2438 = vadd.f32 %v1403, %v2437
        %v2439 = vpop.f32.mrb[0].mxu0
        %v2440 = vadd.f32 %v1399, %v2439
        %v2441 = vpop.f32.mrb[0].mxu0
        %v2442 = vadd.f32 %v1403, %v2441
        %2443 = vmatprep.mubr.bf16.mxu0 0
        %2444 = vmatmul.mubr.bf16.gmra.mrb[0].mxu0 %v1300
        %v2445 = vpop.f32.mrb[0].mxu0
        %v2446 = vadd.f32 %v1399, %v2445
        %v2447 = vpop.f32.mrb[0].mxu0
        %v2448 = vadd.f32 %v1403, %v2447
        %v2449 = vpop.f32.mrb[0].mxu0
        %v2450 = vadd.f32 %v1399, %v2449
        %v2451 = vpop.f32.mrb[0].mxu0
        %v2452 = vadd.f32 %v1403, %v2451
        %2453 = vmatprep.mubr.bf16.mxu0 0
        %2454 = vmatmul.mubr.bf16.gmra.mrb[0].mxu0 %v1301
        %v2455 = vpop.f32.mrb[0].mxu0
        %v2456 = vadd.f32 %v1399, %v2455
        %v2457 = vpop.f32.mrb[0].mxu0
        %v2458 = vadd.f32 %v1403, %v2457
        %v2459 = vpop.f32.mrb[0].mxu0
        %v2460 = vadd.f32 %v1399, %v2459
        %v2461 = vpop.f32.mrb[0].mxu0
        %v2462 = vadd.f32 %v1403, %v2461
        %2463 = vmatprep.mubr.bf16.mxu0 0
        %2464 = vmatmul.mubr.bf16.gmra.mrb[0].mxu0 %v1302
        %v2465 = vpop.f32.mrb[0].mxu0
        %v2466 = vadd.f32 %v1399, %v2465
        %v2467 = vpop.f32.mrb[0].mxu0
        %v2468 = vadd.f32 %v1403, %v2467
        %v2469 = vpop.f32.mrb[0].mxu0
        %v2470 = vadd.f32 %v1399, %v2469
        %v2471 = vpop.f32.mrb[0].mxu0
        %v2472 = vadd.f32 %v1403, %v2471
        %2473 = vmatprep.mubr.bf16.mxu0 0
        %2474 = vmatmul.mubr.bf16.gmra.mrb[0].mxu0 %v1303
        %v2475 = vpop.f32.mrb[0].mxu0
        %v2476 = vadd.f32 %v1399, %v2475
        %v2477 = vpop.f32.mrb[0].mxu0
        %v2478 = vadd.f32 %v1403, %v2477
        %v2479 = vpop.f32.mrb[0].mxu0
        %v2480 = vadd.f32 %v1399, %v2479
        %v2481 = vpop.f32.mrb[0].mxu0
        %v2482 = vadd.f32 %v1403, %v2481
        %2483 = vmatprep.mubr.bf16.mxu0 0
        %2484 = vmatmul.mubr.bf16.gmra.mrb[0].mxu0 %v1304
        %v2485 = vpop.f32.mrb[0].mxu0
        %v2486 = vadd.f32 %v1399, %v2485
        %v2487 = vpop.f32.mrb[0].mxu0
        %v2488 = vadd.f32 %v1403, %v2487
        %v2489 = vpop.f32.mrb[0].mxu0
        %v2490 = vadd.f32 %v1399, %v2489
        %v2491 = vpop.f32.mrb[0].mxu0
        %v2492 = vadd.f32 %v1403, %v2491
        %2493 = vmatprep.mubr.bf16.mxu0 0
        %2494 = vmatmul.mubr.bf16.gmra.mrb[0].mxu0 %v1305
        %v2495 = vpop.f32.mrb[0].mxu0
        %v2496 = vadd.f32 %v1399, %v2495
        %v2497 = vpop.f32.mrb[0].mxu0
        %v2498 = vadd.f32 %v1403, %v2497
        %v2499 = vpop.f32.mrb[0].mxu0
        %v2500 = vadd.f32 %v1399, %v2499
        %v2501 = vpop.f32.mrb[0].mxu0
        %v2502 = vadd.f32 %v1403, %v2501
        %2503 = vdwg.mxu0
        %v2504 = vmax.f32 %v1767, 0.0
        %v2505 = vmax.f32 %v1769, 0.0
        %v2506 = vmax.f32 %v1960, 0.0
        %v2507 = vmax.f32 %v1962, 0.0
        %v2508 = vmax.f32 %v2153, 0.0
        %v2509 = vmax.f32 %v2155, 0.0
        %v2510 = vmax.f32 %v2346, 0.0
        %v2511 = vmax.f32 %v2348, 0.0
        %v2512 = vmax.f32 %v1771, 0.0
        %v2513 = vmax.f32 %v1773, 0.0
        %v2514 = vmax.f32 %v1964, 0.0
        %v2515 = vmax.f32 %v1966, 0.0
        %v2516 = vmax.f32 %v2157, 0.0
        %v2517 = vmax.f32 %v2159, 0.0
        %v2518 = vmax.f32 %v2350, 0.0
        %v2519 = vmax.f32 %v2352, 0.0
        %v2520 = vmax.f32 %v1777, 0.0
        %v2521 = vmax.f32 %v1779, 0.0
        %v2522 = vmax.f32 %v1970, 0.0
        %v2523 = vmax.f32 %v1972, 0.0
        %v2524 = vmax.f32 %v2163, 0.0
        %v2525 = vmax.f32 %v2165, 0.0
        %v2526 = vmax.f32 %v2356, 0.0
        %v2527 = vmax.f32 %v2358, 0.0
        %v2528 = vmax.f32 %v1781, 0.0
        %v2529 = vmax.f32 %v1783, 0.0
        %v2530 = vmax.f32 %v1974, 0.0
        %v2531 = vmax.f32 %v1976, 0.0
        %v2532 = vmax.f32 %v2167, 0.0
        %v2533 = vmax.f32 %v2169, 0.0
        %v2534 = vmax.f32 %v2360, 0.0
        %v2535 = vmax.f32 %v2362, 0.0
        %v2536 = vmax.f32 %v1787, 0.0
        %v2537 = vmax.f32 %v1789, 0.0
        %v2538 = vmax.f32 %v1980, 0.0
        %v2539 = vmax.f32 %v1982, 0.0
        %v2540 = vmax.f32 %v2173, 0.0
        %v2541 = vmax.f32 %v2175, 0.0
        %v2542 = vmax.f32 %v2366, 0.0
        %v2543 = vmax.f32 %v2368, 0.0
        %v2544 = vmax.f32 %v1791, 0.0
        %v2545 = vmax.f32 %v1793, 0.0
        %v2546 = vmax.f32 %v1984, 0.0
        %v2547 = vmax.f32 %v1986, 0.0
        %v2548 = vmax.f32 %v2177, 0.0
        %v2549 = vmax.f32 %v2179, 0.0
        %v2550 = vmax.f32 %v2370, 0.0
        %v2551 = vmax.f32 %v2372, 0.0
        %v2552 = vmax.f32 %v1797, 0.0
        %v2553 = vmax.f32 %v1799, 0.0
        %v2554 = vmax.f32 %v1990, 0.0
        %v2555 = vmax.f32 %v1992, 0.0
        %v2556 = vmax.f32 %v2183, 0.0
        %v2557 = vmax.f32 %v2185, 0.0
        %v2558 = vmax.f32 %v2376, 0.0
        %v2559 = vmax.f32 %v2378, 0.0
        %v2560 = vmax.f32 %v1801, 0.0
        %v2561 = vmax.f32 %v1803, 0.0
        %v2562 = vmax.f32 %v1994, 0.0
        %v2563 = vmax.f32 %v1996, 0.0
        %v2564 = vmax.f32 %v2187, 0.0
        %v2565 = vmax.f32 %v2189, 0.0
        %v2566 = vmax.f32 %v2380, 0.0
        %v2567 = vmax.f32 %v2382, 0.0
        %v2568 = vmax.f32 %v1807, 0.0
        %v2569 = vmax.f32 %v1809, 0.0
        %v2570 = vmax.f32 %v2000, 0.0
        %v2571 = vmax.f32 %v2002, 0.0
        %v2572 = vmax.f32 %v2193, 0.0
        %v2573 = vmax.f32 %v2195, 0.0
        %v2574 = vmax.f32 %v2386, 0.0
        %v2575 = vmax.f32 %v2388, 0.0
        %v2576 = vmax.f32 %v1811, 0.0
        %v2577 = vmax.f32 %v1813, 0.0
        %v2578 = vmax.f32 %v2004, 0.0
        %v2579 = vmax.f32 %v2006, 0.0
        %v2580 = vmax.f32 %v2197, 0.0
        %v2581 = vmax.f32 %v2199, 0.0
        %v2582 = vmax.f32 %v2390, 0.0
        %v2583 = vmax.f32 %v2392, 0.0
        %v2584 = vmax.f32 %v1817, 0.0
        %v2585 = vmax.f32 %v1819, 0.0
        %v2586 = vmax.f32 %v2010, 0.0
        %v2587 = vmax.f32 %v2012, 0.0
        %v2588 = vmax.f32 %v2203, 0.0
        %v2589 = vmax.f32 %v2205, 0.0
        %v2590 = vmax.f32 %v2396, 0.0
        %v2591 = vmax.f32 %v2398, 0.0
        %v2592 = vmax.f32 %v1821, 0.0
        %v2593 = vmax.f32 %v1823, 0.0
        %v2594 = vmax.f32 %v2014, 0.0
        %v2595 = vmax.f32 %v2016, 0.0
        %v2596 = vmax.f32 %v2207, 0.0
        %v2597 = vmax.f32 %v2209, 0.0
        %v2598 = vmax.f32 %v2400, 0.0
        %v2599 = vmax.f32 %v2402, 0.0
        %v2600 = vmax.f32 %v1827, 0.0
        %v2601 = vmax.f32 %v1829, 0.0
        %v2602 = vmax.f32 %v2020, 0.0
        %v2603 = vmax.f32 %v2022, 0.0
        %v2604 = vmax.f32 %v2213, 0.0
        %v2605 = vmax.f32 %v2215, 0.0
        %v2606 = vmax.f32 %v2406, 0.0
        %v2607 = vmax.f32 %v2408, 0.0
        %v2608 = vmax.f32 %v1831, 0.0
        %v2609 = vmax.f32 %v1833, 0.0
        %v2610 = vmax.f32 %v2024, 0.0
        %v2611 = vmax.f32 %v2026, 0.0
        %v2612 = vmax.f32 %v2217, 0.0
        %v2613 = vmax.f32 %v2219, 0.0
        %v2614 = vmax.f32 %v2410, 0.0
        %v2615 = vmax.f32 %v2412, 0.0
        %v2616 = vmax.f32 %v1837, 0.0
        %v2617 = vmax.f32 %v1839, 0.0
        %v2618 = vmax.f32 %v2030, 0.0
        %v2619 = vmax.f32 %v2032, 0.0
        %v2620 = vmax.f32 %v2223, 0.0
        %v2621 = vmax.f32 %v2225, 0.0
        %v2622 = vmax.f32 %v2416, 0.0
        %v2623 = vmax.f32 %v2418, 0.0
        %v2624 = vmax.f32 %v1841, 0.0
        %v2625 = vmax.f32 %v1843, 0.0
        %v2626 = vmax.f32 %v2034, 0.0
        %v2627 = vmax.f32 %v2036, 0.0
        %v2628 = vmax.f32 %v2227, 0.0
        %v2629 = vmax.f32 %v2229, 0.0
        %v2630 = vmax.f32 %v2420, 0.0
        %v2631 = vmax.f32 %v2422, 0.0
        %v2632 = vmax.f32 %v1847, 0.0
        %v2633 = vmax.f32 %v1849, 0.0
        %v2634 = vmax.f32 %v2040, 0.0
        %v2635 = vmax.f32 %v2042, 0.0
        %v2636 = vmax.f32 %v2233, 0.0
        %v2637 = vmax.f32 %v2235, 0.0
        %v2638 = vmax.f32 %v2426, 0.0
        %v2639 = vmax.f32 %v2428, 0.0
        %v2640 = vmax.f32 %v1851, 0.0
        %v2641 = vmax.f32 %v1853, 0.0
        %v2642 = vmax.f32 %v2044, 0.0
        %v2643 = vmax.f32 %v2046, 0.0
        %v2644 = vmax.f32 %v2237, 0.0
        %v2645 = vmax.f32 %v2239, 0.0
        %v2646 = vmax.f32 %v2430, 0.0
        %v2647 = vmax.f32 %v2432, 0.0
        %v2648 = vmax.f32 %v1857, 0.0
        %v2649 = vmax.f32 %v1859, 0.0
        %v2650 = vmax.f32 %v2050, 0.0
        %v2651 = vmax.f32 %v2052, 0.0
        %v2652 = vmax.f32 %v2243, 0.0
        %v2653 = vmax.f32 %v2245, 0.0
        %v2654 = vmax.f32 %v2436, 0.0
        %v2655 = vmax.f32 %v2438, 0.0
        %v2656 = vmax.f32 %v1861, 0.0
        %v2657 = vmax.f32 %v1863, 0.0
        %v2658 = vmax.f32 %v2054, 0.0
        %v2659 = vmax.f32 %v2056, 0.0
        %v2660 = vmax.f32 %v2247, 0.0
        %v2661 = vmax.f32 %v2249, 0.0
        %v2662 = vmax.f32 %v2440, 0.0
        %v2663 = vmax.f32 %v2442, 0.0
        %v2664 = vmax.f32 %v1867, 0.0
        %v2665 = vmax.f32 %v1869, 0.0
        %v2666 = vmax.f32 %v2060, 0.0
        %v2667 = vmax.f32 %v2062, 0.0
        %v2668 = vmax.f32 %v2253, 0.0
        %v2669 = vmax.f32 %v2255, 0.0
        %v2670 = vmax.f32 %v2446, 0.0
        %v2671 = vmax.f32 %v2448, 0.0
        %v2672 = vmax.f32 %v1871, 0.0
        %v2673 = vmax.f32 %v1873, 0.0
        %v2674 = vmax.f32 %v2064, 0.0
        %v2675 = vmax.f32 %v2066, 0.0
        %v2676 = vmax.f32 %v2257, 0.0
        %v2677 = vmax.f32 %v2259, 0.0
        %v2678 = vmax.f32 %v2450, 0.0
        %v2679 = vmax.f32 %v2452, 0.0
        %v2680 = vmax.f32 %v1877, 0.0
        %v2681 = vmax.f32 %v1879, 0.0
        %v2682 = vmax.f32 %v2070, 0.0
        %v2683 = vmax.f32 %v2072, 0.0
        %v2684 = vmax.f32 %v2263, 0.0
        %v2685 = vmax.f32 %v2265, 0.0
        %v2686 = vmax.f32 %v2456, 0.0
        %v2687 = vmax.f32 %v2458, 0.0
        %v2688 = vmax.f32 %v1881, 0.0
        %v2689 = vmax.f32 %v1883, 0.0
        %v2690 = vmax.f32 %v2074, 0.0
        %v2691 = vmax.f32 %v2076, 0.0
        %v2692 = vmax.f32 %v2267, 0.0
        %v2693 = vmax.f32 %v2269, 0.0
        %v2694 = vmax.f32 %v2460, 0.0
        %v2695 = vmax.f32 %v2462, 0.0
        %v2696 = vmax.f32 %v1887, 0.0
        %v2697 = vmax.f32 %v1889, 0.0
        %v2698 = vmax.f32 %v2080, 0.0
        %v2699 = vmax.f32 %v2082, 0.0
        %v2700 = vmax.f32 %v2273, 0.0
        %v2701 = vmax.f32 %v2275, 0.0
        %v2702 = vmax.f32 %v2466, 0.0
        %v2703 = vmax.f32 %v2468, 0.0
        %v2704 = vmax.f32 %v1891, 0.0
        %v2705 = vmax.f32 %v1893, 0.0
        %v2706 = vmax.f32 %v2084, 0.0
        %v2707 = vmax.f32 %v2086, 0.0
        %v2708 = vmax.f32 %v2277, 0.0
        %v2709 = vmax.f32 %v2279, 0.0
        %v2710 = vmax.f32 %v2470, 0.0
        %v2711 = vmax.f32 %v2472, 0.0
        %v2712 = vmax.f32 %v1897, 0.0
        %v2713 = vmax.f32 %v1899, 0.0
        %v2714 = vmax.f32 %v2090, 0.0
        %v2715 = vmax.f32 %v2092, 0.0
        %v2716 = vmax.f32 %v2283, 0.0
        %v2717 = vmax.f32 %v2285, 0.0
        %v2718 = vmax.f32 %v2476, 0.0
        %v2719 = vmax.f32 %v2478, 0.0
        %v2720 = vmax.f32 %v1901, 0.0
        %v2721 = vmax.f32 %v1903, 0.0
        %v2722 = vmax.f32 %v2094, 0.0
        %v2723 = vmax.f32 %v2096, 0.0
        %v2724 = vmax.f32 %v2287, 0.0
        %v2725 = vmax.f32 %v2289, 0.0
        %v2726 = vmax.f32 %v2480, 0.0
        %v2727 = vmax.f32 %v2482, 0.0
        %v2728 = vmax.f32 %v1907, 0.0
        %v2729 = vmax.f32 %v1909, 0.0
        %v2730 = vmax.f32 %v2100, 0.0
        %v2731 = vmax.f32 %v2102, 0.0
        %v2732 = vmax.f32 %v2293, 0.0
        %v2733 = vmax.f32 %v2295, 0.0
        %v2734 = vmax.f32 %v2486, 0.0
        %v2735 = vmax.f32 %v2488, 0.0
        %v2736 = vmax.f32 %v1911, 0.0
        %v2737 = vmax.f32 %v1913, 0.0
        %v2738 = vmax.f32 %v2104, 0.0
        %v2739 = vmax.f32 %v2106, 0.0
        %v2740 = vmax.f32 %v2297, 0.0
        %v2741 = vmax.f32 %v2299, 0.0
        %v2742 = vmax.f32 %v2490, 0.0
        %v2743 = vmax.f32 %v2492, 0.0
        %v2744 = vmax.f32 %v1917, 0.0
        %v2745 = vmax.f32 %v1919, 0.0
        %v2746 = vmax.f32 %v2110, 0.0
        %v2747 = vmax.f32 %v2112, 0.0
        %v2748 = vmax.f32 %v2303, 0.0
        %v2749 = vmax.f32 %v2305, 0.0
        %v2750 = vmax.f32 %v2496, 0.0
        %v2751 = vmax.f32 %v2498, 0.0
        %v2752 = vmax.f32 %v1921, 0.0
        %v2753 = vmax.f32 %v1923, 0.0
        %v2754 = vmax.f32 %v2114, 0.0
        %v2755 = vmax.f32 %v2116, 0.0
        %v2756 = vmax.f32 %v2307, 0.0
        %v2757 = vmax.f32 %v2309, 0.0
        %v2758 = vmax.f32 %v2500, 0.0
        %v2759 = vmax.f32 %v2502, 0.0
        %v2760 = vmax.f32 %v2504, %v2512
        %v2761 = vmax.f32 %v2760, %v2520
        %v2762 = vmax.f32 %v2761, %v2528
        %v2763 = vmax.f32 %v2762, %v2536
        %v2764 = vmax.f32 %v2763, %v2544
        %v2765 = vmax.f32 %v2764, %v2552
        %v2766 = vmax.f32 %v2765, %v2560
        %v2767 = vmax.f32 %v2766, %v2568
        %v2768 = vmax.f32 %v2767, %v2576
        %v2769 = vmax.f32 %v2768, %v2584
        %v2770 = vmax.f32 %v2769, %v2592
        %v2771 = vmax.f32 %v2770, %v2600
        %v2772 = vmax.f32 %v2771, %v2608
        %v2773 = vmax.f32 %v2772, %v2616
        %v2774 = vmax.f32 %v2773, %v2624
        %v2775 = vmax.f32 %v2774, %v2632
        %v2776 = vmax.f32 %v2775, %v2640
        %v2777 = vmax.f32 %v2776, %v2648
        %v2778 = vmax.f32 %v2777, %v2656
        %v2779 = vmax.f32 %v2778, %v2664
        %v2780 = vmax.f32 %v2779, %v2672
        %v2781 = vmax.f32 %v2780, %v2680
        %v2782 = vmax.f32 %v2781, %v2688
        %v2783 = vmax.f32 %v2782, %v2696
        %v2784 = vmax.f32 %v2783, %v2704
        %v2785 = vmax.f32 %v2784, %v2712
        %v2786 = vmax.f32 %v2785, %v2720
        %v2787 = vmax.f32 %v2786, %v2728
        %v2788 = vmax.f32 %v2787, %v2736
        %v2789 = vmax.f32 %v2788, %v2744
        %v2790 = vmax.f32 %v2789, %v2752
        %v2791 = vrot.slane %v2790, 4
        %v2792 = vmax.f32 %v2790, %v2791
        %v2793 = vrot.slane %v2792, 2
        %v2794 = vmax.f32 %v2792, %v2793
        %v2795 = vrot.slane %v2794, 1
        %v2796 = vmax.f32 %v2794, %v2795
        %v2797 = vmax.f32 %v2505, %v2513
        %v2798 = vmax.f32 %v2797, %v2521
        %v2799 = vmax.f32 %v2798, %v2529
        %v2800 = vmax.f32 %v2799, %v2537
        %v2801 = vmax.f32 %v2800, %v2545
        %v2802 = vmax.f32 %v2801, %v2553
        %v2803 = vmax.f32 %v2802, %v2561
        %v2804 = vmax.f32 %v2803, %v2569
        %v2805 = vmax.f32 %v2804, %v2577
        %v2806 = vmax.f32 %v2805, %v2585
        %v2807 = vmax.f32 %v2806, %v2593
        %v2808 = vmax.f32 %v2807, %v2601
        %v2809 = vmax.f32 %v2808, %v2609
        %v2810 = vmax.f32 %v2809, %v2617
        %v2811 = vmax.f32 %v2810, %v2625
        %v2812 = vmax.f32 %v2811, %v2633
        %v2813 = vmax.f32 %v2812, %v2641
        %v2814 = vmax.f32 %v2813, %v2649
        %v2815 = vmax.f32 %v2814, %v2657
        %v2816 = vmax.f32 %v2815, %v2665
        %v2817 = vmax.f32 %v2816, %v2673
        %v2818 = vmax.f32 %v2817, %v2681
        %v2819 = vmax.f32 %v2818, %v2689
        %v2820 = vmax.f32 %v2819, %v2697
        %v2821 = vmax.f32 %v2820, %v2705
        %v2822 = vmax.f32 %v2821, %v2713
        %v2823 = vmax.f32 %v2822, %v2721
        %v2824 = vmax.f32 %v2823, %v2729
        %v2825 = vmax.f32 %v2824, %v2737
        %v2826 = vmax.f32 %v2825, %v2745
        %v2827 = vmax.f32 %v2826, %v2753
        %v2828 = vrot.slane %v2827, 4
        %v2829 = vmax.f32 %v2827, %v2828
        %v2830 = vrot.slane %v2829, 2
        %v2831 = vmax.f32 %v2829, %v2830
        %v2832 = vrot.slane %v2831, 1
        %v2833 = vmax.f32 %v2831, %v2832
        %v2834 = vmax.f32 %v2506, %v2514
        %v2835 = vmax.f32 %v2834, %v2522
        %v2836 = vmax.f32 %v2835, %v2530
        %v2837 = vmax.f32 %v2836, %v2538
        %v2838 = vmax.f32 %v2837, %v2546
        %v2839 = vmax.f32 %v2838, %v2554
        %v2840 = vmax.f32 %v2839, %v2562
        %v2841 = vmax.f32 %v2840, %v2570
        %v2842 = vmax.f32 %v2841, %v2578
        %v2843 = vmax.f32 %v2842, %v2586
        %v2844 = vmax.f32 %v2843, %v2594
        %v2845 = vmax.f32 %v2844, %v2602
        %v2846 = vmax.f32 %v2845, %v2610
        %v2847 = vmax.f32 %v2846, %v2618
        %v2848 = vmax.f32 %v2847, %v2626
        %v2849 = vmax.f32 %v2848, %v2634
        %v2850 = vmax.f32 %v2849, %v2642
        %v2851 = vmax.f32 %v2850, %v2650
        %v2852 = vmax.f32 %v2851, %v2658
        %v2853 = vmax.f32 %v2852, %v2666
        %v2854 = vmax.f32 %v2853, %v2674
        %v2855 = vmax.f32 %v2854, %v2682
        %v2856 = vmax.f32 %v2855, %v2690
        %v2857 = vmax.f32 %v2856, %v2698
        %v2858 = vmax.f32 %v2857, %v2706
        %v2859 = vmax.f32 %v2858, %v2714
        %v2860 = vmax.f32 %v2859, %v2722
        %v2861 = vmax.f32 %v2860, %v2730
        %v2862 = vmax.f32 %v2861, %v2738
        %v2863 = vmax.f32 %v2862, %v2746
        %v2864 = vmax.f32 %v2863, %v2754
        %v2865 = vrot.slane %v2864, 4
        %v2866 = vmax.f32 %v2864, %v2865
        %v2867 = vrot.slane %v2866, 2
        %v2868 = vmax.f32 %v2866, %v2867
        %v2869 = vrot.slane %v2868, 1
        %v2870 = vmax.f32 %v2868, %v2869
        %v2871 = vmax.f32 %v2507, %v2515
        %v2872 = vmax.f32 %v2871, %v2523
        %v2873 = vmax.f32 %v2872, %v2531
        %v2874 = vmax.f32 %v2873, %v2539
        %v2875 = vmax.f32 %v2874, %v2547
        %v2876 = vmax.f32 %v2875, %v2555
        %v2877 = vmax.f32 %v2876, %v2563
        %v2878 = vmax.f32 %v2877, %v2571
        %v2879 = vmax.f32 %v2878, %v2579
        %v2880 = vmax.f32 %v2879, %v2587
        %v2881 = vmax.f32 %v2880, %v2595
        %v2882 = vmax.f32 %v2881, %v2603
        %v2883 = vmax.f32 %v2882, %v2611
        %v2884 = vmax.f32 %v2883, %v2619
        %v2885 = vmax.f32 %v2884, %v2627
        %v2886 = vmax.f32 %v2885, %v2635
        %v2887 = vmax.f32 %v2886, %v2643
        %v2888 = vmax.f32 %v2887, %v2651
        %v2889 = vmax.f32 %v2888, %v2659
        %v2890 = vmax.f32 %v2889, %v2667
        %v2891 = vmax.f32 %v2890, %v2675
        %v2892 = vmax.f32 %v2891, %v2683
        %v2893 = vmax.f32 %v2892, %v2691
        %v2894 = vmax.f32 %v2893, %v2699
        %v2895 = vmax.f32 %v2894, %v2707
        %v2896 = vmax.f32 %v2895, %v2715
        %v2897 = vmax.f32 %v2896, %v2723
        %v2898 = vmax.f32 %v2897, %v2731
        %v2899 = vmax.f32 %v2898, %v2739
        %v2900 = vmax.f32 %v2899, %v2747
        %v2901 = vmax.f32 %v2900, %v2755
        %v2902 = vrot.slane %v2901, 4
        %v2903 = vmax.f32 %v2901, %v2902
        %v2904 = vrot.slane %v2903, 2
        %v2905 = vmax.f32 %v2903, %v2904
        %v2906 = vrot.slane %v2905, 1
        %v2907 = vmax.f32 %v2905, %v2906
        %v2908 = vmax.f32 %v2508, %v2516
        %v2909 = vmax.f32 %v2908, %v2524
        %v2910 = vmax.f32 %v2909, %v2532
        %v2911 = vmax.f32 %v2910, %v2540
        %v2912 = vmax.f32 %v2911, %v2548
        %v2913 = vmax.f32 %v2912, %v2556
        %v2914 = vmax.f32 %v2913, %v2564
        %v2915 = vmax.f32 %v2914, %v2572
        %v2916 = vmax.f32 %v2915, %v2580
        %v2917 = vmax.f32 %v2916, %v2588
        %v2918 = vmax.f32 %v2917, %v2596
        %v2919 = vmax.f32 %v2918, %v2604
        %v2920 = vmax.f32 %v2919, %v2612
        %v2921 = vmax.f32 %v2920, %v2620
        %v2922 = vmax.f32 %v2921, %v2628
        %v2923 = vmax.f32 %v2922, %v2636
        %v2924 = vmax.f32 %v2923, %v2644
        %v2925 = vmax.f32 %v2924, %v2652
        %v2926 = vmax.f32 %v2925, %v2660
        %v2927 = vmax.f32 %v2926, %v2668
        %v2928 = vmax.f32 %v2927, %v2676
        %v2929 = vmax.f32 %v2928, %v2684
        %v2930 = vmax.f32 %v2929, %v2692
        %v2931 = vmax.f32 %v2930, %v2700
        %v2932 = vmax.f32 %v2931, %v2708
        %v2933 = vmax.f32 %v2932, %v2716
        %v2934 = vmax.f32 %v2933, %v2724
        %v2935 = vmax.f32 %v2934, %v2732
        %v2936 = vmax.f32 %v2935, %v2740
        %v2937 = vmax.f32 %v2936, %v2748
        %v2938 = vmax.f32 %v2937, %v2756
        %v2939 = vrot.slane %v2938, 4
        %v2940 = vmax.f32 %v2938, %v2939
        %v2941 = vrot.slane %v2940, 2
        %v2942 = vmax.f32 %v2940, %v2941
        %v2943 = vrot.slane %v2942, 1
        %v2944 = vmax.f32 %v2942, %v2943
        %v2945 = vmax.f32 %v2509, %v2517
        %v2946 = vmax.f32 %v2945, %v2525
        %v2947 = vmax.f32 %v2946, %v2533
        %v2948 = vmax.f32 %v2947, %v2541
        %v2949 = vmax.f32 %v2948, %v2549
        %v2950 = vmax.f32 %v2949, %v2557
        %v2951 = vmax.f32 %v2950, %v2565
        %v2952 = vmax.f32 %v2951, %v2573
        %v2953 = vmax.f32 %v2952, %v2581
        %v2954 = vmax.f32 %v2953, %v2589
        %v2955 = vmax.f32 %v2954, %v2597
        %v2956 = vmax.f32 %v2955, %v2605
        %v2957 = vmax.f32 %v2956, %v2613
        %v2958 = vmax.f32 %v2957, %v2621
        %v2959 = vmax.f32 %v2958, %v2629
        %v2960 = vmax.f32 %v2959, %v2637
        %v2961 = vmax.f32 %v2960, %v2645
        %v2962 = vmax.f32 %v2961, %v2653
        %v2963 = vmax.f32 %v2962, %v2661
        %v2964 = vmax.f32 %v2963, %v2669
        %v2965 = vmax.f32 %v2964, %v2677
        %v2966 = vmax.f32 %v2965, %v2685
        %v2967 = vmax.f32 %v2966, %v2693
        %v2968 = vmax.f32 %v2967, %v2701
        %v2969 = vmax.f32 %v2968, %v2709
        %v2970 = vmax.f32 %v2969, %v2717
        %v2971 = vmax.f32 %v2970, %v2725
        %v2972 = vmax.f32 %v2971, %v2733
        %v2973 = vmax.f32 %v2972, %v2741
        %v2974 = vmax.f32 %v2973, %v2749
        %v2975 = vmax.f32 %v2974, %v2757
        %v2976 = vrot.slane %v2975, 4
        %v2977 = vmax.f32 %v2975, %v2976
        %v2978 = vrot.slane %v2977, 2
        %v2979 = vmax.f32 %v2977, %v2978
        %v2980 = vrot.slane %v2979, 1
        %v2981 = vmax.f32 %v2979, %v2980
        %v2982 = vmax.f32 %v2510, %v2518
        %v2983 = vmax.f32 %v2982, %v2526
        %v2984 = vmax.f32 %v2983, %v2534
        %v2985 = vmax.f32 %v2984, %v2542
        %v2986 = vmax.f32 %v2985, %v2550
        %v2987 = vmax.f32 %v2986, %v2558
        %v2988 = vmax.f32 %v2987, %v2566
        %v2989 = vmax.f32 %v2988, %v2574
        %v2990 = vmax.f32 %v2989, %v2582
        %v2991 = vmax.f32 %v2990, %v2590
        %v2992 = vmax.f32 %v2991, %v2598
        %v2993 = vmax.f32 %v2992, %v2606
        %v2994 = vmax.f32 %v2993, %v2614
        %v2995 = vmax.f32 %v2994, %v2622
        %v2996 = vmax.f32 %v2995, %v2630
        %v2997 = vmax.f32 %v2996, %v2638
        %v2998 = vmax.f32 %v2997, %v2646
        %v2999 = vmax.f32 %v2998, %v2654
        %v3000 = vmax.f32 %v2999, %v2662
        %v3001 = vmax.f32 %v3000, %v2670
        %v3002 = vmax.f32 %v3001, %v2678
        %v3003 = vmax.f32 %v3002, %v2686
        %v3004 = vmax.f32 %v3003, %v2694
        %v3005 = vmax.f32 %v3004, %v2702
        %v3006 = vmax.f32 %v3005, %v2710
        %v3007 = vmax.f32 %v3006, %v2718
        %v3008 = vmax.f32 %v3007, %v2726
        %v3009 = vmax.f32 %v3008, %v2734
        %v3010 = vmax.f32 %v3009, %v2742
        %v3011 = vmax.f32 %v3010, %v2750
        %v3012 = vmax.f32 %v3011, %v2758
        %v3013 = vrot.slane %v3012, 4
        %v3014 = vmax.f32 %v3012, %v3013
        %v3015 = vrot.slane %v3014, 2
        %v3016 = vmax.f32 %v3014, %v3015
        %v3017 = vrot.slane %v3016, 1
        %v3018 = vmax.f32 %v3016, %v3017
        %v3019 = vmax.f32 %v2511, %v2519
        %v3020 = vmax.f32 %v3019, %v2527
        %v3021 = vmax.f32 %v3020, %v2535
        %v3022 = vmax.f32 %v3021, %v2543
        %v3023 = vmax.f32 %v3022, %v2551
        %v3024 = vmax.f32 %v3023, %v2559
        %v3025 = vmax.f32 %v3024, %v2567
        %v3026 = vmax.f32 %v3025, %v2575
        %v3027 = vmax.f32 %v3026, %v2583
        %v3028 = vmax.f32 %v3027, %v2591
        %v3029 = vmax.f32 %v3028, %v2599
        %v3030 = vmax.f32 %v3029, %v2607
        %v3031 = vmax.f32 %v3030, %v2615
        %v3032 = vmax.f32 %v3031, %v2623
        %v3033 = vmax.f32 %v3032, %v2631
        %v3034 = vmax.f32 %v3033, %v2639
        %v3035 = vmax.f32 %v3034, %v2647
        %v3036 = vmax.f32 %v3035, %v2655
        %v3037 = vmax.f32 %v3036, %v2663
        %v3038 = vmax.f32 %v3037, %v2671
        %v3039 = vmax.f32 %v3038, %v2679
        %v3040 = vmax.f32 %v3039, %v2687
        %v3041 = vmax.f32 %v3040, %v2695
        %v3042 = vmax.f32 %v3041, %v2703
        %v3043 = vmax.f32 %v3042, %v2711
        %v3044 = vmax.f32 %v3043, %v2719
        %v3045 = vmax.f32 %v3044, %v2727
        %v3046 = vmax.f32 %v3045, %v2735
        %v3047 = vmax.f32 %v3046, %v2743
        %v3048 = vmax.f32 %v3047, %v2751
        %v3049 = vmax.f32 %v3048, %v2759
        %v3050 = vrot.slane %v3049, 4
        %v3051 = vmax.f32 %v3049, %v3050
        %v3052 = vrot.slane %v3051, 2
        %v3053 = vmax.f32 %v3051, %v3052
        %v3054 = vrot.slane %v3053, 1
        %v3055 = vmax.f32 %v3053, %v3054
        %p3056 = scmp.eq.s32.totalorder %s34, 0
        // Predicated region
        $region81: #{tpu_custom_call.1} parent=71 // pred_check
          %p3057 = pneg %p3056
        $region82: #{tpu_custom_call.1} parent=71 // pred_check_branch
          %3059 = sbr.rel (%p3057) target = $region84
        $region83: #{tpu_custom_call.1} parent=71 // pred_region
          %v3068 = vcombine.low %v2796, %v2833
          %v3069 = vcombine.low %v2870, %v2907
          %v3070 = vcombine.low %v2944, %v2981
          %v3071 = vcombine.low %v3018, %v3055
          %v3073 = vunpack.c.l.s4 1966171168
          %v3074 = vunpack.c.0.s8 %v3073
          %v3075 = vlaneseq
          %v3076 = vshrl.u32 %v3075, 7
          %v3077 = vsub.s32 %v3074, %v3076
          %v3078 = vrot.slane %v3068, %v3077
          %v3080 = vunpack.c.l.s4 1966171168
          %v3081 = vunpack.c.0.s8 %v3080
          %v3082 = vlaneseq
          %v3083 = vshrl.u32 %v3082, 7
          %v3084 = vsub.s32 %v3081, %v3083
          %v3085 = vrot.slane %v3069, %v3084
          %v3087 = vunpack.c.l.s4 1966171168
          %v3088 = vunpack.c.0.s8 %v3087
          %v3089 = vlaneseq
          %v3090 = vshrl.u32 %v3089, 7
          %v3091 = vsub.s32 %v3088, %v3090
          %v3092 = vrot.slane %v3070, %v3091
          %v3094 = vunpack.c.l.s4 1966171168
          %v3095 = vunpack.c.0.s8 %v3094
          %v3096 = vlaneseq
          %v3097 = vshrl.u32 %v3096, 7
          %v3098 = vsub.s32 %v3095, %v3097
          %v3099 = vrot.slane %v3071, %v3098
          %v3100 = vcombine.low %v3078, %v3085
          %v3101 = vcombine.low %v3092, %v3099
          %v3103 = vunpack.c.l.s4 1966171168
          %v3104 = vunpack.c.0.s8 %v3103
          %v3105 = vlaneseq
          %v3106 = vshrl.u32 %v3105, 7
          %v3107 = vsub.s32 %v3104, %v3106
          %v3108 = vrot.slane %v3100, %v3107
          %v3110 = vunpack.c.l.s4 1966171168
          %v3111 = vunpack.c.0.s8 %v3110
          %v3112 = vlaneseq
          %v3113 = vshrl.u32 %v3112, 7
          %v3114 = vsub.s32 %v3111, %v3113
          %v3115 = vrot.slane %v3101, %v3114
          %v3116 = vcombine.low %v3108, %v3115
          %3118 = vst [vmem:[#allocation2] sm:$0xff] %v3116
        $region84: #{tpu_custom_call.1} parent=71 // pred_fallthru
          _
        %p3119 = scmp.gt.s32.totalorder %s34, 0
        // Predicated region
        $region85: #{tpu_custom_call.1} parent=71 // pred_check
          %p3120 = pneg %p3119
        $region86: #{tpu_custom_call.1} parent=71 // pred_check_branch
          %3122 = sbr.rel (%p3120) target = $region88
        $region87: #{tpu_custom_call.1} parent=71 // pred_region
          %v3123 = vld [vmem:[#allocation2] sm:$0xff]
          %v3132 = vcombine.low %v2796, %v2833
          %v3133 = vcombine.low %v2870, %v2907
          %v3134 = vcombine.low %v2944, %v2981
          %v3135 = vcombine.low %v3018, %v3055
          %v3137 = vunpack.c.l.s4 1966171168
          %v3138 = vunpack.c.0.s8 %v3137
          %v3139 = vlaneseq
          %v3140 = vshrl.u32 %v3139, 7
          %v3141 = vsub.s32 %v3138, %v3140
          %v3142 = vrot.slane %v3132, %v3141
          %v3144 = vunpack.c.l.s4 1966171168
          %v3145 = vunpack.c.0.s8 %v3144
          %v3146 = vlaneseq
          %v3147 = vshrl.u32 %v3146, 7
          %v3148 = vsub.s32 %v3145, %v3147
          %v3149 = vrot.slane %v3133, %v3148
          %v3151 = vunpack.c.l.s4 1966171168
          %v3152 = vunpack.c.0.s8 %v3151
          %v3153 = vlaneseq
          %v3154 = vshrl.u32 %v3153, 7
          %v3155 = vsub.s32 %v3152, %v3154
          %v3156 = vrot.slane %v3134, %v3155
          %v3158 = vunpack.c.l.s4 1966171168
          %v3159 = vunpack.c.0.s8 %v3158
          %v3160 = vlaneseq
          %v3161 = vshrl.u32 %v3160, 7
          %v3162 = vsub.s32 %v3159, %v3161
          %v3163 = vrot.slane %v3135, %v3162
          %v3164 = vcombine.low %v3142, %v3149
          %v3165 = vcombine.low %v3156, %v3163
          %v3167 = vunpack.c.l.s4 1966171168
          %v3168 = vunpack.c.0.s8 %v3167
          %v3169 = vlaneseq
          %v3170 = vshrl.u32 %v3169, 7
          %v3171 = vsub.s32 %v3168, %v3170
          %v3172 = vrot.slane %v3164, %v3171
          %v3174 = vunpack.c.l.s4 1966171168
          %v3175 = vunpack.c.0.s8 %v3174
          %v3176 = vlaneseq
          %v3177 = vshrl.u32 %v3176, 7
          %v3178 = vsub.s32 %v3175, %v3177
          %v3179 = vrot.slane %v3165, %v3178
          %v3180 = vcombine.low %v3172, %v3179
          %v3182 = vmax.f32 %v3123, %v3180
          %3183 = vst [vmem:[#allocation2] sm:$0xff] %v3182
        $region88: #{tpu_custom_call.1} parent=71 // pred_fallthru
          _
        // Predicated region
        $region89: #{tpu_custom_call.1} parent=71 // pred_check
          %p3184 = pneg %p3056
        $region90: #{tpu_custom_call.1} parent=71 // pred_check_branch
          %3186 = sbr.rel (%p3184) target = $region92
        $region91: #{tpu_custom_call.1} parent=71 // pred_region
          %v3187 = vld [vmem:[#allocation2] sm:$0xff]
          %v3189 = vlaneseq
          %v3190 = vshrl.u32 %v3189, 7
          %v3191 = vsub.s32 0, %v3190
          %v3192 = vrot.slane %v3187, %v3191
          %v3193 = vlaneseq
          %v3194 = vshrl.u32 %v3193, 7
          %v3195 = vsub.s32 1, %v3194
          %v3196 = vrot.slane %v3187, %v3195
          %v3197 = vlaneseq
          %v3198 = vshrl.u32 %v3197, 7
          %v3199 = vsub.s32 2, %v3198
          %v3200 = vrot.slane %v3187, %v3199
          %v3201 = vlaneseq
          %v3202 = vshrl.u32 %v3201, 7
          %v3203 = vsub.s32 3, %v3202
          %v3204 = vrot.slane %v3187, %v3203
          %v3205 = vlaneseq
          %v3206 = vshrl.u32 %v3205, 7
          %v3207 = vsub.s32 4, %v3206
          %v3208 = vrot.slane %v3187, %v3207
          %v3209 = vlaneseq
          %v3210 = vshrl.u32 %v3209, 7
          %v3211 = vsub.s32 5, %v3210
          %v3212 = vrot.slane %v3187, %v3211
          %v3213 = vlaneseq
          %v3214 = vshrl.u32 %v3213, 7
          %v3215 = vsub.s32 6, %v3214
          %v3216 = vrot.slane %v3187, %v3215
          %v3217 = vlaneseq
          %v3218 = vshrl.u32 %v3217, 7
          %v3219 = vsub.s32 7, %v3218
          %v3220 = vrot.slane %v3187, %v3219
          %v3229 = vpack.c.bf16 %v3192, %v3192
          %v3230 = vpack.c.bf16 %v3196, %v3196
          %v3231 = vpack.c.bf16 %v3200, %v3200
          %v3232 = vpack.c.bf16 %v3204, %v3204
          %v3233 = vpack.c.bf16 %v3208, %v3208
          %v3234 = vpack.c.bf16 %v3212, %v3212
          %v3235 = vpack.c.bf16 %v3216, %v3216
          %v3236 = vpack.c.bf16 %v3220, %v3220
          %v3237 = vld [vmem:[#allocation3] sm:$0xff]
          %v3238 = vld [vmem:[#allocation3 + $0x8] sm:$0xff]
          %v3239 = vld [vmem:[#allocation3 + $0x10] sm:$0xff]
          %v3240 = vld [vmem:[#allocation3 + $0x18] sm:$0xff]
          %v3241 = vld [vmem:[#allocation3 + $0x20] sm:$0xff]
          %v3242 = vld [vmem:[#allocation3 + $0x28] sm:$0xff]
          %v3243 = vld [vmem:[#allocation3 + $0x30] sm:$0xff]
          %v3244 = vld [vmem:[#allocation3 + $0x38] sm:$0xff]
          %v3245 = vld [vmem:[#allocation3 + $0x40] sm:$0xff]
          %v3246 = vld [vmem:[#allocation3 + $0x48] sm:$0xff]
          %v3247 = vld [vmem:[#allocation3 + $0x50] sm:$0xff]
          %v3248 = vld [vmem:[#allocation3 + $0x58] sm:$0xff]
          %v3249 = vld [vmem:[#allocation3 + $0x60] sm:$0xff]
          %v3250 = vld [vmem:[#allocation3 + $0x68] sm:$0xff]
          %v3251 = vld [vmem:[#allocation3 + $0x70] sm:$0xff]
          %v3252 = vld [vmem:[#allocation3 + $0x78] sm:$0xff]
          %v3253 = vld [vmem:[#allocation3 + $0x80] sm:$0xff]
          %v3254 = vld [vmem:[#allocation3 + $0x88] sm:$0xff]
          %v3255 = vld [vmem:[#allocation3 + $0x90] sm:$0xff]
          %v3256 = vld [vmem:[#allocation3 + $0x98] sm:$0xff]
          %v3257 = vld [vmem:[#allocation3 + $0xa0] sm:$0xff]
          %v3258 = vld [vmem:[#allocation3 + $0xa8] sm:$0xff]
          %v3259 = vld [vmem:[#allocation3 + $0xb0] sm:$0xff]
          %v3260 = vld [vmem:[#allocation3 + $0xb8] sm:$0xff]
          %v3261 = vld [vmem:[#allocation3 + $0xc0] sm:$0xff]
          %v3262 = vld [vmem:[#allocation3 + $0xc8] sm:$0xff]
          %v3263 = vld [vmem:[#allocation3 + $0xd0] sm:$0xff]
          %v3264 = vld [vmem:[#allocation3 + $0xd8] sm:$0xff]
          %v3265 = vld [vmem:[#allocation3 + $0xe0] sm:$0xff]
          %v3266 = vld [vmem:[#allocation3 + $0xe8] sm:$0xff]
          %v3267 = vld [vmem:[#allocation3 + $0xf0] sm:$0xff]
          %v3268 = vld [vmem:[#allocation3 + $0xf8] sm:$0xff]
          %v3269 = vld [vmem:[#allocation3 + $0x100] sm:$0xff]
          %v3270 = vld [vmem:[#allocation3 + $0x108] sm:$0xff]
          %v3271 = vld [vmem:[#allocation3 + $0x110] sm:$0xff]
          %v3272 = vld [vmem:[#allocation3 + $0x118] sm:$0xff]
          %v3273 = vld [vmem:[#allocation3 + $0x120] sm:$0xff]
          %v3274 = vld [vmem:[#allocation3 + $0x128] sm:$0xff]
          %v3275 = vld [vmem:[#allocation3 + $0x130] sm:$0xff]
          %v3276 = vld [vmem:[#allocation3 + $0x138] sm:$0xff]
          %v3277 = vld [vmem:[#allocation3 + $0x140] sm:$0xff]
          %v3278 = vld [vmem:[#allocation3 + $0x148] sm:$0xff]
          %v3279 = vld [vmem:[#allocation3 + $0x150] sm:$0xff]
          %v3280 = vld [vmem:[#allocation3 + $0x158] sm:$0xff]
          %v3281 = vld [vmem:[#allocation3 + $0x160] sm:$0xff]
          %v3282 = vld [vmem:[#allocation3 + $0x168] sm:$0xff]
          %v3283 = vld [vmem:[#allocation3 + $0x170] sm:$0xff]
          %v3284 = vld [vmem:[#allocation3 + $0x178] sm:$0xff]
          %v3285 = vld [vmem:[#allocation3 + $0x180] sm:$0xff]
          %v3286 = vld [vmem:[#allocation3 + $0x188] sm:$0xff]
          %v3287 = vld [vmem:[#allocation3 + $0x190] sm:$0xff]
          %v3288 = vld [vmem:[#allocation3 + $0x198] sm:$0xff]
          %v3289 = vld [vmem:[#allocation3 + $0x1a0] sm:$0xff]
          %v3290 = vld [vmem:[#allocation3 + $0x1a8] sm:$0xff]
          %v3291 = vld [vmem:[#allocation3 + $0x1b0] sm:$0xff]
          %v3292 = vld [vmem:[#allocation3 + $0x1b8] sm:$0xff]
          %v3293 = vld [vmem:[#allocation3 + $0x1c0] sm:$0xff]
          %v3294 = vld [vmem:[#allocation3 + $0x1c8] sm:$0xff]
          %v3295 = vld [vmem:[#allocation3 + $0x1d0] sm:$0xff]
          %v3296 = vld [vmem:[#allocation3 + $0x1d8] sm:$0xff]
          %v3297 = vld [vmem:[#allocation3 + $0x1e0] sm:$0xff]
          %v3298 = vld [vmem:[#allocation3 + $0x1e8] sm:$0xff]
          %v3299 = vld [vmem:[#allocation3 + $0x1f0] sm:$0xff]
          %v3300 = vld [vmem:[#allocation3 + $0x1f8] sm:$0xff]
          %v3301 = vld [vmem:[#allocation3 + $0x200] sm:$0xff]
          %v3302 = vld [vmem:[#allocation3 + $0x208] sm:$0xff]
          %v3303 = vld [vmem:[#allocation3 + $0x210] sm:$0xff]
          %v3304 = vld [vmem:[#allocation3 + $0x218] sm:$0xff]
          %v3305 = vld [vmem:[#allocation3 + $0x220] sm:$0xff]
          %v3306 = vld [vmem:[#allocation3 + $0x228] sm:$0xff]
          %v3307 = vld [vmem:[#allocation3 + $0x230] sm:$0xff]
          %v3308 = vld [vmem:[#allocation3 + $0x238] sm:$0xff]
          %v3309 = vld [vmem:[#allocation3 + $0x240] sm:$0xff]
          %v3310 = vld [vmem:[#allocation3 + $0x248] sm:$0xff]
          %v3311 = vld [vmem:[#allocation3 + $0x250] sm:$0xff]
          %v3312 = vld [vmem:[#allocation3 + $0x258] sm:$0xff]
          %v3313 = vld [vmem:[#allocation3 + $0x260] sm:$0xff]
          %v3314 = vld [vmem:[#allocation3 + $0x268] sm:$0xff]
          %v3315 = vld [vmem:[#allocation3 + $0x270] sm:$0xff]
          %v3316 = vld [vmem:[#allocation3 + $0x278] sm:$0xff]
          %v3317 = vld [vmem:[#allocation3 + $0x280] sm:$0xff]
          %v3318 = vld [vmem:[#allocation3 + $0x288] sm:$0xff]
          %v3319 = vld [vmem:[#allocation3 + $0x290] sm:$0xff]
          %v3320 = vld [vmem:[#allocation3 + $0x298] sm:$0xff]
          %v3321 = vld [vmem:[#allocation3 + $0x2a0] sm:$0xff]
          %v3322 = vld [vmem:[#allocation3 + $0x2a8] sm:$0xff]
          %v3323 = vld [vmem:[#allocation3 + $0x2b0] sm:$0xff]
          %v3324 = vld [vmem:[#allocation3 + $0x2b8] sm:$0xff]
          %v3325 = vld [vmem:[#allocation3 + $0x2c0] sm:$0xff]
          %v3326 = vld [vmem:[#allocation3 + $0x2c8] sm:$0xff]
          %v3327 = vld [vmem:[#allocation3 + $0x2d0] sm:$0xff]
          %v3328 = vld [vmem:[#allocation3 + $0x2d8] sm:$0xff]
          %v3329 = vld [vmem:[#allocation3 + $0x2e0] sm:$0xff]
          %v3330 = vld [vmem:[#allocation3 + $0x2e8] sm:$0xff]
          %v3331 = vld [vmem:[#allocation3 + $0x2f0] sm:$0xff]
          %v3332 = vld [vmem:[#allocation3 + $0x2f8] sm:$0xff]
          %v3333 = vld [vmem:[#allocation3 + $0x300] sm:$0xff]
          %v3334 = vld [vmem:[#allocation3 + $0x308] sm:$0xff]
          %v3335 = vld [vmem:[#allocation3 + $0x310] sm:$0xff]
          %v3336 = vld [vmem:[#allocation3 + $0x318] sm:$0xff]
          %v3337 = vld [vmem:[#allocation3 + $0x320] sm:$0xff]
          %v3338 = vld [vmem:[#allocation3 + $0x328] sm:$0xff]
          %v3339 = vld [vmem:[#allocation3 + $0x330] sm:$0xff]
          %v3340 = vld [vmem:[#allocation3 + $0x338] sm:$0xff]
          %v3341 = vld [vmem:[#allocation3 + $0x340] sm:$0xff]
          %v3342 = vld [vmem:[#allocation3 + $0x348] sm:$0xff]
          %v3343 = vld [vmem:[#allocation3 + $0x350] sm:$0xff]
          %v3344 = vld [vmem:[#allocation3 + $0x358] sm:$0xff]
          %v3345 = vld [vmem:[#allocation3 + $0x360] sm:$0xff]
          %v3346 = vld [vmem:[#allocation3 + $0x368] sm:$0xff]
          %v3347 = vld [vmem:[#allocation3 + $0x370] sm:$0xff]
          %v3348 = vld [vmem:[#allocation3 + $0x378] sm:$0xff]
          %v3349 = vld [vmem:[#allocation3 + $0x380] sm:$0xff]
          %v3350 = vld [vmem:[#allocation3 + $0x388] sm:$0xff]
          %v3351 = vld [vmem:[#allocation3 + $0x390] sm:$0xff]
          %v3352 = vld [vmem:[#allocation3 + $0x398] sm:$0xff]
          %v3353 = vld [vmem:[#allocation3 + $0x3a0] sm:$0xff]
          %v3354 = vld [vmem:[#allocation3 + $0x3a8] sm:$0xff]
          %v3355 = vld [vmem:[#allocation3 + $0x3b0] sm:$0xff]
          %v3356 = vld [vmem:[#allocation3 + $0x3b8] sm:$0xff]
          %v3357 = vld [vmem:[#allocation3 + $0x3c0] sm:$0xff]
          %v3358 = vld [vmem:[#allocation3 + $0x3c8] sm:$0xff]
          %v3359 = vld [vmem:[#allocation3 + $0x3d0] sm:$0xff]
          %v3360 = vld [vmem:[#allocation3 + $0x3d8] sm:$0xff]
          %v3361 = vld [vmem:[#allocation3 + $0x3e0] sm:$0xff]
          %v3362 = vld [vmem:[#allocation3 + $0x3e8] sm:$0xff]
          %v3363 = vld [vmem:[#allocation3 + $0x3f0] sm:$0xff]
          %v3364 = vld [vmem:[#allocation3 + $0x3f8] sm:$0xff]
          %v3365 = vld [vmem:[#allocation3 + $0x400] sm:$0xff]
          %v3366 = vld [vmem:[#allocation3 + $0x408] sm:$0xff]
          %v3367 = vld [vmem:[#allocation3 + $0x410] sm:$0xff]
          %v3368 = vld [vmem:[#allocation3 + $0x418] sm:$0xff]
          %v3369 = vld [vmem:[#allocation3 + $0x420] sm:$0xff]
          %v3370 = vld [vmem:[#allocation3 + $0x428] sm:$0xff]
          %v3371 = vld [vmem:[#allocation3 + $0x430] sm:$0xff]
          %v3372 = vld [vmem:[#allocation3 + $0x438] sm:$0xff]
          %v3373 = vld [vmem:[#allocation3 + $0x440] sm:$0xff]
          %v3374 = vld [vmem:[#allocation3 + $0x448] sm:$0xff]
          %v3375 = vld [vmem:[#allocation3 + $0x450] sm:$0xff]
          %v3376 = vld [vmem:[#allocation3 + $0x458] sm:$0xff]
          %v3377 = vld [vmem:[#allocation3 + $0x460] sm:$0xff]
          %v3378 = vld [vmem:[#allocation3 + $0x468] sm:$0xff]
          %v3379 = vld [vmem:[#allocation3 + $0x470] sm:$0xff]
          %v3380 = vld [vmem:[#allocation3 + $0x478] sm:$0xff]
          %v3381 = vld [vmem:[#allocation3 + $0x480] sm:$0xff]
          %v3382 = vld [vmem:[#allocation3 + $0x488] sm:$0xff]
          %v3383 = vld [vmem:[#allocation3 + $0x490] sm:$0xff]
          %v3384 = vld [vmem:[#allocation3 + $0x498] sm:$0xff]
          %v3385 = vld [vmem:[#allocation3 + $0x4a0] sm:$0xff]
          %v3386 = vld [vmem:[#allocation3 + $0x4a8] sm:$0xff]
          %v3387 = vld [vmem:[#allocation3 + $0x4b0] sm:$0xff]
          %v3388 = vld [vmem:[#allocation3 + $0x4b8] sm:$0xff]
          %v3389 = vld [vmem:[#allocation3 + $0x4c0] sm:$0xff]
          %v3390 = vld [vmem:[#allocation3 + $0x4c8] sm:$0xff]
          %v3391 = vld [vmem:[#allocation3 + $0x4d0] sm:$0xff]
          %v3392 = vld [vmem:[#allocation3 + $0x4d8] sm:$0xff]
          %v3393 = vld [vmem:[#allocation3 + $0x4e0] sm:$0xff]
          %v3394 = vld [vmem:[#allocation3 + $0x4e8] sm:$0xff]
          %v3395 = vld [vmem:[#allocation3 + $0x4f0] sm:$0xff]
          %v3396 = vld [vmem:[#allocation3 + $0x4f8] sm:$0xff]
          %v3397 = vld [vmem:[#allocation3 + $0x500] sm:$0xff]
          %v3398 = vld [vmem:[#allocation3 + $0x508] sm:$0xff]
          %v3399 = vld [vmem:[#allocation3 + $0x510] sm:$0xff]
          %v3400 = vld [vmem:[#allocation3 + $0x518] sm:$0xff]
          %v3401 = vld [vmem:[#allocation3 + $0x520] sm:$0xff]
          %v3402 = vld [vmem:[#allocation3 + $0x528] sm:$0xff]
          %v3403 = vld [vmem:[#allocation3 + $0x530] sm:$0xff]
          %v3404 = vld [vmem:[#allocation3 + $0x538] sm:$0xff]
          %v3405 = vld [vmem:[#allocation3 + $0x540] sm:$0xff]
          %v3406 = vld [vmem:[#allocation3 + $0x548] sm:$0xff]
          %v3407 = vld [vmem:[#allocation3 + $0x550] sm:$0xff]
          %v3408 = vld [vmem:[#allocation3 + $0x558] sm:$0xff]
          %v3409 = vld [vmem:[#allocation3 + $0x560] sm:$0xff]
          %v3410 = vld [vmem:[#allocation3 + $0x568] sm:$0xff]
          %v3411 = vld [vmem:[#allocation3 + $0x570] sm:$0xff]
          %v3412 = vld [vmem:[#allocation3 + $0x578] sm:$0xff]
          %v3413 = vld [vmem:[#allocation3 + $0x580] sm:$0xff]
          %v3414 = vld [vmem:[#allocation3 + $0x588] sm:$0xff]
          %v3415 = vld [vmem:[#allocation3 + $0x590] sm:$0xff]
          %v3416 = vld [vmem:[#allocation3 + $0x598] sm:$0xff]
          %v3417 = vld [vmem:[#allocation3 + $0x5a0] sm:$0xff]
          %v3418 = vld [vmem:[#allocation3 + $0x5a8] sm:$0xff]
          %v3419 = vld [vmem:[#allocation3 + $0x5b0] sm:$0xff]
          %v3420 = vld [vmem:[#allocation3 + $0x5b8] sm:$0xff]
          %v3421 = vld [vmem:[#allocation3 + $0x5c0] sm:$0xff]
          %v3422 = vld [vmem:[#allocation3 + $0x5c8] sm:$0xff]
          %v3423 = vld [vmem:[#allocation3 + $0x5d0] sm:$0xff]
          %v3424 = vld [vmem:[#allocation3 + $0x5d8] sm:$0xff]
          %v3425 = vld [vmem:[#allocation3 + $0x5e0] sm:$0xff]
          %v3426 = vld [vmem:[#allocation3 + $0x5e8] sm:$0xff]
          %v3427 = vld [vmem:[#allocation3 + $0x5f0] sm:$0xff]
          %v3428 = vld [vmem:[#allocation3 + $0x5f8] sm:$0xff]
          %v3429 = vld [vmem:[#allocation3 + $0x600] sm:$0xff]
          %v3430 = vld [vmem:[#allocation3 + $0x608] sm:$0xff]
          %v3431 = vld [vmem:[#allocation3 + $0x610] sm:$0xff]
          %v3432 = vld [vmem:[#allocation3 + $0x618] sm:$0xff]
          %v3433 = vld [vmem:[#allocation3 + $0x620] sm:$0xff]
          %v3434 = vld [vmem:[#allocation3 + $0x628] sm:$0xff]
          %v3435 = vld [vmem:[#allocation3 + $0x630] sm:$0xff]
          %v3436 = vld [vmem:[#allocation3 + $0x638] sm:$0xff]
          %v3437 = vld [vmem:[#allocation3 + $0x640] sm:$0xff]
          %v3438 = vld [vmem:[#allocation3 + $0x648] sm:$0xff]
          %v3439 = vld [vmem:[#allocation3 + $0x650] sm:$0xff]
          %v3440 = vld [vmem:[#allocation3 + $0x658] sm:$0xff]
          %v3441 = vld [vmem:[#allocation3 + $0x660] sm:$0xff]
          %v3442 = vld [vmem:[#allocation3 + $0x668] sm:$0xff]
          %v3443 = vld [vmem:[#allocation3 + $0x670] sm:$0xff]
          %v3444 = vld [vmem:[#allocation3 + $0x678] sm:$0xff]
          %v3445 = vld [vmem:[#allocation3 + $0x680] sm:$0xff]
          %v3446 = vld [vmem:[#allocation3 + $0x688] sm:$0xff]
          %v3447 = vld [vmem:[#allocation3 + $0x690] sm:$0xff]
          %v3448 = vld [vmem:[#allocation3 + $0x698] sm:$0xff]
          %v3449 = vld [vmem:[#allocation3 + $0x6a0] sm:$0xff]
          %v3450 = vld [vmem:[#allocation3 + $0x6a8] sm:$0xff]
          %v3451 = vld [vmem:[#allocation3 + $0x6b0] sm:$0xff]
          %v3452 = vld [vmem:[#allocation3 + $0x6b8] sm:$0xff]
          %v3453 = vld [vmem:[#allocation3 + $0x6c0] sm:$0xff]
          %v3454 = vld [vmem:[#allocation3 + $0x6c8] sm:$0xff]
          %v3455 = vld [vmem:[#allocation3 + $0x6d0] sm:$0xff]
          %v3456 = vld [vmem:[#allocation3 + $0x6d8] sm:$0xff]
          %v3457 = vld [vmem:[#allocation3 + $0x6e0] sm:$0xff]
          %v3458 = vld [vmem:[#allocation3 + $0x6e8] sm:$0xff]
          %v3459 = vld [vmem:[#allocation3 + $0x6f0] sm:$0xff]
          %v3460 = vld [vmem:[#allocation3 + $0x6f8] sm:$0xff]
          %v3461 = vld [vmem:[#allocation3 + $0x700] sm:$0xff]
          %v3462 = vld [vmem:[#allocation3 + $0x708] sm:$0xff]
          %v3463 = vld [vmem:[#allocation3 + $0x710] sm:$0xff]
          %v3464 = vld [vmem:[#allocation3 + $0x718] sm:$0xff]
          %v3465 = vld [vmem:[#allocation3 + $0x720] sm:$0xff]
          %v3466 = vld [vmem:[#allocation3 + $0x728] sm:$0xff]
          %v3467 = vld [vmem:[#allocation3 + $0x730] sm:$0xff]
          %v3468 = vld [vmem:[#allocation3 + $0x738] sm:$0xff]
          %v3469 = vld [vmem:[#allocation3 + $0x740] sm:$0xff]
          %v3470 = vld [vmem:[#allocation3 + $0x748] sm:$0xff]
          %v3471 = vld [vmem:[#allocation3 + $0x750] sm:$0xff]
          %v3472 = vld [vmem:[#allocation3 + $0x758] sm:$0xff]
          %v3473 = vld [vmem:[#allocation3 + $0x760] sm:$0xff]
          %v3474 = vld [vmem:[#allocation3 + $0x768] sm:$0xff]
          %v3475 = vld [vmem:[#allocation3 + $0x770] sm:$0xff]
          %v3476 = vld [vmem:[#allocation3 + $0x778] sm:$0xff]
          %v3477 = vld [vmem:[#allocation3 + $0x780] sm:$0xff]
          %v3478 = vld [vmem:[#allocation3 + $0x788] sm:$0xff]
          %v3479 = vld [vmem:[#allocation3 + $0x790] sm:$0xff]
          %v3480 = vld [vmem:[#allocation3 + $0x798] sm:$0xff]
          %v3481 = vld [vmem:[#allocation3 + $0x7a0] sm:$0xff]
          %v3482 = vld [vmem:[#allocation3 + $0x7a8] sm:$0xff]
          %v3483 = vld [vmem:[#allocation3 + $0x7b0] sm:$0xff]
          %v3484 = vld [vmem:[#allocation3 + $0x7b8] sm:$0xff]
          %v3485 = vld [vmem:[#allocation3 + $0x7c0] sm:$0xff]
          %v3486 = vld [vmem:[#allocation3 + $0x7c8] sm:$0xff]
          %v3487 = vld [vmem:[#allocation3 + $0x7d0] sm:$0xff]
          %v3488 = vld [vmem:[#allocation3 + $0x7d8] sm:$0xff]
          %v3489 = vld [vmem:[#allocation3 + $0x7e0] sm:$0xff]
          %v3490 = vld [vmem:[#allocation3 + $0x7e8] sm:$0xff]
          %v3491 = vld [vmem:[#allocation3 + $0x7f0] sm:$0xff]
          %v3492 = vld [vmem:[#allocation3 + $0x7f8] sm:$0xff]
          %v3493 = vld [vmem:[%s8] sm:$0xf]
          %v3750 = vunpack.c.l.b16 %v3237
          %v3751 = vunpack.c.h.b16 %v3237
          %v3752 = vunpack.c.l.b16 %v3238
          %v3753 = vunpack.c.h.b16 %v3238
          %v3754 = vunpack.c.l.b16 %v3239
          %v3755 = vunpack.c.h.b16 %v3239
          %v3756 = vunpack.c.l.b16 %v3240
          %v3757 = vunpack.c.h.b16 %v3240
          %v3758 = vunpack.c.l.b16 %v3241
          %v3759 = vunpack.c.h.b16 %v3241
          %v3760 = vunpack.c.l.b16 %v3242
          %v3761 = vunpack.c.h.b16 %v3242
          %v3762 = vunpack.c.l.b16 %v3243
          %v3763 = vunpack.c.h.b16 %v3243
          %v3764 = vunpack.c.l.b16 %v3244
          %v3765 = vunpack.c.h.b16 %v3244
          %v3766 = vunpack.c.l.b16 %v3245
          %v3767 = vunpack.c.h.b16 %v3245
          %v3768 = vunpack.c.l.b16 %v3246
          %v3769 = vunpack.c.h.b16 %v3246
          %v3770 = vunpack.c.l.b16 %v3247
          %v3771 = vunpack.c.h.b16 %v3247
          %v3772 = vunpack.c.l.b16 %v3248
          %v3773 = vunpack.c.h.b16 %v3248
          %v3774 = vunpack.c.l.b16 %v3249
          %v3775 = vunpack.c.h.b16 %v3249
          %v3776 = vunpack.c.l.b16 %v3250
          %v3777 = vunpack.c.h.b16 %v3250
          %v3778 = vunpack.c.l.b16 %v3251
          %v3779 = vunpack.c.h.b16 %v3251
          %v3780 = vunpack.c.l.b16 %v3252
          %v3781 = vunpack.c.h.b16 %v3252
          %v3782 = vunpack.c.l.b16 %v3253
          %v3783 = vunpack.c.h.b16 %v3253
          %v3784 = vunpack.c.l.b16 %v3254
          %v3785 = vunpack.c.h.b16 %v3254
          %v3786 = vunpack.c.l.b16 %v3255
          %v3787 = vunpack.c.h.b16 %v3255
          %v3788 = vunpack.c.l.b16 %v3256
          %v3789 = vunpack.c.h.b16 %v3256
          %v3790 = vunpack.c.l.b16 %v3257
          %v3791 = vunpack.c.h.b16 %v3257
          %v3792 = vunpack.c.l.b16 %v3258
          %v3793 = vunpack.c.h.b16 %v3258
          %v3794 = vunpack.c.l.b16 %v3259
          %v3795 = vunpack.c.h.b16 %v3259
          %v3796 = vunpack.c.l.b16 %v3260
          %v3797 = vunpack.c.h.b16 %v3260
          %v3798 = vunpack.c.l.b16 %v3261
          %v3799 = vunpack.c.h.b16 %v3261
          %v3800 = vunpack.c.l.b16 %v3262
          %v3801 = vunpack.c.h.b16 %v3262
          %v3802 = vunpack.c.l.b16 %v3263
          %v3803 = vunpack.c.h.b16 %v3263
          %v3804 = vunpack.c.l.b16 %v3264
          %v3805 = vunpack.c.h.b16 %v3264
          %v3806 = vunpack.c.l.b16 %v3265
          %v3807 = vunpack.c.h.b16 %v3265
          %v3808 = vunpack.c.l.b16 %v3266
          %v3809 = vunpack.c.h.b16 %v3266
          %v3810 = vunpack.c.l.b16 %v3267
          %v3811 = vunpack.c.h.b16 %v3267
          %v3812 = vunpack.c.l.b16 %v3268
          %v3813 = vunpack.c.h.b16 %v3268
          %v3814 = vunpack.c.l.b16 %v3269
          %v3815 = vunpack.c.h.b16 %v3269
          %v3816 = vunpack.c.l.b16 %v3270
          %v3817 = vunpack.c.h.b16 %v3270
          %v3818 = vunpack.c.l.b16 %v3271
          %v3819 = vunpack.c.h.b16 %v3271
          %v3820 = vunpack.c.l.b16 %v3272
          %v3821 = vunpack.c.h.b16 %v3272
          %v3822 = vunpack.c.l.b16 %v3273
          %v3823 = vunpack.c.h.b16 %v3273
          %v3824 = vunpack.c.l.b16 %v3274
          %v3825 = vunpack.c.h.b16 %v3274
          %v3826 = vunpack.c.l.b16 %v3275
          %v3827 = vunpack.c.h.b16 %v3275
          %v3828 = vunpack.c.l.b16 %v3276
          %v3829 = vunpack.c.h.b16 %v3276
          %v3830 = vunpack.c.l.b16 %v3277
          %v3831 = vunpack.c.h.b16 %v3277
          %v3832 = vunpack.c.l.b16 %v3278
          %v3833 = vunpack.c.h.b16 %v3278
          %v3834 = vunpack.c.l.b16 %v3279
          %v3835 = vunpack.c.h.b16 %v3279
          %v3836 = vunpack.c.l.b16 %v3280
          %v3837 = vunpack.c.h.b16 %v3280
          %v3838 = vunpack.c.l.b16 %v3281
          %v3839 = vunpack.c.h.b16 %v3281
          %v3840 = vunpack.c.l.b16 %v3282
          %v3841 = vunpack.c.h.b16 %v3282
          %v3842 = vunpack.c.l.b16 %v3283
          %v3843 = vunpack.c.h.b16 %v3283
          %v3844 = vunpack.c.l.b16 %v3284
          %v3845 = vunpack.c.h.b16 %v3284
          %v3846 = vunpack.c.l.b16 %v3285
          %v3847 = vunpack.c.h.b16 %v3285
          %v3848 = vunpack.c.l.b16 %v3286
          %v3849 = vunpack.c.h.b16 %v3286
          %v3850 = vunpack.c.l.b16 %v3287
          %v3851 = vunpack.c.h.b16 %v3287
          %v3852 = vunpack.c.l.b16 %v3288
          %v3853 = vunpack.c.h.b16 %v3288
          %v3854 = vunpack.c.l.b16 %v3289
          %v3855 = vunpack.c.h.b16 %v3289
          %v3856 = vunpack.c.l.b16 %v3290
          %v3857 = vunpack.c.h.b16 %v3290
          %v3858 = vunpack.c.l.b16 %v3291
          %v3859 = vunpack.c.h.b16 %v3291
          %v3860 = vunpack.c.l.b16 %v3292
          %v3861 = vunpack.c.h.b16 %v3292
          %v3862 = vunpack.c.l.b16 %v3293
          %v3863 = vunpack.c.h.b16 %v3293
          %v3864 = vunpack.c.l.b16 %v3294
          %v3865 = vunpack.c.h.b16 %v3294
          %v3866 = vunpack.c.l.b16 %v3295
          %v3867 = vunpack.c.h.b16 %v3295
          %v3868 = vunpack.c.l.b16 %v3296
          %v3869 = vunpack.c.h.b16 %v3296
          %v3870 = vunpack.c.l.b16 %v3297
          %v3871 = vunpack.c.h.b16 %v3297
          %v3872 = vunpack.c.l.b16 %v3298
          %v3873 = vunpack.c.h.b16 %v3298
          %v3874 = vunpack.c.l.b16 %v3299
          %v3875 = vunpack.c.h.b16 %v3299
          %v3876 = vunpack.c.l.b16 %v3300
          %v3877 = vunpack.c.h.b16 %v3300
          %v3878 = vunpack.c.l.b16 %v3301
          %v3879 = vunpack.c.h.b16 %v3301
          %v3880 = vunpack.c.l.b16 %v3302
          %v3881 = vunpack.c.h.b16 %v3302
          %v3882 = vunpack.c.l.b16 %v3303
          %v3883 = vunpack.c.h.b16 %v3303
          %v3884 = vunpack.c.l.b16 %v3304
          %v3885 = vunpack.c.h.b16 %v3304
          %v3886 = vunpack.c.l.b16 %v3305
          %v3887 = vunpack.c.h.b16 %v3305
          %v3888 = vunpack.c.l.b16 %v3306
          %v3889 = vunpack.c.h.b16 %v3306
          %v3890 = vunpack.c.l.b16 %v3307
          %v3891 = vunpack.c.h.b16 %v3307
          %v3892 = vunpack.c.l.b16 %v3308
          %v3893 = vunpack.c.h.b16 %v3308
          %v3894 = vunpack.c.l.b16 %v3309
          %v3895 = vunpack.c.h.b16 %v3309
          %v3896 = vunpack.c.l.b16 %v3310
          %v3897 = vunpack.c.h.b16 %v3310
          %v3898 = vunpack.c.l.b16 %v3311
          %v3899 = vunpack.c.h.b16 %v3311
          %v3900 = vunpack.c.l.b16 %v3312
          %v3901 = vunpack.c.h.b16 %v3312
          %v3902 = vunpack.c.l.b16 %v3313
          %v3903 = vunpack.c.h.b16 %v3313
          %v3904 = vunpack.c.l.b16 %v3314
          %v3905 = vunpack.c.h.b16 %v3314
          %v3906 = vunpack.c.l.b16 %v3315
          %v3907 = vunpack.c.h.b16 %v3315
          %v3908 = vunpack.c.l.b16 %v3316
          %v3909 = vunpack.c.h.b16 %v3316
          %v3910 = vunpack.c.l.b16 %v3317
          %v3911 = vunpack.c.h.b16 %v3317
          %v3912 = vunpack.c.l.b16 %v3318
          %v3913 = vunpack.c.h.b16 %v3318
          %v3914 = vunpack.c.l.b16 %v3319
          %v3915 = vunpack.c.h.b16 %v3319
          %v3916 = vunpack.c.l.b16 %v3320
          %v3917 = vunpack.c.h.b16 %v3320
          %v3918 = vunpack.c.l.b16 %v3321
          %v3919 = vunpack.c.h.b16 %v3321
          %v3920 = vunpack.c.l.b16 %v3322
          %v3921 = vunpack.c.h.b16 %v3322
          %v3922 = vunpack.c.l.b16 %v3323
          %v3923 = vunpack.c.h.b16 %v3323
          %v3924 = vunpack.c.l.b16 %v3324
          %v3925 = vunpack.c.h.b16 %v3324
          %v3926 = vunpack.c.l.b16 %v3325
          %v3927 = vunpack.c.h.b16 %v3325
          %v3928 = vunpack.c.l.b16 %v3326
          %v3929 = vunpack.c.h.b16 %v3326
          %v3930 = vunpack.c.l.b16 %v3327
          %v3931 = vunpack.c.h.b16 %v3327
          %v3932 = vunpack.c.l.b16 %v3328
          %v3933 = vunpack.c.h.b16 %v3328
          %v3934 = vunpack.c.l.b16 %v3329
          %v3935 = vunpack.c.h.b16 %v3329
          %v3936 = vunpack.c.l.b16 %v3330
          %v3937 = vunpack.c.h.b16 %v3330
          %v3938 = vunpack.c.l.b16 %v3331
          %v3939 = vunpack.c.h.b16 %v3331
          %v3940 = vunpack.c.l.b16 %v3332
          %v3941 = vunpack.c.h.b16 %v3332
          %v3942 = vunpack.c.l.b16 %v3333
          %v3943 = vunpack.c.h.b16 %v3333
          %v3944 = vunpack.c.l.b16 %v3334
          %v3945 = vunpack.c.h.b16 %v3334
          %v3946 = vunpack.c.l.b16 %v3335
          %v3947 = vunpack.c.h.b16 %v3335
          %v3948 = vunpack.c.l.b16 %v3336
          %v3949 = vunpack.c.h.b16 %v3336
          %v3950 = vunpack.c.l.b16 %v3337
          %v3951 = vunpack.c.h.b16 %v3337
          %v3952 = vunpack.c.l.b16 %v3338
          %v3953 = vunpack.c.h.b16 %v3338
          %v3954 = vunpack.c.l.b16 %v3339
          %v3955 = vunpack.c.h.b16 %v3339
          %v3956 = vunpack.c.l.b16 %v3340
          %v3957 = vunpack.c.h.b16 %v3340
          %v3958 = vunpack.c.l.b16 %v3341
          %v3959 = vunpack.c.h.b16 %v3341
          %v3960 = vunpack.c.l.b16 %v3342
          %v3961 = vunpack.c.h.b16 %v3342
          %v3962 = vunpack.c.l.b16 %v3343
          %v3963 = vunpack.c.h.b16 %v3343
          %v3964 = vunpack.c.l.b16 %v3344
          %v3965 = vunpack.c.h.b16 %v3344
          %v3966 = vunpack.c.l.b16 %v3345
          %v3967 = vunpack.c.h.b16 %v3345
          %v3968 = vunpack.c.l.b16 %v3346
          %v3969 = vunpack.c.h.b16 %v3346
          %v3970 = vunpack.c.l.b16 %v3347
          %v3971 = vunpack.c.h.b16 %v3347
          %v3972 = vunpack.c.l.b16 %v3348
          %v3973 = vunpack.c.h.b16 %v3348
          %v3974 = vunpack.c.l.b16 %v3349
          %v3975 = vunpack.c.h.b16 %v3349
          %v3976 = vunpack.c.l.b16 %v3350
          %v3977 = vunpack.c.h.b16 %v3350
          %v3978 = vunpack.c.l.b16 %v3351
          %v3979 = vunpack.c.h.b16 %v3351
          %v3980 = vunpack.c.l.b16 %v3352
          %v3981 = vunpack.c.h.b16 %v3352
          %v3982 = vunpack.c.l.b16 %v3353
          %v3983 = vunpack.c.h.b16 %v3353
          %v3984 = vunpack.c.l.b16 %v3354
          %v3985 = vunpack.c.h.b16 %v3354
          %v3986 = vunpack.c.l.b16 %v3355
          %v3987 = vunpack.c.h.b16 %v3355
          %v3988 = vunpack.c.l.b16 %v3356
          %v3989 = vunpack.c.h.b16 %v3356
          %v3990 = vunpack.c.l.b16 %v3357
          %v3991 = vunpack.c.h.b16 %v3357
          %v3992 = vunpack.c.l.b16 %v3358
          %v3993 = vunpack.c.h.b16 %v3358
          %v3994 = vunpack.c.l.b16 %v3359
          %v3995 = vunpack.c.h.b16 %v3359
          %v3996 = vunpack.c.l.b16 %v3360
          %v3997 = vunpack.c.h.b16 %v3360
          %v3998 = vunpack.c.l.b16 %v3361
          %v3999 = vunpack.c.h.b16 %v3361
          %v4000 = vunpack.c.l.b16 %v3362
          %v4001 = vunpack.c.h.b16 %v3362
          %v4002 = vunpack.c.l.b16 %v3363
          %v4003 = vunpack.c.h.b16 %v3363
          %v4004 = vunpack.c.l.b16 %v3364
          %v4005 = vunpack.c.h.b16 %v3364
          %v4006 = vunpack.c.l.b16 %v3365
          %v4007 = vunpack.c.h.b16 %v3365
          %v4008 = vunpack.c.l.b16 %v3366
          %v4009 = vunpack.c.h.b16 %v3366
          %v4010 = vunpack.c.l.b16 %v3367
          %v4011 = vunpack.c.h.b16 %v3367
          %v4012 = vunpack.c.l.b16 %v3368
          %v4013 = vunpack.c.h.b16 %v3368
          %v4014 = vunpack.c.l.b16 %v3369
          %v4015 = vunpack.c.h.b16 %v3369
          %v4016 = vunpack.c.l.b16 %v3370
          %v4017 = vunpack.c.h.b16 %v3370
          %v4018 = vunpack.c.l.b16 %v3371
          %v4019 = vunpack.c.h.b16 %v3371
          %v4020 = vunpack.c.l.b16 %v3372
          %v4021 = vunpack.c.h.b16 %v3372
          %v4022 = vunpack.c.l.b16 %v3373
          %v4023 = vunpack.c.h.b16 %v3373
          %v4024 = vunpack.c.l.b16 %v3374
          %v4025 = vunpack.c.h.b16 %v3374
          %v4026 = vunpack.c.l.b16 %v3375
          %v4027 = vunpack.c.h.b16 %v3375
          %v4028 = vunpack.c.l.b16 %v3376
          %v4029 = vunpack.c.h.b16 %v3376
          %v4030 = vunpack.c.l.b16 %v3377
          %v4031 = vunpack.c.h.b16 %v3377
          %v4032 = vunpack.c.l.b16 %v3378
          %v4033 = vunpack.c.h.b16 %v3378
          %v4034 = vunpack.c.l.b16 %v3379
          %v4035 = vunpack.c.h.b16 %v3379
          %v4036 = vunpack.c.l.b16 %v3380
          %v4037 = vunpack.c.h.b16 %v3380
          %v4038 = vunpack.c.l.b16 %v3381
          %v4039 = vunpack.c.h.b16 %v3381
          %v4040 = vunpack.c.l.b16 %v3382
          %v4041 = vunpack.c.h.b16 %v3382
          %v4042 = vunpack.c.l.b16 %v3383
          %v4043 = vunpack.c.h.b16 %v3383
          %v4044 = vunpack.c.l.b16 %v3384
          %v4045 = vunpack.c.h.b16 %v3384
          %v4046 = vunpack.c.l.b16 %v3385
          %v4047 = vunpack.c.h.b16 %v3385
          %v4048 = vunpack.c.l.b16 %v3386
          %v4049 = vunpack.c.h.b16 %v3386
          %v4050 = vunpack.c.l.b16 %v3387
          %v4051 = vunpack.c.h.b16 %v3387
          %v4052 = vunpack.c.l.b16 %v3388
          %v4053 = vunpack.c.h.b16 %v3388
          %v4054 = vunpack.c.l.b16 %v3389
          %v4055 = vunpack.c.h.b16 %v3389
          %v4056 = vunpack.c.l.b16 %v3390
          %v4057 = vunpack.c.h.b16 %v3390
          %v4058 = vunpack.c.l.b16 %v3391
          %v4059 = vunpack.c.h.b16 %v3391
          %v4060 = vunpack.c.l.b16 %v3392
          %v4061 = vunpack.c.h.b16 %v3392
          %v4062 = vunpack.c.l.b16 %v3393
          %v4063 = vunpack.c.h.b16 %v3393
          %v4064 = vunpack.c.l.b16 %v3394
          %v4065 = vunpack.c.h.b16 %v3394
          %v4066 = vunpack.c.l.b16 %v3395
          %v4067 = vunpack.c.h.b16 %v3395
          %v4068 = vunpack.c.l.b16 %v3396
          %v4069 = vunpack.c.h.b16 %v3396
          %v4070 = vunpack.c.l.b16 %v3397
          %v4071 = vunpack.c.h.b16 %v3397
          %v4072 = vunpack.c.l.b16 %v3398
          %v4073 = vunpack.c.h.b16 %v3398
          %v4074 = vunpack.c.l.b16 %v3399
          %v4075 = vunpack.c.h.b16 %v3399
          %v4076 = vunpack.c.l.b16 %v3400
          %v4077 = vunpack.c.h.b16 %v3400
          %v4078 = vunpack.c.l.b16 %v3401
          %v4079 = vunpack.c.h.b16 %v3401
          %v4080 = vunpack.c.l.b16 %v3402
          %v4081 = vunpack.c.h.b16 %v3402
          %v4082 = vunpack.c.l.b16 %v3403
          %v4083 = vunpack.c.h.b16 %v3403
          %v4084 = vunpack.c.l.b16 %v3404
          %v4085 = vunpack.c.h.b16 %v3404
          %v4086 = vunpack.c.l.b16 %v3405
          %v4087 = vunpack.c.h.b16 %v3405
          %v4088 = vunpack.c.l.b16 %v3406
          %v4089 = vunpack.c.h.b16 %v3406
          %v4090 = vunpack.c.l.b16 %v3407
          %v4091 = vunpack.c.h.b16 %v3407
          %v4092 = vunpack.c.l.b16 %v3408
          %v4093 = vunpack.c.h.b16 %v3408
          %v4094 = vunpack.c.l.b16 %v3409
          %v4095 = vunpack.c.h.b16 %v3409
          %v4096 = vunpack.c.l.b16 %v3410
          %v4097 = vunpack.c.h.b16 %v3410
          %v4098 = vunpack.c.l.b16 %v3411
          %v4099 = vunpack.c.h.b16 %v3411
          %v4100 = vunpack.c.l.b16 %v3412
          %v4101 = vunpack.c.h.b16 %v3412
          %v4102 = vunpack.c.l.b16 %v3413
          %v4103 = vunpack.c.h.b16 %v3413
          %v4104 = vunpack.c.l.b16 %v3414
          %v4105 = vunpack.c.h.b16 %v3414
          %v4106 = vunpack.c.l.b16 %v3415
          %v4107 = vunpack.c.h.b16 %v3415
          %v4108 = vunpack.c.l.b16 %v3416
          %v4109 = vunpack.c.h.b16 %v3416
          %v4110 = vunpack.c.l.b16 %v3417
          %v4111 = vunpack.c.h.b16 %v3417
          %v4112 = vunpack.c.l.b16 %v3418
          %v4113 = vunpack.c.h.b16 %v3418
          %v4114 = vunpack.c.l.b16 %v3419
          %v4115 = vunpack.c.h.b16 %v3419
          %v4116 = vunpack.c.l.b16 %v3420
          %v4117 = vunpack.c.h.b16 %v3420
          %v4118 = vunpack.c.l.b16 %v3421
          %v4119 = vunpack.c.h.b16 %v3421
          %v4120 = vunpack.c.l.b16 %v3422
          %v4121 = vunpack.c.h.b16 %v3422
          %v4122 = vunpack.c.l.b16 %v3423
          %v4123 = vunpack.c.h.b16 %v3423
          %v4124 = vunpack.c.l.b16 %v3424
          %v4125 = vunpack.c.h.b16 %v3424
          %v4126 = vunpack.c.l.b16 %v3425
          %v4127 = vunpack.c.h.b16 %v3425
          %v4128 = vunpack.c.l.b16 %v3426
          %v4129 = vunpack.c.h.b16 %v3426
          %v4130 = vunpack.c.l.b16 %v3427
          %v4131 = vunpack.c.h.b16 %v3427
          %v4132 = vunpack.c.l.b16 %v3428
          %v4133 = vunpack.c.h.b16 %v3428
          %v4134 = vunpack.c.l.b16 %v3429
          %v4135 = vunpack.c.h.b16 %v3429
          %v4136 = vunpack.c.l.b16 %v3430
          %v4137 = vunpack.c.h.b16 %v3430
          %v4138 = vunpack.c.l.b16 %v3431
          %v4139 = vunpack.c.h.b16 %v3431
          %v4140 = vunpack.c.l.b16 %v3432
          %v4141 = vunpack.c.h.b16 %v3432
          %v4142 = vunpack.c.l.b16 %v3433
          %v4143 = vunpack.c.h.b16 %v3433
          %v4144 = vunpack.c.l.b16 %v3434
          %v4145 = vunpack.c.h.b16 %v3434
          %v4146 = vunpack.c.l.b16 %v3435
          %v4147 = vunpack.c.h.b16 %v3435
          %v4148 = vunpack.c.l.b16 %v3436
          %v4149 = vunpack.c.h.b16 %v3436
          %v4150 = vunpack.c.l.b16 %v3437
          %v4151 = vunpack.c.h.b16 %v3437
          %v4152 = vunpack.c.l.b16 %v3438
          %v4153 = vunpack.c.h.b16 %v3438
          %v4154 = vunpack.c.l.b16 %v3439
          %v4155 = vunpack.c.h.b16 %v3439
          %v4156 = vunpack.c.l.b16 %v3440
          %v4157 = vunpack.c.h.b16 %v3440
          %v4158 = vunpack.c.l.b16 %v3441
          %v4159 = vunpack.c.h.b16 %v3441
          %v4160 = vunpack.c.l.b16 %v3442
          %v4161 = vunpack.c.h.b16 %v3442
          %v4162 = vunpack.c.l.b16 %v3443
          %v4163 = vunpack.c.h.b16 %v3443
          %v4164 = vunpack.c.l.b16 %v3444
          %v4165 = vunpack.c.h.b16 %v3444
          %v4166 = vunpack.c.l.b16 %v3445
          %v4167 = vunpack.c.h.b16 %v3445
          %v4168 = vunpack.c.l.b16 %v3446
          %v4169 = vunpack.c.h.b16 %v3446
          %v4170 = vunpack.c.l.b16 %v3447
          %v4171 = vunpack.c.h.b16 %v3447
          %v4172 = vunpack.c.l.b16 %v3448
          %v4173 = vunpack.c.h.b16 %v3448
          %v4174 = vunpack.c.l.b16 %v3449
          %v4175 = vunpack.c.h.b16 %v3449
          %v4176 = vunpack.c.l.b16 %v3450
          %v4177 = vunpack.c.h.b16 %v3450
          %v4178 = vunpack.c.l.b16 %v3451
          %v4179 = vunpack.c.h.b16 %v3451
          %v4180 = vunpack.c.l.b16 %v3452
          %v4181 = vunpack.c.h.b16 %v3452
          %v4182 = vunpack.c.l.b16 %v3453
          %v4183 = vunpack.c.h.b16 %v3453
          %v4184 = vunpack.c.l.b16 %v3454
          %v4185 = vunpack.c.h.b16 %v3454
          %v4186 = vunpack.c.l.b16 %v3455
          %v4187 = vunpack.c.h.b16 %v3455
          %v4188 = vunpack.c.l.b16 %v3456
          %v4189 = vunpack.c.h.b16 %v3456
          %v4190 = vunpack.c.l.b16 %v3457
          %v4191 = vunpack.c.h.b16 %v3457
          %v4192 = vunpack.c.l.b16 %v3458
          %v4193 = vunpack.c.h.b16 %v3458
          %v4194 = vunpack.c.l.b16 %v3459
          %v4195 = vunpack.c.h.b16 %v3459
          %v4196 = vunpack.c.l.b16 %v3460
          %v4197 = vunpack.c.h.b16 %v3460
          %v4198 = vunpack.c.l.b16 %v3461
          %v4199 = vunpack.c.h.b16 %v3461
          %v4200 = vunpack.c.l.b16 %v3462
          %v4201 = vunpack.c.h.b16 %v3462
          %v4202 = vunpack.c.l.b16 %v3463
          %v4203 = vunpack.c.h.b16 %v3463
          %v4204 = vunpack.c.l.b16 %v3464
          %v4205 = vunpack.c.h.b16 %v3464
          %v4206 = vunpack.c.l.b16 %v3465
          %v4207 = vunpack.c.h.b16 %v3465
          %v4208 = vunpack.c.l.b16 %v3466
          %v4209 = vunpack.c.h.b16 %v3466
          %v4210 = vunpack.c.l.b16 %v3467
          %v4211 = vunpack.c.h.b16 %v3467
          %v4212 = vunpack.c.l.b16 %v3468
          %v4213 = vunpack.c.h.b16 %v3468
          %v4214 = vunpack.c.l.b16 %v3469
          %v4215 = vunpack.c.h.b16 %v3469
          %v4216 = vunpack.c.l.b16 %v3470
          %v4217 = vunpack.c.h.b16 %v3470
          %v4218 = vunpack.c.l.b16 %v3471
          %v4219 = vunpack.c.h.b16 %v3471
          %v4220 = vunpack.c.l.b16 %v3472
          %v4221 = vunpack.c.h.b16 %v3472
          %v4222 = vunpack.c.l.b16 %v3473
          %v4223 = vunpack.c.h.b16 %v3473
          %v4224 = vunpack.c.l.b16 %v3474
          %v4225 = vunpack.c.h.b16 %v3474
          %v4226 = vunpack.c.l.b16 %v3475
          %v4227 = vunpack.c.h.b16 %v3475
          %v4228 = vunpack.c.l.b16 %v3476
          %v4229 = vunpack.c.h.b16 %v3476
          %v4230 = vunpack.c.l.b16 %v3477
          %v4231 = vunpack.c.h.b16 %v3477
          %v4232 = vunpack.c.l.b16 %v3478
          %v4233 = vunpack.c.h.b16 %v3478
          %v4234 = vunpack.c.l.b16 %v3479
          %v4235 = vunpack.c.h.b16 %v3479
          %v4236 = vunpack.c.l.b16 %v3480
          %v4237 = vunpack.c.h.b16 %v3480
          %v4238 = vunpack.c.l.b16 %v3481
          %v4239 = vunpack.c.h.b16 %v3481
          %v4240 = vunpack.c.l.b16 %v3482
          %v4241 = vunpack.c.h.b16 %v3482
          %v4242 = vunpack.c.l.b16 %v3483
          %v4243 = vunpack.c.h.b16 %v3483
          %v4244 = vunpack.c.l.b16 %v3484
          %v4245 = vunpack.c.h.b16 %v3484
          %v4246 = vunpack.c.l.b16 %v3485
          %v4247 = vunpack.c.h.b16 %v3485
          %v4248 = vunpack.c.l.b16 %v3486
          %v4249 = vunpack.c.h.b16 %v3486
          %v4250 = vunpack.c.l.b16 %v3487
          %v4251 = vunpack.c.h.b16 %v3487
          %v4252 = vunpack.c.l.b16 %v3488
          %v4253 = vunpack.c.h.b16 %v3488
          %v4254 = vunpack.c.l.b16 %v3489
          %v4255 = vunpack.c.h.b16 %v3489
          %v4256 = vunpack.c.l.b16 %v3490
          %v4257 = vunpack.c.h.b16 %v3490
          %v4258 = vunpack.c.l.b16 %v3491
          %v4259 = vunpack.c.h.b16 %v3491
          %v4260 = vunpack.c.l.b16 %v3492
          %v4261 = vunpack.c.h.b16 %v3492
          %v4262 = vpack.c.b16 %v3754, %v3750
          %v4263 = vpack.c.b16 %v3755, %v3751
          %v4264 = vpack.c.b16 %v3756, %v3752
          %v4265 = vpack.c.b16 %v3757, %v3753
          %v4266 = vpack.c.b16 %v3762, %v3758
          %v4267 = vpack.c.b16 %v3763, %v3759
          %v4268 = vpack.c.b16 %v3764, %v3760
          %v4269 = vpack.c.b16 %v3765, %v3761
          %v4270 = vpack.c.b16 %v3770, %v3766
          %v4271 = vpack.c.b16 %v3771, %v3767
          %v4272 = vpack.c.b16 %v3772, %v3768
          %v4273 = vpack.c.b16 %v3773, %v3769
          %v4274 = vpack.c.b16 %v3778, %v3774
          %v4275 = vpack.c.b16 %v3779, %v3775
          %v4276 = vpack.c.b16 %v3780, %v3776
          %v4277 = vpack.c.b16 %v3781, %v3777
          %v4278 = vpack.c.b16 %v3786, %v3782
          %v4279 = vpack.c.b16 %v3787, %v3783
          %v4280 = vpack.c.b16 %v3788, %v3784
          %v4281 = vpack.c.b16 %v3789, %v3785
          %v4282 = vpack.c.b16 %v3794, %v3790
          %v4283 = vpack.c.b16 %v3795, %v3791
          %v4284 = vpack.c.b16 %v3796, %v3792
          %v4285 = vpack.c.b16 %v3797, %v3793
          %v4286 = vpack.c.b16 %v3802, %v3798
          %v4287 = vpack.c.b16 %v3803, %v3799
          %v4288 = vpack.c.b16 %v3804, %v3800
          %v4289 = vpack.c.b16 %v3805, %v3801
          %v4290 = vpack.c.b16 %v3810, %v3806
          %v4291 = vpack.c.b16 %v3811, %v3807
          %v4292 = vpack.c.b16 %v3812, %v3808
          %v4293 = vpack.c.b16 %v3813, %v3809
          %v4294 = vpack.c.b16 %v3818, %v3814
          %v4295 = vpack.c.b16 %v3819, %v3815
          %v4296 = vpack.c.b16 %v3820, %v3816
          %v4297 = vpack.c.b16 %v3821, %v3817
          %v4298 = vpack.c.b16 %v3826, %v3822
          %v4299 = vpack.c.b16 %v3827, %v3823
          %v4300 = vpack.c.b16 %v3828, %v3824
          %v4301 = vpack.c.b16 %v3829, %v3825
          %v4302 = vpack.c.b16 %v3834, %v3830
          %v4303 = vpack.c.b16 %v3835, %v3831
          %v4304 = vpack.c.b16 %v3836, %v3832
          %v4305 = vpack.c.b16 %v3837, %v3833
          %v4306 = vpack.c.b16 %v3842, %v3838
          %v4307 = vpack.c.b16 %v3843, %v3839
          %v4308 = vpack.c.b16 %v3844, %v3840
          %v4309 = vpack.c.b16 %v3845, %v3841
          %v4310 = vpack.c.b16 %v3850, %v3846
          %v4311 = vpack.c.b16 %v3851, %v3847
          %v4312 = vpack.c.b16 %v3852, %v3848
          %v4313 = vpack.c.b16 %v3853, %v3849
          %v4314 = vpack.c.b16 %v3858, %v3854
          %v4315 = vpack.c.b16 %v3859, %v3855
          %v4316 = vpack.c.b16 %v3860, %v3856
          %v4317 = vpack.c.b16 %v3861, %v3857
          %v4318 = vpack.c.b16 %v3866, %v3862
          %v4319 = vpack.c.b16 %v3867, %v3863
          %v4320 = vpack.c.b16 %v3868, %v3864
          %v4321 = vpack.c.b16 %v3869, %v3865
          %v4322 = vpack.c.b16 %v3874, %v3870
          %v4323 = vpack.c.b16 %v3875, %v3871
          %v4324 = vpack.c.b16 %v3876, %v3872
          %v4325 = vpack.c.b16 %v3877, %v3873
          %v4326 = vpack.c.b16 %v3882, %v3878
          %v4327 = vpack.c.b16 %v3883, %v3879
          %v4328 = vpack.c.b16 %v3884, %v3880
          %v4329 = vpack.c.b16 %v3885, %v3881
          %v4330 = vpack.c.b16 %v3890, %v3886
          %v4331 = vpack.c.b16 %v3891, %v3887
          %v4332 = vpack.c.b16 %v3892, %v3888
          %v4333 = vpack.c.b16 %v3893, %v3889
          %v4334 = vpack.c.b16 %v3898, %v3894
          %v4335 = vpack.c.b16 %v3899, %v3895
          %v4336 = vpack.c.b16 %v3900, %v3896
          %v4337 = vpack.c.b16 %v3901, %v3897
          %v4338 = vpack.c.b16 %v3906, %v3902
          %v4339 = vpack.c.b16 %v3907, %v3903
          %v4340 = vpack.c.b16 %v3908, %v3904
          %v4341 = vpack.c.b16 %v3909, %v3905
          %v4342 = vpack.c.b16 %v3914, %v3910
          %v4343 = vpack.c.b16 %v3915, %v3911
          %v4344 = vpack.c.b16 %v3916, %v3912
          %v4345 = vpack.c.b16 %v3917, %v3913
          %v4346 = vpack.c.b16 %v3922, %v3918
          %v4347 = vpack.c.b16 %v3923, %v3919
          %v4348 = vpack.c.b16 %v3924, %v3920
          %v4349 = vpack.c.b16 %v3925, %v3921
          %v4350 = vpack.c.b16 %v3930, %v3926
          %v4351 = vpack.c.b16 %v3931, %v3927
          %v4352 = vpack.c.b16 %v3932, %v3928
          %v4353 = vpack.c.b16 %v3933, %v3929
          %v4354 = vpack.c.b16 %v3938, %v3934
          %v4355 = vpack.c.b16 %v3939, %v3935
          %v4356 = vpack.c.b16 %v3940, %v3936
          %v4357 = vpack.c.b16 %v3941, %v3937
          %v4358 = vpack.c.b16 %v3946, %v3942
          %v4359 = vpack.c.b16 %v3947, %v3943
          %v4360 = vpack.c.b16 %v3948, %v3944
          %v4361 = vpack.c.b16 %v3949, %v3945
          %v4362 = vpack.c.b16 %v3954, %v3950
          %v4363 = vpack.c.b16 %v3955, %v3951
          %v4364 = vpack.c.b16 %v3956, %v3952
          %v4365 = vpack.c.b16 %v3957, %v3953
          %v4366 = vpack.c.b16 %v3962, %v3958
          %v4367 = vpack.c.b16 %v3963, %v3959
          %v4368 = vpack.c.b16 %v3964, %v3960
          %v4369 = vpack.c.b16 %v3965, %v3961
          %v4370 = vpack.c.b16 %v3970, %v3966
          %v4371 = vpack.c.b16 %v3971, %v3967
          %v4372 = vpack.c.b16 %v3972, %v3968
          %v4373 = vpack.c.b16 %v3973, %v3969
          %v4374 = vpack.c.b16 %v3978, %v3974
          %v4375 = vpack.c.b16 %v3979, %v3975
          %v4376 = vpack.c.b16 %v3980, %v3976
          %v4377 = vpack.c.b16 %v3981, %v3977
          %v4378 = vpack.c.b16 %v3986, %v3982
          %v4379 = vpack.c.b16 %v3987, %v3983
          %v4380 = vpack.c.b16 %v3988, %v3984
          %v4381 = vpack.c.b16 %v3989, %v3985
          %v4382 = vpack.c.b16 %v3994, %v3990
          %v4383 = vpack.c.b16 %v3995, %v3991
          %v4384 = vpack.c.b16 %v3996, %v3992
          %v4385 = vpack.c.b16 %v3997, %v3993
          %v4386 = vpack.c.b16 %v4002, %v3998
          %v4387 = vpack.c.b16 %v4003, %v3999
          %v4388 = vpack.c.b16 %v4004, %v4000
          %v4389 = vpack.c.b16 %v4005, %v4001
          %v4390 = vpack.c.b16 %v4010, %v4006
          %v4391 = vpack.c.b16 %v4011, %v4007
          %v4392 = vpack.c.b16 %v4012, %v4008
          %v4393 = vpack.c.b16 %v4013, %v4009
          %v4394 = vpack.c.b16 %v4018, %v4014
          %v4395 = vpack.c.b16 %v4019, %v4015
          %v4396 = vpack.c.b16 %v4020, %v4016
          %v4397 = vpack.c.b16 %v4021, %v4017
          %v4398 = vpack.c.b16 %v4026, %v4022
          %v4399 = vpack.c.b16 %v4027, %v4023
          %v4400 = vpack.c.b16 %v4028, %v4024
          %v4401 = vpack.c.b16 %v4029, %v4025
          %v4402 = vpack.c.b16 %v4034, %v4030
          %v4403 = vpack.c.b16 %v4035, %v4031
          %v4404 = vpack.c.b16 %v4036, %v4032
          %v4405 = vpack.c.b16 %v4037, %v4033
          %v4406 = vpack.c.b16 %v4042, %v4038
          %v4407 = vpack.c.b16 %v4043, %v4039
          %v4408 = vpack.c.b16 %v4044, %v4040
          %v4409 = vpack.c.b16 %v4045, %v4041
          %v4410 = vpack.c.b16 %v4050, %v4046
          %v4411 = vpack.c.b16 %v4051, %v4047
          %v4412 = vpack.c.b16 %v4052, %v4048
          %v4413 = vpack.c.b16 %v4053, %v4049
          %v4414 = vpack.c.b16 %v4058, %v4054
          %v4415 = vpack.c.b16 %v4059, %v4055
          %v4416 = vpack.c.b16 %v4060, %v4056
          %v4417 = vpack.c.b16 %v4061, %v4057
          %v4418 = vpack.c.b16 %v4066, %v4062
          %v4419 = vpack.c.b16 %v4067, %v4063
          %v4420 = vpack.c.b16 %v4068, %v4064
          %v4421 = vpack.c.b16 %v4069, %v4065
          %v4422 = vpack.c.b16 %v4074, %v4070
          %v4423 = vpack.c.b16 %v4075, %v4071
          %v4424 = vpack.c.b16 %v4076, %v4072
          %v4425 = vpack.c.b16 %v4077, %v4073
          %v4426 = vpack.c.b16 %v4082, %v4078
          %v4427 = vpack.c.b16 %v4083, %v4079
          %v4428 = vpack.c.b16 %v4084, %v4080
          %v4429 = vpack.c.b16 %v4085, %v4081
          %v4430 = vpack.c.b16 %v4090, %v4086
          %v4431 = vpack.c.b16 %v4091, %v4087
          %v4432 = vpack.c.b16 %v4092, %v4088
          %v4433 = vpack.c.b16 %v4093, %v4089
          %v4434 = vpack.c.b16 %v4098, %v4094
          %v4435 = vpack.c.b16 %v4099, %v4095
          %v4436 = vpack.c.b16 %v4100, %v4096
          %v4437 = vpack.c.b16 %v4101, %v4097
          %v4438 = vpack.c.b16 %v4106, %v4102
          %v4439 = vpack.c.b16 %v4107, %v4103
          %v4440 = vpack.c.b16 %v4108, %v4104
          %v4441 = vpack.c.b16 %v4109, %v4105
          %v4442 = vpack.c.b16 %v4114, %v4110
          %v4443 = vpack.c.b16 %v4115, %v4111
          %v4444 = vpack.c.b16 %v4116, %v4112
          %v4445 = vpack.c.b16 %v4117, %v4113
          %v4446 = vpack.c.b16 %v4122, %v4118
          %v4447 = vpack.c.b16 %v4123, %v4119
          %v4448 = vpack.c.b16 %v4124, %v4120
          %v4449 = vpack.c.b16 %v4125, %v4121
          %v4450 = vpack.c.b16 %v4130, %v4126
          %v4451 = vpack.c.b16 %v4131, %v4127
          %v4452 = vpack.c.b16 %v4132, %v4128
          %v4453 = vpack.c.b16 %v4133, %v4129
          %v4454 = vpack.c.b16 %v4138, %v4134
          %v4455 = vpack.c.b16 %v4139, %v4135
          %v4456 = vpack.c.b16 %v4140, %v4136
          %v4457 = vpack.c.b16 %v4141, %v4137
          %v4458 = vpack.c.b16 %v4146, %v4142
          %v4459 = vpack.c.b16 %v4147, %v4143
          %v4460 = vpack.c.b16 %v4148, %v4144
          %v4461 = vpack.c.b16 %v4149, %v4145
          %v4462 = vpack.c.b16 %v4154, %v4150
          %v4463 = vpack.c.b16 %v4155, %v4151
          %v4464 = vpack.c.b16 %v4156, %v4152
          %v4465 = vpack.c.b16 %v4157, %v4153
          %v4466 = vpack.c.b16 %v4162, %v4158
          %v4467 = vpack.c.b16 %v4163, %v4159
          %v4468 = vpack.c.b16 %v4164, %v4160
          %v4469 = vpack.c.b16 %v4165, %v4161
          %v4470 = vpack.c.b16 %v4170, %v4166
          %v4471 = vpack.c.b16 %v4171, %v4167
          %v4472 = vpack.c.b16 %v4172, %v4168
          %v4473 = vpack.c.b16 %v4173, %v4169
          %v4474 = vpack.c.b16 %v4178, %v4174
          %v4475 = vpack.c.b16 %v4179, %v4175
          %v4476 = vpack.c.b16 %v4180, %v4176
          %v4477 = vpack.c.b16 %v4181, %v4177
          %v4478 = vpack.c.b16 %v4186, %v4182
          %v4479 = vpack.c.b16 %v4187, %v4183
          %v4480 = vpack.c.b16 %v4188, %v4184
          %v4481 = vpack.c.b16 %v4189, %v4185
          %v4482 = vpack.c.b16 %v4194, %v4190
          %v4483 = vpack.c.b16 %v4195, %v4191
          %v4484 = vpack.c.b16 %v4196, %v4192
          %v4485 = vpack.c.b16 %v4197, %v4193
          %v4486 = vpack.c.b16 %v4202, %v4198
          %v4487 = vpack.c.b16 %v4203, %v4199
          %v4488 = vpack.c.b16 %v4204, %v4200
          %v4489 = vpack.c.b16 %v4205, %v4201
          %v4490 = vpack.c.b16 %v4210, %v4206
          %v4491 = vpack.c.b16 %v4211, %v4207
          %v4492 = vpack.c.b16 %v4212, %v4208
          %v4493 = vpack.c.b16 %v4213, %v4209
          %v4494 = vpack.c.b16 %v4218, %v4214
          %v4495 = vpack.c.b16 %v4219, %v4215
          %v4496 = vpack.c.b16 %v4220, %v4216
          %v4497 = vpack.c.b16 %v4221, %v4217
          %v4498 = vpack.c.b16 %v4226, %v4222
          %v4499 = vpack.c.b16 %v4227, %v4223
          %v4500 = vpack.c.b16 %v4228, %v4224
          %v4501 = vpack.c.b16 %v4229, %v4225
          %v4502 = vpack.c.b16 %v4234, %v4230
          %v4503 = vpack.c.b16 %v4235, %v4231
          %v4504 = vpack.c.b16 %v4236, %v4232
          %v4505 = vpack.c.b16 %v4237, %v4233
          %v4506 = vpack.c.b16 %v4242, %v4238
          %v4507 = vpack.c.b16 %v4243, %v4239
          %v4508 = vpack.c.b16 %v4244, %v4240
          %v4509 = vpack.c.b16 %v4245, %v4241
          %v4510 = vpack.c.b16 %v4250, %v4246
          %v4511 = vpack.c.b16 %v4251, %v4247
          %v4512 = vpack.c.b16 %v4252, %v4248
          %v4513 = vpack.c.b16 %v4253, %v4249
          %v4514 = vpack.c.b16 %v4258, %v4254
          %v4515 = vpack.c.b16 %v4259, %v4255
          %v4516 = vpack.c.b16 %v4260, %v4256
          %v4517 = vpack.c.b16 %v4261, %v4257
          %v4775 = vlaneseq
          %v4776 = vshrl.u32 %v4775, 7
          %v4777 = vsub.s32 0, %v4776
          %v4778 = vrot.slane %v3493, %v4777
          %v4779 = vlaneseq
          %v4780 = vshrl.u32 %v4779, 7
          %v4781 = vsub.s32 1, %v4780
          %v4782 = vrot.slane %v3493, %v4781
          %v4783 = vlaneseq
          %v4784 = vshrl.u32 %v4783, 7
          %v4785 = vsub.s32 2, %v4784
          %v4786 = vrot.slane %v3493, %v4785
          %v4787 = vlaneseq
          %v4788 = vshrl.u32 %v4787, 7
          %v4789 = vsub.s32 3, %v4788
          %v4790 = vrot.slane %v3493, %v4789
          %4795 = vmatprep.subr.bf16.mxu0 %v4263
          %4796 = vmatpush1.bf16.msra.mxu0 %v4262
          %4797 = vmatprep.subr.bf16.mxu0 %v4267
          %4798 = vmatpush1.bf16.msra.mxu0 %v4266
          %4799 = vmatprep.subr.bf16.mxu0 %v4271
          %4800 = vmatpush1.bf16.msra.mxu0 %v4270
          %4801 = vmatprep.subr.bf16.mxu0 %v4275
          %4802 = vmatpush1.bf16.msra.mxu0 %v4274
          %4803 = vmatprep.subr.bf16.mxu0 %v4279
          %4804 = vmatpush1.bf16.msra.mxu0 %v4278
          %4805 = vmatprep.subr.bf16.mxu0 %v4283
          %4806 = vmatpush1.bf16.msra.mxu0 %v4282
          %4807 = vmatprep.subr.bf16.mxu0 %v4287
          %4808 = vmatpush1.bf16.msra.mxu0 %v4286
          %4809 = vmatprep.subr.bf16.mxu0 %v4291
          %4810 = vmatpush1.bf16.msra.mxu0 %v4290
          %4811 = vmatprep.subr.bf16.mxu0 %v4295
          %4812 = vmatpush1.bf16.msra.mxu0 %v4294
          %4813 = vmatprep.subr.bf16.mxu0 %v4299
          %4814 = vmatpush1.bf16.msra.mxu0 %v4298
          %4815 = vmatprep.subr.bf16.mxu0 %v4303
          %4816 = vmatpush1.bf16.msra.mxu0 %v4302
          %4817 = vmatprep.subr.bf16.mxu0 %v4307
          %4818 = vmatpush1.bf16.msra.mxu0 %v4306
          %4819 = vmatprep.subr.bf16.mxu0 %v4311
          %4820 = vmatpush1.bf16.msra.mxu0 %v4310
          %4821 = vmatprep.subr.bf16.mxu0 %v4315
          %4822 = vmatpush1.bf16.msra.mxu0 %v4314
          %4823 = vmatprep.subr.bf16.mxu0 %v4319
          %4824 = vmatpush1.bf16.msra.mxu0 %v4318
          %4825 = vmatprep.subr.bf16.mxu0 %v4323
          %4826 = vmatpush1.bf16.msra.mxu0 %v4322
          %4827 = vmatprep.mubr.bf16.mxu0 %v3230
          %4828 = vmatmul.mubr.bf16.gmra.mrb[0].mxu0 %v3229
          %v4829 = vpop.f32.mrb[0].mxu0
          %v4830 = vadd.f32 %v4778, %v4829
          %v4831 = vpop.f32.mrb[0].mxu0
          %v4832 = vadd.f32 %v4782, %v4831
          %v4833 = vpop.f32.mrb[0].mxu0
          %v4834 = vpop.f32.mrb[0].mxu0
          %4835 = vdwg.mxu0
          %4836 = vmatprep.subr.bf16.mxu0 %v4327
          %4837 = vmatpush1.bf16.msra.mxu0 %v4326
          %4838 = vmatprep.subr.bf16.mxu0 %v4331
          %4839 = vmatpush1.bf16.msra.mxu0 %v4330
          %4840 = vmatprep.subr.bf16.mxu0 %v4335
          %4841 = vmatpush1.bf16.msra.mxu0 %v4334
          %4842 = vmatprep.subr.bf16.mxu0 %v4339
          %4843 = vmatpush1.bf16.msra.mxu0 %v4338
          %4844 = vmatprep.subr.bf16.mxu0 %v4343
          %4845 = vmatpush1.bf16.msra.mxu0 %v4342
          %4846 = vmatprep.subr.bf16.mxu0 %v4347
          %4847 = vmatpush1.bf16.msra.mxu0 %v4346
          %4848 = vmatprep.subr.bf16.mxu0 %v4351
          %4849 = vmatpush1.bf16.msra.mxu0 %v4350
          %4850 = vmatprep.subr.bf16.mxu0 %v4355
          %4851 = vmatpush1.bf16.msra.mxu0 %v4354
          %4852 = vmatprep.subr.bf16.mxu0 %v4359
          %4853 = vmatpush1.bf16.msra.mxu0 %v4358
          %4854 = vmatprep.subr.bf16.mxu0 %v4363
          %4855 = vmatpush1.bf16.msra.mxu0 %v4362
          %4856 = vmatprep.subr.bf16.mxu0 %v4367
          %4857 = vmatpush1.bf16.msra.mxu0 %v4366
          %4858 = vmatprep.subr.bf16.mxu0 %v4371
          %4859 = vmatpush1.bf16.msra.mxu0 %v4370
          %4860 = vmatprep.subr.bf16.mxu0 %v4375
          %4861 = vmatpush1.bf16.msra.mxu0 %v4374
          %4862 = vmatprep.subr.bf16.mxu0 %v4379
          %4863 = vmatpush1.bf16.msra.mxu0 %v4378
          %4864 = vmatprep.subr.bf16.mxu0 %v4383
          %4865 = vmatpush1.bf16.msra.mxu0 %v4382
          %4866 = vmatprep.subr.bf16.mxu0 %v4387
          %4867 = vmatpush1.bf16.msra.mxu0 %v4386
          %4868 = vmatprep.mubr.bf16.mxu0 %v3232
          %4869 = vmatmul.mubr.bf16.gmra.mrb[0].mxu0 %v3231
          %v4870 = vpop.f32.mrb[0].mxu0
          %v4871 = vadd.f32 %v4830, %v4870
          %v4872 = vpop.f32.mrb[0].mxu0
          %v4873 = vadd.f32 %v4832, %v4872
          %v4874 = vpop.f32.mrb[0].mxu0
          %v4875 = vpop.f32.mrb[0].mxu0
          %4876 = vdwg.mxu0
          %4877 = vmatprep.subr.bf16.mxu0 %v4391
          %4878 = vmatpush1.bf16.msra.mxu0 %v4390
          %4879 = vmatprep.subr.bf16.mxu0 %v4395
          %4880 = vmatpush1.bf16.msra.mxu0 %v4394
          %4881 = vmatprep.subr.bf16.mxu0 %v4399
          %4882 = vmatpush1.bf16.msra.mxu0 %v4398
          %4883 = vmatprep.subr.bf16.mxu0 %v4403
          %4884 = vmatpush1.bf16.msra.mxu0 %v4402
          %4885 = vmatprep.subr.bf16.mxu0 %v4407
          %4886 = vmatpush1.bf16.msra.mxu0 %v4406
          %4887 = vmatprep.subr.bf16.mxu0 %v4411
          %4888 = vmatpush1.bf16.msra.mxu0 %v4410
          %4889 = vmatprep.subr.bf16.mxu0 %v4415
          %4890 = vmatpush1.bf16.msra.mxu0 %v4414
          %4891 = vmatprep.subr.bf16.mxu0 %v4419
          %4892 = vmatpush1.bf16.msra.mxu0 %v4418
          %4893 = vmatprep.subr.bf16.mxu0 %v4423
          %4894 = vmatpush1.bf16.msra.mxu0 %v4422
          %4895 = vmatprep.subr.bf16.mxu0 %v4427
          %4896 = vmatpush1.bf16.msra.mxu0 %v4426
          %4897 = vmatprep.subr.bf16.mxu0 %v4431
          %4898 = vmatpush1.bf16.msra.mxu0 %v4430
          %4899 = vmatprep.subr.bf16.mxu0 %v4435
          %4900 = vmatpush1.bf16.msra.mxu0 %v4434
          %4901 = vmatprep.subr.bf16.mxu0 %v4439
          %4902 = vmatpush1.bf16.msra.mxu0 %v4438
          %4903 = vmatprep.subr.bf16.mxu0 %v4443
          %4904 = vmatpush1.bf16.msra.mxu0 %v4442
          %4905 = vmatprep.subr.bf16.mxu0 %v4447
          %4906 = vmatpush1.bf16.msra.mxu0 %v4446
          %4907 = vmatprep.subr.bf16.mxu0 %v4451
          %4908 = vmatpush1.bf16.msra.mxu0 %v4450
          %4909 = vmatprep.mubr.bf16.mxu0 %v3234
          %4910 = vmatmul.mubr.bf16.gmra.mrb[0].mxu0 %v3233
          %v4911 = vpop.f32.mrb[0].mxu0
          %v4912 = vadd.f32 %v4871, %v4911
          %v4913 = vpop.f32.mrb[0].mxu0
          %v4914 = vadd.f32 %v4873, %v4913
          %v4915 = vpop.f32.mrb[0].mxu0
          %v4916 = vpop.f32.mrb[0].mxu0
          %4917 = vdwg.mxu0
          %4918 = vmatprep.subr.bf16.mxu0 %v4455
          %4919 = vmatpush1.bf16.msra.mxu0 %v4454
          %4920 = vmatprep.subr.bf16.mxu0 %v4459
          %4921 = vmatpush1.bf16.msra.mxu0 %v4458
          %4922 = vmatprep.subr.bf16.mxu0 %v4463
          %4923 = vmatpush1.bf16.msra.mxu0 %v4462
          %4924 = vmatprep.subr.bf16.mxu0 %v4467
          %4925 = vmatpush1.bf16.msra.mxu0 %v4466
          %4926 = vmatprep.subr.bf16.mxu0 %v4471
          %4927 = vmatpush1.bf16.msra.mxu0 %v4470
          %4928 = vmatprep.subr.bf16.mxu0 %v4475
          %4929 = vmatpush1.bf16.msra.mxu0 %v4474
          %4930 = vmatprep.subr.bf16.mxu0 %v4479
          %4931 = vmatpush1.bf16.msra.mxu0 %v4478
          %4932 = vmatprep.subr.bf16.mxu0 %v4483
          %4933 = vmatpush1.bf16.msra.mxu0 %v4482
          %4934 = vmatprep.subr.bf16.mxu0 %v4487
          %4935 = vmatpush1.bf16.msra.mxu0 %v4486
          %4936 = vmatprep.subr.bf16.mxu0 %v4491
          %4937 = vmatpush1.bf16.msra.mxu0 %v4490
          %4938 = vmatprep.subr.bf16.mxu0 %v4495
          %4939 = vmatpush1.bf16.msra.mxu0 %v4494
          %4940 = vmatprep.subr.bf16.mxu0 %v4499
          %4941 = vmatpush1.bf16.msra.mxu0 %v4498
          %4942 = vmatprep.subr.bf16.mxu0 %v4503
          %4943 = vmatpush1.bf16.msra.mxu0 %v4502
          %4944 = vmatprep.subr.bf16.mxu0 %v4507
          %4945 = vmatpush1.bf16.msra.mxu0 %v4506
          %4946 = vmatprep.subr.bf16.mxu0 %v4511
          %4947 = vmatpush1.bf16.msra.mxu0 %v4510
          %4948 = vmatprep.subr.bf16.mxu0 %v4515
          %4949 = vmatpush1.bf16.msra.mxu0 %v4514
          %4950 = vmatprep.mubr.bf16.mxu0 %v3236
          %4951 = vmatmul.mubr.bf16.gmra.mrb[0].mxu0 %v3235
          %v4952 = vpop.f32.mrb[0].mxu0
          %v4953 = vadd.f32 %v4912, %v4952
          %v4954 = vpop.f32.mrb[0].mxu0
          %v4955 = vadd.f32 %v4914, %v4954
          %v4956 = vpop.f32.mrb[0].mxu0
          %v4957 = vpop.f32.mrb[0].mxu0
          %4958 = vdwg.mxu0
          %4959 = vmatprep.subr.bf16.mxu0 %v4265
          %4960 = vmatpush1.bf16.msra.mxu0 %v4264
          %4961 = vmatprep.subr.bf16.mxu0 %v4269
          %4962 = vmatpush1.bf16.msra.mxu0 %v4268
          %4963 = vmatprep.subr.bf16.mxu0 %v4273
          %4964 = vmatpush1.bf16.msra.mxu0 %v4272
          %4965 = vmatprep.subr.bf16.mxu0 %v4277
          %4966 = vmatpush1.bf16.msra.mxu0 %v4276
          %4967 = vmatprep.subr.bf16.mxu0 %v4281
          %4968 = vmatpush1.bf16.msra.mxu0 %v4280
          %4969 = vmatprep.subr.bf16.mxu0 %v4285
          %4970 = vmatpush1.bf16.msra.mxu0 %v4284
          %4971 = vmatprep.subr.bf16.mxu0 %v4289
          %4972 = vmatpush1.bf16.msra.mxu0 %v4288
          %4973 = vmatprep.subr.bf16.mxu0 %v4293
          %4974 = vmatpush1.bf16.msra.mxu0 %v4292
          %4975 = vmatprep.subr.bf16.mxu0 %v4297
          %4976 = vmatpush1.bf16.msra.mxu0 %v4296
          %4977 = vmatprep.subr.bf16.mxu0 %v4301
          %4978 = vmatpush1.bf16.msra.mxu0 %v4300
          %4979 = vmatprep.subr.bf16.mxu0 %v4305
          %4980 = vmatpush1.bf16.msra.mxu0 %v4304
          %4981 = vmatprep.subr.bf16.mxu0 %v4309
          %4982 = vmatpush1.bf16.msra.mxu0 %v4308
          %4983 = vmatprep.subr.bf16.mxu0 %v4313
          %4984 = vmatpush1.bf16.msra.mxu0 %v4312
          %4985 = vmatprep.subr.bf16.mxu0 %v4317
          %4986 = vmatpush1.bf16.msra.mxu0 %v4316
          %4987 = vmatprep.subr.bf16.mxu0 %v4321
          %4988 = vmatpush1.bf16.msra.mxu0 %v4320
          %4989 = vmatprep.subr.bf16.mxu0 %v4325
          %4990 = vmatpush1.bf16.msra.mxu0 %v4324
          %4991 = vmatprep.mubr.bf16.mxu0 %v3230
          %4992 = vmatmul.mubr.bf16.gmra.mrb[0].mxu0 %v3229
          %v4993 = vpop.f32.mrb[0].mxu0
          %v4994 = vadd.f32 %v4786, %v4993
          %v4995 = vpop.f32.mrb[0].mxu0
          %v4996 = vadd.f32 %v4790, %v4995
          %v4997 = vpop.f32.mrb[0].mxu0
          %v4998 = vpop.f32.mrb[0].mxu0
          %4999 = vdwg.mxu0
          %5000 = vmatprep.subr.bf16.mxu0 %v4329
          %5001 = vmatpush1.bf16.msra.mxu0 %v4328
          %5002 = vmatprep.subr.bf16.mxu0 %v4333
          %5003 = vmatpush1.bf16.msra.mxu0 %v4332
          %5004 = vmatprep.subr.bf16.mxu0 %v4337
          %5005 = vmatpush1.bf16.msra.mxu0 %v4336
          %5006 = vmatprep.subr.bf16.mxu0 %v4341
          %5007 = vmatpush1.bf16.msra.mxu0 %v4340
          %5008 = vmatprep.subr.bf16.mxu0 %v4345
          %5009 = vmatpush1.bf16.msra.mxu0 %v4344
          %5010 = vmatprep.subr.bf16.mxu0 %v4349
          %5011 = vmatpush1.bf16.msra.mxu0 %v4348
          %5012 = vmatprep.subr.bf16.mxu0 %v4353
          %5013 = vmatpush1.bf16.msra.mxu0 %v4352
          %5014 = vmatprep.subr.bf16.mxu0 %v4357
          %5015 = vmatpush1.bf16.msra.mxu0 %v4356
          %5016 = vmatprep.subr.bf16.mxu0 %v4361
          %5017 = vmatpush1.bf16.msra.mxu0 %v4360
          %5018 = vmatprep.subr.bf16.mxu0 %v4365
          %5019 = vmatpush1.bf16.msra.mxu0 %v4364
          %5020 = vmatprep.subr.bf16.mxu0 %v4369
          %5021 = vmatpush1.bf16.msra.mxu0 %v4368
          %5022 = vmatprep.subr.bf16.mxu0 %v4373
          %5023 = vmatpush1.bf16.msra.mxu0 %v4372
          %5024 = vmatprep.subr.bf16.mxu0 %v4377
          %5025 = vmatpush1.bf16.msra.mxu0 %v4376
          %5026 = vmatprep.subr.bf16.mxu0 %v4381
          %5027 = vmatpush1.bf16.msra.mxu0 %v4380
          %5028 = vmatprep.subr.bf16.mxu0 %v4385
          %5029 = vmatpush1.bf16.msra.mxu0 %v4384
          %5030 = vmatprep.subr.bf16.mxu0 %v4389
          %5031 = vmatpush1.bf16.msra.mxu0 %v4388
          %5032 = vmatprep.mubr.bf16.mxu0 %v3232
          %5033 = vmatmul.mubr.bf16.gmra.mrb[0].mxu0 %v3231
          %v5034 = vpop.f32.mrb[0].mxu0
          %v5035 = vadd.f32 %v4994, %v5034
          %v5036 = vpop.f32.mrb[0].mxu0
          %v5037 = vadd.f32 %v4996, %v5036
          %v5038 = vpop.f32.mrb[0].mxu0
          %v5039 = vpop.f32.mrb[0].mxu0
          %5040 = vdwg.mxu0
          %5041 = vmatprep.subr.bf16.mxu0 %v4393
          %5042 = vmatpush1.bf16.msra.mxu0 %v4392
          %5043 = vmatprep.subr.bf16.mxu0 %v4397
          %5044 = vmatpush1.bf16.msra.mxu0 %v4396
          %5045 = vmatprep.subr.bf16.mxu0 %v4401
          %5046 = vmatpush1.bf16.msra.mxu0 %v4400
          %5047 = vmatprep.subr.bf16.mxu0 %v4405
          %5048 = vmatpush1.bf16.msra.mxu0 %v4404
          %5049 = vmatprep.subr.bf16.mxu0 %v4409
          %5050 = vmatpush1.bf16.msra.mxu0 %v4408
          %5051 = vmatprep.subr.bf16.mxu0 %v4413
          %5052 = vmatpush1.bf16.msra.mxu0 %v4412
          %5053 = vmatprep.subr.bf16.mxu0 %v4417
          %5054 = vmatpush1.bf16.msra.mxu0 %v4416
          %5055 = vmatprep.subr.bf16.mxu0 %v4421
          %5056 = vmatpush1.bf16.msra.mxu0 %v4420
          %5057 = vmatprep.subr.bf16.mxu0 %v4425
          %5058 = vmatpush1.bf16.msra.mxu0 %v4424
          %5059 = vmatprep.subr.bf16.mxu0 %v4429
          %5060 = vmatpush1.bf16.msra.mxu0 %v4428
          %5061 = vmatprep.subr.bf16.mxu0 %v4433
          %5062 = vmatpush1.bf16.msra.mxu0 %v4432
          %5063 = vmatprep.subr.bf16.mxu0 %v4437
          %5064 = vmatpush1.bf16.msra.mxu0 %v4436
          %5065 = vmatprep.subr.bf16.mxu0 %v4441
          %5066 = vmatpush1.bf16.msra.mxu0 %v4440
          %5067 = vmatprep.subr.bf16.mxu0 %v4445
          %5068 = vmatpush1.bf16.msra.mxu0 %v4444
          %5069 = vmatprep.subr.bf16.mxu0 %v4449
          %5070 = vmatpush1.bf16.msra.mxu0 %v4448
          %5071 = vmatprep.subr.bf16.mxu0 %v4453
          %5072 = vmatpush1.bf16.msra.mxu0 %v4452
          %5073 = vmatprep.mubr.bf16.mxu0 %v3234
          %5074 = vmatmul.mubr.bf16.gmra.mrb[0].mxu0 %v3233
          %v5075 = vpop.f32.mrb[0].mxu0
          %v5076 = vadd.f32 %v5035, %v5075
          %v5077 = vpop.f32.mrb[0].mxu0
          %v5078 = vadd.f32 %v5037, %v5077
          %v5079 = vpop.f32.mrb[0].mxu0
          %v5080 = vpop.f32.mrb[0].mxu0
          %5081 = vdwg.mxu0
          %5082 = vmatprep.subr.bf16.mxu0 %v4457
          %5083 = vmatpush1.bf16.msra.mxu0 %v4456
          %5084 = vmatprep.subr.bf16.mxu0 %v4461
          %5085 = vmatpush1.bf16.msra.mxu0 %v4460
          %5086 = vmatprep.subr.bf16.mxu0 %v4465
          %5087 = vmatpush1.bf16.msra.mxu0 %v4464
          %5088 = vmatprep.subr.bf16.mxu0 %v4469
          %5089 = vmatpush1.bf16.msra.mxu0 %v4468
          %5090 = vmatprep.subr.bf16.mxu0 %v4473
          %5091 = vmatpush1.bf16.msra.mxu0 %v4472
          %5092 = vmatprep.subr.bf16.mxu0 %v4477
          %5093 = vmatpush1.bf16.msra.mxu0 %v4476
          %5094 = vmatprep.subr.bf16.mxu0 %v4481
          %5095 = vmatpush1.bf16.msra.mxu0 %v4480
          %5096 = vmatprep.subr.bf16.mxu0 %v4485
          %5097 = vmatpush1.bf16.msra.mxu0 %v4484
          %5098 = vmatprep.subr.bf16.mxu0 %v4489
          %5099 = vmatpush1.bf16.msra.mxu0 %v4488
          %5100 = vmatprep.subr.bf16.mxu0 %v4493
          %5101 = vmatpush1.bf16.msra.mxu0 %v4492
          %5102 = vmatprep.subr.bf16.mxu0 %v4497
          %5103 = vmatpush1.bf16.msra.mxu0 %v4496
          %5104 = vmatprep.subr.bf16.mxu0 %v4501
          %5105 = vmatpush1.bf16.msra.mxu0 %v4500
          %5106 = vmatprep.subr.bf16.mxu0 %v4505
          %5107 = vmatpush1.bf16.msra.mxu0 %v4504
          %5108 = vmatprep.subr.bf16.mxu0 %v4509
          %5109 = vmatpush1.bf16.msra.mxu0 %v4508
          %5110 = vmatprep.subr.bf16.mxu0 %v4513
          %5111 = vmatpush1.bf16.msra.mxu0 %v4512
          %5112 = vmatprep.subr.bf16.mxu0 %v4517
          %5113 = vmatpush1.bf16.msra.mxu0 %v4516
          %5114 = vmatprep.mubr.bf16.mxu0 %v3236
          %5115 = vmatmul.mubr.bf16.gmra.mrb[0].mxu0 %v3235
          %v5116 = vpop.f32.mrb[0].mxu0
          %v5117 = vadd.f32 %v5076, %v5116
          %v5118 = vpop.f32.mrb[0].mxu0
          %v5119 = vadd.f32 %v5078, %v5118
          %v5120 = vpop.f32.mrb[0].mxu0
          %v5121 = vpop.f32.mrb[0].mxu0
          %5122 = vdwg.mxu0
          %v5123 = vmax.f32 %v4953, 0.0
          %v5124 = vmax.f32 %v4955, 0.0
          %v5125 = vmax.f32 %v5117, 0.0
          %v5126 = vmax.f32 %v5119, 0.0
          %v5127 = vpack.c.bf16 %v5123, %v5123
          %v5128 = vpack.c.bf16 %v5124, %v5124
          %v5129 = vpack.c.bf16 %v5125, %v5125
          %v5130 = vpack.c.bf16 %v5126, %v5126
          %v5131 = vld [vmem:[#allocation6] sm:$0xff]
          %v5132 = vld [vmem:[#allocation6 + $0x8] sm:$0xff]
          %v5133 = vld [vmem:[#allocation6 + $0x10] sm:$0xff]
          %v5134 = vld [vmem:[#allocation6 + $0x18] sm:$0xff]
          %v5135 = vld [vmem:[#allocation6 + $0x20] sm:$0xff]
          %v5136 = vld [vmem:[#allocation6 + $0x28] sm:$0xff]
          %v5137 = vld [vmem:[#allocation6 + $0x30] sm:$0xff]
          %v5138 = vld [vmem:[#allocation6 + $0x38] sm:$0xff]
          %v5139 = vld [vmem:[#allocation6 + $0x40] sm:$0xff]
          %v5140 = vld [vmem:[#allocation6 + $0x48] sm:$0xff]
          %v5141 = vld [vmem:[#allocation6 + $0x50] sm:$0xff]
          %v5142 = vld [vmem:[#allocation6 + $0x58] sm:$0xff]
          %v5143 = vld [vmem:[#allocation6 + $0x60] sm:$0xff]
          %v5144 = vld [vmem:[#allocation6 + $0x68] sm:$0xff]
          %v5145 = vld [vmem:[#allocation6 + $0x70] sm:$0xff]
          %v5146 = vld [vmem:[#allocation6 + $0x78] sm:$0xff]
          %v5147 = vld [vmem:[#allocation6 + $0x80] sm:$0xff]
          %v5148 = vld [vmem:[#allocation6 + $0x88] sm:$0xff]
          %v5149 = vld [vmem:[#allocation6 + $0x90] sm:$0xff]
          %v5150 = vld [vmem:[#allocation6 + $0x98] sm:$0xff]
          %v5151 = vld [vmem:[#allocation6 + $0xa0] sm:$0xff]
          %v5152 = vld [vmem:[#allocation6 + $0xa8] sm:$0xff]
          %v5153 = vld [vmem:[#allocation6 + $0xb0] sm:$0xff]
          %v5154 = vld [vmem:[#allocation6 + $0xb8] sm:$0xff]
          %v5155 = vld [vmem:[#allocation6 + $0xc0] sm:$0xff]
          %v5156 = vld [vmem:[#allocation6 + $0xc8] sm:$0xff]
          %v5157 = vld [vmem:[#allocation6 + $0xd0] sm:$0xff]
          %v5158 = vld [vmem:[#allocation6 + $0xd8] sm:$0xff]
          %v5159 = vld [vmem:[#allocation6 + $0xe0] sm:$0xff]
          %v5160 = vld [vmem:[#allocation6 + $0xe8] sm:$0xff]
          %v5161 = vld [vmem:[#allocation6 + $0xf0] sm:$0xff]
          %v5162 = vld [vmem:[#allocation6 + $0xf8] sm:$0xff]
          %v5163 = vld [vmem:[#allocation6 + $0x100] sm:$0xff]
          %v5164 = vld [vmem:[#allocation6 + $0x108] sm:$0xff]
          %v5165 = vld [vmem:[#allocation6 + $0x110] sm:$0xff]
          %v5166 = vld [vmem:[#allocation6 + $0x118] sm:$0xff]
          %v5167 = vld [vmem:[#allocation6 + $0x120] sm:$0xff]
          %v5168 = vld [vmem:[#allocation6 + $0x128] sm:$0xff]
          %v5169 = vld [vmem:[#allocation6 + $0x130] sm:$0xff]
          %v5170 = vld [vmem:[#allocation6 + $0x138] sm:$0xff]
          %v5171 = vld [vmem:[#allocation6 + $0x140] sm:$0xff]
          %v5172 = vld [vmem:[#allocation6 + $0x148] sm:$0xff]
          %v5173 = vld [vmem:[#allocation6 + $0x150] sm:$0xff]
          %v5174 = vld [vmem:[#allocation6 + $0x158] sm:$0xff]
          %v5175 = vld [vmem:[#allocation6 + $0x160] sm:$0xff]
          %v5176 = vld [vmem:[#allocation6 + $0x168] sm:$0xff]
          %v5177 = vld [vmem:[#allocation6 + $0x170] sm:$0xff]
          %v5178 = vld [vmem:[#allocation6 + $0x178] sm:$0xff]
          %v5179 = vld [vmem:[#allocation6 + $0x180] sm:$0xff]
          %v5180 = vld [vmem:[#allocation6 + $0x188] sm:$0xff]
          %v5181 = vld [vmem:[#allocation6 + $0x190] sm:$0xff]
          %v5182 = vld [vmem:[#allocation6 + $0x198] sm:$0xff]
          %v5183 = vld [vmem:[#allocation6 + $0x1a0] sm:$0xff]
          %v5184 = vld [vmem:[#allocation6 + $0x1a8] sm:$0xff]
          %v5185 = vld [vmem:[#allocation6 + $0x1b0] sm:$0xff]
          %v5186 = vld [vmem:[#allocation6 + $0x1b8] sm:$0xff]
          %v5187 = vld [vmem:[#allocation6 + $0x1c0] sm:$0xff]
          %v5188 = vld [vmem:[#allocation6 + $0x1c8] sm:$0xff]
          %v5189 = vld [vmem:[#allocation6 + $0x1d0] sm:$0xff]
          %v5190 = vld [vmem:[#allocation6 + $0x1d8] sm:$0xff]
          %v5191 = vld [vmem:[#allocation6 + $0x1e0] sm:$0xff]
          %v5192 = vld [vmem:[#allocation6 + $0x1e8] sm:$0xff]
          %v5193 = vld [vmem:[#allocation6 + $0x1f0] sm:$0xff]
          %v5194 = vld [vmem:[#allocation6 + $0x1f8] sm:$0xff]
          %v5195 = vld [vmem:[%s10] sm:$0x3]
          %v5260 = vunpack.c.l.b16 %v5131
          %v5261 = vunpack.c.h.b16 %v5131
          %v5262 = vunpack.c.l.b16 %v5132
          %v5263 = vunpack.c.h.b16 %v5132
          %v5264 = vunpack.c.l.b16 %v5133
          %v5265 = vunpack.c.h.b16 %v5133
          %v5266 = vunpack.c.l.b16 %v5134
          %v5267 = vunpack.c.h.b16 %v5134
          %v5268 = vunpack.c.l.b16 %v5135
          %v5269 = vunpack.c.h.b16 %v5135
          %v5270 = vunpack.c.l.b16 %v5136
          %v5271 = vunpack.c.h.b16 %v5136
          %v5272 = vunpack.c.l.b16 %v5137
          %v5273 = vunpack.c.h.b16 %v5137
          %v5274 = vunpack.c.l.b16 %v5138
          %v5275 = vunpack.c.h.b16 %v5138
          %v5276 = vunpack.c.l.b16 %v5139
          %v5277 = vunpack.c.h.b16 %v5139
          %v5278 = vunpack.c.l.b16 %v5140
          %v5279 = vunpack.c.h.b16 %v5140
          %v5280 = vunpack.c.l.b16 %v5141
          %v5281 = vunpack.c.h.b16 %v5141
          %v5282 = vunpack.c.l.b16 %v5142
          %v5283 = vunpack.c.h.b16 %v5142
          %v5284 = vunpack.c.l.b16 %v5143
          %v5285 = vunpack.c.h.b16 %v5143
          %v5286 = vunpack.c.l.b16 %v5144
          %v5287 = vunpack.c.h.b16 %v5144
          %v5288 = vunpack.c.l.b16 %v5145
          %v5289 = vunpack.c.h.b16 %v5145
          %v5290 = vunpack.c.l.b16 %v5146
          %v5291 = vunpack.c.h.b16 %v5146
          %v5292 = vunpack.c.l.b16 %v5147
          %v5293 = vunpack.c.h.b16 %v5147
          %v5294 = vunpack.c.l.b16 %v5148
          %v5295 = vunpack.c.h.b16 %v5148
          %v5296 = vunpack.c.l.b16 %v5149
          %v5297 = vunpack.c.h.b16 %v5149
          %v5298 = vunpack.c.l.b16 %v5150
          %v5299 = vunpack.c.h.b16 %v5150
          %v5300 = vunpack.c.l.b16 %v5151
          %v5301 = vunpack.c.h.b16 %v5151
          %v5302 = vunpack.c.l.b16 %v5152
          %v5303 = vunpack.c.h.b16 %v5152
          %v5304 = vunpack.c.l.b16 %v5153
          %v5305 = vunpack.c.h.b16 %v5153
          %v5306 = vunpack.c.l.b16 %v5154
          %v5307 = vunpack.c.h.b16 %v5154
          %v5308 = vunpack.c.l.b16 %v5155
          %v5309 = vunpack.c.h.b16 %v5155
          %v5310 = vunpack.c.l.b16 %v5156
          %v5311 = vunpack.c.h.b16 %v5156
          %v5312 = vunpack.c.l.b16 %v5157
          %v5313 = vunpack.c.h.b16 %v5157
          %v5314 = vunpack.c.l.b16 %v5158
          %v5315 = vunpack.c.h.b16 %v5158
          %v5316 = vunpack.c.l.b16 %v5159
          %v5317 = vunpack.c.h.b16 %v5159
          %v5318 = vunpack.c.l.b16 %v5160
          %v5319 = vunpack.c.h.b16 %v5160
          %v5320 = vunpack.c.l.b16 %v5161
          %v5321 = vunpack.c.h.b16 %v5161
          %v5322 = vunpack.c.l.b16 %v5162
          %v5323 = vunpack.c.h.b16 %v5162
          %v5324 = vunpack.c.l.b16 %v5163
          %v5325 = vunpack.c.h.b16 %v5163
          %v5326 = vunpack.c.l.b16 %v5164
          %v5327 = vunpack.c.h.b16 %v5164
          %v5328 = vunpack.c.l.b16 %v5165
          %v5329 = vunpack.c.h.b16 %v5165
          %v5330 = vunpack.c.l.b16 %v5166
          %v5331 = vunpack.c.h.b16 %v5166
          %v5332 = vunpack.c.l.b16 %v5167
          %v5333 = vunpack.c.h.b16 %v5167
          %v5334 = vunpack.c.l.b16 %v5168
          %v5335 = vunpack.c.h.b16 %v5168
          %v5336 = vunpack.c.l.b16 %v5169
          %v5337 = vunpack.c.h.b16 %v5169
          %v5338 = vunpack.c.l.b16 %v5170
          %v5339 = vunpack.c.h.b16 %v5170
          %v5340 = vunpack.c.l.b16 %v5171
          %v5341 = vunpack.c.h.b16 %v5171
          %v5342 = vunpack.c.l.b16 %v5172
          %v5343 = vunpack.c.h.b16 %v5172
          %v5344 = vunpack.c.l.b16 %v5173
          %v5345 = vunpack.c.h.b16 %v5173
          %v5346 = vunpack.c.l.b16 %v5174
          %v5347 = vunpack.c.h.b16 %v5174
          %v5348 = vunpack.c.l.b16 %v5175
          %v5349 = vunpack.c.h.b16 %v5175
          %v5350 = vunpack.c.l.b16 %v5176
          %v5351 = vunpack.c.h.b16 %v5176
          %v5352 = vunpack.c.l.b16 %v5177
          %v5353 = vunpack.c.h.b16 %v5177
          %v5354 = vunpack.c.l.b16 %v5178
          %v5355 = vunpack.c.h.b16 %v5178
          %v5356 = vunpack.c.l.b16 %v5179
          %v5357 = vunpack.c.h.b16 %v5179
          %v5358 = vunpack.c.l.b16 %v5180
          %v5359 = vunpack.c.h.b16 %v5180
          %v5360 = vunpack.c.l.b16 %v5181
          %v5361 = vunpack.c.h.b16 %v5181
          %v5362 = vunpack.c.l.b16 %v5182
          %v5363 = vunpack.c.h.b16 %v5182
          %v5364 = vunpack.c.l.b16 %v5183
          %v5365 = vunpack.c.h.b16 %v5183
          %v5366 = vunpack.c.l.b16 %v5184
          %v5367 = vunpack.c.h.b16 %v5184
          %v5368 = vunpack.c.l.b16 %v5185
          %v5369 = vunpack.c.h.b16 %v5185
          %v5370 = vunpack.c.l.b16 %v5186
          %v5371 = vunpack.c.h.b16 %v5186
          %v5372 = vunpack.c.l.b16 %v5187
          %v5373 = vunpack.c.h.b16 %v5187
          %v5374 = vunpack.c.l.b16 %v5188
          %v5375 = vunpack.c.h.b16 %v5188
          %v5376 = vunpack.c.l.b16 %v5189
          %v5377 = vunpack.c.h.b16 %v5189
          %v5378 = vunpack.c.l.b16 %v5190
          %v5379 = vunpack.c.h.b16 %v5190
          %v5380 = vunpack.c.l.b16 %v5191
          %v5381 = vunpack.c.h.b16 %v5191
          %v5382 = vunpack.c.l.b16 %v5192
          %v5383 = vunpack.c.h.b16 %v5192
          %v5384 = vunpack.c.l.b16 %v5193
          %v5385 = vunpack.c.h.b16 %v5193
          %v5386 = vunpack.c.l.b16 %v5194
          %v5387 = vunpack.c.h.b16 %v5194
          %v5388 = vpack.c.b16 %v5262, %v5260
          %v5389 = vpack.c.b16 %v5263, %v5261
          %v5390 = vpack.c.b16 %v5266, %v5264
          %v5391 = vpack.c.b16 %v5267, %v5265
          %v5392 = vpack.c.b16 %v5270, %v5268
          %v5393 = vpack.c.b16 %v5271, %v5269
          %v5394 = vpack.c.b16 %v5274, %v5272
          %v5395 = vpack.c.b16 %v5275, %v5273
          %v5396 = vpack.c.b16 %v5278, %v5276
          %v5397 = vpack.c.b16 %v5279, %v5277
          %v5398 = vpack.c.b16 %v5282, %v5280
          %v5399 = vpack.c.b16 %v5283, %v5281
          %v5400 = vpack.c.b16 %v5286, %v5284
          %v5401 = vpack.c.b16 %v5287, %v5285
          %v5402 = vpack.c.b16 %v5290, %v5288
          %v5403 = vpack.c.b16 %v5291, %v5289
          %v5404 = vpack.c.b16 %v5294, %v5292
          %v5405 = vpack.c.b16 %v5295, %v5293
          %v5406 = vpack.c.b16 %v5298, %v5296
          %v5407 = vpack.c.b16 %v5299, %v5297
          %v5408 = vpack.c.b16 %v5302, %v5300
          %v5409 = vpack.c.b16 %v5303, %v5301
          %v5410 = vpack.c.b16 %v5306, %v5304
          %v5411 = vpack.c.b16 %v5307, %v5305
          %v5412 = vpack.c.b16 %v5310, %v5308
          %v5413 = vpack.c.b16 %v5311, %v5309
          %v5414 = vpack.c.b16 %v5314, %v5312
          %v5415 = vpack.c.b16 %v5315, %v5313
          %v5416 = vpack.c.b16 %v5318, %v5316
          %v5417 = vpack.c.b16 %v5319, %v5317
          %v5418 = vpack.c.b16 %v5322, %v5320
          %v5419 = vpack.c.b16 %v5323, %v5321
          %v5420 = vpack.c.b16 %v5326, %v5324
          %v5421 = vpack.c.b16 %v5327, %v5325
          %v5422 = vpack.c.b16 %v5330, %v5328
          %v5423 = vpack.c.b16 %v5331, %v5329
          %v5424 = vpack.c.b16 %v5334, %v5332
          %v5425 = vpack.c.b16 %v5335, %v5333
          %v5426 = vpack.c.b16 %v5338, %v5336
          %v5427 = vpack.c.b16 %v5339, %v5337
          %v5428 = vpack.c.b16 %v5342, %v5340
          %v5429 = vpack.c.b16 %v5343, %v5341
          %v5430 = vpack.c.b16 %v5346, %v5344
          %v5431 = vpack.c.b16 %v5347, %v5345
          %v5432 = vpack.c.b16 %v5350, %v5348
          %v5433 = vpack.c.b16 %v5351, %v5349
          %v5434 = vpack.c.b16 %v5354, %v5352
          %v5435 = vpack.c.b16 %v5355, %v5353
          %v5436 = vpack.c.b16 %v5358, %v5356
          %v5437 = vpack.c.b16 %v5359, %v5357
          %v5438 = vpack.c.b16 %v5362, %v5360
          %v5439 = vpack.c.b16 %v5363, %v5361
          %v5440 = vpack.c.b16 %v5366, %v5364
          %v5441 = vpack.c.b16 %v5367, %v5365
          %v5442 = vpack.c.b16 %v5370, %v5368
          %v5443 = vpack.c.b16 %v5371, %v5369
          %v5444 = vpack.c.b16 %v5374, %v5372
          %v5445 = vpack.c.b16 %v5375, %v5373
          %v5446 = vpack.c.b16 %v5378, %v5376
          %v5447 = vpack.c.b16 %v5379, %v5377
          %v5448 = vpack.c.b16 %v5382, %v5380
          %v5449 = vpack.c.b16 %v5383, %v5381
          %v5450 = vpack.c.b16 %v5386, %v5384
          %v5451 = vpack.c.b16 %v5387, %v5385
          %v5517 = vlaneseq
          %v5518 = vshrl.u32 %v5517, 7
          %v5519 = vsub.s32 0, %v5518
          %v5520 = vrot.slane %v5195, %v5519
          %v5521 = vlaneseq
          %v5522 = vshrl.u32 %v5521, 7
          %v5523 = vsub.s32 1, %v5522
          %v5524 = vrot.slane %v5195, %v5523
          %5527 = vmatprep.subr.bf16.mxu0 %v5389
          %5528 = vmatpush1.bf16.msra.mxu0 %v5388
          %5529 = vmatprep.subr.bf16.mxu0 %v5391
          %5530 = vmatpush1.bf16.msra.mxu0 %v5390
          %5531 = vmatprep.subr.bf16.mxu0 %v5393
          %5532 = vmatpush1.bf16.msra.mxu0 %v5392
          %5533 = vmatprep.subr.bf16.mxu0 %v5395
          %5534 = vmatpush1.bf16.msra.mxu0 %v5394
          %5535 = vmatprep.subr.bf16.mxu0 %v5397
          %5536 = vmatpush1.bf16.msra.mxu0 %v5396
          %5537 = vmatprep.subr.bf16.mxu0 %v5399
          %5538 = vmatpush1.bf16.msra.mxu0 %v5398
          %5539 = vmatprep.subr.bf16.mxu0 %v5401
          %5540 = vmatpush1.bf16.msra.mxu0 %v5400
          %5541 = vmatprep.subr.bf16.mxu0 %v5403
          %5542 = vmatpush1.bf16.msra.mxu0 %v5402
          %5543 = vmatprep.subr.bf16.mxu0 %v5405
          %5544 = vmatpush1.bf16.msra.mxu0 %v5404
          %5545 = vmatprep.subr.bf16.mxu0 %v5407
          %5546 = vmatpush1.bf16.msra.mxu0 %v5406
          %5547 = vmatprep.subr.bf16.mxu0 %v5409
          %5548 = vmatpush1.bf16.msra.mxu0 %v5408
          %5549 = vmatprep.subr.bf16.mxu0 %v5411
          %5550 = vmatpush1.bf16.msra.mxu0 %v5410
          %5551 = vmatprep.subr.bf16.mxu0 %v5413
          %5552 = vmatpush1.bf16.msra.mxu0 %v5412
          %5553 = vmatprep.subr.bf16.mxu0 %v5415
          %5554 = vmatpush1.bf16.msra.mxu0 %v5414
          %5555 = vmatprep.subr.bf16.mxu0 %v5417
          %5556 = vmatpush1.bf16.msra.mxu0 %v5416
          %5557 = vmatprep.subr.bf16.mxu0 %v5419
          %5558 = vmatpush1.bf16.msra.mxu0 %v5418
          %5559 = vmatprep.mubr.bf16.mxu0 %v5128
          %5560 = vmatmul.mubr.bf16.gmra.mrb[0].mxu0 %v5127
          %v5561 = vpop.f32.mrb[0].mxu0
          %v5562 = vadd.f32 %v5520, %v5561
          %v5563 = vpop.f32.mrb[0].mxu0
          %v5564 = vadd.f32 %v5524, %v5563
          %v5565 = vpop.f32.mrb[0].mxu0
          %v5566 = vpop.f32.mrb[0].mxu0
          %5567 = vdwg.mxu0
          %5568 = vmatprep.subr.bf16.mxu0 %v5421
          %5569 = vmatpush1.bf16.msra.mxu0 %v5420
          %5570 = vmatprep.subr.bf16.mxu0 %v5423
          %5571 = vmatpush1.bf16.msra.mxu0 %v5422
          %5572 = vmatprep.subr.bf16.mxu0 %v5425
          %5573 = vmatpush1.bf16.msra.mxu0 %v5424
          %5574 = vmatprep.subr.bf16.mxu0 %v5427
          %5575 = vmatpush1.bf16.msra.mxu0 %v5426
          %5576 = vmatprep.subr.bf16.mxu0 %v5429
          %5577 = vmatpush1.bf16.msra.mxu0 %v5428
          %5578 = vmatprep.subr.bf16.mxu0 %v5431
          %5579 = vmatpush1.bf16.msra.mxu0 %v5430
          %5580 = vmatprep.subr.bf16.mxu0 %v5433
          %5581 = vmatpush1.bf16.msra.mxu0 %v5432
          %5582 = vmatprep.subr.bf16.mxu0 %v5435
          %5583 = vmatpush1.bf16.msra.mxu0 %v5434
          %5584 = vmatprep.subr.bf16.mxu0 %v5437
          %5585 = vmatpush1.bf16.msra.mxu0 %v5436
          %5586 = vmatprep.subr.bf16.mxu0 %v5439
          %5587 = vmatpush1.bf16.msra.mxu0 %v5438
          %5588 = vmatprep.subr.bf16.mxu0 %v5441
          %5589 = vmatpush1.bf16.msra.mxu0 %v5440
          %5590 = vmatprep.subr.bf16.mxu0 %v5443
          %5591 = vmatpush1.bf16.msra.mxu0 %v5442
          %5592 = vmatprep.subr.bf16.mxu0 %v5445
          %5593 = vmatpush1.bf16.msra.mxu0 %v5444
          %5594 = vmatprep.subr.bf16.mxu0 %v5447
          %5595 = vmatpush1.bf16.msra.mxu0 %v5446
          %5596 = vmatprep.subr.bf16.mxu0 %v5449
          %5597 = vmatpush1.bf16.msra.mxu0 %v5448
          %5598 = vmatprep.subr.bf16.mxu0 %v5451
          %5599 = vmatpush1.bf16.msra.mxu0 %v5450
          %5600 = vmatprep.mubr.bf16.mxu0 %v5130
          %5601 = vmatmul.mubr.bf16.gmra.mrb[0].mxu0 %v5129
          %v5602 = vpop.f32.mrb[0].mxu0
          %v5603 = vadd.f32 %v5562, %v5602
          %v5604 = vpop.f32.mrb[0].mxu0
          %v5605 = vadd.f32 %v5564, %v5604
          %v5606 = vpop.f32.mrb[0].mxu0
          %v5607 = vpop.f32.mrb[0].mxu0
          %5608 = vdwg.mxu0
          %v5609 = vmax.f32 %v5603, 0.0
          %v5610 = vmax.f32 %v5605, 0.0
          %v5611 = vld [vmem:[%s11] sm:$0xff]
          %v5612 = vld [vmem:[%s11 + $0x8] sm:$0xff]
          %v5613 = vld [vmem:[%s11 + $0x10] sm:$0xff]
          %v5614 = vld [vmem:[%s11 + $0x18] sm:$0xff]
          %v5615 = vld [vmem:[%s11 + $0x20] sm:$0xff]
          %v5616 = vld [vmem:[%s11 + $0x28] sm:$0xff]
          %v5617 = vld [vmem:[%s11 + $0x30] sm:$0xff]
          %v5618 = vld [vmem:[%s11 + $0x38] sm:$0xff]
          %v5619 = vld [vmem:[%s11 + $0x40] sm:$0xff]
          %v5620 = vld [vmem:[%s11 + $0x48] sm:$0xff]
          %v5621 = vld [vmem:[%s11 + $0x50] sm:$0xff]
          %v5622 = vld [vmem:[%s11 + $0x58] sm:$0xff]
          %v5623 = vld [vmem:[%s11 + $0x60] sm:$0xff]
          %v5624 = vld [vmem:[%s11 + $0x68] sm:$0xff]
          %v5625 = vld [vmem:[%s11 + $0x70] sm:$0xff]
          %v5626 = vld [vmem:[%s11 + $0x78] sm:$0xff]
          %v5627 = vld [vmem:[%s11 + $0x80] sm:$0xff]
          %v5628 = vld [vmem:[%s11 + $0x88] sm:$0xff]
          %v5629 = vld [vmem:[%s11 + $0x90] sm:$0xff]
          %v5630 = vld [vmem:[%s11 + $0x98] sm:$0xff]
          %v5631 = vld [vmem:[%s11 + $0xa0] sm:$0xff]
          %v5632 = vld [vmem:[%s11 + $0xa8] sm:$0xff]
          %v5633 = vld [vmem:[%s11 + $0xb0] sm:$0xff]
          %v5634 = vld [vmem:[%s11 + $0xb8] sm:$0xff]
          %v5635 = vld [vmem:[%s11 + $0xc0] sm:$0xff]
          %v5636 = vld [vmem:[%s11 + $0xc8] sm:$0xff]
          %v5637 = vld [vmem:[%s11 + $0xd0] sm:$0xff]
          %v5638 = vld [vmem:[%s11 + $0xd8] sm:$0xff]
          %v5639 = vld [vmem:[%s11 + $0xe0] sm:$0xff]
          %v5640 = vld [vmem:[%s11 + $0xe8] sm:$0xff]
          %v5641 = vld [vmem:[%s11 + $0xf0] sm:$0xff]
          %v5642 = vld [vmem:[%s11 + $0xf8] sm:$0xff]
          %v5643 = vld [vmem:[%s12] sm:$0x1]
          %5644 = vmatprep.subr.mxu0 0.0
          %5645 = vmatpush1.msra.mxu0 %v5611
          %5646 = vmatprep.subr.mxu0 0.0
          %5647 = vmatpush1.msra.mxu0 %v5612
          %5648 = vmatprep.subr.mxu0 0.0
          %5649 = vmatpush1.msra.mxu0 %v5613
          %5650 = vmatprep.subr.mxu0 0.0
          %5651 = vmatpush1.msra.mxu0 %v5614
          %5652 = vmatprep.subr.mxu0 0.0
          %5653 = vmatpush1.msra.mxu0 %v5615
          %5654 = vmatprep.subr.mxu0 0.0
          %5655 = vmatpush1.msra.mxu0 %v5616
          %5656 = vmatprep.subr.mxu0 0.0
          %5657 = vmatpush1.msra.mxu0 %v5617
          %5658 = vmatprep.subr.mxu0 0.0
          %5659 = vmatpush1.msra.mxu0 %v5618
          %5660 = vmatprep.subr.mxu0 0.0
          %5661 = vmatpush1.msra.mxu0 %v5619
          %5662 = vmatprep.subr.mxu0 0.0
          %5663 = vmatpush1.msra.mxu0 %v5620
          %5664 = vmatprep.subr.mxu0 0.0
          %5665 = vmatpush1.msra.mxu0 %v5621
          %5666 = vmatprep.subr.mxu0 0.0
          %5667 = vmatpush1.msra.mxu0 %v5622
          %5668 = vmatprep.subr.mxu0 0.0
          %5669 = vmatpush1.msra.mxu0 %v5623
          %5670 = vmatprep.subr.mxu0 0.0
          %5671 = vmatpush1.msra.mxu0 %v5624
          %5672 = vmatprep.subr.mxu0 0.0
          %5673 = vmatpush1.msra.mxu0 %v5625
          %5674 = vmatprep.subr.mxu0 0.0
          %5675 = vmatpush1.msra.mxu0 %v5626
          %5676 = vmatprep.subr.mxu0 0.0
          %5677 = vmatpush1.msra.mxu0 %v5627
          %5678 = vmatprep.subr.mxu0 0.0
          %5679 = vmatpush1.msra.mxu0 %v5628
          %5680 = vmatprep.subr.mxu0 0.0
          %5681 = vmatpush1.msra.mxu0 %v5629
          %5682 = vmatprep.subr.mxu0 0.0
          %5683 = vmatpush1.msra.mxu0 %v5630
          %5684 = vmatprep.subr.mxu0 0.0
          %5685 = vmatpush1.msra.mxu0 %v5631
          %5686 = vmatprep.subr.mxu0 0.0
          %5687 = vmatpush1.msra.mxu0 %v5632
          %5688 = vmatprep.subr.mxu0 0.0
          %5689 = vmatpush1.msra.mxu0 %v5633
          %5690 = vmatprep.subr.mxu0 0.0
          %5691 = vmatpush1.msra.mxu0 %v5634
          %5692 = vmatprep.subr.mxu0 0.0
          %5693 = vmatpush1.msra.mxu0 %v5635
          %5694 = vmatprep.subr.mxu0 0.0
          %5695 = vmatpush1.msra.mxu0 %v5636
          %5696 = vmatprep.subr.mxu0 0.0
          %5697 = vmatpush1.msra.mxu0 %v5637
          %5698 = vmatprep.subr.mxu0 0.0
          %5699 = vmatpush1.msra.mxu0 %v5638
          %5700 = vmatprep.subr.mxu0 0.0
          %5701 = vmatpush1.msra.mxu0 %v5639
          %5702 = vmatprep.subr.mxu0 0.0
          %5703 = vmatpush1.msra.mxu0 %v5640
          %5704 = vmatprep.subr.mxu0 0.0
          %5705 = vmatpush1.msra.mxu0 %v5641
          %5706 = vmatprep.subr.mxu0 0.0
          %5707 = vmatpush1.msra.mxu0 %v5642
          %5708 = vmatprep.mubr.f32.mxu0 %v5610
          %5709 = vmatmul.mubr.f32.gmra.mrb[0].mxu0 %v5609
          %v5710 = vpop.f32.mrb[0].mxu0
          %v5711 = vadd.f32 %v5643, %v5710
          %v5712 = vpop.f32.mrb[0].mxu0
          %5713 = vdwg.mxu0
          %vm5714 = vcmask 24576
          %5715 = vst.msk [vmem:[%s485] sm:$0x1] %vm5714, %v5711
        $region92: #{tpu_custom_call.1} parent=71 // pred_fallthru
          _
        %s5716 = sand.u32 %s329, 1
        %s5717 = scalar_lea.sflag [#allocation5], %s5716
        %s5718 = sand.u32 %s329, 1
        %s5719 = scalar_lea.vmem [#allocation8], %s5718
        // Predicated region
        $region93: #{tpu_custom_call.1} parent=71 // pred_check
          %p5720 = pneg %p339
        $region94: #{tpu_custom_call.1} parent=71 // pred_check_branch
          %5722 = sbr.rel (%p5720) target = $region96
        $region95: #{tpu_custom_call.1} parent=71 // pred_region
          %s5724 = ssub.s32 16, 16
          %5725 = vsyncadd %s5717, %s5724
          %s5726 = smul.addr %s33, 16
          %s5727 = scalar_lea.hbm %s13, %s5726
          %s5729 = sshll.u32 %s5719, 4
          %s5730 = int_to_ptr.vmem [resolvable:$true] %s5729
          %5732 = dma.vmem_to_hbm [thread:$0]  %s5730, 16, %s5727, %s5717
        $region96: #{tpu_custom_call.1} parent=71 // pred_fallthru
          _
      $region72: #{tpu_custom_call.1} parent=5 // pred_fallthru
        _
      %p5733 = scmp.le.s32.totalorder 2, %s24
      // Predicated region
      $region97: #{tpu_custom_call.1} parent=5 // pred_check
        %p5734 = pneg %p5733
      $region98: #{tpu_custom_call.1} parent=5 // pred_check_branch
        %5736 = sbr.rel (%p5734) target = $region100
      $region99: #{tpu_custom_call.1} parent=5 // pred_region
        %s5737 = ssub.s32 %s24, 2
        // Predicated region
        $region101: #{tpu_custom_call.1} parent=99 // pred_check
          %p5738 = pneg %p345
        $region102: #{tpu_custom_call.1} parent=99 // pred_check_branch
          %5740 = sbr.rel (%p5738) target = $region104
        $region103: #{tpu_custom_call.1} parent=99 // pred_region
          %s5741 = sand.u32 %s330, 1
          %s5742 = scalar_lea.sflag [#allocation5], %s5741
          %s5743 = sand.u32 %s330, 1
          %s5744 = scalar_lea.vmem [#allocation8], %s5743
          %5745 = dma.done %s5742, 16
        $region104: #{tpu_custom_call.1} parent=99 // pred_fallthru
          _
      $region100: #{tpu_custom_call.1} parent=5 // pred_fallthru
        _
    $region6: #{tpu_custom_call.1} parent=1 // loop_footer
      %s28 = sadd.s32 1, %s24
    $region7: #{tpu_custom_call.1} parent=1 // loop_footer_branch
      %23 = sbr.rel target = $region3
    $region8: #{tpu_custom_call.1} parent=1 // loop_exit
      _
    %5746 = vsyncpa [#allocation4], 1
    %s5747 = scalar_lea.sflag [#allocation4], 1
    %5748 = vsyncpa %s5747, 1
    %5749 = vsyncpa [#allocation7], 1
    %5750 = vsyncpa [#allocation5], 1
    %s5751 = scalar_lea.sflag [#allocation5], 1
    %5752 = vsyncpa %s5751, 1

// kernel: tpu_custom_call.1
$region0: #{tpu_custom_call.1}
  #allocation0 [shape = 'u32[]', space=smem, size = 0x4, offset = 0x4, fixed_abs, tag = 'smem constant byte address 0x4 - core index']
  #allocation1 [shape = 'u32[144,128]{1,0:T(1,128)}', space=vmem, size = 0x12000, scoped, tag = 'internal scratch']
  #allocation2 [shape = 'f32[1,1024]{1,0:T(1,128)}', space=vmem, size = 0x1000, scoped, tag = 'scratch operand']
  %s0 = inlined_call_operand.vmem [shape: f32[2,1,256,2], index: 0, kind: input, shape index: {}]
  %s1 = inlined_call_operand.vmem [shape: f32[2,64], index: 1, kind: input, shape index: {}]
  %s2 = inlined_call_operand.vmem [shape: f32[1,64], index: 2, kind: input, shape index: {}]
  %s3 = inlined_call_operand.vmem [shape: bf16[64,128], index: 3, kind: input, shape index: {}]
  %s4 = inlined_call_operand.vmem [shape: f32[1,128], index: 4, kind: input, shape index: {}]
  %s5 = inlined_call_operand.vmem [shape: bf16[128,1024], index: 5, kind: input, shape index: {}]
  %s6 = inlined_call_operand.vmem [shape: f32[1,1024], index: 6, kind: input, shape index: {}]
  %s7 = inlined_call_operand.hbm [shape: bf16[1024,512], index: 7, kind: input, shape index: {}]
  %s8 = inlined_call_operand.vmem [shape: f32[1,512], index: 8, kind: input, shape index: {}]
  %s9 = inlined_call_operand.hbm [shape: bf16[512,256], index: 9, kind: input, shape index: {}]
  %s10 = inlined_call_operand.vmem [shape: f32[1,256], index: 10, kind: input, shape index: {}]
  %s11 = inlined_call_operand.vmem [shape: f32[256,4], index: 11, kind: input, shape index: {}]
  %s12 = inlined_call_operand.vmem [shape: f32[1,4], index: 12, kind: input, shape index: {}]
  %s13 = inlined_call_operand.hbm [shape: f32[2,1,4], index: 13, kind: output, shape index: {}]
  %s14 = sld [smem:[#allocation0]]
  $region105: #{tpu_custom_call.1} parent=0
    _
  %s16 = ssub.s32 1, %s14
  %s17 = scalar_select 0, %s16, %s14
  $region1: #{tpu_custom_call.1} parent=0
    #allocation3 [shape = 'u8[1048576]{0}', space=vmem, size = 0x100000, scoped, tag = 'input window, operand 7, single buffered']
    #allocation4 [shape = 's32[2]{0}', space=sflag, size = 0x8, scoped, tag = 'scoped memory for tpu_custom_call.1']
    #allocation5 [shape = 's32[2]{0}', space=sflag, size = 0x8, scoped, tag = 'scoped memory for tpu_custom_call.1']
    #allocation6 [shape = 'u8[262144]{0}', space=vmem, size = 0x40000, scoped, tag = 'input window, operand 9, single buffered']
    #allocation7 [shape = 's32[1]{0}', space=sflag, size = 0x4, scoped, tag = 'scoped memory for tpu_custom_call.1']
    #allocation8 [shape = 'u8[1024]{0}', space=vmem, size = 0x400, scoped, tag = 'output window, operand 0']
    %18 = vsyncpa [#allocation4], 0
    %19 = vsyncpa [#allocation7], 0
    %20 = vsyncpa [#allocation5], 0
    %s21 = scalar_lea.sflag [#allocation5], 1
    %22 = vsyncpa %s21, 0
    loop: start=0, step=1, limit=4
    $region2: #{tpu_custom_call.1} parent=1 // loop_pre_header
      _
    $region3: #{tpu_custom_call.1} parent=1 // loop_header
      %s24 = sphi 0, %s28
      %p25 = scmp.ge.s32.totalorder %s24, 4
      %s31 = sphi 0, %s43
      %s32 = sphi 0, %s39
      %s33 = sphi 0, %s31
      %s34 = sphi 0, %s32
      %s35 = sphi 0, %s33
      %s36 = sphi 0, %s34
      %s48 = sphi 0, %s50
      %s51 = sphi 0, %s48
      %s52 = sphi 0, %s51
      %s68 = sphi 0, %s52
      %s72 = sphi 0, %s72
      %s74 = sphi 0, %s72
      %s75 = sphi 0, %s74
      %s89 = sphi 0, %s75
      %s93 = sphi 0, %s93
      %s95 = sphi 0, %s93
      %s96 = sphi 0, %s95
      %s110 = sphi 0, %s96
      %s114 = sphi 0, %s114
      %s116 = sphi 0, %s114
      %s117 = sphi 0, %s116
      %s131 = sphi 0, %s117
      %s135 = sphi 0, %s135
      %s137 = sphi 0, %s135
      %s138 = sphi 0, %s137
      %s152 = sphi 0, %s138
      %s156 = sphi 0, %s156
      %s158 = sphi 0, %s156
      %s159 = sphi 0, %s158
      %s173 = sphi 0, %s159
      %s177 = sphi 0, %s177
      %s179 = sphi 0, %s177
      %s180 = sphi 0, %s179
      %s194 = sphi 0, %s180
      %s198 = sphi 0, %s198
      %s200 = sphi 0, %s198
      %s201 = sphi 0, %s200
      %s215 = sphi 0, %s201
      %s219 = sphi 0, %s219
      %s221 = sphi 0, %s219
      %s222 = sphi 0, %s221
      %s236 = sphi 0, %s222
      %s240 = sphi 0, %s240
      %s242 = sphi 0, %s240
      %s243 = sphi 0, %s242
      %s257 = sphi 0, %s243
      %s261 = sphi 0, %s261
      %s263 = sphi 0, %s261
      %s264 = sphi 0, %s263
      %s278 = sphi 0, %s264
      %s282 = sphi 0, %s282
      %s284 = sphi 0, %s282
      %s285 = sphi 0, %s284
      %s299 = sphi 0, %s285
      %s303 = sphi 0, %s303
      %s305 = sphi 0, %s303
      %s306 = sphi 0, %s305
      %s320 = sphi 0, %s306
      %s326 = sphi 0, %s328
      %s329 = sphi 0, %s326
      %s330 = sphi 0, %s329
      %s346 = sphi 0, %s330
    $region4: #{tpu_custom_call.1} parent=1 // loop_header_branch
      %27 = sbr.rel (%p25) target = $region8
    $region5: #{tpu_custom_call.1} parent=1 // loop_body
      %s29 = ssub.s32 %s24, 1
      %s30 = ssub.s32 %s24, 2
      %s37 = sadd.s32 1, %s32
      %p38 = scmp.ge.s32.totalorder %s37, 1
      %s39 = scalar_select %p38, 0, %s37
      %s40 = sadd.s32 1, %s31
      %s41 = scalar_select %p38, %s40, %s31
      %p42 = scmp.ge.s32.totalorder %s41, 2
      %s43 = scalar_select %p42, 0, %s41
      %s44 = ssub.s32 %s31, %s43
      %s45 = ssub.s32 %s32, %s39
      %s46 = sor.u32 %s44, %s45
      %p47 = scmp.eq.s32.totalorder %s46, 0
      %s49 = sadd.s32 %s48, 1
      %s50 = scalar_select %p47, %s48, %s49
      %p53 = pneg %p47
      %p54 = scmp.eq.s32.totalorder %s24, 1
      %p55 = por %p53, %p54
      %p56 = scmp.ne.s32.totalorder %s48, %s51
      %p57 = scmp.eq.s32.totalorder %s24, 0
      %p58 = por %p56, %p57
      %p59 = scmp.ne.s32.totalorder %s48, %s51
      %p60 = scmp.eq.s32.totalorder %s29, 1
      %p61 = por %p59, %p60
      %p62 = scmp.ne.s32.totalorder %s51, %s52
      %p63 = scmp.eq.s32.totalorder %s29, 0
      %p64 = por %p62, %p63
      %p65 = scmp.ne.s32.totalorder %s51, %s52
      %p66 = scmp.eq.s32.totalorder %s30, 1
      %p67 = por %p65, %p66
      %p69 = scmp.ne.s32.totalorder %s52, %s68
      %p70 = scmp.eq.s32.totalorder %s30, 0
      %p71 = por %p69, %p70
      %s73 = sadd.s32 %s72, 1
      %p76 = scmp.eq.s32.totalorder %s24, 1
      %p77 = scmp.ne.s32.totalorder %s72, %s74
      %p78 = scmp.eq.s32.totalorder %s24, 0
      %p79 = por %p77, %p78
      %p80 = scmp.ne.s32.totalorder %s72, %s74
      %p81 = scmp.eq.s32.totalorder %s29, 1
      %p82 = por %p80, %p81
      %p83 = scmp.ne.s32.totalorder %s74, %s75
      %p84 = scmp.eq.s32.totalorder %s29, 0
      %p85 = por %p83, %p84
      %p86 = scmp.ne.s32.totalorder %s74, %s75
      %p87 = scmp.eq.s32.totalorder %s30, 1
      %p88 = por %p86, %p87
      %p90 = scmp.ne.s32.totalorder %s75, %s89
      %p91 = scmp.eq.s32.totalorder %s30, 0
      %p92 = por %p90, %p91
      %s94 = sadd.s32 %s93, 1
      %p97 = scmp.eq.s32.totalorder %s24, 1
      %p98 = scmp.ne.s32.totalorder %s93, %s95
      %p99 = scmp.eq.s32.totalorder %s24, 0
      %p100 = por %p98, %p99
      %p101 = scmp.ne.s32.totalorder %s93, %s95
      %p102 = scmp.eq.s32.totalorder %s29, 1
      %p103 = por %p101, %p102
      %p104 = scmp.ne.s32.totalorder %s95, %s96
      %p105 = scmp.eq.s32.totalorder %s29, 0
      %p106 = por %p104, %p105
      %p107 = scmp.ne.s32.totalorder %s95, %s96
      %p108 = scmp.eq.s32.totalorder %s30, 1
      %p109 = por %p107, %p108
      %p111 = scmp.ne.s32.totalorder %s96, %s110
      %p112 = scmp.eq.s32.totalorder %s30, 0
      %p113 = por %p111, %p112
      %s115 = sadd.s32 %s114, 1
      %p118 = scmp.eq.s32.totalorder %s24, 1
      %p119 = scmp.ne.s32.totalorder %s114, %s116
      %p120 = scmp.eq.s32.totalorder %s24, 0
      %p121 = por %p119, %p120
      %p122 = scmp.ne.s32.totalorder %s114, %s116
      %p123 = scmp.eq.s32.totalorder %s29, 1
      %p124 = por %p122, %p123
      %p125 = scmp.ne.s32.totalorder %s116, %s117
      %p126 = scmp.eq.s32.totalorder %s29, 0
      %p127 = por %p125, %p126
      %p128 = scmp.ne.s32.totalorder %s116, %s117
      %p129 = scmp.eq.s32.totalorder %s30, 1
      %p130 = por %p128, %p129
      %p132 = scmp.ne.s32.totalorder %s117, %s131
      %p133 = scmp.eq.s32.totalorder %s30, 0
      %p134 = por %p132, %p133
      %s136 = sadd.s32 %s135, 1
      %p139 = scmp.eq.s32.totalorder %s24, 1
      %p140 = scmp.ne.s32.totalorder %s135, %s137
      %p141 = scmp.eq.s32.totalorder %s24, 0
      %p142 = por %p140, %p141
      %p143 = scmp.ne.s32.totalorder %s135, %s137
      %p144 = scmp.eq.s32.totalorder %s29, 1
      %p145 = por %p143, %p144
      %p146 = scmp.ne.s32.totalorder %s137, %s138
      %p147 = scmp.eq.s32.totalorder %s29, 0
      %p148 = por %p146, %p147
      %p149 = scmp.ne.s32.totalorder %s137, %s138
      %p150 = scmp.eq.s32.totalorder %s30, 1
      %p151 = por %p149, %p150
      %p153 = scmp.ne.s32.totalorder %s138, %s152
      %p154 = scmp.eq.s32.totalorder %s30, 0
      %p155 = por %p153, %p154
      %s157 = sadd.s32 %s156, 1
      %p160 = scmp.eq.s32.totalorder %s24, 1
      %p161 = scmp.ne.s32.totalorder %s156, %s158
      %p162 = scmp.eq.s32.totalorder %s24, 0
      %p163 = por %p161, %p162
      %p164 = scmp.ne.s32.totalorder %s156, %s158
      %p165 = scmp.eq.s32.totalorder %s29, 1
      %p166 = por %p164, %p165
      %p167 = scmp.ne.s32.totalorder %s158, %s159
      %p168 = scmp.eq.s32.totalorder %s29, 0
      %p169 = por %p167, %p168
      %p170 = scmp.ne.s32.totalorder %s158, %s159
      %p171 = scmp.eq.s32.totalorder %s30, 1
      %p172 = por %p170, %p171
      %p174 = scmp.ne.s32.totalorder %s159, %s173
      %p175 = scmp.eq.s32.totalorder %s30, 0
      %p176 = por %p174, %p175
      %s178 = sadd.s32 %s177, 1
      %p181 = scmp.eq.s32.totalorder %s24, 1
      %p182 = scmp.ne.s32.totalorder %s177, %s179
      %p183 = scmp.eq.s32.totalorder %s24, 0
      %p184 = por %p182, %p183
      %p185 = scmp.ne.s32.totalorder %s177, %s179
      %p186 = scmp.eq.s32.totalorder %s29, 1
      %p187 = por %p185, %p186
      %p188 = scmp.ne.s32.totalorder %s179, %s180
      %p189 = scmp.eq.s32.totalorder %s29, 0
      %p190 = por %p188, %p189
      %p191 = scmp.ne.s32.totalorder %s179, %s180
      %p192 = scmp.eq.s32.totalorder %s30, 1
      %p193 = por %p191, %p192
      %p195 = scmp.ne.s32.totalorder %s180, %s194
      %p196 = scmp.eq.s32.totalorder %s30, 0
      %p197 = por %p195, %p196
      %s199 = sadd.s32 %s198, 1
      %p202 = scmp.eq.s32.totalorder %s24, 1
      %p203 = scmp.ne.s32.totalorder %s198, %s200
      %p204 = scmp.eq.s32.totalorder %s24, 0
      %p205 = por %p203, %p204
      %p206 = scmp.ne.s32.totalorder %s198, %s200
      %p207 = scmp.eq.s32.totalorder %s29, 1
      %p208 = por %p206, %p207
      %p209 = scmp.ne.s32.totalorder %s200, %s201
      %p210 = scmp.eq.s32.totalorder %s29, 0
      %p211 = por %p209, %p210
      %p212 = scmp.ne.s32.totalorder %s200, %s201
      %p213 = scmp.eq.s32.totalorder %s30, 1
      %p214 = por %p212, %p213
      %p216 = scmp.ne.s32.totalorder %s201, %s215
      %p217 = scmp.eq.s32.totalorder %s30, 0
      %p218 = por %p216, %p217
      %s220 = sadd.s32 %s219, 1
      %p223 = scmp.eq.s32.totalorder %s24, 1
      %p224 = scmp.ne.s32.totalorder %s219, %s221
      %p225 = scmp.eq.s32.totalorder %s24, 0
      %p226 = por %p224, %p225
      %p227 = scmp.ne.s32.totalorder %s219, %s221
      %p228 = scmp.eq.s32.totalorder %s29, 1
      %p229 = por %p227, %p228
      %p230 = scmp.ne.s32.totalorder %s221, %s222
      %p231 = scmp.eq.s32.totalorder %s29, 0
      %p232 = por %p230, %p231
      %p233 = scmp.ne.s32.totalorder %s221, %s222
      %p234 = scmp.eq.s32.totalorder %s30, 1
      %p235 = por %p233, %p234
      %p237 = scmp.ne.s32.totalorder %s222, %s236
      %p238 = scmp.eq.s32.totalorder %s30, 0
      %p239 = por %p237, %p238
      %s241 = sadd.s32 %s240, 1
      %p244 = scmp.eq.s32.totalorder %s24, 1
      %p245 = scmp.ne.s32.totalorder %s240, %s242
      %p246 = scmp.eq.s32.totalorder %s24, 0
      %p247 = por %p245, %p246
      %p248 = scmp.ne.s32.totalorder %s240, %s242
      %p249 = scmp.eq.s32.totalorder %s29, 1
      %p250 = por %p248, %p249
      %p251 = scmp.ne.s32.totalorder %s242, %s243
      %p252 = scmp.eq.s32.totalorder %s29, 0
      %p253 = por %p251, %p252
      %p254 = scmp.ne.s32.totalorder %s242, %s243
      %p255 = scmp.eq.s32.totalorder %s30, 1
      %p256 = por %p254, %p255
      %p258 = scmp.ne.s32.totalorder %s243, %s257
      %p259 = scmp.eq.s32.totalorder %s30, 0
      %p260 = por %p258, %p259
      %s262 = sadd.s32 %s261, 1
      %p265 = scmp.eq.s32.totalorder %s24, 1
      %p266 = scmp.ne.s32.totalorder %s261, %s263
      %p267 = scmp.eq.s32.totalorder %s24, 0
      %p268 = por %p266, %p267
      %p269 = scmp.ne.s32.totalorder %s261, %s263
      %p270 = scmp.eq.s32.totalorder %s29, 1
      %p271 = por %p269, %p270
      %p272 = scmp.ne.s32.totalorder %s263, %s264
      %p273 = scmp.eq.s32.totalorder %s29, 0
      %p274 = por %p272, %p273
      %p275 = scmp.ne.s32.totalorder %s263, %s264
      %p276 = scmp.eq.s32.totalorder %s30, 1
      %p277 = por %p275, %p276
      %p279 = scmp.ne.s32.totalorder %s264, %s278
      %p280 = scmp.eq.s32.totalorder %s30, 0
      %p281 = por %p279, %p280
      %s283 = sadd.s32 %s282, 1
      %p286 = scmp.eq.s32.totalorder %s24, 1
      %p287 = scmp.ne.s32.totalorder %s282, %s284
      %p288 = scmp.eq.s32.totalorder %s24, 0
      %p289 = por %p287, %p288
      %p290 = scmp.ne.s32.totalorder %s282, %s284
      %p291 = scmp.eq.s32.totalorder %s29, 1
      %p292 = por %p290, %p291
      %p293 = scmp.ne.s32.totalorder %s284, %s285
      %p294 = scmp.eq.s32.totalorder %s29, 0
      %p295 = por %p293, %p294
      %p296 = scmp.ne.s32.totalorder %s284, %s285
      %p297 = scmp.eq.s32.totalorder %s30, 1
      %p298 = por %p296, %p297
      %p300 = scmp.ne.s32.totalorder %s285, %s299
      %p301 = scmp.eq.s32.totalorder %s30, 0
      %p302 = por %p300, %p301
      %s304 = sadd.s32 %s303, 1
      %p307 = scmp.eq.s32.totalorder %s24, 1
      %p308 = scmp.ne.s32.totalorder %s303, %s305
      %p309 = scmp.eq.s32.totalorder %s24, 0
      %p310 = por %p308, %p309
      %p311 = scmp.ne.s32.totalorder %s303, %s305
      %p312 = scmp.eq.s32.totalorder %s29, 1
      %p313 = por %p311, %p312
      %p314 = scmp.ne.s32.totalorder %s305, %s306
      %p315 = scmp.eq.s32.totalorder %s29, 0
      %p316 = por %p314, %p315
      %p317 = scmp.ne.s32.totalorder %s305, %s306
      %p318 = scmp.eq.s32.totalorder %s30, 1
      %p319 = por %p317, %p318
      %p321 = scmp.ne.s32.totalorder %s306, %s320
      %p322 = scmp.eq.s32.totalorder %s30, 0
      %p323 = por %p321, %p322
      %s324 = ssub.s32 %s31, %s43
      %p325 = scmp.eq.s32.totalorder %s324, 0
      %s327 = sadd.s32 %s326, 1
      %s328 = scalar_select %p325, %s326, %s327
      %p331 = pneg %p325
      %p332 = scmp.eq.s32.totalorder %s24, 1
      %p333 = por %p331, %p332
      %p334 = scmp.ne.s32.totalorder %s326, %s329
      %p335 = scmp.eq.s32.totalorder %s24, 0
      %p336 = por %p334, %p335
      %p337 = scmp.ne.s32.totalorder %s326, %s329
      %p338 = scmp.eq.s32.totalorder %s29, 1
      %p339 = por %p337, %p338
      %p340 = scmp.ne.s32.totalorder %s329, %s330
      %p341 = scmp.eq.s32.totalorder %s29, 0
      %p342 = por %p340, %p341
      %p343 = scmp.ne.s32.totalorder %s329, %s330
      %p344 = scmp.eq.s32.totalorder %s30, 1
      %p345 = por %p343, %p344
      %p347 = scmp.ne.s32.totalorder %s330, %s346
      %p348 = scmp.eq.s32.totalorder %s30, 0
      %p349 = por %p347, %p348
      %p350 = scmp.le.s32.totalorder 1, %s24
      %p351 = scmp.lt.s32.totalorder %s24, 3
      %p352 = pnand %p350, %p351
      %p353 = pneg %p352
      // Predicated region
      $region9: #{tpu_custom_call.1} parent=5 // pred_check
        _
      $region10: #{tpu_custom_call.1} parent=5 // pred_check_branch
        %355 = sbr.rel (%p352) target = $region12
      $region11: #{tpu_custom_call.1} parent=5 // pred_region
        %s356 = ssub.s32 %s24, 1
        // Predicated region
        $region13: #{tpu_custom_call.1} parent=11 // pred_check
          %p357 = pneg %p85
        $region14: #{tpu_custom_call.1} parent=11 // pred_check_branch
          %359 = sbr.rel (%p357) target = $region16
        $region15: #{tpu_custom_call.1} parent=11 // pred_region
          _
        $region16: #{tpu_custom_call.1} parent=11 // pred_fallthru
          _
        // Predicated region
        $region17: #{tpu_custom_call.1} parent=11 // pred_check
          %p360 = pneg %p106
        $region18: #{tpu_custom_call.1} parent=11 // pred_check_branch
          %362 = sbr.rel (%p360) target = $region20
        $region19: #{tpu_custom_call.1} parent=11 // pred_region
          _
        $region20: #{tpu_custom_call.1} parent=11 // pred_fallthru
          _
        // Predicated region
        $region21: #{tpu_custom_call.1} parent=11 // pred_check
          %p363 = pneg %p127
        $region22: #{tpu_custom_call.1} parent=11 // pred_check_branch
          %365 = sbr.rel (%p363) target = $region24
        $region23: #{tpu_custom_call.1} parent=11 // pred_region
          _
        $region24: #{tpu_custom_call.1} parent=11 // pred_fallthru
          _
        // Predicated region
        $region25: #{tpu_custom_call.1} parent=11 // pred_check
          %p366 = pneg %p148
        $region26: #{tpu_custom_call.1} parent=11 // pred_check_branch
          %368 = sbr.rel (%p366) target = $region28
        $region27: #{tpu_custom_call.1} parent=11 // pred_region
          _
        $region28: #{tpu_custom_call.1} parent=11 // pred_fallthru
          _
        // Predicated region
        $region29: #{tpu_custom_call.1} parent=11 // pred_check
          %p369 = pneg %p169
        $region30: #{tpu_custom_call.1} parent=11 // pred_check_branch
          %371 = sbr.rel (%p369) target = $region32
        $region31: #{tpu_custom_call.1} parent=11 // pred_region
          _
        $region32: #{tpu_custom_call.1} parent=11 // pred_fallthru
          _
        // Predicated region
        $region33: #{tpu_custom_call.1} parent=11 // pred_check
          %p372 = pneg %p190
        $region34: #{tpu_custom_call.1} parent=11 // pred_check_branch
          %374 = sbr.rel (%p372) target = $region36
        $region35: #{tpu_custom_call.1} parent=11 // pred_region
          _
        $region36: #{tpu_custom_call.1} parent=11 // pred_fallthru
          _
        // Predicated region
        $region37: #{tpu_custom_call.1} parent=11 // pred_check
          %p375 = pneg %p211
        $region38: #{tpu_custom_call.1} parent=11 // pred_check_branch
          %377 = sbr.rel (%p375) target = $region40
        $region39: #{tpu_custom_call.1} parent=11 // pred_region
          %s379 = ssub.s32 32768, 32768
          %380 = vsyncadd [#allocation4], %s379
          %s381 = sshll.u32 [#allocation3], 4
          %s382 = int_to_ptr.vmem [resolvable:$true] %s381
          %387 = dma.hbm_to_vmem [thread:$0]  %s7, 32768, %s382, [#allocation4], 256, 256, 16
        $region40: #{tpu_custom_call.1} parent=11 // pred_fallthru
          _
        // Predicated region
        $region41: #{tpu_custom_call.1} parent=11 // pred_check
          %p388 = pneg %p232
        $region42: #{tpu_custom_call.1} parent=11 // pred_check_branch
          %390 = sbr.rel (%p388) target = $region44
        $region43: #{tpu_custom_call.1} parent=11 // pred_region
          _
        $region44: #{tpu_custom_call.1} parent=11 // pred_fallthru
          _
        // Predicated region
        $region45: #{tpu_custom_call.1} parent=11 // pred_check
          %p391 = pneg %p253
        $region46: #{tpu_custom_call.1} parent=11 // pred_check_branch
          %393 = sbr.rel (%p391) target = $region48
        $region47: #{tpu_custom_call.1} parent=11 // pred_region
          %s395 = ssub.s32 8192, 8192
          %396 = vsyncadd [#allocation7], %s395
          %s397 = sshll.u32 [#allocation6], 4
          %s398 = int_to_ptr.vmem [resolvable:$true] %s397
          %403 = dma.hbm_to_vmem [thread:$0]  %s9, 8192, %s398, [#allocation7], 128, 128, 8
        $region48: #{tpu_custom_call.1} parent=11 // pred_fallthru
          _
        // Predicated region
        $region49: #{tpu_custom_call.1} parent=11 // pred_check
          %p404 = pneg %p274
        $region50: #{tpu_custom_call.1} parent=11 // pred_check_branch
          %406 = sbr.rel (%p404) target = $region52
        $region51: #{tpu_custom_call.1} parent=11 // pred_region
          _
        $region52: #{tpu_custom_call.1} parent=11 // pred_fallthru
          _
        // Predicated region
        $region53: #{tpu_custom_call.1} parent=11 // pred_check
          %p407 = pneg %p295
        $region54: #{tpu_custom_call.1} parent=11 // pred_check_branch
          %409 = sbr.rel (%p407) target = $region56
        $region55: #{tpu_custom_call.1} parent=11 // pred_region
          _
        $region56: #{tpu_custom_call.1} parent=11 // pred_fallthru
          _
        // Predicated region
        $region57: #{tpu_custom_call.1} parent=11 // pred_check
          %p410 = pneg %p316
        $region58: #{tpu_custom_call.1} parent=11 // pred_check_branch
          %412 = sbr.rel (%p410) target = $region60
        $region59: #{tpu_custom_call.1} parent=11 // pred_region
          _
        $region60: #{tpu_custom_call.1} parent=11 // pred_fallthru
          _
      $region12: #{tpu_custom_call.1} parent=5 // pred_fallthru
        _
      %p413 = scmp.lt.s32.totalorder %s24, 2
      // Predicated region
      $region61: #{tpu_custom_call.1} parent=5 // pred_check
        %p414 = pneg %p413
      $region62: #{tpu_custom_call.1} parent=5 // pred_check_branch
        %416 = sbr.rel (%p414) target = $region64
      $region63: #{tpu_custom_call.1} parent=5 // pred_region
        // Predicated region
        $region65: #{tpu_custom_call.1} parent=63 // pred_check
          %p417 = pneg %p58
        $region66: #{tpu_custom_call.1} parent=63 // pred_check_branch
          %419 = sbr.rel (%p417) target = $region68
        $region67: #{tpu_custom_call.1} parent=63 // pred_region
          %s420 = smul.u32 32, %s32
          %p421 = scmp.lt.s32.totalorder %s31, 1
          %s422 = scalar_select %p421, %s31, 1
          %p423 = scmp.lt.s32.totalorder %s420, 31
          %s424 = scalar_select %p423, %s420, 31
          %s425 = smul.addr %s422, 32
          %s426 = sadd.s32 %s424, %s425
          %s427 = smul.addr %s426, 8
          %s428 = scalar_lea.vmem %s0, %s427
          %s429 = smul.u32 32, %s32
        $region68: #{tpu_custom_call.1} parent=63 // pred_fallthru
          _
      $region64: #{tpu_custom_call.1} parent=5 // pred_fallthru
        _
      %p430 = scmp.le.s32.totalorder 1, %s24
      %p431 = scmp.lt.s32.totalorder %s24, 3
      %p432 = pnand %p430, %p431
      %p433 = pneg %p432
      // Predicated region
      $region69: #{tpu_custom_call.1} parent=5 // pred_check
        _
      $region70: #{tpu_custom_call.1} parent=5 // pred_check_branch
        %435 = sbr.rel (%p432) target = $region72
      $region71: #{tpu_custom_call.1} parent=5 // pred_region
        %s436 = ssub.s32 %s24, 1
        // Predicated region
        $region73: #{tpu_custom_call.1} parent=71 // pred_check
          %p437 = pneg %p211
        $region74: #{tpu_custom_call.1} parent=71 // pred_check_branch
          %439 = sbr.rel (%p437) target = $region76
        $region75: #{tpu_custom_call.1} parent=71 // pred_region
          %440 = dma.done [#allocation4], 32768
        $region76: #{tpu_custom_call.1} parent=71 // pred_fallthru
          _
        // Predicated region
        $region77: #{tpu_custom_call.1} parent=71 // pred_check
          %p441 = pneg %p253
        $region78: #{tpu_custom_call.1} parent=71 // pred_check_branch
          %443 = sbr.rel (%p441) target = $region80
        $region79: #{tpu_custom_call.1} parent=71 // pred_region
          %444 = dma.done [#allocation7], 8192
        $region80: #{tpu_custom_call.1} parent=71 // pred_fallthru
          _
        %s445 = smul.u32 32, %s34
        %p446 = scmp.lt.s32.totalorder %s33, 1
        %s447 = scalar_select %p446, %s33, 1
        %p448 = scmp.lt.s32.totalorder %s445, 31
        %s449 = scalar_select %p448, %s445, 31
        %s450 = smul.addr %s447, 32
        %s451 = sadd.s32 %s449, %s450
        %s452 = smul.addr %s451, 8
        %s453 = scalar_lea.vmem %s0, %s452
        %p454 = pneg %p64
        %p455 = pneg %p61
        %p456 = pneg %p85
        %p457 = pneg %p82
        %p458 = pneg %p106
        %p459 = pneg %p103
        %p460 = pneg %p127
        %p461 = pneg %p124
        %p462 = pneg %p148
        %p463 = pneg %p145
        %p464 = pneg %p169
        %p465 = pneg %p166
        %p466 = pneg %p190
        %p467 = pneg %p187
        %p468 = pneg %p211
        %p469 = pneg %p208
        %p470 = pneg %p232
        %p471 = pneg %p229
        %p472 = pneg %p253
        %p473 = pneg %p250
        %p474 = pneg %p274
        %p475 = pneg %p271
        %p476 = pneg %p295
        %p477 = pneg %p292
        %p478 = pneg %p316
        %p479 = pneg %p313
        %p480 = pneg %p342
        %p481 = pneg %p339
        %s482 = sand.u32 %s329, 1
        %s483 = scalar_lea.sflag [#allocation5], %s482
        %s484 = sand.u32 %s329, 1
        %s485 = scalar_lea.vmem [#allocation8], %s484
        %s486 = smul.u32 32, %s34
        %p487 = scmp.lt.s32.totalorder %s33, 1
        %s488 = scalar_select %p487, %s33, 1
        %p489 = scmp.lt.s32.totalorder %s486, 31
        %s490 = scalar_select %p489, %s486, 31
        %s491 = smul.addr %s488, 32
        %s492 = sadd.s32 %s490, %s491
        %s493 = smul.addr %s492, 8
        %s494 = scalar_lea.vmem %s0, %s493
        %s495 = smul.u32 32, %s34
        %v497 = vld [vmem:[%s494] sm:$0xff]
        %v498 = vld [vmem:[%s494 + $0x8] sm:$0xff]
        %v499 = vld [vmem:[%s494 + $0x10] sm:$0xff]
        %v500 = vld [vmem:[%s494 + $0x18] sm:$0xff]
        %v501 = vld [vmem:[%s494 + $0x20] sm:$0xff]
        %v502 = vld [vmem:[%s494 + $0x28] sm:$0xff]
        %v503 = vld [vmem:[%s494 + $0x30] sm:$0xff]
        %v504 = vld [vmem:[%s494 + $0x38] sm:$0xff]
        %v505 = vld [vmem:[%s494 + $0x40] sm:$0xff]
        %v506 = vld [vmem:[%s494 + $0x48] sm:$0xff]
        %v507 = vld [vmem:[%s494 + $0x50] sm:$0xff]
        %v508 = vld [vmem:[%s494 + $0x58] sm:$0xff]
        %v509 = vld [vmem:[%s494 + $0x60] sm:$0xff]
        %v510 = vld [vmem:[%s494 + $0x68] sm:$0xff]
        %v511 = vld [vmem:[%s494 + $0x70] sm:$0xff]
        %v512 = vld [vmem:[%s494 + $0x78] sm:$0xff]
        %v513 = vld [vmem:[%s494 + $0x80] sm:$0xff]
        %v514 = vld [vmem:[%s494 + $0x88] sm:$0xff]
        %v515 = vld [vmem:[%s494 + $0x90] sm:$0xff]
        %v516 = vld [vmem:[%s494 + $0x98] sm:$0xff]
        %v517 = vld [vmem:[%s494 + $0xa0] sm:$0xff]
        %v518 = vld [vmem:[%s494 + $0xa8] sm:$0xff]
        %v519 = vld [vmem:[%s494 + $0xb0] sm:$0xff]
        %v520 = vld [vmem:[%s494 + $0xb8] sm:$0xff]
        %v521 = vld [vmem:[%s494 + $0xc0] sm:$0xff]
        %v522 = vld [vmem:[%s494 + $0xc8] sm:$0xff]
        %v523 = vld [vmem:[%s494 + $0xd0] sm:$0xff]
        %v524 = vld [vmem:[%s494 + $0xd8] sm:$0xff]
        %v525 = vld [vmem:[%s494 + $0xe0] sm:$0xff]
        %v526 = vld [vmem:[%s494 + $0xe8] sm:$0xff]
        %v527 = vld [vmem:[%s494 + $0xf0] sm:$0xff]
        %v528 = vld [vmem:[%s494 + $0xf8] sm:$0xff]
        %v529 = vld [vmem:[%s1] sm:$0x3]
        %v530 = vld [vmem:[%s2] sm:$0x1]
        %532 = vset.pattern.permute.xlu0 0
        %533 = vperm.xlu0 %532, %v497
        %v534 = vpop.permute.xlu0 %533
        %537 = vset.pattern.permute.xlu0 0
        %538 = vperm.xlu0 %537, %v498
        %v539 = vpop.permute.xlu0 %538
        %542 = vset.pattern.permute.xlu0 0
        %543 = vperm.xlu0 %542, %v499
        %v544 = vpop.permute.xlu0 %543
        %547 = vset.pattern.permute.xlu0 0
        %548 = vperm.xlu0 %547, %v500
        %v549 = vpop.permute.xlu0 %548
        %552 = vset.pattern.permute.xlu0 0
        %553 = vperm.xlu0 %552, %v501
        %v554 = vpop.permute.xlu0 %553
        %557 = vset.pattern.permute.xlu0 0
        %558 = vperm.xlu0 %557, %v502
        %v559 = vpop.permute.xlu0 %558
        %562 = vset.pattern.permute.xlu0 0
        %563 = vperm.xlu0 %562, %v503
        %v564 = vpop.permute.xlu0 %563
        %567 = vset.pattern.permute.xlu0 0
        %568 = vperm.xlu0 %567, %v504
        %v569 = vpop.permute.xlu0 %568
        %572 = vset.pattern.permute.xlu0 0
        %573 = vperm.xlu0 %572, %v505
        %v574 = vpop.permute.xlu0 %573
        %577 = vset.pattern.permute.xlu0 0
        %578 = vperm.xlu0 %577, %v506
        %v579 = vpop.permute.xlu0 %578
        %582 = vset.pattern.permute.xlu0 0
        %583 = vperm.xlu0 %582, %v507
        %v584 = vpop.permute.xlu0 %583
        %587 = vset.pattern.permute.xlu0 0
        %588 = vperm.xlu0 %587, %v508
        %v589 = vpop.permute.xlu0 %588
        %592 = vset.pattern.permute.xlu0 0
        %593 = vperm.xlu0 %592, %v509
        %v594 = vpop.permute.xlu0 %593
        %597 = vset.pattern.permute.xlu0 0
        %598 = vperm.xlu0 %597, %v510
        %v599 = vpop.permute.xlu0 %598
        %602 = vset.pattern.permute.xlu0 0
        %603 = vperm.xlu0 %602, %v511
        %v604 = vpop.permute.xlu0 %603
        %607 = vset.pattern.permute.xlu0 0
        %608 = vperm.xlu0 %607, %v512
        %v609 = vpop.permute.xlu0 %608
        %612 = vset.pattern.permute.xlu0 0
        %613 = vperm.xlu0 %612, %v513
        %v614 = vpop.permute.xlu0 %613
        %617 = vset.pattern.permute.xlu0 0
        %618 = vperm.xlu0 %617, %v514
        %v619 = vpop.permute.xlu0 %618
        %622 = vset.pattern.permute.xlu0 0
        %623 = vperm.xlu0 %622, %v515
        %v624 = vpop.permute.xlu0 %623
        %627 = vset.pattern.permute.xlu0 0
        %628 = vperm.xlu0 %627, %v516
        %v629 = vpop.permute.xlu0 %628
        %632 = vset.pattern.permute.xlu0 0
        %633 = vperm.xlu0 %632, %v517
        %v634 = vpop.permute.xlu0 %633
        %637 = vset.pattern.permute.xlu0 0
        %638 = vperm.xlu0 %637, %v518
        %v639 = vpop.permute.xlu0 %638
        %642 = vset.pattern.permute.xlu0 0
        %643 = vperm.xlu0 %642, %v519
        %v644 = vpop.permute.xlu0 %643
        %647 = vset.pattern.permute.xlu0 0
        %648 = vperm.xlu0 %647, %v520
        %v649 = vpop.permute.xlu0 %648
        %652 = vset.pattern.permute.xlu0 0
        %653 = vperm.xlu0 %652, %v521
        %v654 = vpop.permute.xlu0 %653
        %657 = vset.pattern.permute.xlu0 0
        %658 = vperm.xlu0 %657, %v522
        %v659 = vpop.permute.xlu0 %658
        %662 = vset.pattern.permute.xlu0 0
        %663 = vperm.xlu0 %662, %v523
        %v664 = vpop.permute.xlu0 %663
        %667 = vset.pattern.permute.xlu0 0
        %668 = vperm.xlu0 %667, %v524
        %v669 = vpop.permute.xlu0 %668
        %672 = vset.pattern.permute.xlu0 0
        %673 = vperm.xlu0 %672, %v525
        %v674 = vpop.permute.xlu0 %673
        %677 = vset.pattern.permute.xlu0 0
        %678 = vperm.xlu0 %677, %v526
        %v679 = vpop.permute.xlu0 %678
        %682 = vset.pattern.permute.xlu0 0
        %683 = vperm.xlu0 %682, %v527
        %v684 = vpop.permute.xlu0 %683
        %687 = vset.pattern.permute.xlu0 0
        %688 = vperm.xlu0 %687, %v528
        %v689 = vpop.permute.xlu0 %688
        %v691 = vlaneseq
        %v692 = vshrl.u32 %v691, 7
        %v693 = vsub.s32 0, %v692
        %v694 = vrot.slane %v529, %v693
        %v695 = vmul.f32 %v534, %v694
        %v696 = vmul.f32 %v539, %v694
        %v697 = vmul.f32 %v544, %v694
        %v698 = vmul.f32 %v549, %v694
        %v699 = vmul.f32 %v554, %v694
        %v700 = vmul.f32 %v559, %v694
        %v701 = vmul.f32 %v564, %v694
        %v702 = vmul.f32 %v569, %v694
        %v703 = vmul.f32 %v574, %v694
        %v704 = vmul.f32 %v579, %v694
        %v705 = vmul.f32 %v584, %v694
        %v706 = vmul.f32 %v589, %v694
        %v707 = vmul.f32 %v594, %v694
        %v708 = vmul.f32 %v599, %v694
        %v709 = vmul.f32 %v604, %v694
        %v710 = vmul.f32 %v609, %v694
        %v711 = vmul.f32 %v614, %v694
        %v712 = vmul.f32 %v619, %v694
        %v713 = vmul.f32 %v624, %v694
        %v714 = vmul.f32 %v629, %v694
        %v715 = vmul.f32 %v634, %v694
        %v716 = vmul.f32 %v639, %v694
        %v717 = vmul.f32 %v644, %v694
        %v718 = vmul.f32 %v649, %v694
        %v719 = vmul.f32 %v654, %v694
        %v720 = vmul.f32 %v659, %v694
        %v721 = vmul.f32 %v664, %v694
        %v722 = vmul.f32 %v669, %v694
        %v723 = vmul.f32 %v674, %v694
        %v724 = vmul.f32 %v679, %v694
        %v725 = vmul.f32 %v684, %v694
        %v726 = vmul.f32 %v689, %v694
        %v728 = vlaneseq
        %v729 = vshrl.u32 %v728, 7
        %v730 = vsub.s32 0, %v729
        %v731 = vrot.slane %v530, %v730
        %v733 = vadd.f32 %v731, %v695
        %v734 = vadd.f32 %v731, %v696
        %v735 = vadd.f32 %v731, %v697
        %v736 = vadd.f32 %v731, %v698
        %v737 = vadd.f32 %v731, %v699
        %v738 = vadd.f32 %v731, %v700
        %v739 = vadd.f32 %v731, %v701
        %v740 = vadd.f32 %v731, %v702
        %v741 = vadd.f32 %v731, %v703
        %v742 = vadd.f32 %v731, %v704
        %v743 = vadd.f32 %v731, %v705
        %v744 = vadd.f32 %v731, %v706
        %v745 = vadd.f32 %v731, %v707
        %v746 = vadd.f32 %v731, %v708
        %v747 = vadd.f32 %v731, %v709
        %v748 = vadd.f32 %v731, %v710
        %v749 = vadd.f32 %v731, %v711
        %v750 = vadd.f32 %v731, %v712
        %v751 = vadd.f32 %v731, %v713
        %v752 = vadd.f32 %v731, %v714
        %v753 = vadd.f32 %v731, %v715
        %v754 = vadd.f32 %v731, %v716
        %v755 = vadd.f32 %v731, %v717
        %v756 = vadd.f32 %v731, %v718
        %v757 = vadd.f32 %v731, %v719
        %v758 = vadd.f32 %v731, %v720
        %v759 = vadd.f32 %v731, %v721
        %v760 = vadd.f32 %v731, %v722
        %v761 = vadd.f32 %v731, %v723
        %v762 = vadd.f32 %v731, %v724
        %v763 = vadd.f32 %v731, %v725
        %v764 = vadd.f32 %v731, %v726
        %765 = vset.pattern.permute.xlu0 1
        %766 = vperm.xlu0 %765, %v497
        %v767 = vpop.permute.xlu0 %766
        %769 = vset.pattern.permute.xlu0 1
        %770 = vperm.xlu0 %769, %v498
        %v771 = vpop.permute.xlu0 %770
        %773 = vset.pattern.permute.xlu0 1
        %774 = vperm.xlu0 %773, %v499
        %v775 = vpop.permute.xlu0 %774
        %777 = vset.pattern.permute.xlu0 1
        %778 = vperm.xlu0 %777, %v500
        %v779 = vpop.permute.xlu0 %778
        %781 = vset.pattern.permute.xlu0 1
        %782 = vperm.xlu0 %781, %v501
        %v783 = vpop.permute.xlu0 %782
        %785 = vset.pattern.permute.xlu0 1
        %786 = vperm.xlu0 %785, %v502
        %v787 = vpop.permute.xlu0 %786
        %789 = vset.pattern.permute.xlu0 1
        %790 = vperm.xlu0 %789, %v503
        %v791 = vpop.permute.xlu0 %790
        %793 = vset.pattern.permute.xlu0 1
        %794 = vperm.xlu0 %793, %v504
        %v795 = vpop.permute.xlu0 %794
        %797 = vset.pattern.permute.xlu0 1
        %798 = vperm.xlu0 %797, %v505
        %v799 = vpop.permute.xlu0 %798
        %801 = vset.pattern.permute.xlu0 1
        %802 = vperm.xlu0 %801, %v506
        %v803 = vpop.permute.xlu0 %802
        %805 = vset.pattern.permute.xlu0 1
        %806 = vperm.xlu0 %805, %v507
        %v807 = vpop.permute.xlu0 %806
        %809 = vset.pattern.permute.xlu0 1
        %810 = vperm.xlu0 %809, %v508
        %v811 = vpop.permute.xlu0 %810
        %813 = vset.pattern.permute.xlu0 1
        %814 = vperm.xlu0 %813, %v509
        %v815 = vpop.permute.xlu0 %814
        %817 = vset.pattern.permute.xlu0 1
        %818 = vperm.xlu0 %817, %v510
        %v819 = vpop.permute.xlu0 %818
        %821 = vset.pattern.permute.xlu0 1
        %822 = vperm.xlu0 %821, %v511
        %v823 = vpop.permute.xlu0 %822
        %825 = vset.pattern.permute.xlu0 1
        %826 = vperm.xlu0 %825, %v512
        %v827 = vpop.permute.xlu0 %826
        %829 = vset.pattern.permute.xlu0 1
        %830 = vperm.xlu0 %829, %v513
        %v831 = vpop.permute.xlu0 %830
        %833 = vset.pattern.permute.xlu0 1
        %834 = vperm.xlu0 %833, %v514
        %v835 = vpop.permute.xlu0 %834
        %837 = vset.pattern.permute.xlu0 1
        %838 = vperm.xlu0 %837, %v515
        %v839 = vpop.permute.xlu0 %838
        %841 = vset.pattern.permute.xlu0 1
        %842 = vperm.xlu0 %841, %v516
        %v843 = vpop.permute.xlu0 %842
        %845 = vset.pattern.permute.xlu0 1
        %846 = vperm.xlu0 %845, %v517
        %v847 = vpop.permute.xlu0 %846
        %849 = vset.pattern.permute.xlu0 1
        %850 = vperm.xlu0 %849, %v518
        %v851 = vpop.permute.xlu0 %850
        %853 = vset.pattern.permute.xlu0 1
        %854 = vperm.xlu0 %853, %v519
        %v855 = vpop.permute.xlu0 %854
        %857 = vset.pattern.permute.xlu0 1
        %858 = vperm.xlu0 %857, %v520
        %v859 = vpop.permute.xlu0 %858
        %861 = vset.pattern.permute.xlu0 1
        %862 = vperm.xlu0 %861, %v521
        %v863 = vpop.permute.xlu0 %862
        %865 = vset.pattern.permute.xlu0 1
        %866 = vperm.xlu0 %865, %v522
        %v867 = vpop.permute.xlu0 %866
        %869 = vset.pattern.permute.xlu0 1
        %870 = vperm.xlu0 %869, %v523
        %v871 = vpop.permute.xlu0 %870
        %873 = vset.pattern.permute.xlu0 1
        %874 = vperm.xlu0 %873, %v524
        %v875 = vpop.permute.xlu0 %874
        %877 = vset.pattern.permute.xlu0 1
        %878 = vperm.xlu0 %877, %v525
        %v879 = vpop.permute.xlu0 %878
        %881 = vset.pattern.permute.xlu0 1
        %882 = vperm.xlu0 %881, %v526
        %v883 = vpop.permute.xlu0 %882
        %885 = vset.pattern.permute.xlu0 1
        %886 = vperm.xlu0 %885, %v527
        %v887 = vpop.permute.xlu0 %886
        %889 = vset.pattern.permute.xlu0 1
        %890 = vperm.xlu0 %889, %v528
        %v891 = vpop.permute.xlu0 %890
        %v893 = vlaneseq
        %v894 = vshrl.u32 %v893, 7
        %v895 = vsub.s32 1, %v894
        %v896 = vrot.slane %v529, %v895
        %v897 = vmul.f32 %v767, %v896
        %v898 = vmul.f32 %v771, %v896
        %v899 = vmul.f32 %v775, %v896
        %v900 = vmul.f32 %v779, %v896
        %v901 = vmul.f32 %v783, %v896
        %v902 = vmul.f32 %v787, %v896
        %v903 = vmul.f32 %v791, %v896
        %v904 = vmul.f32 %v795, %v896
        %v905 = vmul.f32 %v799, %v896
        %v906 = vmul.f32 %v803, %v896
        %v907 = vmul.f32 %v807, %v896
        %v908 = vmul.f32 %v811, %v896
        %v909 = vmul.f32 %v815, %v896
        %v910 = vmul.f32 %v819, %v896
        %v911 = vmul.f32 %v823, %v896
        %v912 = vmul.f32 %v827, %v896
        %v913 = vmul.f32 %v831, %v896
        %v914 = vmul.f32 %v835, %v896
        %v915 = vmul.f32 %v839, %v896
        %v916 = vmul.f32 %v843, %v896
        %v917 = vmul.f32 %v847, %v896
        %v918 = vmul.f32 %v851, %v896
        %v919 = vmul.f32 %v855, %v896
        %v920 = vmul.f32 %v859, %v896
        %v921 = vmul.f32 %v863, %v896
        %v922 = vmul.f32 %v867, %v896
        %v923 = vmul.f32 %v871, %v896
        %v924 = vmul.f32 %v875, %v896
        %v925 = vmul.f32 %v879, %v896
        %v926 = vmul.f32 %v883, %v896
        %v927 = vmul.f32 %v887, %v896
        %v928 = vmul.f32 %v891, %v896
        %v929 = vadd.f32 %v733, %v897
        %v930 = vadd.f32 %v734, %v898
        %v931 = vadd.f32 %v735, %v899
        %v932 = vadd.f32 %v736, %v900
        %v933 = vadd.f32 %v737, %v901
        %v934 = vadd.f32 %v738, %v902
        %v935 = vadd.f32 %v739, %v903
        %v936 = vadd.f32 %v740, %v904
        %v937 = vadd.f32 %v741, %v905
        %v938 = vadd.f32 %v742, %v906
        %v939 = vadd.f32 %v743, %v907
        %v940 = vadd.f32 %v744, %v908
        %v941 = vadd.f32 %v745, %v909
        %v942 = vadd.f32 %v746, %v910
        %v943 = vadd.f32 %v747, %v911
        %v944 = vadd.f32 %v748, %v912
        %v945 = vadd.f32 %v749, %v913
        %v946 = vadd.f32 %v750, %v914
        %v947 = vadd.f32 %v751, %v915
        %v948 = vadd.f32 %v752, %v916
        %v949 = vadd.f32 %v753, %v917
        %v950 = vadd.f32 %v754, %v918
        %v951 = vadd.f32 %v755, %v919
        %v952 = vadd.f32 %v756, %v920
        %v953 = vadd.f32 %v757, %v921
        %v954 = vadd.f32 %v758, %v922
        %v955 = vadd.f32 %v759, %v923
        %v956 = vadd.f32 %v760, %v924
        %v957 = vadd.f32 %v761, %v925
        %v958 = vadd.f32 %v762, %v926
        %v959 = vadd.f32 %v763, %v927
        %v960 = vadd.f32 %v764, %v928
        %v961 = vmax.f32 %v929, 0.0
        %v962 = vmax.f32 %v930, 0.0
        %v963 = vmax.f32 %v931, 0.0
        %v964 = vmax.f32 %v932, 0.0
        %v965 = vmax.f32 %v933, 0.0
        %v966 = vmax.f32 %v934, 0.0
        %v967 = vmax.f32 %v935, 0.0
        %v968 = vmax.f32 %v936, 0.0
        %v969 = vmax.f32 %v937, 0.0
        %v970 = vmax.f32 %v938, 0.0
        %v971 = vmax.f32 %v939, 0.0
        %v972 = vmax.f32 %v940, 0.0
        %v973 = vmax.f32 %v941, 0.0
        %v974 = vmax.f32 %v942, 0.0
        %v975 = vmax.f32 %v943, 0.0
        %v976 = vmax.f32 %v944, 0.0
        %v977 = vmax.f32 %v945, 0.0
        %v978 = vmax.f32 %v946, 0.0
        %v979 = vmax.f32 %v947, 0.0
        %v980 = vmax.f32 %v948, 0.0
        %v981 = vmax.f32 %v949, 0.0
        %v982 = vmax.f32 %v950, 0.0
        %v983 = vmax.f32 %v951, 0.0
        %v984 = vmax.f32 %v952, 0.0
        %v985 = vmax.f32 %v953, 0.0
        %v986 = vmax.f32 %v954, 0.0
        %v987 = vmax.f32 %v955, 0.0
        %v988 = vmax.f32 %v956, 0.0
        %v989 = vmax.f32 %v957, 0.0
        %v990 = vmax.f32 %v958, 0.0
        %v991 = vmax.f32 %v959, 0.0
        %v992 = vmax.f32 %v960, 0.0
        %v993 = vpack.c.bf16 %v962, %v961
        %v994 = vpack.c.bf16 %v964, %v963
        %v995 = vpack.c.bf16 %v966, %v965
        %v996 = vpack.c.bf16 %v968, %v967
        %v997 = vpack.c.bf16 %v970, %v969
        %v998 = vpack.c.bf16 %v972, %v971
        %v999 = vpack.c.bf16 %v974, %v973
        %v1000 = vpack.c.bf16 %v976, %v975
        %v1001 = vpack.c.bf16 %v978, %v977
        %v1002 = vpack.c.bf16 %v980, %v979
        %v1003 = vpack.c.bf16 %v982, %v981
        %v1004 = vpack.c.bf16 %v984, %v983
        %v1005 = vpack.c.bf16 %v986, %v985
        %v1006 = vpack.c.bf16 %v988, %v987
        %v1007 = vpack.c.bf16 %v990, %v989
        %v1008 = vpack.c.bf16 %v992, %v991
        %v1009 = vld [vmem:[%s3] sm:$0xf]
        %v1010 = vld [vmem:[%s3 + $0x4] sm:$0xf]
        %v1011 = vld [vmem:[%s3 + $0x8] sm:$0xf]
        %v1012 = vld [vmem:[%s3 + $0xc] sm:$0xf]
        %v1013 = vld [vmem:[%s3 + $0x10] sm:$0xf]
        %v1014 = vld [vmem:[%s3 + $0x14] sm:$0xf]
        %v1015 = vld [vmem:[%s3 + $0x18] sm:$0xf]
        %v1016 = vld [vmem:[%s3 + $0x1c] sm:$0xf]
        %v1017 = vld [vmem:[%s4] sm:$0x1]
        %v1019 = vlaneseq
        %v1020 = vshrl.u32 %v1019, 7
        %v1021 = vsub.s32 0, %v1020
        %v1022 = vrot.slane %v1017, %v1021
        %v1032 = vunpack.c.l.b16 %v1009
        %v1033 = vunpack.c.l.b16 %v1010
        %v1034 = vunpack.c.l.b16 %v1011
        %v1035 = vunpack.c.l.b16 %v1012
        %v1036 = vunpack.c.l.b16 %v1013
        %v1037 = vunpack.c.l.b16 %v1014
        %v1038 = vunpack.c.l.b16 %v1015
        %v1039 = vunpack.c.l.b16 %v1016
        %v1040 = vpack.c.b16 %v1033, %v1032
        %v1041 = vpack.c.b16 %v1035, %v1034
        %v1042 = vpack.c.b16 %v1037, %v1036
        %v1043 = vpack.c.b16 %v1039, %v1038
        %vm1048 = vcmask 523264
        %v1050 = vsel %vm1048, %v993, 0
        %v1053 = vsel %vm1048, %v994, 0
        %v1056 = vsel %vm1048, %v995, 0
        %v1059 = vsel %vm1048, %v996, 0
        %v1062 = vsel %vm1048, %v997, 0
        %v1065 = vsel %vm1048, %v998, 0
        %v1068 = vsel %vm1048, %v999, 0
        %v1071 = vsel %vm1048, %v1000, 0
        %v1074 = vsel %vm1048, %v1001, 0
        %v1077 = vsel %vm1048, %v1002, 0
        %v1080 = vsel %vm1048, %v1003, 0
        %v1083 = vsel %vm1048, %v1004, 0
        %v1086 = vsel %vm1048, %v1005, 0
        %v1089 = vsel %vm1048, %v1006, 0
        %v1092 = vsel %vm1048, %v1007, 0
        %v1095 = vsel %vm1048, %v1008, 0
        %1097 = vmatprep.subr.bf16.mxu0 0
        %1098 = vmatpush1.bf16.msra.mxu0 %v1040
        %1099 = vmatprep.subr.bf16.mxu0 0
        %1100 = vmatpush1.bf16.msra.mxu0 %v1041
        %1101 = vmatprep.subr.bf16.mxu0 0
        %1102 = vmatpush1.bf16.msra.mxu0 %v1042
        %1103 = vmatprep.subr.bf16.mxu0 0
        %1104 = vmatpush1.bf16.msra.mxu0 %v1043
        %1105 = vmatprep.subr.bf16.mxu0 0
        %1106 = vmatpush1.bf16.msra.mxu0 0
        %1107 = vmatprep.subr.bf16.mxu0 0
        %1108 = vmatpush1.bf16.msra.mxu0 0
        %1109 = vmatprep.subr.bf16.mxu0 0
        %1110 = vmatpush1.bf16.msra.mxu0 0
        %1111 = vmatprep.subr.bf16.mxu0 0
        %1112 = vmatpush1.bf16.msra.mxu0 0
        %1113 = vmatprep.subr.bf16.mxu0 0
        %1114 = vmatpush1.bf16.msra.mxu0 0
        %1115 = vmatprep.subr.bf16.mxu0 0
        %1116 = vmatpush1.bf16.msra.mxu0 0
        %1117 = vmatprep.subr.bf16.mxu0 0
        %1118 = vmatpush1.bf16.msra.mxu0 0
        %1119 = vmatprep.subr.bf16.mxu0 0
        %1120 = vmatpush1.bf16.msra.mxu0 0
        %1121 = vmatprep.subr.bf16.mxu0 0
        %1122 = vmatpush1.bf16.msra.mxu0 0
        %1123 = vmatprep.subr.bf16.mxu0 0
        %1124 = vmatpush1.bf16.msra.mxu0 0
        %1125 = vmatprep.subr.bf16.mxu0 0
        %1126 = vmatpush1.bf16.msra.mxu0 0
        %1127 = vmatprep.subr.bf16.mxu0 0
        %1128 = vmatpush1.bf16.msra.mxu0 0
        %1129 = vmatprep.mubr.bf16.mxu0 0
        %1130 = vmatmul.mubr.bf16.gmra.mrb[0].mxu0 %v1050
        %v1131 = vpop.f32.mrb[0].mxu0
        %v1132 = vadd.f32 %v1022, %v1131
        %v1133 = vpop.f32.mrb[0].mxu0
        %v1134 = vpop.f32.mrb[0].mxu0
        %v1135 = vadd.f32 %v1022, %v1134
        %v1136 = vpop.f32.mrb[0].mxu0
        %1137 = vmatprep.mubr.bf16.mxu0 0
        %1138 = vmatmul.mubr.bf16.gmra.mrb[0].mxu0 %v1053
        %v1139 = vpop.f32.mrb[0].mxu0
        %v1140 = vadd.f32 %v1022, %v1139
        %v1141 = vpop.f32.mrb[0].mxu0
        %v1142 = vpop.f32.mrb[0].mxu0
        %v1143 = vadd.f32 %v1022, %v1142
        %v1144 = vpop.f32.mrb[0].mxu0
        %1145 = vmatprep.mubr.bf16.mxu0 0
        %1146 = vmatmul.mubr.bf16.gmra.mrb[0].mxu0 %v1056
        %v1147 = vpop.f32.mrb[0].mxu0
        %v1148 = vadd.f32 %v1022, %v1147
        %v1149 = vpop.f32.mrb[0].mxu0
        %v1150 = vpop.f32.mrb[0].mxu0
        %v1151 = vadd.f32 %v1022, %v1150
        %v1152 = vpop.f32.mrb[0].mxu0
        %1153 = vmatprep.mubr.bf16.mxu0 0
        %1154 = vmatmul.mubr.bf16.gmra.mrb[0].mxu0 %v1059
        %v1155 = vpop.f32.mrb[0].mxu0
        %v1156 = vadd.f32 %v1022, %v1155
        %v1157 = vpop.f32.mrb[0].mxu0
        %v1158 = vpop.f32.mrb[0].mxu0
        %v1159 = vadd.f32 %v1022, %v1158
        %v1160 = vpop.f32.mrb[0].mxu0
        %1161 = vmatprep.mubr.bf16.mxu0 0
        %1162 = vmatmul.mubr.bf16.gmra.mrb[0].mxu0 %v1062
        %v1163 = vpop.f32.mrb[0].mxu0
        %v1164 = vadd.f32 %v1022, %v1163
        %v1165 = vpop.f32.mrb[0].mxu0
        %v1166 = vpop.f32.mrb[0].mxu0
        %v1167 = vadd.f32 %v1022, %v1166
        %v1168 = vpop.f32.mrb[0].mxu0
        %1169 = vmatprep.mubr.bf16.mxu0 0
        %1170 = vmatmul.mubr.bf16.gmra.mrb[0].mxu0 %v1065
        %v1171 = vpop.f32.mrb[0].mxu0
        %v1172 = vadd.f32 %v1022, %v1171
        %v1173 = vpop.f32.mrb[0].mxu0
        %v1174 = vpop.f32.mrb[0].mxu0
        %v1175 = vadd.f32 %v1022, %v1174
        %v1176 = vpop.f32.mrb[0].mxu0
        %1177 = vmatprep.mubr.bf16.mxu0 0
        %1178 = vmatmul.mubr.bf16.gmra.mrb[0].mxu0 %v1068
        %v1179 = vpop.f32.mrb[0].mxu0
        %v1180 = vadd.f32 %v1022, %v1179
        %v1181 = vpop.f32.mrb[0].mxu0
        %v1182 = vpop.f32.mrb[0].mxu0
        %v1183 = vadd.f32 %v1022, %v1182
        %v1184 = vpop.f32.mrb[0].mxu0
        %1185 = vmatprep.mubr.bf16.mxu0 0
        %1186 = vmatmul.mubr.bf16.gmra.mrb[0].mxu0 %v1071
        %v1187 = vpop.f32.mrb[0].mxu0
        %v1188 = vadd.f32 %v1022, %v1187
        %v1189 = vpop.f32.mrb[0].mxu0
        %v1190 = vpop.f32.mrb[0].mxu0
        %v1191 = vadd.f32 %v1022, %v1190
        %v1192 = vpop.f32.mrb[0].mxu0
        %1193 = vmatprep.mubr.bf16.mxu0 0
        %1194 = vmatmul.mubr.bf16.gmra.mrb[0].mxu0 %v1074
        %v1195 = vpop.f32.mrb[0].mxu0
        %v1196 = vadd.f32 %v1022, %v1195
        %v1197 = vpop.f32.mrb[0].mxu0
        %v1198 = vpop.f32.mrb[0].mxu0
        %v1199 = vadd.f32 %v1022, %v1198
        %v1200 = vpop.f32.mrb[0].mxu0
        %1201 = vmatprep.mubr.bf16.mxu0 0
        %1202 = vmatmul.mubr.bf16.gmra.mrb[0].mxu0 %v1077
        %v1203 = vpop.f32.mrb[0].mxu0
        %v1204 = vadd.f32 %v1022, %v1203
        %v1205 = vpop.f32.mrb[0].mxu0
        %v1206 = vpop.f32.mrb[0].mxu0
        %v1207 = vadd.f32 %v1022, %v1206
        %v1208 = vpop.f32.mrb[0].mxu0
        %1209 = vmatprep.mubr.bf16.mxu0 0
        %1210 = vmatmul.mubr.bf16.gmra.mrb[0].mxu0 %v1080
        %v1211 = vpop.f32.mrb[0].mxu0
        %v1212 = vadd.f32 %v1022, %v1211
        %v1213 = vpop.f32.mrb[0].mxu0
        %v1214 = vpop.f32.mrb[0].mxu0
        %v1215 = vadd.f32 %v1022, %v1214
        %v1216 = vpop.f32.mrb[0].mxu0
        %1217 = vmatprep.mubr.bf16.mxu0 0
        %1218 = vmatmul.mubr.bf16.gmra.mrb[0].mxu0 %v1083
        %v1219 = vpop.f32.mrb[0].mxu0
        %v1220 = vadd.f32 %v1022, %v1219
        %v1221 = vpop.f32.mrb[0].mxu0
        %v1222 = vpop.f32.mrb[0].mxu0
        %v1223 = vadd.f32 %v1022, %v1222
        %v1224 = vpop.f32.mrb[0].mxu0
        %1225 = vmatprep.mubr.bf16.mxu0 0
        %1226 = vmatmul.mubr.bf16.gmra.mrb[0].mxu0 %v1086
        %v1227 = vpop.f32.mrb[0].mxu0
        %v1228 = vadd.f32 %v1022, %v1227
        %v1229 = vpop.f32.mrb[0].mxu0
        %v1230 = vpop.f32.mrb[0].mxu0
        %v1231 = vadd.f32 %v1022, %v1230
        %v1232 = vpop.f32.mrb[0].mxu0
        %1233 = vmatprep.mubr.bf16.mxu0 0
        %1234 = vmatmul.mubr.bf16.gmra.mrb[0].mxu0 %v1089
        %v1235 = vpop.f32.mrb[0].mxu0
        %v1236 = vadd.f32 %v1022, %v1235
        %v1237 = vpop.f32.mrb[0].mxu0
        %v1238 = vpop.f32.mrb[0].mxu0
        %v1239 = vadd.f32 %v1022, %v1238
        %v1240 = vpop.f32.mrb[0].mxu0
        %1241 = vmatprep.mubr.bf16.mxu0 0
        %1242 = vmatmul.mubr.bf16.gmra.mrb[0].mxu0 %v1092
        %v1243 = vpop.f32.mrb[0].mxu0
        %v1244 = vadd.f32 %v1022, %v1243
        %v1245 = vpop.f32.mrb[0].mxu0
        %v1246 = vpop.f32.mrb[0].mxu0
        %v1247 = vadd.f32 %v1022, %v1246
        %v1248 = vpop.f32.mrb[0].mxu0
        %1249 = vmatprep.mubr.bf16.mxu0 0
        %1250 = vmatmul.mubr.bf16.gmra.mrb[0].mxu0 %v1095
        %v1251 = vpop.f32.mrb[0].mxu0
        %v1252 = vadd.f32 %v1022, %v1251
        %v1253 = vpop.f32.mrb[0].mxu0
        %v1254 = vpop.f32.mrb[0].mxu0
        %v1255 = vadd.f32 %v1022, %v1254
        %v1256 = vpop.f32.mrb[0].mxu0
        %1257 = vdwg.mxu0
        %v1258 = vmax.f32 %v1132, 0.0
        %v1259 = vmax.f32 %v1135, 0.0
        %v1260 = vmax.f32 %v1140, 0.0
        %v1261 = vmax.f32 %v1143, 0.0
        %v1262 = vmax.f32 %v1148, 0.0
        %v1263 = vmax.f32 %v1151, 0.0
        %v1264 = vmax.f32 %v1156, 0.0
        %v1265 = vmax.f32 %v1159, 0.0
        %v1266 = vmax.f32 %v1164, 0.0
        %v1267 = vmax.f32 %v1167, 0.0
        %v1268 = vmax.f32 %v1172, 0.0
        %v1269 = vmax.f32 %v1175, 0.0
        %v1270 = vmax.f32 %v1180, 0.0
        %v1271 = vmax.f32 %v1183, 0.0
        %v1272 = vmax.f32 %v1188, 0.0
        %v1273 = vmax.f32 %v1191, 0.0
        %v1274 = vmax.f32 %v1196, 0.0
        %v1275 = vmax.f32 %v1199, 0.0
        %v1276 = vmax.f32 %v1204, 0.0
        %v1277 = vmax.f32 %v1207, 0.0
        %v1278 = vmax.f32 %v1212, 0.0
        %v1279 = vmax.f32 %v1215, 0.0
        %v1280 = vmax.f32 %v1220, 0.0
        %v1281 = vmax.f32 %v1223, 0.0
        %v1282 = vmax.f32 %v1228, 0.0
        %v1283 = vmax.f32 %v1231, 0.0
        %v1284 = vmax.f32 %v1236, 0.0
        %v1285 = vmax.f32 %v1239, 0.0
        %v1286 = vmax.f32 %v1244, 0.0
        %v1287 = vmax.f32 %v1247, 0.0
        %v1288 = vmax.f32 %v1252, 0.0
        %v1289 = vmax.f32 %v1255, 0.0
        %v1290 = vpack.c.bf16 %v1259, %v1258
        %v1291 = vpack.c.bf16 %v1261, %v1260
        %v1292 = vpack.c.bf16 %v1263, %v1262
        %v1293 = vpack.c.bf16 %v1265, %v1264
        %v1294 = vpack.c.bf16 %v1267, %v1266
        %v1295 = vpack.c.bf16 %v1269, %v1268
        %v1296 = vpack.c.bf16 %v1271, %v1270
        %v1297 = vpack.c.bf16 %v1273, %v1272
        %v1298 = vpack.c.bf16 %v1275, %v1274
        %v1299 = vpack.c.bf16 %v1277, %v1276
        %v1300 = vpack.c.bf16 %v1279, %v1278
        %v1301 = vpack.c.bf16 %v1281, %v1280
        %v1302 = vpack.c.bf16 %v1283, %v1282
        %v1303 = vpack.c.bf16 %v1285, %v1284
        %v1304 = vpack.c.bf16 %v1287, %v1286
        %v1305 = vpack.c.bf16 %v1289, %v1288
        %v1306 = vld [vmem:[%s5] sm:$0xff]
        %v1307 = vld [vmem:[%s5 + $0x8] sm:$0xff]
        %v1308 = vld [vmem:[%s5 + $0x10] sm:$0xff]
        %v1309 = vld [vmem:[%s5 + $0x18] sm:$0xff]
        %v1310 = vld [vmem:[%s5 + $0x20] sm:$0xff]
        %v1311 = vld [vmem:[%s5 + $0x28] sm:$0xff]
        %v1312 = vld [vmem:[%s5 + $0x30] sm:$0xff]
        %v1313 = vld [vmem:[%s5 + $0x38] sm:$0xff]
        %v1314 = vld [vmem:[%s5 + $0x40] sm:$0xff]
        %v1315 = vld [vmem:[%s5 + $0x48] sm:$0xff]
        %v1316 = vld [vmem:[%s5 + $0x50] sm:$0xff]
        %v1317 = vld [vmem:[%s5 + $0x58] sm:$0xff]
        %v1318 = vld [vmem:[%s5 + $0x60] sm:$0xff]
        %v1319 = vld [vmem:[%s5 + $0x68] sm:$0xff]
        %v1320 = vld [vmem:[%s5 + $0x70] sm:$0xff]
        %v1321 = vld [vmem:[%s5 + $0x78] sm:$0xff]
        %v1322 = vld [vmem:[%s5 + $0x80] sm:$0xff]
        %v1323 = vld [vmem:[%s5 + $0x88] sm:$0xff]
        %v1324 = vld [vmem:[%s5 + $0x90] sm:$0xff]
        %v1325 = vld [vmem:[%s5 + $0x98] sm:$0xff]
        %v1326 = vld [vmem:[%s5 + $0xa0] sm:$0xff]
        %v1327 = vld [vmem:[%s5 + $0xa8] sm:$0xff]
        %v1328 = vld [vmem:[%s5 + $0xb0] sm:$0xff]
        %v1329 = vld [vmem:[%s5 + $0xb8] sm:$0xff]
        %v1330 = vld [vmem:[%s5 + $0xc0] sm:$0xff]
        %v1331 = vld [vmem:[%s5 + $0xc8] sm:$0xff]
        %v1332 = vld [vmem:[%s5 + $0xd0] sm:$0xff]
        %v1333 = vld [vmem:[%s5 + $0xd8] sm:$0xff]
        %v1334 = vld [vmem:[%s5 + $0xe0] sm:$0xff]
        %v1335 = vld [vmem:[%s5 + $0xe8] sm:$0xff]
        %v1336 = vld [vmem:[%s5 + $0xf0] sm:$0xff]
        %v1337 = vld [vmem:[%s5 + $0xf8] sm:$0xff]
        %v1338 = vld [vmem:[%s5 + $0x100] sm:$0xff]
        %v1339 = vld [vmem:[%s5 + $0x108] sm:$0xff]
        %v1340 = vld [vmem:[%s5 + $0x110] sm:$0xff]
        %v1341 = vld [vmem:[%s5 + $0x118] sm:$0xff]
        %v1342 = vld [vmem:[%s5 + $0x120] sm:$0xff]
        %v1343 = vld [vmem:[%s5 + $0x128] sm:$0xff]
        %v1344 = vld [vmem:[%s5 + $0x130] sm:$0xff]
        %v1345 = vld [vmem:[%s5 + $0x138] sm:$0xff]
        %v1346 = vld [vmem:[%s5 + $0x140] sm:$0xff]
        %v1347 = vld [vmem:[%s5 + $0x148] sm:$0xff]
        %v1348 = vld [vmem:[%s5 + $0x150] sm:$0xff]
        %v1349 = vld [vmem:[%s5 + $0x158] sm:$0xff]
        %v1350 = vld [vmem:[%s5 + $0x160] sm:$0xff]
        %v1351 = vld [vmem:[%s5 + $0x168] sm:$0xff]
        %v1352 = vld [vmem:[%s5 + $0x170] sm:$0xff]
        %v1353 = vld [vmem:[%s5 + $0x178] sm:$0xff]
        %v1354 = vld [vmem:[%s5 + $0x180] sm:$0xff]
        %v1355 = vld [vmem:[%s5 + $0x188] sm:$0xff]
        %v1356 = vld [vmem:[%s5 + $0x190] sm:$0xff]
        %v1357 = vld [vmem:[%s5 + $0x198] sm:$0xff]
        %v1358 = vld [vmem:[%s5 + $0x1a0] sm:$0xff]
        %v1359 = vld [vmem:[%s5 + $0x1a8] sm:$0xff]
        %v1360 = vld [vmem:[%s5 + $0x1b0] sm:$0xff]
        %v1361 = vld [vmem:[%s5 + $0x1b8] sm:$0xff]
        %v1362 = vld [vmem:[%s5 + $0x1c0] sm:$0xff]
        %v1363 = vld [vmem:[%s5 + $0x1c8] sm:$0xff]
        %v1364 = vld [vmem:[%s5 + $0x1d0] sm:$0xff]
        %v1365 = vld [vmem:[%s5 + $0x1d8] sm:$0xff]
        %v1366 = vld [vmem:[%s5 + $0x1e0] sm:$0xff]
        %v1367 = vld [vmem:[%s5 + $0x1e8] sm:$0xff]
        %v1368 = vld [vmem:[%s5 + $0x1f0] sm:$0xff]
        %v1369 = vld [vmem:[%s5 + $0x1f8] sm:$0xff]
        %v1370 = vld [vmem:[%s6] sm:$0xff]
        %v1372 = vlaneseq
        %v1373 = vshrl.u32 %v1372, 7
        %v1374 = vsub.s32 0, %v1373
        %v1375 = vrot.slane %v1370, %v1374
        %v1376 = vlaneseq
        %v1377 = vshrl.u32 %v1376, 7
        %v1378 = vsub.s32 1, %v1377
        %v1379 = vrot.slane %v1370, %v1378
        %v1380 = vlaneseq
        %v1381 = vshrl.u32 %v1380, 7
        %v1382 = vsub.s32 2, %v1381
        %v1383 = vrot.slane %v1370, %v1382
        %v1384 = vlaneseq
        %v1385 = vshrl.u32 %v1384, 7
        %v1386 = vsub.s32 3, %v1385
        %v1387 = vrot.slane %v1370, %v1386
        %v1388 = vlaneseq
        %v1389 = vshrl.u32 %v1388, 7
        %v1390 = vsub.s32 4, %v1389
        %v1391 = vrot.slane %v1370, %v1390
        %v1392 = vlaneseq
        %v1393 = vshrl.u32 %v1392, 7
        %v1394 = vsub.s32 5, %v1393
        %v1395 = vrot.slane %v1370, %v1394
        %v1396 = vlaneseq
        %v1397 = vshrl.u32 %v1396, 7
        %v1398 = vsub.s32 6, %v1397
        %v1399 = vrot.slane %v1370, %v1398
        %v1400 = vlaneseq
        %v1401 = vshrl.u32 %v1400, 7
        %v1402 = vsub.s32 7, %v1401
        %v1403 = vrot.slane %v1370, %v1402
        %v1476 = vunpack.c.l.b16 %v1306
        %v1477 = vunpack.c.h.b16 %v1306
        %v1478 = vunpack.c.l.b16 %v1307
        %v1479 = vunpack.c.h.b16 %v1307
        %v1480 = vunpack.c.l.b16 %v1308
        %v1481 = vunpack.c.h.b16 %v1308
        %v1482 = vunpack.c.l.b16 %v1309
        %v1483 = vunpack.c.h.b16 %v1309
        %v1484 = vunpack.c.l.b16 %v1310
        %v1485 = vunpack.c.h.b16 %v1310
        %v1486 = vunpack.c.l.b16 %v1311
        %v1487 = vunpack.c.h.b16 %v1311
        %v1488 = vunpack.c.l.b16 %v1312
        %v1489 = vunpack.c.h.b16 %v1312
        %v1490 = vunpack.c.l.b16 %v1313
        %v1491 = vunpack.c.h.b16 %v1313
        %v1492 = vunpack.c.l.b16 %v1314
        %v1493 = vunpack.c.h.b16 %v1314
        %v1494 = vunpack.c.l.b16 %v1315
        %v1495 = vunpack.c.h.b16 %v1315
        %v1496 = vunpack.c.l.b16 %v1316
        %v1497 = vunpack.c.h.b16 %v1316
        %v1498 = vunpack.c.l.b16 %v1317
        %v1499 = vunpack.c.h.b16 %v1317
        %v1500 = vunpack.c.l.b16 %v1318
        %v1501 = vunpack.c.h.b16 %v1318
        %v1502 = vunpack.c.l.b16 %v1319
        %v1503 = vunpack.c.h.b16 %v1319
        %v1504 = vunpack.c.l.b16 %v1320
        %v1505 = vunpack.c.h.b16 %v1320
        %v1506 = vunpack.c.l.b16 %v1321
        %v1507 = vunpack.c.h.b16 %v1321
        %v1508 = vunpack.c.l.b16 %v1322
        %v1509 = vunpack.c.h.b16 %v1322
        %v1510 = vunpack.c.l.b16 %v1323
        %v1511 = vunpack.c.h.b16 %v1323
        %v1512 = vunpack.c.l.b16 %v1324
        %v1513 = vunpack.c.h.b16 %v1324
        %v1514 = vunpack.c.l.b16 %v1325
        %v1515 = vunpack.c.h.b16 %v1325
        %v1516 = vunpack.c.l.b16 %v1326
        %v1517 = vunpack.c.h.b16 %v1326
        %v1518 = vunpack.c.l.b16 %v1327
        %v1519 = vunpack.c.h.b16 %v1327
        %v1520 = vunpack.c.l.b16 %v1328
        %v1521 = vunpack.c.h.b16 %v1328
        %v1522 = vunpack.c.l.b16 %v1329
        %v1523 = vunpack.c.h.b16 %v1329
        %v1524 = vunpack.c.l.b16 %v1330
        %v1525 = vunpack.c.h.b16 %v1330
        %v1526 = vunpack.c.l.b16 %v1331
        %v1527 = vunpack.c.h.b16 %v1331
        %v1528 = vunpack.c.l.b16 %v1332
        %v1529 = vunpack.c.h.b16 %v1332
        %v1530 = vunpack.c.l.b16 %v1333
        %v1531 = vunpack.c.h.b16 %v1333
        %v1532 = vunpack.c.l.b16 %v1334
        %v1533 = vunpack.c.h.b16 %v1334
        %v1534 = vunpack.c.l.b16 %v1335
        %v1535 = vunpack.c.h.b16 %v1335
        %v1536 = vunpack.c.l.b16 %v1336
        %v1537 = vunpack.c.h.b16 %v1336
        %v1538 = vunpack.c.l.b16 %v1337
        %v1539 = vunpack.c.h.b16 %v1337
        %v1540 = vunpack.c.l.b16 %v1338
        %v1541 = vunpack.c.h.b16 %v1338
        %v1542 = vunpack.c.l.b16 %v1339
        %v1543 = vunpack.c.h.b16 %v1339
        %v1544 = vunpack.c.l.b16 %v1340
        %v1545 = vunpack.c.h.b16 %v1340
        %v1546 = vunpack.c.l.b16 %v1341
        %v1547 = vunpack.c.h.b16 %v1341
        %v1548 = vunpack.c.l.b16 %v1342
        %v1549 = vunpack.c.h.b16 %v1342
        %v1550 = vunpack.c.l.b16 %v1343
        %v1551 = vunpack.c.h.b16 %v1343
        %v1552 = vunpack.c.l.b16 %v1344
        %v1553 = vunpack.c.h.b16 %v1344
        %v1554 = vunpack.c.l.b16 %v1345
        %v1555 = vunpack.c.h.b16 %v1345
        %v1556 = vunpack.c.l.b16 %v1346
        %v1557 = vunpack.c.h.b16 %v1346
        %v1558 = vunpack.c.l.b16 %v1347
        %v1559 = vunpack.c.h.b16 %v1347
        %v1560 = vunpack.c.l.b16 %v1348
        %v1561 = vunpack.c.h.b16 %v1348
        %v1562 = vunpack.c.l.b16 %v1349
        %v1563 = vunpack.c.h.b16 %v1349
        %v1564 = vunpack.c.l.b16 %v1350
        %v1565 = vunpack.c.h.b16 %v1350
        %v1566 = vunpack.c.l.b16 %v1351
        %v1567 = vunpack.c.h.b16 %v1351
        %v1568 = vunpack.c.l.b16 %v1352
        %v1569 = vunpack.c.h.b16 %v1352
        %v1570 = vunpack.c.l.b16 %v1353
        %v1571 = vunpack.c.h.b16 %v1353
        %v1572 = vunpack.c.l.b16 %v1354
        %v1573 = vunpack.c.h.b16 %v1354
        %v1574 = vunpack.c.l.b16 %v1355
        %v1575 = vunpack.c.h.b16 %v1355
        %v1576 = vunpack.c.l.b16 %v1356
        %v1577 = vunpack.c.h.b16 %v1356
        %v1578 = vunpack.c.l.b16 %v1357
        %v1579 = vunpack.c.h.b16 %v1357
        %v1580 = vunpack.c.l.b16 %v1358
        %v1581 = vunpack.c.h.b16 %v1358
        %v1582 = vunpack.c.l.b16 %v1359
        %v1583 = vunpack.c.h.b16 %v1359
        %v1584 = vunpack.c.l.b16 %v1360
        %v1585 = vunpack.c.h.b16 %v1360
        %v1586 = vunpack.c.l.b16 %v1361
        %v1587 = vunpack.c.h.b16 %v1361
        %v1588 = vunpack.c.l.b16 %v1362
        %v1589 = vunpack.c.h.b16 %v1362
        %v1590 = vunpack.c.l.b16 %v1363
        %v1591 = vunpack.c.h.b16 %v1363
        %v1592 = vunpack.c.l.b16 %v1364
        %v1593 = vunpack.c.h.b16 %v1364
        %v1594 = vunpack.c.l.b16 %v1365
        %v1595 = vunpack.c.h.b16 %v1365
        %v1596 = vunpack.c.l.b16 %v1366
        %v1597 = vunpack.c.h.b16 %v1366
        %v1598 = vunpack.c.l.b16 %v1367
        %v1599 = vunpack.c.h.b16 %v1367
        %v1600 = vunpack.c.l.b16 %v1368
        %v1601 = vunpack.c.h.b16 %v1368
        %v1602 = vunpack.c.l.b16 %v1369
        %v1603 = vunpack.c.h.b16 %v1369
        %v1604 = vpack.c.b16 %v1484, %v1476
        %v1605 = vpack.c.b16 %v1485, %v1477
        %v1606 = vpack.c.b16 %v1486, %v1478
        %v1607 = vpack.c.b16 %v1487, %v1479
        %v1608 = vpack.c.b16 %v1488, %v1480
        %v1609 = vpack.c.b16 %v1489, %v1481
        %v1610 = vpack.c.b16 %v1490, %v1482
        %v1611 = vpack.c.b16 %v1491, %v1483
        %v1612 = vpack.c.b16 %v1500, %v1492
        %v1613 = vpack.c.b16 %v1501, %v1493
        %v1614 = vpack.c.b16 %v1502, %v1494
        %v1615 = vpack.c.b16 %v1503, %v1495
        %v1616 = vpack.c.b16 %v1504, %v1496
        %v1617 = vpack.c.b16 %v1505, %v1497
        %v1618 = vpack.c.b16 %v1506, %v1498
        %v1619 = vpack.c.b16 %v1507, %v1499
        %v1620 = vpack.c.b16 %v1516, %v1508
        %v1621 = vpack.c.b16 %v1517, %v1509
        %v1622 = vpack.c.b16 %v1518, %v1510
        %v1623 = vpack.c.b16 %v1519, %v1511
        %v1624 = vpack.c.b16 %v1520, %v1512
        %v1625 = vpack.c.b16 %v1521, %v1513
        %v1626 = vpack.c.b16 %v1522, %v1514
        %v1627 = vpack.c.b16 %v1523, %v1515
        %v1628 = vpack.c.b16 %v1532, %v1524
        %v1629 = vpack.c.b16 %v1533, %v1525
        %v1630 = vpack.c.b16 %v1534, %v1526
        %v1631 = vpack.c.b16 %v1535, %v1527
        %v1632 = vpack.c.b16 %v1536, %v1528
        %v1633 = vpack.c.b16 %v1537, %v1529
        %v1634 = vpack.c.b16 %v1538, %v1530
        %v1635 = vpack.c.b16 %v1539, %v1531
        %v1636 = vpack.c.b16 %v1548, %v1540
        %v1637 = vpack.c.b16 %v1549, %v1541
        %v1638 = vpack.c.b16 %v1550, %v1542
        %v1639 = vpack.c.b16 %v1551, %v1543
        %v1640 = vpack.c.b16 %v1552, %v1544
        %v1641 = vpack.c.b16 %v1553, %v1545
        %v1642 = vpack.c.b16 %v1554, %v1546
        %v1643 = vpack.c.b16 %v1555, %v1547
        %v1644 = vpack.c.b16 %v1564, %v1556
        %v1645 = vpack.c.b16 %v1565, %v1557
        %v1646 = vpack.c.b16 %v1566, %v1558
        %v1647 = vpack.c.b16 %v1567, %v1559
        %v1648 = vpack.c.b16 %v1568, %v1560
        %v1649 = vpack.c.b16 %v1569, %v1561
        %v1650 = vpack.c.b16 %v1570, %v1562
        %v1651 = vpack.c.b16 %v1571, %v1563
        %v1652 = vpack.c.b16 %v1580, %v1572
        %v1653 = vpack.c.b16 %v1581, %v1573
        %v1654 = vpack.c.b16 %v1582, %v1574
        %v1655 = vpack.c.b16 %v1583, %v1575
        %v1656 = vpack.c.b16 %v1584, %v1576
        %v1657 = vpack.c.b16 %v1585, %v1577
        %v1658 = vpack.c.b16 %v1586, %v1578
        %v1659 = vpack.c.b16 %v1587, %v1579
        %v1660 = vpack.c.b16 %v1596, %v1588
        %v1661 = vpack.c.b16 %v1597, %v1589
        %v1662 = vpack.c.b16 %v1598, %v1590
        %v1663 = vpack.c.b16 %v1599, %v1591
        %v1664 = vpack.c.b16 %v1600, %v1592
        %v1665 = vpack.c.b16 %v1601, %v1593
        %v1666 = vpack.c.b16 %v1602, %v1594
        %v1667 = vpack.c.b16 %v1603, %v1595
        %1732 = vmatprep.subr.bf16.mxu0 %v1605
        %1733 = vmatpush1.bf16.msra.mxu0 %v1604
        %1734 = vmatprep.subr.bf16.mxu0 %v1613
        %1735 = vmatpush1.bf16.msra.mxu0 %v1612
        %1736 = vmatprep.subr.bf16.mxu0 %v1621
        %1737 = vmatpush1.bf16.msra.mxu0 %v1620
        %1738 = vmatprep.subr.bf16.mxu0 %v1629
        %1739 = vmatpush1.bf16.msra.mxu0 %v1628
        %1740 = vmatprep.subr.bf16.mxu0 %v1637
        %1741 = vmatpush1.bf16.msra.mxu0 %v1636
        %1742 = vmatprep.subr.bf16.mxu0 %v1645
        %1743 = vmatpush1.bf16.msra.mxu0 %v1644
        %1744 = vmatprep.subr.bf16.mxu0 %v1653
        %1745 = vmatpush1.bf16.msra.mxu0 %v1652
        %1746 = vmatprep.subr.bf16.mxu0 %v1661
        %1747 = vmatpush1.bf16.msra.mxu0 %v1660
        %1748 = vmatprep.subr.bf16.mxu0 0
        %1749 = vmatpush1.bf16.msra.mxu0 0
        %1750 = vmatprep.subr.bf16.mxu0 0
        %1751 = vmatpush1.bf16.msra.mxu0 0
        %1752 = vmatprep.subr.bf16.mxu0 0
        %1753 = vmatpush1.bf16.msra.mxu0 0
        %1754 = vmatprep.subr.bf16.mxu0 0
        %1755 = vmatpush1.bf16.msra.mxu0 0
        %1756 = vmatprep.subr.bf16.mxu0 0
        %1757 = vmatpush1.bf16.msra.mxu0 0
        %1758 = vmatprep.subr.bf16.mxu0 0
        %1759 = vmatpush1.bf16.msra.mxu0 0
        %1760 = vmatprep.subr.bf16.mxu0 0
        %1761 = vmatpush1.bf16.msra.mxu0 0
        %1762 = vmatprep.subr.bf16.mxu0 0
        %1763 = vmatpush1.bf16.msra.mxu0 0
        %1764 = vmatprep.mubr.bf16.mxu0 0
        %1765 = vmatmul.mubr.bf16.gmra.mrb[0].mxu0 %v1290
        %v1766 = vpop.f32.mrb[0].mxu0
        %v1767 = vadd.f32 %v1375, %v1766
        %v1768 = vpop.f32.mrb[0].mxu0
        %v1769 = vadd.f32 %v1379, %v1768
        %v1770 = vpop.f32.mrb[0].mxu0
        %v1771 = vadd.f32 %v1375, %v1770
        %v1772 = vpop.f32.mrb[0].mxu0
        %v1773 = vadd.f32 %v1379, %v1772
        %1774 = vmatprep.mubr.bf16.mxu0 0
        %1775 = vmatmul.mubr.bf16.gmra.mrb[0].mxu0 %v1291
        %v1776 = vpop.f32.mrb[0].mxu0
        %v1777 = vadd.f32 %v1375, %v1776
        %v1778 = vpop.f32.mrb[0].mxu0
        %v1779 = vadd.f32 %v1379, %v1778
        %v1780 = vpop.f32.mrb[0].mxu0
        %v1781 = vadd.f32 %v1375, %v1780
        %v1782 = vpop.f32.mrb[0].mxu0
        %v1783 = vadd.f32 %v1379, %v1782
        %1784 = vmatprep.mubr.bf16.mxu0 0
        %1785 = vmatmul.mubr.bf16.gmra.mrb[0].mxu0 %v1292
        %v1786 = vpop.f32.mrb[0].mxu0
        %v1787 = vadd.f32 %v1375, %v1786
        %v1788 = vpop.f32.mrb[0].mxu0
        %v1789 = vadd.f32 %v1379, %v1788
        %v1790 = vpop.f32.mrb[0].mxu0
        %v1791 = vadd.f32 %v1375, %v1790
        %v1792 = vpop.f32.mrb[0].mxu0
        %v1793 = vadd.f32 %v1379, %v1792
        %1794 = vmatprep.mubr.bf16.mxu0 0
        %1795 = vmatmul.mubr.bf16.gmra.mrb[0].mxu0 %v1293
        %v1796 = vpop.f32.mrb[0].mxu0
        %v1797 = vadd.f32 %v1375, %v1796
        %v1798 = vpop.f32.mrb[0].mxu0
        %v1799 = vadd.f32 %v1379, %v1798
        %v1800 = vpop.f32.mrb[0].mxu0
        %v1801 = vadd.f32 %v1375, %v1800
        %v1802 = vpop.f32.mrb[0].mxu0
        %v1803 = vadd.f32 %v1379, %v1802
        %1804 = vmatprep.mubr.bf16.mxu0 0
        %1805 = vmatmul.mubr.bf16.gmra.mrb[0].mxu0 %v1294
        %v1806 = vpop.f32.mrb[0].mxu0
        %v1807 = vadd.f32 %v1375, %v1806
        %v1808 = vpop.f32.mrb[0].mxu0
        %v1809 = vadd.f32 %v1379, %v1808
        %v1810 = vpop.f32.mrb[0].mxu0
        %v1811 = vadd.f32 %v1375, %v1810
        %v1812 = vpop.f32.mrb[0].mxu0
        %v1813 = vadd.f32 %v1379, %v1812
        %1814 = vmatprep.mubr.bf16.mxu0 0
        %1815 = vmatmul.mubr.bf16.gmra.mrb[0].mxu0 %v1295
        %v1816 = vpop.f32.mrb[0].mxu0
        %v1817 = vadd.f32 %v1375, %v1816
        %v1818 = vpop.f32.mrb[0].mxu0
        %v1819 = vadd.f32 %v1379, %v1818
        %v1820 = vpop.f32.mrb[0].mxu0
        %v1821 = vadd.f32 %v1375, %v1820
        %v1822 = vpop.f32.mrb[0].mxu0
        %v1823 = vadd.f32 %v1379, %v1822
        %1824 = vmatprep.mubr.bf16.mxu0 0
        %1825 = vmatmul.mubr.bf16.gmra.mrb[0].mxu0 %v1296
        %v1826 = vpop.f32.mrb[0].mxu0
        %v1827 = vadd.f32 %v1375, %v1826
        %v1828 = vpop.f32.mrb[0].mxu0
        %v1829 = vadd.f32 %v1379, %v1828
        %v1830 = vpop.f32.mrb[0].mxu0
        %v1831 = vadd.f32 %v1375, %v1830
        %v1832 = vpop.f32.mrb[0].mxu0
        %v1833 = vadd.f32 %v1379, %v1832
        %1834 = vmatprep.mubr.bf16.mxu0 0
        %1835 = vmatmul.mubr.bf16.gmra.mrb[0].mxu0 %v1297
        %v1836 = vpop.f32.mrb[0].mxu0
        %v1837 = vadd.f32 %v1375, %v1836
        %v1838 = vpop.f32.mrb[0].mxu0
        %v1839 = vadd.f32 %v1379, %v1838
        %v1840 = vpop.f32.mrb[0].mxu0
        %v1841 = vadd.f32 %v1375, %v1840
        %v1842 = vpop.f32.mrb[0].mxu0
        %v1843 = vadd.f32 %v1379, %v1842
        %1844 = vmatprep.mubr.bf16.mxu0 0
        %1845 = vmatmul.mubr.bf16.gmra.mrb[0].mxu0 %v1298
        %v1846 = vpop.f32.mrb[0].mxu0
        %v1847 = vadd.f32 %v1375, %v1846
        %v1848 = vpop.f32.mrb[0].mxu0
        %v1849 = vadd.f32 %v1379, %v1848
        %v1850 = vpop.f32.mrb[0].mxu0
        %v1851 = vadd.f32 %v1375, %v1850
        %v1852 = vpop.f32.mrb[0].mxu0
        %v1853 = vadd.f32 %v1379, %v1852
        %1854 = vmatprep.mubr.bf16.mxu0 0
        %1855 = vmatmul.mubr.bf16.gmra.mrb[0].mxu0 %v1299
        %v1856 = vpop.f32.mrb[0].mxu0
        %v1857 = vadd.f32 %v1375, %v1856
        %v1858 = vpop.f32.mrb[0].mxu0
        %v1859 = vadd.f32 %v1379, %v1858
        %v1860 = vpop.f32.mrb[0].mxu0
        %v1861 = vadd.f32 %v1375, %v1860
        %v1862 = vpop.f32.mrb[0].mxu0
        %v1863 = vadd.f32 %v1379, %v1862
        %1864 = vmatprep.mubr.bf16.mxu0 0
        %1865 = vmatmul.mubr.bf16.gmra.mrb[0].mxu0 %v1300
        %v1866 = vpop.f32.mrb[0].mxu0
        %v1867 = vadd.f32 %v1375, %v1866
        %v1868 = vpop.f32.mrb[0].mxu0
        %v1869 = vadd.f32 %v1379, %v1868
        %v1870 = vpop.f32.mrb[0].mxu0
        %v1871 = vadd.f32 %v1375, %v1870
        %v1872 = vpop.f32.mrb[0].mxu0
        %v1873 = vadd.f32 %v1379, %v1872
        %1874 = vmatprep.mubr.bf16.mxu0 0
        %1875 = vmatmul.mubr.bf16.gmra.mrb[0].mxu0 %v1301
        %v1876 = vpop.f32.mrb[0].mxu0
        %v1877 = vadd.f32 %v1375, %v1876
        %v1878 = vpop.f32.mrb[0].mxu0
        %v1879 = vadd.f32 %v1379, %v1878
        %v1880 = vpop.f32.mrb[0].mxu0
        %v1881 = vadd.f32 %v1375, %v1880
        %v1882 = vpop.f32.mrb[0].mxu0
        %v1883 = vadd.f32 %v1379, %v1882
        %1884 = vmatprep.mubr.bf16.mxu0 0
        %1885 = vmatmul.mubr.bf16.gmra.mrb[0].mxu0 %v1302
        %v1886 = vpop.f32.mrb[0].mxu0
        %v1887 = vadd.f32 %v1375, %v1886
        %v1888 = vpop.f32.mrb[0].mxu0
        %v1889 = vadd.f32 %v1379, %v1888
        %v1890 = vpop.f32.mrb[0].mxu0
        %v1891 = vadd.f32 %v1375, %v1890
        %v1892 = vpop.f32.mrb[0].mxu0
        %v1893 = vadd.f32 %v1379, %v1892
        %1894 = vmatprep.mubr.bf16.mxu0 0
        %1895 = vmatmul.mubr.bf16.gmra.mrb[0].mxu0 %v1303
        %v1896 = vpop.f32.mrb[0].mxu0
        %v1897 = vadd.f32 %v1375, %v1896
        %v1898 = vpop.f32.mrb[0].mxu0
        %v1899 = vadd.f32 %v1379, %v1898
        %v1900 = vpop.f32.mrb[0].mxu0
        %v1901 = vadd.f32 %v1375, %v1900
        %v1902 = vpop.f32.mrb[0].mxu0
        %v1903 = vadd.f32 %v1379, %v1902
        %1904 = vmatprep.mubr.bf16.mxu0 0
        %1905 = vmatmul.mubr.bf16.gmra.mrb[0].mxu0 %v1304
        %v1906 = vpop.f32.mrb[0].mxu0
        %v1907 = vadd.f32 %v1375, %v1906
        %v1908 = vpop.f32.mrb[0].mxu0
        %v1909 = vadd.f32 %v1379, %v1908
        %v1910 = vpop.f32.mrb[0].mxu0
        %v1911 = vadd.f32 %v1375, %v1910
        %v1912 = vpop.f32.mrb[0].mxu0
        %v1913 = vadd.f32 %v1379, %v1912
        %1914 = vmatprep.mubr.bf16.mxu0 0
        %1915 = vmatmul.mubr.bf16.gmra.mrb[0].mxu0 %v1305
        %v1916 = vpop.f32.mrb[0].mxu0
        %v1917 = vadd.f32 %v1375, %v1916
        %v1918 = vpop.f32.mrb[0].mxu0
        %v1919 = vadd.f32 %v1379, %v1918
        %v1920 = vpop.f32.mrb[0].mxu0
        %v1921 = vadd.f32 %v1375, %v1920
        %v1922 = vpop.f32.mrb[0].mxu0
        %v1923 = vadd.f32 %v1379, %v1922
        %1924 = vdwg.mxu0
        %1925 = vmatprep.subr.bf16.mxu0 %v1607
        %1926 = vmatpush1.bf16.msra.mxu0 %v1606
        %1927 = vmatprep.subr.bf16.mxu0 %v1615
        %1928 = vmatpush1.bf16.msra.mxu0 %v1614
        %1929 = vmatprep.subr.bf16.mxu0 %v1623
        %1930 = vmatpush1.bf16.msra.mxu0 %v1622
        %1931 = vmatprep.subr.bf16.mxu0 %v1631
        %1932 = vmatpush1.bf16.msra.mxu0 %v1630
        %1933 = vmatprep.subr.bf16.mxu0 %v1639
        %1934 = vmatpush1.bf16.msra.mxu0 %v1638
        %1935 = vmatprep.subr.bf16.mxu0 %v1647
        %1936 = vmatpush1.bf16.msra.mxu0 %v1646
        %1937 = vmatprep.subr.bf16.mxu0 %v1655
        %1938 = vmatpush1.bf16.msra.mxu0 %v1654
        %1939 = vmatprep.subr.bf16.mxu0 %v1663
        %1940 = vmatpush1.bf16.msra.mxu0 %v1662
        %1941 = vmatprep.subr.bf16.mxu0 0
        %1942 = vmatpush1.bf16.msra.mxu0 0
        %1943 = vmatprep.subr.bf16.mxu0 0
        %1944 = vmatpush1.bf16.msra.mxu0 0
        %1945 = vmatprep.subr.bf16.mxu0 0
        %1946 = vmatpush1.bf16.msra.mxu0 0
        %1947 = vmatprep.subr.bf16.mxu0 0
        %1948 = vmatpush1.bf16.msra.mxu0 0
        %1949 = vmatprep.subr.bf16.mxu0 0
        %1950 = vmatpush1.bf16.msra.mxu0 0
        %1951 = vmatprep.subr.bf16.mxu0 0
        %1952 = vmatpush1.bf16.msra.mxu0 0
        %1953 = vmatprep.subr.bf16.mxu0 0
        %1954 = vmatpush1.bf16.msra.mxu0 0
        %1955 = vmatprep.subr.bf16.mxu0 0
        %1956 = vmatpush1.bf16.msra.mxu0 0
        %1957 = vmatprep.mubr.bf16.mxu0 0
        %1958 = vmatmul.mubr.bf16.gmra.mrb[0].mxu0 %v1290
        %v1959 = vpop.f32.mrb[0].mxu0
        %v1960 = vadd.f32 %v1383, %v1959
        %v1961 = vpop.f32.mrb[0].mxu0
        %v1962 = vadd.f32 %v1387, %v1961
        %v1963 = vpop.f32.mrb[0].mxu0
        %v1964 = vadd.f32 %v1383, %v1963
        %v1965 = vpop.f32.mrb[0].mxu0
        %v1966 = vadd.f32 %v1387, %v1965
        %1967 = vmatprep.mubr.bf16.mxu0 0
        %1968 = vmatmul.mubr.bf16.gmra.mrb[0].mxu0 %v1291
        %v1969 = vpop.f32.mrb[0].mxu0
        %v1970 = vadd.f32 %v1383, %v1969
        %v1971 = vpop.f32.mrb[0].mxu0
        %v1972 = vadd.f32 %v1387, %v1971
        %v1973 = vpop.f32.mrb[0].mxu0
        %v1974 = vadd.f32 %v1383, %v1973
        %v1975 = vpop.f32.mrb[0].mxu0
        %v1976 = vadd.f32 %v1387, %v1975
        %1977 = vmatprep.mubr.bf16.mxu0 0
        %1978 = vmatmul.mubr.bf16.gmra.mrb[0].mxu0 %v1292
        %v1979 = vpop.f32.mrb[0].mxu0
        %v1980 = vadd.f32 %v1383, %v1979
        %v1981 = vpop.f32.mrb[0].mxu0
        %v1982 = vadd.f32 %v1387, %v1981
        %v1983 = vpop.f32.mrb[0].mxu0
        %v1984 = vadd.f32 %v1383, %v1983
        %v1985 = vpop.f32.mrb[0].mxu0
        %v1986 = vadd.f32 %v1387, %v1985
        %1987 = vmatprep.mubr.bf16.mxu0 0
        %1988 = vmatmul.mubr.bf16.gmra.mrb[0].mxu0 %v1293
        %v1989 = vpop.f32.mrb[0].mxu0
        %v1990 = vadd.f32 %v1383, %v1989
        %v1991 = vpop.f32.mrb[0].mxu0
        %v1992 = vadd.f32 %v1387, %v1991
        %v1993 = vpop.f32.mrb[0].mxu0
        %v1994 = vadd.f32 %v1383, %v1993
        %v1995 = vpop.f32.mrb[0].mxu0
        %v1996 = vadd.f32 %v1387, %v1995
        %1997 = vmatprep.mubr.bf16.mxu0 0
        %1998 = vmatmul.mubr.bf16.gmra.mrb[0].mxu0 %v1294
        %v1999 = vpop.f32.mrb[0].mxu0
        %v2000 = vadd.f32 %v1383, %v1999
        %v2001 = vpop.f32.mrb[0].mxu0
        %v2002 = vadd.f32 %v1387, %v2001
        %v2003 = vpop.f32.mrb[0].mxu0
        %v2004 = vadd.f32 %v1383, %v2003
        %v2005 = vpop.f32.mrb[0].mxu0
        %v2006 = vadd.f32 %v1387, %v2005
        %2007 = vmatprep.mubr.bf16.mxu0 0
        %2008 = vmatmul.mubr.bf16.gmra.mrb[0].mxu0 %v1295
        %v2009 = vpop.f32.mrb[0].mxu0
        %v2010 = vadd.f32 %v1383, %v2009
        %v2011 = vpop.f32.mrb[0].mxu0
        %v2012 = vadd.f32 %v1387, %v2011
        %v2013 = vpop.f32.mrb[0].mxu0
        %v2014 = vadd.f32 %v1383, %v2013
        %v2015 = vpop.f32.mrb[0].mxu0
        %v2016 = vadd.f32 %v1387, %v2015
        %2017 = vmatprep.mubr.bf16.mxu0 0
        %2018 = vmatmul.mubr.bf16.gmra.mrb[0].mxu0 %v1296
        %v2019 = vpop.f32.mrb[0].mxu0
        %v2020 = vadd.f32 %v1383, %v2019
        %v2021 = vpop.f32.mrb[0].mxu0
        %v2022 = vadd.f32 %v1387, %v2021
        %v2023 = vpop.f32.mrb[0].mxu0
        %v2024 = vadd.f32 %v1383, %v2023
        %v2025 = vpop.f32.mrb[0].mxu0
        %v2026 = vadd.f32 %v1387, %v2025
        %2027 = vmatprep.mubr.bf16.mxu0 0
        %2028 = vmatmul.mubr.bf16.gmra.mrb[0].mxu0 %v1297
        %v2029 = vpop.f32.mrb[0].mxu0
        %v2030 = vadd.f32 %v1383, %v2029
        %v2031 = vpop.f32.mrb[0].mxu0
        %v2032 = vadd.f32 %v1387, %v2031
        %v2033 = vpop.f32.mrb[0].mxu0
        %v2034 = vadd.f32 %v1383, %v2033
        %v2035 = vpop.f32.mrb[0].mxu0
        %v2036 = vadd.f32 %v1387, %v2035
        %2037 = vmatprep.mubr.bf16.mxu0 0
        %2038 = vmatmul.mubr.bf16.gmra.mrb[0].mxu0 %v1298
        %v2039 = vpop.f32.mrb[0].mxu0
        %v2040 = vadd.f32 %v1383, %v2039
        %v2041 = vpop.f32.mrb[0].mxu0
        %v2042 = vadd.f32 %v1387, %v2041
        %v2043 = vpop.f32.mrb[0].mxu0
        %v2044 = vadd.f32 %v1383, %v2043
        %v2045 = vpop.f32.mrb[0].mxu0
        %v2046 = vadd.f32 %v1387, %v2045
        %2047 = vmatprep.mubr.bf16.mxu0 0
        %2048 = vmatmul.mubr.bf16.gmra.mrb[0].mxu0 %v1299
        %v2049 = vpop.f32.mrb[0].mxu0
        %v2050 = vadd.f32 %v1383, %v2049
        %v2051 = vpop.f32.mrb[0].mxu0
        %v2052 = vadd.f32 %v1387, %v2051
        %v2053 = vpop.f32.mrb[0].mxu0
        %v2054 = vadd.f32 %v1383, %v2053
        %v2055 = vpop.f32.mrb[0].mxu0
        %v2056 = vadd.f32 %v1387, %v2055
        %2057 = vmatprep.mubr.bf16.mxu0 0
        %2058 = vmatmul.mubr.bf16.gmra.mrb[0].mxu0 %v1300
        %v2059 = vpop.f32.mrb[0].mxu0
        %v2060 = vadd.f32 %v1383, %v2059
        %v2061 = vpop.f32.mrb[0].mxu0
        %v2062 = vadd.f32 %v1387, %v2061
        %v2063 = vpop.f32.mrb[0].mxu0
        %v2064 = vadd.f32 %v1383, %v2063
        %v2065 = vpop.f32.mrb[0].mxu0
        %v2066 = vadd.f32 %v1387, %v2065
        %2067 = vmatprep.mubr.bf16.mxu0 0
        %2068 = vmatmul.mubr.bf16.gmra.mrb[0].mxu0 %v1301
        %v2069 = vpop.f32.mrb[0].mxu0
        %v2070 = vadd.f32 %v1383, %v2069
        %v2071 = vpop.f32.mrb[0].mxu0
        %v2072 = vadd.f32 %v1387, %v2071
        %v2073 = vpop.f32.mrb[0].mxu0
        %v2074 = vadd.f32 %v1383, %v2073
        %v2075 = vpop.f32.mrb[0].mxu0
        %v2076 = vadd.f32 %v1387, %v2075
        %2077 = vmatprep.mubr.bf16.mxu0 0
        %2078 = vmatmul.mubr.bf16.gmra.mrb[0].mxu0 %v1302
        %v2079 = vpop.f32.mrb[0].mxu0
        %v2080 = vadd.f32 %v1383, %v2079
        %v2081 = vpop.f32.mrb[0].mxu0
        %v2082 = vadd.f32 %v1387, %v2081
        %v2083 = vpop.f32.mrb[0].mxu0
        %v2084 = vadd.f32 %v1383, %v2083
        %v2085 = vpop.f32.mrb[0].mxu0
        %v2086 = vadd.f32 %v1387, %v2085
        %2087 = vmatprep.mubr.bf16.mxu0 0
        %2088 = vmatmul.mubr.bf16.gmra.mrb[0].mxu0 %v1303
        %v2089 = vpop.f32.mrb[0].mxu0
        %v2090 = vadd.f32 %v1383, %v2089
        %v2091 = vpop.f32.mrb[0].mxu0
        %v2092 = vadd.f32 %v1387, %v2091
        %v2093 = vpop.f32.mrb[0].mxu0
        %v2094 = vadd.f32 %v1383, %v2093
        %v2095 = vpop.f32.mrb[0].mxu0
        %v2096 = vadd.f32 %v1387, %v2095
        %2097 = vmatprep.mubr.bf16.mxu0 0
        %2098 = vmatmul.mubr.bf16.gmra.mrb[0].mxu0 %v1304
        %v2099 = vpop.f32.mrb[0].mxu0
        %v2100 = vadd.f32 %v1383, %v2099
        %v2101 = vpop.f32.mrb[0].mxu0
        %v2102 = vadd.f32 %v1387, %v2101
        %v2103 = vpop.f32.mrb[0].mxu0
        %v2104 = vadd.f32 %v1383, %v2103
        %v2105 = vpop.f32.mrb[0].mxu0
        %v2106 = vadd.f32 %v1387, %v2105
        %2107 = vmatprep.mubr.bf16.mxu0 0
        %2108 = vmatmul.mubr.bf16.gmra.mrb[0].mxu0 %v1305
        %v2109 = vpop.f32.mrb[0].mxu0
        %v2110 = vadd.f32 %v1383, %v2109
        %v2111 = vpop.f32.mrb[0].mxu0
        %v2112 = vadd.f32 %v1387, %v2111
        %v2113 = vpop.f32.mrb[0].mxu0
        %v2114 = vadd.f32 %v1383, %v2113
        %v2115 = vpop.f32.mrb[0].mxu0
        %v2116 = vadd.f32 %v1387, %v2115
        %2117 = vdwg.mxu0
        %2118 = vmatprep.subr.bf16.mxu0 %v1609
        %2119 = vmatpush1.bf16.msra.mxu0 %v1608
        %2120 = vmatprep.subr.bf16.mxu0 %v1617
        %2121 = vmatpush1.bf16.msra.mxu0 %v1616
        %2122 = vmatprep.subr.bf16.mxu0 %v1625
        %2123 = vmatpush1.bf16.msra.mxu0 %v1624
        %2124 = vmatprep.subr.bf16.mxu0 %v1633
        %2125 = vmatpush1.bf16.msra.mxu0 %v1632
        %2126 = vmatprep.subr.bf16.mxu0 %v1641
        %2127 = vmatpush1.bf16.msra.mxu0 %v1640
        %2128 = vmatprep.subr.bf16.mxu0 %v1649
        %2129 = vmatpush1.bf16.msra.mxu0 %v1648
        %2130 = vmatprep.subr.bf16.mxu0 %v1657
        %2131 = vmatpush1.bf16.msra.mxu0 %v1656
        %2132 = vmatprep.subr.bf16.mxu0 %v1665
        %2133 = vmatpush1.bf16.msra.mxu0 %v1664
        %2134 = vmatprep.subr.bf16.mxu0 0
        %2135 = vmatpush1.bf16.msra.mxu0 0
        %2136 = vmatprep.subr.bf16.mxu0 0
        %2137 = vmatpush1.bf16.msra.mxu0 0
        %2138 = vmatprep.subr.bf16.mxu0 0
        %2139 = vmatpush1.bf16.msra.mxu0 0
        %2140 = vmatprep.subr.bf16.mxu0 0
        %2141 = vmatpush1.bf16.msra.mxu0 0
        %2142 = vmatprep.subr.bf16.mxu0 0
        %2143 = vmatpush1.bf16.msra.mxu0 0
        %2144 = vmatprep.subr.bf16.mxu0 0
        %2145 = vmatpush1.bf16.msra.mxu0 0
        %2146 = vmatprep.subr.bf16.mxu0 0
        %2147 = vmatpush1.bf16.msra.mxu0 0
        %2148 = vmatprep.subr.bf16.mxu0 0
        %2149 = vmatpush1.bf16.msra.mxu0 0
        %2150 = vmatprep.mubr.bf16.mxu0 0
        %2151 = vmatmul.mubr.bf16.gmra.mrb[0].mxu0 %v1290
        %v2152 = vpop.f32.mrb[0].mxu0
        %v2153 = vadd.f32 %v1391, %v2152
        %v2154 = vpop.f32.mrb[0].mxu0
        %v2155 = vadd.f32 %v1395, %v2154
        %v2156 = vpop.f32.mrb[0].mxu0
        %v2157 = vadd.f32 %v1391, %v2156
        %v2158 = vpop.f32.mrb[0].mxu0
        %v2159 = vadd.f32 %v1395, %v2158
        %2160 = vmatprep.mubr.bf16.mxu0 0
        %2161 = vmatmul.mubr.bf16.gmra.mrb[0].mxu0 %v1291
        %v2162 = vpop.f32.mrb[0].mxu0
        %v2163 = vadd.f32 %v1391, %v2162
        %v2164 = vpop.f32.mrb[0].mxu0
        %v2165 = vadd.f32 %v1395, %v2164
        %v2166 = vpop.f32.mrb[0].mxu0
        %v2167 = vadd.f32 %v1391, %v2166
        %v2168 = vpop.f32.mrb[0].mxu0
        %v2169 = vadd.f32 %v1395, %v2168
        %2170 = vmatprep.mubr.bf16.mxu0 0
        %2171 = vmatmul.mubr.bf16.gmra.mrb[0].mxu0 %v1292
        %v2172 = vpop.f32.mrb[0].mxu0
        %v2173 = vadd.f32 %v1391, %v2172
        %v2174 = vpop.f32.mrb[0].mxu0
        %v2175 = vadd.f32 %v1395, %v2174
        %v2176 = vpop.f32.mrb[0].mxu0
        %v2177 = vadd.f32 %v1391, %v2176
        %v2178 = vpop.f32.mrb[0].mxu0
        %v2179 = vadd.f32 %v1395, %v2178
        %2180 = vmatprep.mubr.bf16.mxu0 0
        %2181 = vmatmul.mubr.bf16.gmra.mrb[0].mxu0 %v1293
        %v2182 = vpop.f32.mrb[0].mxu0
        %v2183 = vadd.f32 %v1391, %v2182
        %v2184 = vpop.f32.mrb[0].mxu0
        %v2185 = vadd.f32 %v1395, %v2184
        %v2186 = vpop.f32.mrb[0].mxu0
        %v2187 = vadd.f32 %v1391, %v2186
        %v2188 = vpop.f32.mrb[0].mxu0
        %v2189 = vadd.f32 %v1395, %v2188
        %2190 = vmatprep.mubr.bf16.mxu0 0
        %2191 = vmatmul.mubr.bf16.gmra.mrb[0].mxu0 %v1294
        %v2192 = vpop.f32.mrb[0].mxu0
        %v2193 = vadd.f32 %v1391, %v2192
        %v2194 = vpop.f32.mrb[0].mxu0
        %v2195 = vadd.f32 %v1395, %v2194
        %v2196 = vpop.f32.mrb[0].mxu0
        %v2197 = vadd.f32 %v1391, %v2196
        %v2198 = vpop.f32.mrb[0].mxu0
        %v2199 = vadd.f32 %v1395, %v2198
        %2200 = vmatprep.mubr.bf16.mxu0 0
        %2201 = vmatmul.mubr.bf16.gmra.mrb[0].mxu0 %v1295
        %v2202 = vpop.f32.mrb[0].mxu0
        %v2203 = vadd.f32 %v1391, %v2202
        %v2204 = vpop.f32.mrb[0].mxu0
        %v2205 = vadd.f32 %v1395, %v2204
        %v2206 = vpop.f32.mrb[0].mxu0
        %v2207 = vadd.f32 %v1391, %v2206
        %v2208 = vpop.f32.mrb[0].mxu0
        %v2209 = vadd.f32 %v1395, %v2208
        %2210 = vmatprep.mubr.bf16.mxu0 0
        %2211 = vmatmul.mubr.bf16.gmra.mrb[0].mxu0 %v1296
        %v2212 = vpop.f32.mrb[0].mxu0
        %v2213 = vadd.f32 %v1391, %v2212
        %v2214 = vpop.f32.mrb[0].mxu0
        %v2215 = vadd.f32 %v1395, %v2214
        %v2216 = vpop.f32.mrb[0].mxu0
        %v2217 = vadd.f32 %v1391, %v2216
        %v2218 = vpop.f32.mrb[0].mxu0
        %v2219 = vadd.f32 %v1395, %v2218
        %2220 = vmatprep.mubr.bf16.mxu0 0
        %2221 = vmatmul.mubr.bf16.gmra.mrb[0].mxu0 %v1297
        %v2222 = vpop.f32.mrb[0].mxu0
        %v2223 = vadd.f32 %v1391, %v2222
        %v2224 = vpop.f32.mrb[0].mxu0
        %v2225 = vadd.f32 %v1395, %v2224
        %v2226 = vpop.f32.mrb[0].mxu0
        %v2227 = vadd.f32 %v1391, %v2226
        %v2228 = vpop.f32.mrb[0].mxu0
        %v2229 = vadd.f32 %v1395, %v2228
        %2230 = vmatprep.mubr.bf16.mxu0 0
        %2231 = vmatmul.mubr.bf16.gmra.mrb[0].mxu0 %v1298
        %v2232 = vpop.f32.mrb[0].mxu0
        %v2233 = vadd.f32 %v1391, %v2232
        %v2234 = vpop.f32.mrb[0].mxu0
        %v2235 = vadd.f32 %v1395, %v2234
        %v2236 = vpop.f32.mrb[0].mxu0
        %v2237 = vadd.f32 %v1391, %v2236
        %v2238 = vpop.f32.mrb[0].mxu0
        %v2239 = vadd.f32 %v1395, %v2238
        %2240 = vmatprep.mubr.bf16.mxu0 0
        %2241 = vmatmul.mubr.bf16.gmra.mrb[0].mxu0 %v1299
        %v2242 = vpop.f32.mrb[0].mxu0
        %v2243 = vadd.f32 %v1391, %v2242
        %v2244 = vpop.f32.mrb[0].mxu0
        %v2245 = vadd.f32 %v1395, %v2244
        %v2246 = vpop.f32.mrb[0].mxu0
        %v2247 = vadd.f32 %v1391, %v2246
        %v2248 = vpop.f32.mrb[0].mxu0
        %v2249 = vadd.f32 %v1395, %v2248
        %2250 = vmatprep.mubr.bf16.mxu0 0
        %2251 = vmatmul.mubr.bf16.gmra.mrb[0].mxu0 %v1300
        %v2252 = vpop.f32.mrb[0].mxu0
        %v2253 = vadd.f32 %v1391, %v2252
        %v2254 = vpop.f32.mrb[0].mxu0
        %v2255 = vadd.f32 %v1395, %v2254
        %v2256 = vpop.f32.mrb[0].mxu0
        %v2257 = vadd.f32 %v1391, %v2256
        %v2258 = vpop.f32.mrb[0].mxu0
        %v2259 = vadd.f32 %v1395, %v2258
        %2260 = vmatprep.mubr.bf16.mxu0 0
        %2261 = vmatmul.mubr.bf16.gmra.mrb[0].mxu0 %v1301
        %v2262 = vpop.f32.mrb[0].mxu0
        %v2263 = vadd.f32 %v1391, %v2262
        %v2264 = vpop.f32.mrb[0].mxu0
        %v2265 = vadd.f32 %v1395, %v2264
        %v2266 = vpop.f32.mrb[0].mxu0
        %v2267 = vadd.f32 %v1391, %v2266
        %v2268 = vpop.f32.mrb[0].mxu0
        %v2269 = vadd.f32 %v1395, %v2268
        %2270 = vmatprep.mubr.bf16.mxu0 0
        %2271 = vmatmul.mubr.bf16.gmra.mrb[0].mxu0 %v1302
        %v2272 = vpop.f32.mrb[0].mxu0
        %v2273 = vadd.f32 %v1391, %v2272
        %v2274 = vpop.f32.mrb[0].mxu0
        %v2275 = vadd.f32 %v1395, %v2274
        %v2276 = vpop.f32.mrb[0].mxu0
        %v2277 = vadd.f32 %v1391, %v2276
        %v2278 = vpop.f32.mrb[0].mxu0
        %v2279 = vadd.f32 %v1395, %v2278
        %2280 = vmatprep.mubr.bf16.mxu0 0
        %2281 = vmatmul.mubr.bf16.gmra.mrb[0].mxu0 %v1303
        %v2282 = vpop.f32.mrb[0].mxu0
        %v2283 = vadd.f32 %v1391, %v2282
        %v2284 = vpop.f32.mrb[0].mxu0
        %v2285 = vadd.f32 %v1395, %v2284
        %v2286 = vpop.f32.mrb[0].mxu0
        %v2287 = vadd.f32 %v1391, %v2286
        %v2288 = vpop.f32.mrb[0].mxu0
        %v2289 = vadd.f32 %v1395, %v2288
        %2290 = vmatprep.mubr.bf16.mxu0 0
        %2291 = vmatmul.mubr.bf16.gmra.mrb[0].mxu0 %v1304
        %v2292 = vpop.f32.mrb[0].mxu0
        %v2293 = vadd.f32 %v1391, %v2292
        %v2294 = vpop.f32.mrb[0].mxu0
        %v2295 = vadd.f32 %v1395, %v2294
        %v2296 = vpop.f32.mrb[0].mxu0
        %v2297 = vadd.f32 %v1391, %v2296
        %v2298 = vpop.f32.mrb[0].mxu0
        %v2299 = vadd.f32 %v1395, %v2298
        %2300 = vmatprep.mubr.bf16.mxu0 0
        %2301 = vmatmul.mubr.bf16.gmra.mrb[0].mxu0 %v1305
        %v2302 = vpop.f32.mrb[0].mxu0
        %v2303 = vadd.f32 %v1391, %v2302
        %v2304 = vpop.f32.mrb[0].mxu0
        %v2305 = vadd.f32 %v1395, %v2304
        %v2306 = vpop.f32.mrb[0].mxu0
        %v2307 = vadd.f32 %v1391, %v2306
        %v2308 = vpop.f32.mrb[0].mxu0
        %v2309 = vadd.f32 %v1395, %v2308
        %2310 = vdwg.mxu0
        %2311 = vmatprep.subr.bf16.mxu0 %v1611
        %2312 = vmatpush1.bf16.msra.mxu0 %v1610
        %2313 = vmatprep.subr.bf16.mxu0 %v1619
        %2314 = vmatpush1.bf16.msra.mxu0 %v1618
        %2315 = vmatprep.subr.bf16.mxu0 %v1627
        %2316 = vmatpush1.bf16.msra.mxu0 %v1626
        %2317 = vmatprep.subr.bf16.mxu0 %v1635
        %2318 = vmatpush1.bf16.msra.mxu0 %v1634
        %2319 = vmatprep.subr.bf16.mxu0 %v1643
        %2320 = vmatpush1.bf16.msra.mxu0 %v1642
        %2321 = vmatprep.subr.bf16.mxu0 %v1651
        %2322 = vmatpush1.bf16.msra.mxu0 %v1650
        %2323 = vmatprep.subr.bf16.mxu0 %v1659
        %2324 = vmatpush1.bf16.msra.mxu0 %v1658
        %2325 = vmatprep.subr.bf16.mxu0 %v1667
        %2326 = vmatpush1.bf16.msra.mxu0 %v1666
        %2327 = vmatprep.subr.bf16.mxu0 0
        %2328 = vmatpush1.bf16.msra.mxu0 0
        %2329 = vmatprep.subr.bf16.mxu0 0
        %2330 = vmatpush1.bf16.msra.mxu0 0
        %2331 = vmatprep.subr.bf16.mxu0 0
        %2332 = vmatpush1.bf16.msra.mxu0 0
        %2333 = vmatprep.subr.bf16.mxu0 0
        %2334 = vmatpush1.bf16.msra.mxu0 0
        %2335 = vmatprep.subr.bf16.mxu0 0
        %2336 = vmatpush1.bf16.msra.mxu0 0
        %2337 = vmatprep.subr.bf16.mxu0 0
        %2338 = vmatpush1.bf16.msra.mxu0 0
        %2339 = vmatprep.subr.bf16.mxu0 0
        %2340 = vmatpush1.bf16.msra.mxu0 0
        %2341 = vmatprep.subr.bf16.mxu0 0
        %2342 = vmatpush1.bf16.msra.mxu0 0
        %2343 = vmatprep.mubr.bf16.mxu0 0
        %2344 = vmatmul.mubr.bf16.gmra.mrb[0].mxu0 %v1290
        %v2345 = vpop.f32.mrb[0].mxu0
        %v2346 = vadd.f32 %v1399, %v2345
        %v2347 = vpop.f32.mrb[0].mxu0
        %v2348 = vadd.f32 %v1403, %v2347
        %v2349 = vpop.f32.mrb[0].mxu0
        %v2350 = vadd.f32 %v1399, %v2349
        %v2351 = vpop.f32.mrb[0].mxu0
        %v2352 = vadd.f32 %v1403, %v2351
        %2353 = vmatprep.mubr.bf16.mxu0 0
        %2354 = vmatmul.mubr.bf16.gmra.mrb[0].mxu0 %v1291
        %v2355 = vpop.f32.mrb[0].mxu0
        %v2356 = vadd.f32 %v1399, %v2355
        %v2357 = vpop.f32.mrb[0].mxu0
        %v2358 = vadd.f32 %v1403, %v2357
        %v2359 = vpop.f32.mrb[0].mxu0
        %v2360 = vadd.f32 %v1399, %v2359
        %v2361 = vpop.f32.mrb[0].mxu0
        %v2362 = vadd.f32 %v1403, %v2361
        %2363 = vmatprep.mubr.bf16.mxu0 0
        %2364 = vmatmul.mubr.bf16.gmra.mrb[0].mxu0 %v1292
        %v2365 = vpop.f32.mrb[0].mxu0
        %v2366 = vadd.f32 %v1399, %v2365
        %v2367 = vpop.f32.mrb[0].mxu0
        %v2368 = vadd.f32 %v1403, %v2367
        %v2369 = vpop.f32.mrb[0].mxu0
        %v2370 = vadd.f32 %v1399, %v2369
        %v2371 = vpop.f32.mrb[0].mxu0
        %v2372 = vadd.f32 %v1403, %v2371
        %2373 = vmatprep.mubr.bf16.mxu0 0
        %2374 = vmatmul.mubr.bf16.gmra.mrb[0].mxu0 %v1293
        %v2375 = vpop.f32.mrb[0].mxu0
        %v2376 = vadd.f32 %v1399, %v2375
        %v2377 = vpop.f32.mrb[0].mxu0
        %v2378 = vadd.f32 %v1403, %v2377
        %v2379 = vpop.f32.mrb[0].mxu0
        %v2380 = vadd.f32 %v1399, %v2379
        %v2381 = vpop.f32.mrb[0].mxu0
        %v2382 = vadd.f32 %v1403, %v2381
        %2383 = vmatprep.mubr.bf16.mxu0 0
        %2384 = vmatmul.mubr.bf16.gmra.mrb[0].mxu0 %v1294
        %v2385 = vpop.f32.mrb[0].mxu0
        %v2386 = vadd.f32 %v1399, %v2385
        %v2387 = vpop.f32.mrb[0].mxu0
        %v2388 = vadd.f32 %v1403, %v2387
        %v2389 = vpop.f32.mrb[0].mxu0
        %v2390 = vadd.f32 %v1399, %v2389
        %v2391 = vpop.f32.mrb[0].mxu0
        %v2392 = vadd.f32 %v1403, %v2391
        %2393 = vmatprep.mubr.bf16.mxu0 0
        %2394 = vmatmul.mubr.bf16.gmra.mrb[0].mxu0 %v1295
        %v2395 = vpop.f32.mrb[0].mxu0
        %v2396 = vadd.f32 %v1399, %v2395
        %v2397 = vpop.f32.mrb[0].mxu0
        %v2398 = vadd.f32 %v1403, %v2397
        %v2399 = vpop.f32.mrb[0].mxu0
        %v2400 = vadd.f32 %v1399, %v2399
        %v2401 = vpop.f32.mrb[0].mxu0
        %v2402 = vadd.f32 %v1403, %v2401
        %2403 = vmatprep.mubr.bf16.mxu0 0
        %2404 = vmatmul.mubr.bf16.gmra.mrb[0].mxu0 %v1296
        %v2405 = vpop.f32.mrb[0].mxu0
        %v2406 = vadd.f32 %v1399, %v2405
        %v2407 = vpop.f32.mrb[0].mxu0
        %v2408 = vadd.f32 %v1403, %v2407
        %v2409 = vpop.f32.mrb[0].mxu0
        %v2410 = vadd.f32 %v1399, %v2409
        %v2411 = vpop.f32.mrb[0].mxu0
        %v2412 = vadd.f32 %v1403, %v2411
        %2413 = vmatprep.mubr.bf16.mxu0 0
        %2414 = vmatmul.mubr.bf16.gmra.mrb[0].mxu0 %v1297
        %v2415 = vpop.f32.mrb[0].mxu0
        %v2416 = vadd.f32 %v1399, %v2415
        %v2417 = vpop.f32.mrb[0].mxu0
        %v2418 = vadd.f32 %v1403, %v2417
        %v2419 = vpop.f32.mrb[0].mxu0
        %v2420 = vadd.f32 %v1399, %v2419
        %v2421 = vpop.f32.mrb[0].mxu0
        %v2422 = vadd.f32 %v1403, %v2421
        %2423 = vmatprep.mubr.bf16.mxu0 0
        %2424 = vmatmul.mubr.bf16.gmra.mrb[0].mxu0 %v1298
        %v2425 = vpop.f32.mrb[0].mxu0
        %v2426 = vadd.f32 %v1399, %v2425
        %v2427 = vpop.f32.mrb[0].mxu0
        %v2428 = vadd.f32 %v1403, %v2427
        %v2429 = vpop.f32.mrb[0].mxu0
        %v2430 = vadd.f32 %v1399, %v2429
        %v2431 = vpop.f32.mrb[0].mxu0
        %v2432 = vadd.f32 %v1403, %v2431
        %2433 = vmatprep.mubr.bf16.mxu0 0
        %2434 = vmatmul.mubr.bf16.gmra.mrb[0].mxu0 %v1299
        %v2435 = vpop.f32.mrb[0].mxu0
        %v2436 = vadd.f32 %v1399, %v2435
        %v2437 = vpop.f32.mrb[0].mxu0
        %v2438 = vadd.f32 %v1403, %v2437
        %v2439 = vpop.f32.mrb[0].mxu0
        %v2440 = vadd.f32 %v1399, %v2439
        %v2441 = vpop.f32.mrb[0].mxu0
        %v2442 = vadd.f32 %v1403, %v2441
        %2443 = vmatprep.mubr.bf16.mxu0 0
        %2444 = vmatmul.mubr.bf16.gmra.mrb[0].mxu0 %v1300
        %v2445 = vpop.f32.mrb[0].mxu0
        %v2446 = vadd.f32 %v1399, %v2445
        %v2447 = vpop.f32.mrb[0].mxu0
        %v2448 = vadd.f32 %v1403, %v2447
        %v2449 = vpop.f32.mrb[0].mxu0
        %v2450 = vadd.f32 %v1399, %v2449
        %v2451 = vpop.f32.mrb[0].mxu0
        %v2452 = vadd.f32 %v1403, %v2451
        %2453 = vmatprep.mubr.bf16.mxu0 0
        %2454 = vmatmul.mubr.bf16.gmra.mrb[0].mxu0 %v1301
        %v2455 = vpop.f32.mrb[0].mxu0
        %v2456 = vadd.f32 %v1399, %v2455
        %v2457 = vpop.f32.mrb[0].mxu0
        %v2458 = vadd.f32 %v1403, %v2457
        %v2459 = vpop.f32.mrb[0].mxu0
        %v2460 = vadd.f32 %v1399, %v2459
        %v2461 = vpop.f32.mrb[0].mxu0
        %v2462 = vadd.f32 %v1403, %v2461
        %2463 = vmatprep.mubr.bf16.mxu0 0
        %2464 = vmatmul.mubr.bf16.gmra.mrb[0].mxu0 %v1302
        %v2465 = vpop.f32.mrb[0].mxu0
        %v2466 = vadd.f32 %v1399, %v2465
        %v2467 = vpop.f32.mrb[0].mxu0
        %v2468 = vadd.f32 %v1403, %v2467
        %v2469 = vpop.f32.mrb[0].mxu0
        %v2470 = vadd.f32 %v1399, %v2469
        %v2471 = vpop.f32.mrb[0].mxu0
        %v2472 = vadd.f32 %v1403, %v2471
        %2473 = vmatprep.mubr.bf16.mxu0 0
        %2474 = vmatmul.mubr.bf16.gmra.mrb[0].mxu0 %v1303
        %v2475 = vpop.f32.mrb[0].mxu0
        %v2476 = vadd.f32 %v1399, %v2475
        %v2477 = vpop.f32.mrb[0].mxu0
        %v2478 = vadd.f32 %v1403, %v2477
        %v2479 = vpop.f32.mrb[0].mxu0
        %v2480 = vadd.f32 %v1399, %v2479
        %v2481 = vpop.f32.mrb[0].mxu0
        %v2482 = vadd.f32 %v1403, %v2481
        %2483 = vmatprep.mubr.bf16.mxu0 0
        %2484 = vmatmul.mubr.bf16.gmra.mrb[0].mxu0 %v1304
        %v2485 = vpop.f32.mrb[0].mxu0
        %v2486 = vadd.f32 %v1399, %v2485
        %v2487 = vpop.f32.mrb[0].mxu0
        %v2488 = vadd.f32 %v1403, %v2487
        %v2489 = vpop.f32.mrb[0].mxu0
        %v2490 = vadd.f32 %v1399, %v2489
        %v2491 = vpop.f32.mrb[0].mxu0
        %v2492 = vadd.f32 %v1403, %v2491
        %2493 = vmatprep.mubr.bf16.mxu0 0
        %2494 = vmatmul.mubr.bf16.gmra.mrb[0].mxu0 %v1305
        %v2495 = vpop.f32.mrb[0].mxu0
        %v2496 = vadd.f32 %v1399, %v2495
        %v2497 = vpop.f32.mrb[0].mxu0
        %v2498 = vadd.f32 %v1403, %v2497
        %v2499 = vpop.f32.mrb[0].mxu0
        %v2500 = vadd.f32 %v1399, %v2499
        %v2501 = vpop.f32.mrb[0].mxu0
        %v2502 = vadd.f32 %v1403, %v2501
        %2503 = vdwg.mxu0
        %v2504 = vmax.f32 %v1767, 0.0
        %v2505 = vmax.f32 %v1769, 0.0
        %v2506 = vmax.f32 %v1960, 0.0
        %v2507 = vmax.f32 %v1962, 0.0
        %v2508 = vmax.f32 %v2153, 0.0
        %v2509 = vmax.f32 %v2155, 0.0
        %v2510 = vmax.f32 %v2346, 0.0
        %v2511 = vmax.f32 %v2348, 0.0
        %v2512 = vmax.f32 %v1771, 0.0
        %v2513 = vmax.f32 %v1773, 0.0
        %v2514 = vmax.f32 %v1964, 0.0
        %v2515 = vmax.f32 %v1966, 0.0
        %v2516 = vmax.f32 %v2157, 0.0
        %v2517 = vmax.f32 %v2159, 0.0
        %v2518 = vmax.f32 %v2350, 0.0
        %v2519 = vmax.f32 %v2352, 0.0
        %v2520 = vmax.f32 %v1777, 0.0
        %v2521 = vmax.f32 %v1779, 0.0
        %v2522 = vmax.f32 %v1970, 0.0
        %v2523 = vmax.f32 %v1972, 0.0
        %v2524 = vmax.f32 %v2163, 0.0
        %v2525 = vmax.f32 %v2165, 0.0
        %v2526 = vmax.f32 %v2356, 0.0
        %v2527 = vmax.f32 %v2358, 0.0
        %v2528 = vmax.f32 %v1781, 0.0
        %v2529 = vmax.f32 %v1783, 0.0
        %v2530 = vmax.f32 %v1974, 0.0
        %v2531 = vmax.f32 %v1976, 0.0
        %v2532 = vmax.f32 %v2167, 0.0
        %v2533 = vmax.f32 %v2169, 0.0
        %v2534 = vmax.f32 %v2360, 0.0
        %v2535 = vmax.f32 %v2362, 0.0
        %v2536 = vmax.f32 %v1787, 0.0
        %v2537 = vmax.f32 %v1789, 0.0
        %v2538 = vmax.f32 %v1980, 0.0
        %v2539 = vmax.f32 %v1982, 0.0
        %v2540 = vmax.f32 %v2173, 0.0
        %v2541 = vmax.f32 %v2175, 0.0
        %v2542 = vmax.f32 %v2366, 0.0
        %v2543 = vmax.f32 %v2368, 0.0
        %v2544 = vmax.f32 %v1791, 0.0
        %v2545 = vmax.f32 %v1793, 0.0
        %v2546 = vmax.f32 %v1984, 0.0
        %v2547 = vmax.f32 %v1986, 0.0
        %v2548 = vmax.f32 %v2177, 0.0
        %v2549 = vmax.f32 %v2179, 0.0
        %v2550 = vmax.f32 %v2370, 0.0
        %v2551 = vmax.f32 %v2372, 0.0
        %v2552 = vmax.f32 %v1797, 0.0
        %v2553 = vmax.f32 %v1799, 0.0
        %v2554 = vmax.f32 %v1990, 0.0
        %v2555 = vmax.f32 %v1992, 0.0
        %v2556 = vmax.f32 %v2183, 0.0
        %v2557 = vmax.f32 %v2185, 0.0
        %v2558 = vmax.f32 %v2376, 0.0
        %v2559 = vmax.f32 %v2378, 0.0
        %v2560 = vmax.f32 %v1801, 0.0
        %v2561 = vmax.f32 %v1803, 0.0
        %v2562 = vmax.f32 %v1994, 0.0
        %v2563 = vmax.f32 %v1996, 0.0
        %v2564 = vmax.f32 %v2187, 0.0
        %v2565 = vmax.f32 %v2189, 0.0
        %v2566 = vmax.f32 %v2380, 0.0
        %v2567 = vmax.f32 %v2382, 0.0
        %v2568 = vmax.f32 %v1807, 0.0
        %v2569 = vmax.f32 %v1809, 0.0
        %v2570 = vmax.f32 %v2000, 0.0
        %v2571 = vmax.f32 %v2002, 0.0
        %v2572 = vmax.f32 %v2193, 0.0
        %v2573 = vmax.f32 %v2195, 0.0
        %v2574 = vmax.f32 %v2386, 0.0
        %v2575 = vmax.f32 %v2388, 0.0
        %v2576 = vmax.f32 %v1811, 0.0
        %v2577 = vmax.f32 %v1813, 0.0
        %v2578 = vmax.f32 %v2004, 0.0
        %v2579 = vmax.f32 %v2006, 0.0
        %v2580 = vmax.f32 %v2197, 0.0
        %v2581 = vmax.f32 %v2199, 0.0
        %v2582 = vmax.f32 %v2390, 0.0
        %v2583 = vmax.f32 %v2392, 0.0
        %v2584 = vmax.f32 %v1817, 0.0
        %v2585 = vmax.f32 %v1819, 0.0
        %v2586 = vmax.f32 %v2010, 0.0
        %v2587 = vmax.f32 %v2012, 0.0
        %v2588 = vmax.f32 %v2203, 0.0
        %v2589 = vmax.f32 %v2205, 0.0
        %v2590 = vmax.f32 %v2396, 0.0
        %v2591 = vmax.f32 %v2398, 0.0
        %v2592 = vmax.f32 %v1821, 0.0
        %v2593 = vmax.f32 %v1823, 0.0
        %v2594 = vmax.f32 %v2014, 0.0
        %v2595 = vmax.f32 %v2016, 0.0
        %v2596 = vmax.f32 %v2207, 0.0
        %v2597 = vmax.f32 %v2209, 0.0
        %v2598 = vmax.f32 %v2400, 0.0
        %v2599 = vmax.f32 %v2402, 0.0
        %v2600 = vmax.f32 %v1827, 0.0
        %v2601 = vmax.f32 %v1829, 0.0
        %v2602 = vmax.f32 %v2020, 0.0
        %v2603 = vmax.f32 %v2022, 0.0
        %v2604 = vmax.f32 %v2213, 0.0
        %v2605 = vmax.f32 %v2215, 0.0
        %v2606 = vmax.f32 %v2406, 0.0
        %v2607 = vmax.f32 %v2408, 0.0
        %v2608 = vmax.f32 %v1831, 0.0
        %v2609 = vmax.f32 %v1833, 0.0
        %v2610 = vmax.f32 %v2024, 0.0
        %v2611 = vmax.f32 %v2026, 0.0
        %v2612 = vmax.f32 %v2217, 0.0
        %v2613 = vmax.f32 %v2219, 0.0
        %v2614 = vmax.f32 %v2410, 0.0
        %v2615 = vmax.f32 %v2412, 0.0
        %v2616 = vmax.f32 %v1837, 0.0
        %v2617 = vmax.f32 %v1839, 0.0
        %v2618 = vmax.f32 %v2030, 0.0
        %v2619 = vmax.f32 %v2032, 0.0
        %v2620 = vmax.f32 %v2223, 0.0
        %v2621 = vmax.f32 %v2225, 0.0
        %v2622 = vmax.f32 %v2416, 0.0
        %v2623 = vmax.f32 %v2418, 0.0
        %v2624 = vmax.f32 %v1841, 0.0
        %v2625 = vmax.f32 %v1843, 0.0
        %v2626 = vmax.f32 %v2034, 0.0
        %v2627 = vmax.f32 %v2036, 0.0
        %v2628 = vmax.f32 %v2227, 0.0
        %v2629 = vmax.f32 %v2229, 0.0
        %v2630 = vmax.f32 %v2420, 0.0
        %v2631 = vmax.f32 %v2422, 0.0
        %v2632 = vmax.f32 %v1847, 0.0
        %v2633 = vmax.f32 %v1849, 0.0
        %v2634 = vmax.f32 %v2040, 0.0
        %v2635 = vmax.f32 %v2042, 0.0
        %v2636 = vmax.f32 %v2233, 0.0
        %v2637 = vmax.f32 %v2235, 0.0
        %v2638 = vmax.f32 %v2426, 0.0
        %v2639 = vmax.f32 %v2428, 0.0
        %v2640 = vmax.f32 %v1851, 0.0
        %v2641 = vmax.f32 %v1853, 0.0
        %v2642 = vmax.f32 %v2044, 0.0
        %v2643 = vmax.f32 %v2046, 0.0
        %v2644 = vmax.f32 %v2237, 0.0
        %v2645 = vmax.f32 %v2239, 0.0
        %v2646 = vmax.f32 %v2430, 0.0
        %v2647 = vmax.f32 %v2432, 0.0
        %v2648 = vmax.f32 %v1857, 0.0
        %v2649 = vmax.f32 %v1859, 0.0
        %v2650 = vmax.f32 %v2050, 0.0
        %v2651 = vmax.f32 %v2052, 0.0
        %v2652 = vmax.f32 %v2243, 0.0
        %v2653 = vmax.f32 %v2245, 0.0
        %v2654 = vmax.f32 %v2436, 0.0
        %v2655 = vmax.f32 %v2438, 0.0
        %v2656 = vmax.f32 %v1861, 0.0
        %v2657 = vmax.f32 %v1863, 0.0
        %v2658 = vmax.f32 %v2054, 0.0
        %v2659 = vmax.f32 %v2056, 0.0
        %v2660 = vmax.f32 %v2247, 0.0
        %v2661 = vmax.f32 %v2249, 0.0
        %v2662 = vmax.f32 %v2440, 0.0
        %v2663 = vmax.f32 %v2442, 0.0
        %v2664 = vmax.f32 %v1867, 0.0
        %v2665 = vmax.f32 %v1869, 0.0
        %v2666 = vmax.f32 %v2060, 0.0
        %v2667 = vmax.f32 %v2062, 0.0
        %v2668 = vmax.f32 %v2253, 0.0
        %v2669 = vmax.f32 %v2255, 0.0
        %v2670 = vmax.f32 %v2446, 0.0
        %v2671 = vmax.f32 %v2448, 0.0
        %v2672 = vmax.f32 %v1871, 0.0
        %v2673 = vmax.f32 %v1873, 0.0
        %v2674 = vmax.f32 %v2064, 0.0
        %v2675 = vmax.f32 %v2066, 0.0
        %v2676 = vmax.f32 %v2257, 0.0
        %v2677 = vmax.f32 %v2259, 0.0
        %v2678 = vmax.f32 %v2450, 0.0
        %v2679 = vmax.f32 %v2452, 0.0
        %v2680 = vmax.f32 %v1877, 0.0
        %v2681 = vmax.f32 %v1879, 0.0
        %v2682 = vmax.f32 %v2070, 0.0
        %v2683 = vmax.f32 %v2072, 0.0
        %v2684 = vmax.f32 %v2263, 0.0
        %v2685 = vmax.f32 %v2265, 0.0
        %v2686 = vmax.f32 %v2456, 0.0
        %v2687 = vmax.f32 %v2458, 0.0
        %v2688 = vmax.f32 %v1881, 0.0
        %v2689 = vmax.f32 %v1883, 0.0
        %v2690 = vmax.f32 %v2074, 0.0
        %v2691 = vmax.f32 %v2076, 0.0
        %v2692 = vmax.f32 %v2267, 0.0
        %v2693 = vmax.f32 %v2269, 0.0
        %v2694 = vmax.f32 %v2460, 0.0
        %v2695 = vmax.f32 %v2462, 0.0
        %v2696 = vmax.f32 %v1887, 0.0
        %v2697 = vmax.f32 %v1889, 0.0
        %v2698 = vmax.f32 %v2080, 0.0
        %v2699 = vmax.f32 %v2082, 0.0
        %v2700 = vmax.f32 %v2273, 0.0
        %v2701 = vmax.f32 %v2275, 0.0
        %v2702 = vmax.f32 %v2466, 0.0
        %v2703 = vmax.f32 %v2468, 0.0
        %v2704 = vmax.f32 %v1891, 0.0
        %v2705 = vmax.f32 %v1893, 0.0
        %v2706 = vmax.f32 %v2084, 0.0
        %v2707 = vmax.f32 %v2086, 0.0
        %v2708 = vmax.f32 %v2277, 0.0
        %v2709 = vmax.f32 %v2279, 0.0
        %v2710 = vmax.f32 %v2470, 0.0
        %v2711 = vmax.f32 %v2472, 0.0
        %v2712 = vmax.f32 %v1897, 0.0
        %v2713 = vmax.f32 %v1899, 0.0
        %v2714 = vmax.f32 %v2090, 0.0
        %v2715 = vmax.f32 %v2092, 0.0
        %v2716 = vmax.f32 %v2283, 0.0
        %v2717 = vmax.f32 %v2285, 0.0
        %v2718 = vmax.f32 %v2476, 0.0
        %v2719 = vmax.f32 %v2478, 0.0
        %v2720 = vmax.f32 %v1901, 0.0
        %v2721 = vmax.f32 %v1903, 0.0
        %v2722 = vmax.f32 %v2094, 0.0
        %v2723 = vmax.f32 %v2096, 0.0
        %v2724 = vmax.f32 %v2287, 0.0
        %v2725 = vmax.f32 %v2289, 0.0
        %v2726 = vmax.f32 %v2480, 0.0
        %v2727 = vmax.f32 %v2482, 0.0
        %v2728 = vmax.f32 %v1907, 0.0
        %v2729 = vmax.f32 %v1909, 0.0
        %v2730 = vmax.f32 %v2100, 0.0
        %v2731 = vmax.f32 %v2102, 0.0
        %v2732 = vmax.f32 %v2293, 0.0
        %v2733 = vmax.f32 %v2295, 0.0
        %v2734 = vmax.f32 %v2486, 0.0
        %v2735 = vmax.f32 %v2488, 0.0
        %v2736 = vmax.f32 %v1911, 0.0
        %v2737 = vmax.f32 %v1913, 0.0
        %v2738 = vmax.f32 %v2104, 0.0
        %v2739 = vmax.f32 %v2106, 0.0
        %v2740 = vmax.f32 %v2297, 0.0
        %v2741 = vmax.f32 %v2299, 0.0
        %v2742 = vmax.f32 %v2490, 0.0
        %v2743 = vmax.f32 %v2492, 0.0
        %v2744 = vmax.f32 %v1917, 0.0
        %v2745 = vmax.f32 %v1919, 0.0
        %v2746 = vmax.f32 %v2110, 0.0
        %v2747 = vmax.f32 %v2112, 0.0
        %v2748 = vmax.f32 %v2303, 0.0
        %v2749 = vmax.f32 %v2305, 0.0
        %v2750 = vmax.f32 %v2496, 0.0
        %v2751 = vmax.f32 %v2498, 0.0
        %v2752 = vmax.f32 %v1921, 0.0
        %v2753 = vmax.f32 %v1923, 0.0
        %v2754 = vmax.f32 %v2114, 0.0
        %v2755 = vmax.f32 %v2116, 0.0
        %v2756 = vmax.f32 %v2307, 0.0
        %v2757 = vmax.f32 %v2309, 0.0
        %v2758 = vmax.f32 %v2500, 0.0
        %v2759 = vmax.f32 %v2502, 0.0
        %v2760 = vmax.f32 %v2504, %v2512
        %v2761 = vmax.f32 %v2760, %v2520
        %v2762 = vmax.f32 %v2761, %v2528
        %v2763 = vmax.f32 %v2762, %v2536
        %v2764 = vmax.f32 %v2763, %v2544
        %v2765 = vmax.f32 %v2764, %v2552
        %v2766 = vmax.f32 %v2765, %v2560
        %v2767 = vmax.f32 %v2766, %v2568
        %v2768 = vmax.f32 %v2767, %v2576
        %v2769 = vmax.f32 %v2768, %v2584
        %v2770 = vmax.f32 %v2769, %v2592
        %v2771 = vmax.f32 %v2770, %v2600
        %v2772 = vmax.f32 %v2771, %v2608
        %v2773 = vmax.f32 %v2772, %v2616
        %v2774 = vmax.f32 %v2773, %v2624
        %v2775 = vmax.f32 %v2774, %v2632
        %v2776 = vmax.f32 %v2775, %v2640
        %v2777 = vmax.f32 %v2776, %v2648
        %v2778 = vmax.f32 %v2777, %v2656
        %v2779 = vmax.f32 %v2778, %v2664
        %v2780 = vmax.f32 %v2779, %v2672
        %v2781 = vmax.f32 %v2780, %v2680
        %v2782 = vmax.f32 %v2781, %v2688
        %v2783 = vmax.f32 %v2782, %v2696
        %v2784 = vmax.f32 %v2783, %v2704
        %v2785 = vmax.f32 %v2784, %v2712
        %v2786 = vmax.f32 %v2785, %v2720
        %v2787 = vmax.f32 %v2786, %v2728
        %v2788 = vmax.f32 %v2787, %v2736
        %v2789 = vmax.f32 %v2788, %v2744
        %v2790 = vmax.f32 %v2789, %v2752
        %v2791 = vrot.slane %v2790, 4
        %v2792 = vmax.f32 %v2790, %v2791
        %v2793 = vrot.slane %v2792, 2
        %v2794 = vmax.f32 %v2792, %v2793
        %v2795 = vrot.slane %v2794, 1
        %v2796 = vmax.f32 %v2794, %v2795
        %v2797 = vmax.f32 %v2505, %v2513
        %v2798 = vmax.f32 %v2797, %v2521
        %v2799 = vmax.f32 %v2798, %v2529
        %v2800 = vmax.f32 %v2799, %v2537
        %v2801 = vmax.f32 %v2800, %v2545
        %v2802 = vmax.f32 %v2801, %v2553
        %v2803 = vmax.f32 %v2802, %v2561
        %v2804 = vmax.f32 %v2803, %v2569
        %v2805 = vmax.f32 %v2804, %v2577
        %v2806 = vmax.f32 %v2805, %v2585
        %v2807 = vmax.f32 %v2806, %v2593
        %v2808 = vmax.f32 %v2807, %v2601
        %v2809 = vmax.f32 %v2808, %v2609
        %v2810 = vmax.f32 %v2809, %v2617
        %v2811 = vmax.f32 %v2810, %v2625
        %v2812 = vmax.f32 %v2811, %v2633
        %v2813 = vmax.f32 %v2812, %v2641
        %v2814 = vmax.f32 %v2813, %v2649
        %v2815 = vmax.f32 %v2814, %v2657
        %v2816 = vmax.f32 %v2815, %v2665
        %v2817 = vmax.f32 %v2816, %v2673
        %v2818 = vmax.f32 %v2817, %v2681
        %v2819 = vmax.f32 %v2818, %v2689
        %v2820 = vmax.f32 %v2819, %v2697
        %v2821 = vmax.f32 %v2820, %v2705
        %v2822 = vmax.f32 %v2821, %v2713
        %v2823 = vmax.f32 %v2822, %v2721
        %v2824 = vmax.f32 %v2823, %v2729
        %v2825 = vmax.f32 %v2824, %v2737
        %v2826 = vmax.f32 %v2825, %v2745
        %v2827 = vmax.f32 %v2826, %v2753
        %v2828 = vrot.slane %v2827, 4
        %v2829 = vmax.f32 %v2827, %v2828
        %v2830 = vrot.slane %v2829, 2
        %v2831 = vmax.f32 %v2829, %v2830
        %v2832 = vrot.slane %v2831, 1
        %v2833 = vmax.f32 %v2831, %v2832
        %v2834 = vmax.f32 %v2506, %v2514
        %v2835 = vmax.f32 %v2834, %v2522
        %v2836 = vmax.f32 %v2835, %v2530
        %v2837 = vmax.f32 %v2836, %v2538
        %v2838 = vmax.f32 %v2837, %v2546
        %v2839 = vmax.f32 %v2838, %v2554
        %v2840 = vmax.f32 %v2839, %v2562
        %v2841 = vmax.f32 %v2840, %v2570
        %v2842 = vmax.f32 %v2841, %v2578
        %v2843 = vmax.f32 %v2842, %v2586
        %v2844 = vmax.f32 %v2843, %v2594
        %v2845 = vmax.f32 %v2844, %v2602
        %v2846 = vmax.f32 %v2845, %v2610
        %v2847 = vmax.f32 %v2846, %v2618
        %v2848 = vmax.f32 %v2847, %v2626
        %v2849 = vmax.f32 %v2848, %v2634
        %v2850 = vmax.f32 %v2849, %v2642
        %v2851 = vmax.f32 %v2850, %v2650
        %v2852 = vmax.f32 %v2851, %v2658
        %v2853 = vmax.f32 %v2852, %v2666
        %v2854 = vmax.f32 %v2853, %v2674
        %v2855 = vmax.f32 %v2854, %v2682
        %v2856 = vmax.f32 %v2855, %v2690
        %v2857 = vmax.f32 %v2856, %v2698
        %v2858 = vmax.f32 %v2857, %v2706
        %v2859 = vmax.f32 %v2858, %v2714
        %v2860 = vmax.f32 %v2859, %v2722
        %v2861 = vmax.f32 %v2860, %v2730
        %v2862 = vmax.f32 %v2861, %v2738
        %v2863 = vmax.f32 %v2862, %v2746
        %v2864 = vmax.f32 %v2863, %v2754
        %v2865 = vrot.slane %v2864, 4
        %v2866 = vmax.f32 %v2864, %v2865
        %v2867 = vrot.slane %v2866, 2
        %v2868 = vmax.f32 %v2866, %v2867
        %v2869 = vrot.slane %v2868, 1
        %v2870 = vmax.f32 %v2868, %v2869
        %v2871 = vmax.f32 %v2507, %v2515
        %v2872 = vmax.f32 %v2871, %v2523
        %v2873 = vmax.f32 %v2872, %v2531
        %v2874 = vmax.f32 %v2873, %v2539
        %v2875 = vmax.f32 %v2874, %v2547
        %v2876 = vmax.f32 %v2875, %v2555
        %v2877 = vmax.f32 %v2876, %v2563
        %v2878 = vmax.f32 %v2877, %v2571
        %v2879 = vmax.f32 %v2878, %v2579
        %v2880 = vmax.f32 %v2879, %v2587
        %v2881 = vmax.f32 %v2880, %v2595
        %v2882 = vmax.f32 %v2881, %v2603
        %v2883 = vmax.f32 %v2882, %v2611
        %v2884 = vmax.f32 %v2883, %v2619
        %v2885 = vmax.f32 %v2884, %v2627
        %v2886 = vmax.f32 %v2885, %v2635
        %v2887 = vmax.f32 %v2886, %v2643
        %v2888 = vmax.f32 %v2887, %v2651
        %v2889 = vmax.f32 %v2888, %v2659
        %v2890 = vmax.f32 %v2889, %v2667
        %v2891 = vmax.f32 %v2890, %v2675
        %v2892 = vmax.f32 %v2891, %v2683
        %v2893 = vmax.f32 %v2892, %v2691
        %v2894 = vmax.f32 %v2893, %v2699
        %v2895 = vmax.f32 %v2894, %v2707
        %v2896 = vmax.f32 %v2895, %v2715
        %v2897 = vmax.f32 %v2896, %v2723
        %v2898 = vmax.f32 %v2897, %v2731
        %v2899 = vmax.f32 %v2898, %v2739
        %v2900 = vmax.f32 %v2899, %v2747
        %v2901 = vmax.f32 %v2900, %v2755
        %v2902 = vrot.slane %v2901, 4
        %v2903 = vmax.f32 %v2901, %v2902
        %v2904 = vrot.slane %v2903, 2
        %v2905 = vmax.f32 %v2903, %v2904
        %v2906 = vrot.slane %v2905, 1
        %v2907 = vmax.f32 %v2905, %v2906
        %v2908 = vmax.f32 %v2508, %v2516
        %v2909 = vmax.f32 %v2908, %v2524
        %v2910 = vmax.f32 %v2909, %v2532
        %v2911 = vmax.f32 %v2910, %v2540
        %v2912 = vmax.f32 %v2911, %v2548
        %v2913 = vmax.f32 %v2912, %v2556
        %v2914 = vmax.f32 %v2913, %v2564
        %v2915 = vmax.f32 %v2914, %v2572
        %v2916 = vmax.f32 %v2915, %v2580
        %v2917 = vmax.f32 %v2916, %v2588
        %v2918 = vmax.f32 %v2917, %v2596
        %v2919 = vmax.f32 %v2918, %v2604
        %v2920 = vmax.f32 %v2919, %v2612
        %v2921 = vmax.f32 %v2920, %v2620
        %v2922 = vmax.f32 %v2921, %v2628
        %v2923 = vmax.f32 %v2922, %v2636
        %v2924 = vmax.f32 %v2923, %v2644
        %v2925 = vmax.f32 %v2924, %v2652
        %v2926 = vmax.f32 %v2925, %v2660
        %v2927 = vmax.f32 %v2926, %v2668
        %v2928 = vmax.f32 %v2927, %v2676
        %v2929 = vmax.f32 %v2928, %v2684
        %v2930 = vmax.f32 %v2929, %v2692
        %v2931 = vmax.f32 %v2930, %v2700
        %v2932 = vmax.f32 %v2931, %v2708
        %v2933 = vmax.f32 %v2932, %v2716
        %v2934 = vmax.f32 %v2933, %v2724
        %v2935 = vmax.f32 %v2934, %v2732
        %v2936 = vmax.f32 %v2935, %v2740
        %v2937 = vmax.f32 %v2936, %v2748
        %v2938 = vmax.f32 %v2937, %v2756
        %v2939 = vrot.slane %v2938, 4
        %v2940 = vmax.f32 %v2938, %v2939
        %v2941 = vrot.slane %v2940, 2
        %v2942 = vmax.f32 %v2940, %v2941
        %v2943 = vrot.slane %v2942, 1
        %v2944 = vmax.f32 %v2942, %v2943
        %v2945 = vmax.f32 %v2509, %v2517
        %v2946 = vmax.f32 %v2945, %v2525
        %v2947 = vmax.f32 %v2946, %v2533
        %v2948 = vmax.f32 %v2947, %v2541
        %v2949 = vmax.f32 %v2948, %v2549
        %v2950 = vmax.f32 %v2949, %v2557
        %v2951 = vmax.f32 %v2950, %v2565
        %v2952 = vmax.f32 %v2951, %v2573
        %v2953 = vmax.f32 %v2952, %v2581
        %v2954 = vmax.f32 %v2953, %v2589
        %v2955 = vmax.f32 %v2954, %v2597
        %v2956 = vmax.f32 %v2955, %v2605
        %v2957 = vmax.f32 %v2956, %v2613
        %v2958 = vmax.f32 %v2957, %v2621
        %v2959 = vmax.f32 %v2958, %v2629
        %v2960 = vmax.f32 %v2959, %v2637
        %v2961 = vmax.f32 %v2960, %v2645
        %v2962 = vmax.f32 %v2961, %v2653
        %v2963 = vmax.f32 %v2962, %v2661
        %v2964 = vmax.f32 %v2963, %v2669
        %v2965 = vmax.f32 %v2964, %v2677
        %v2966 = vmax.f32 %v2965, %v2685
        %v2967 = vmax.f32 %v2966, %v2693
        %v2968 = vmax.f32 %v2967, %v2701
        %v2969 = vmax.f32 %v2968, %v2709
        %v2970 = vmax.f32 %v2969, %v2717
        %v2971 = vmax.f32 %v2970, %v2725
        %v2972 = vmax.f32 %v2971, %v2733
        %v2973 = vmax.f32 %v2972, %v2741
        %v2974 = vmax.f32 %v2973, %v2749
        %v2975 = vmax.f32 %v2974, %v2757
        %v2976 = vrot.slane %v2975, 4
        %v2977 = vmax.f32 %v2975, %v2976
        %v2978 = vrot.slane %v2977, 2
        %v2979 = vmax.f32 %v2977, %v2978
        %v2980 = vrot.slane %v2979, 1
        %v2981 = vmax.f32 %v2979, %v2980
        %v2982 = vmax.f32 %v2510, %v2518
        %v2983 = vmax.f32 %v2982, %v2526
        %v2984 = vmax.f32 %v2983, %v2534
        %v2985 = vmax.f32 %v2984, %v2542
        %v2986 = vmax.f32 %v2985, %v2550
        %v2987 = vmax.f32 %v2986, %v2558
        %v2988 = vmax.f32 %v2987, %v2566
        %v2989 = vmax.f32 %v2988, %v2574
        %v2990 = vmax.f32 %v2989, %v2582
        %v2991 = vmax.f32 %v2990, %v2590
        %v2992 = vmax.f32 %v2991, %v2598
        %v2993 = vmax.f32 %v2992, %v2606
        %v2994 = vmax.f32 %v2993, %v2614
        %v2995 = vmax.f32 %v2994, %v2622
        %v2996 = vmax.f32 %v2995, %v2630
        %v2997 = vmax.f32 %v2996, %v2638
        %v2998 = vmax.f32 %v2997, %v2646
        %v2999 = vmax.f32 %v2998, %v2654
        %v3000 = vmax.f32 %v2999, %v2662
        %v3001 = vmax.f32 %v3000, %v2670
        %v3002 = vmax.f32 %v3001, %v2678
        %v3003 = vmax.f32 %v3002, %v2686
        %v3004 = vmax.f32 %v3003, %v2694
        %v3005 = vmax.f32 %v3004, %v2702
        %v3006 = vmax.f32 %v3005, %v2710
        %v3007 = vmax.f32 %v3006, %v2718
        %v3008 = vmax.f32 %v3007, %v2726
        %v3009 = vmax.f32 %v3008, %v2734
        %v3010 = vmax.f32 %v3009, %v2742
        %v3011 = vmax.f32 %v3010, %v2750
        %v3012 = vmax.f32 %v3011, %v2758
        %v3013 = vrot.slane %v3012, 4
        %v3014 = vmax.f32 %v3012, %v3013
        %v3015 = vrot.slane %v3014, 2
        %v3016 = vmax.f32 %v3014, %v3015
        %v3017 = vrot.slane %v3016, 1
        %v3018 = vmax.f32 %v3016, %v3017
        %v3019 = vmax.f32 %v2511, %v2519
        %v3020 = vmax.f32 %v3019, %v2527
        %v3021 = vmax.f32 %v3020, %v2535
        %v3022 = vmax.f32 %v3021, %v2543
        %v3023 = vmax.f32 %v3022, %v2551
        %v3024 = vmax.f32 %v3023, %v2559
        %v3025 = vmax.f32 %v3024, %v2567
        %v3026 = vmax.f32 %v3025, %v2575
        %v3027 = vmax.f32 %v3026, %v2583
        %v3028 = vmax.f32 %v3027, %v2591
        %v3029 = vmax.f32 %v3028, %v2599
        %v3030 = vmax.f32 %v3029, %v2607
        %v3031 = vmax.f32 %v3030, %v2615
        %v3032 = vmax.f32 %v3031, %v2623
        %v3033 = vmax.f32 %v3032, %v2631
        %v3034 = vmax.f32 %v3033, %v2639
        %v3035 = vmax.f32 %v3034, %v2647
        %v3036 = vmax.f32 %v3035, %v2655
        %v3037 = vmax.f32 %v3036, %v2663
        %v3038 = vmax.f32 %v3037, %v2671
        %v3039 = vmax.f32 %v3038, %v2679
        %v3040 = vmax.f32 %v3039, %v2687
        %v3041 = vmax.f32 %v3040, %v2695
        %v3042 = vmax.f32 %v3041, %v2703
        %v3043 = vmax.f32 %v3042, %v2711
        %v3044 = vmax.f32 %v3043, %v2719
        %v3045 = vmax.f32 %v3044, %v2727
        %v3046 = vmax.f32 %v3045, %v2735
        %v3047 = vmax.f32 %v3046, %v2743
        %v3048 = vmax.f32 %v3047, %v2751
        %v3049 = vmax.f32 %v3048, %v2759
        %v3050 = vrot.slane %v3049, 4
        %v3051 = vmax.f32 %v3049, %v3050
        %v3052 = vrot.slane %v3051, 2
        %v3053 = vmax.f32 %v3051, %v3052
        %v3054 = vrot.slane %v3053, 1
        %v3055 = vmax.f32 %v3053, %v3054
        %p3056 = scmp.eq.s32.totalorder %s34, 0
        // Predicated region
        $region81: #{tpu_custom_call.1} parent=71 // pred_check
          %p3057 = pneg %p3056
        $region82: #{tpu_custom_call.1} parent=71 // pred_check_branch
          %3059 = sbr.rel (%p3057) target = $region84
        $region83: #{tpu_custom_call.1} parent=71 // pred_region
          %v3068 = vcombine.low %v2796, %v2833
          %v3069 = vcombine.low %v2870, %v2907
          %v3070 = vcombine.low %v2944, %v2981
          %v3071 = vcombine.low %v3018, %v3055
          %v3073 = vunpack.c.l.s4 1966171168
          %v3074 = vunpack.c.0.s8 %v3073
          %v3075 = vlaneseq
          %v3076 = vshrl.u32 %v3075, 7
          %v3077 = vsub.s32 %v3074, %v3076
          %v3078 = vrot.slane %v3068, %v3077
          %v3080 = vunpack.c.l.s4 1966171168
          %v3081 = vunpack.c.0.s8 %v3080
          %v3082 = vlaneseq
          %v3083 = vshrl.u32 %v3082, 7
          %v3084 = vsub.s32 %v3081, %v3083
          %v3085 = vrot.slane %v3069, %v3084
          %v3087 = vunpack.c.l.s4 1966171168
          %v3088 = vunpack.c.0.s8 %v3087
          %v3089 = vlaneseq
          %v3090 = vshrl.u32 %v3089, 7
          %v3091 = vsub.s32 %v3088, %v3090
          %v3092 = vrot.slane %v3070, %v3091
          %v3094 = vunpack.c.l.s4 1966171168
          %v3095 = vunpack.c.0.s8 %v3094
          %v3096 = vlaneseq
          %v3097 = vshrl.u32 %v3096, 7
          %v3098 = vsub.s32 %v3095, %v3097
          %v3099 = vrot.slane %v3071, %v3098
          %v3100 = vcombine.low %v3078, %v3085
          %v3101 = vcombine.low %v3092, %v3099
          %v3103 = vunpack.c.l.s4 1966171168
          %v3104 = vunpack.c.0.s8 %v3103
          %v3105 = vlaneseq
          %v3106 = vshrl.u32 %v3105, 7
          %v3107 = vsub.s32 %v3104, %v3106
          %v3108 = vrot.slane %v3100, %v3107
          %v3110 = vunpack.c.l.s4 1966171168
          %v3111 = vunpack.c.0.s8 %v3110
          %v3112 = vlaneseq
          %v3113 = vshrl.u32 %v3112, 7
          %v3114 = vsub.s32 %v3111, %v3113
          %v3115 = vrot.slane %v3101, %v3114
          %v3116 = vcombine.low %v3108, %v3115
          %3118 = vst [vmem:[#allocation2] sm:$0xff] %v3116
        $region84: #{tpu_custom_call.1} parent=71 // pred_fallthru
          _
        %p3119 = scmp.gt.s32.totalorder %s34, 0
        // Predicated region
        $region85: #{tpu_custom_call.1} parent=71 // pred_check
          %p3120 = pneg %p3119
        $region86: #{tpu_custom_call.1} parent=71 // pred_check_branch
          %3122 = sbr.rel (%p3120) target = $region88
        $region87: #{tpu_custom_call.1} parent=71 // pred_region
          %v3123 = vld [vmem:[#allocation2] sm:$0xff]
          %v3132 = vcombine.low %v2796, %v2833
          %v3133 = vcombine.low %v2870, %v2907
          %v3134 = vcombine.low %v2944, %v2981
          %v3135 = vcombine.low %v3018, %v3055
          %v3137 = vunpack.c.l.s4 1966171168
          %v3138 = vunpack.c.0.s8 %v3137
          %v3139 = vlaneseq
          %v3140 = vshrl.u32 %v3139, 7
          %v3141 = vsub.s32 %v3138, %v3140
          %v3142 = vrot.slane %v3132, %v3141
          %v3144 = vunpack.c.l.s4 1966171168
          %v3145 = vunpack.c.0.s8 %v3144
          %v3146 = vlaneseq
          %v3147 = vshrl.u32 %v3146, 7
          %v3148 = vsub.s32 %v3145, %v3147
          %v3149 = vrot.slane %v3133, %v3148
          %v3151 = vunpack.c.l.s4 1966171168
          %v3152 = vunpack.c.0.s8 %v3151
          %v3153 = vlaneseq
          %v3154 = vshrl.u32 %v3153, 7
          %v3155 = vsub.s32 %v3152, %v3154
          %v3156 = vrot.slane %v3134, %v3155
          %v3158 = vunpack.c.l.s4 1966171168
          %v3159 = vunpack.c.0.s8 %v3158
          %v3160 = vlaneseq
          %v3161 = vshrl.u32 %v3160, 7
          %v3162 = vsub.s32 %v3159, %v3161
          %v3163 = vrot.slane %v3135, %v3162
          %v3164 = vcombine.low %v3142, %v3149
          %v3165 = vcombine.low %v3156, %v3163
          %v3167 = vunpack.c.l.s4 1966171168
          %v3168 = vunpack.c.0.s8 %v3167
          %v3169 = vlaneseq
          %v3170 = vshrl.u32 %v3169, 7
          %v3171 = vsub.s32 %v3168, %v3170
          %v3172 = vrot.slane %v3164, %v3171
          %v3174 = vunpack.c.l.s4 1966171168
          %v3175 = vunpack.c.0.s8 %v3174
          %v3176 = vlaneseq
          %v3177 = vshrl.u32 %v3176, 7
          %v3178 = vsub.s32 %v3175, %v3177
          %v3179 = vrot.slane %v3165, %v3178
          %v3180 = vcombine.low %v3172, %v3179
          %v3182 = vmax.f32 %v3123, %v3180
          %3183 = vst [vmem:[#allocation2] sm:$0xff] %v3182
        $region88: #{tpu_custom_call.1} parent=71 // pred_fallthru
          _
        // Predicated region
        $region89: #{tpu_custom_call.1} parent=71 // pred_check
          %p3184 = pneg %p3056
        $region90: #{tpu_custom_call.1} parent=71 // pred_check_branch
          %3186 = sbr.rel (%p3184) target = $region92
        $region91: #{tpu_custom_call.1} parent=71 // pred_region
          %v3187 = vld [vmem:[#allocation2] sm:$0xff]
          %v3189 = vlaneseq
          %v3190 = vshrl.u32 %v3189, 7
          %v3191 = vsub.s32 0, %v3190
          %v3192 = vrot.slane %v3187, %v3191
          %v3193 = vlaneseq
          %v3194 = vshrl.u32 %v3193, 7
          %v3195 = vsub.s32 1, %v3194
          %v3196 = vrot.slane %v3187, %v3195
          %v3197 = vlaneseq
          %v3198 = vshrl.u32 %v3197, 7
          %v3199 = vsub.s32 2, %v3198
          %v3200 = vrot.slane %v3187, %v3199
          %v3201 = vlaneseq
          %v3202 = vshrl.u32 %v3201, 7
          %v3203 = vsub.s32 3, %v3202
          %v3204 = vrot.slane %v3187, %v3203
          %v3205 = vlaneseq
          %v3206 = vshrl.u32 %v3205, 7
          %v3207 = vsub.s32 4, %v3206
          %v3208 = vrot.slane %v3187, %v3207
          %v3209 = vlaneseq
          %v3210 = vshrl.u32 %v3209, 7
          %v3211 = vsub.s32 5, %v3210
          %v3212 = vrot.slane %v3187, %v3211
          %v3213 = vlaneseq
          %v3214 = vshrl.u32 %v3213, 7
          %v3215 = vsub.s32 6, %v3214
          %v3216 = vrot.slane %v3187, %v3215
          %v3217 = vlaneseq
          %v3218 = vshrl.u32 %v3217, 7
          %v3219 = vsub.s32 7, %v3218
          %v3220 = vrot.slane %v3187, %v3219
          %v3229 = vpack.c.bf16 %v3192, %v3192
          %v3230 = vpack.c.bf16 %v3196, %v3196
          %v3231 = vpack.c.bf16 %v3200, %v3200
          %v3232 = vpack.c.bf16 %v3204, %v3204
          %v3233 = vpack.c.bf16 %v3208, %v3208
          %v3234 = vpack.c.bf16 %v3212, %v3212
          %v3235 = vpack.c.bf16 %v3216, %v3216
          %v3236 = vpack.c.bf16 %v3220, %v3220
          %v3237 = vld [vmem:[#allocation3] sm:$0xff]
          %v3238 = vld [vmem:[#allocation3 + $0x8] sm:$0xff]
          %v3239 = vld [vmem:[#allocation3 + $0x10] sm:$0xff]
          %v3240 = vld [vmem:[#allocation3 + $0x18] sm:$0xff]
          %v3241 = vld [vmem:[#allocation3 + $0x20] sm:$0xff]
          %v3242 = vld [vmem:[#allocation3 + $0x28] sm:$0xff]
          %v3243 = vld [vmem:[#allocation3 + $0x30] sm:$0xff]
          %v3244 = vld [vmem:[#allocation3 + $0x38] sm:$0xff]
          %v3245 = vld [vmem:[#allocation3 + $0x40] sm:$0xff]
          %v3246 = vld [vmem:[#allocation3 + $0x48] sm:$0xff]
          %v3247 = vld [vmem:[#allocation3 + $0x50] sm:$0xff]
          %v3248 = vld [vmem:[#allocation3 + $0x58] sm:$0xff]
          %v3249 = vld [vmem:[#allocation3 + $0x60] sm:$0xff]
          %v3250 = vld [vmem:[#allocation3 + $0x68] sm:$0xff]
          %v3251 = vld [vmem:[#allocation3 + $0x70] sm:$0xff]
          %v3252 = vld [vmem:[#allocation3 + $0x78] sm:$0xff]
          %v3253 = vld [vmem:[#allocation3 + $0x80] sm:$0xff]
          %v3254 = vld [vmem:[#allocation3 + $0x88] sm:$0xff]
          %v3255 = vld [vmem:[#allocation3 + $0x90] sm:$0xff]
          %v3256 = vld [vmem:[#allocation3 + $0x98] sm:$0xff]
          %v3257 = vld [vmem:[#allocation3 + $0xa0] sm:$0xff]
          %v3258 = vld [vmem:[#allocation3 + $0xa8] sm:$0xff]
          %v3259 = vld [vmem:[#allocation3 + $0xb0] sm:$0xff]
          %v3260 = vld [vmem:[#allocation3 + $0xb8] sm:$0xff]
          %v3261 = vld [vmem:[#allocation3 + $0xc0] sm:$0xff]
          %v3262 = vld [vmem:[#allocation3 + $0xc8] sm:$0xff]
          %v3263 = vld [vmem:[#allocation3 + $0xd0] sm:$0xff]
          %v3264 = vld [vmem:[#allocation3 + $0xd8] sm:$0xff]
          %v3265 = vld [vmem:[#allocation3 + $0xe0] sm:$0xff]
          %v3266 = vld [vmem:[#allocation3 + $0xe8] sm:$0xff]
          %v3267 = vld [vmem:[#allocation3 + $0xf0] sm:$0xff]
          %v3268 = vld [vmem:[#allocation3 + $0xf8] sm:$0xff]
          %v3269 = vld [vmem:[#allocation3 + $0x100] sm:$0xff]
          %v3270 = vld [vmem:[#allocation3 + $0x108] sm:$0xff]
          %v3271 = vld [vmem:[#allocation3 + $0x110] sm:$0xff]
          %v3272 = vld [vmem:[#allocation3 + $0x118] sm:$0xff]
          %v3273 = vld [vmem:[#allocation3 + $0x120] sm:$0xff]
          %v3274 = vld [vmem:[#allocation3 + $0x128] sm:$0xff]
          %v3275 = vld [vmem:[#allocation3 + $0x130] sm:$0xff]
          %v3276 = vld [vmem:[#allocation3 + $0x138] sm:$0xff]
          %v3277 = vld [vmem:[#allocation3 + $0x140] sm:$0xff]
          %v3278 = vld [vmem:[#allocation3 + $0x148] sm:$0xff]
          %v3279 = vld [vmem:[#allocation3 + $0x150] sm:$0xff]
          %v3280 = vld [vmem:[#allocation3 + $0x158] sm:$0xff]
          %v3281 = vld [vmem:[#allocation3 + $0x160] sm:$0xff]
          %v3282 = vld [vmem:[#allocation3 + $0x168] sm:$0xff]
          %v3283 = vld [vmem:[#allocation3 + $0x170] sm:$0xff]
          %v3284 = vld [vmem:[#allocation3 + $0x178] sm:$0xff]
          %v3285 = vld [vmem:[#allocation3 + $0x180] sm:$0xff]
          %v3286 = vld [vmem:[#allocation3 + $0x188] sm:$0xff]
          %v3287 = vld [vmem:[#allocation3 + $0x190] sm:$0xff]
          %v3288 = vld [vmem:[#allocation3 + $0x198] sm:$0xff]
          %v3289 = vld [vmem:[#allocation3 + $0x1a0] sm:$0xff]
          %v3290 = vld [vmem:[#allocation3 + $0x1a8] sm:$0xff]
          %v3291 = vld [vmem:[#allocation3 + $0x1b0] sm:$0xff]
          %v3292 = vld [vmem:[#allocation3 + $0x1b8] sm:$0xff]
          %v3293 = vld [vmem:[#allocation3 + $0x1c0] sm:$0xff]
          %v3294 = vld [vmem:[#allocation3 + $0x1c8] sm:$0xff]
          %v3295 = vld [vmem:[#allocation3 + $0x1d0] sm:$0xff]
          %v3296 = vld [vmem:[#allocation3 + $0x1d8] sm:$0xff]
          %v3297 = vld [vmem:[#allocation3 + $0x1e0] sm:$0xff]
          %v3298 = vld [vmem:[#allocation3 + $0x1e8] sm:$0xff]
          %v3299 = vld [vmem:[#allocation3 + $0x1f0] sm:$0xff]
          %v3300 = vld [vmem:[#allocation3 + $0x1f8] sm:$0xff]
          %v3301 = vld [vmem:[#allocation3 + $0x200] sm:$0xff]
          %v3302 = vld [vmem:[#allocation3 + $0x208] sm:$0xff]
          %v3303 = vld [vmem:[#allocation3 + $0x210] sm:$0xff]
          %v3304 = vld [vmem:[#allocation3 + $0x218] sm:$0xff]
          %v3305 = vld [vmem:[#allocation3 + $0x220] sm:$0xff]
          %v3306 = vld [vmem:[#allocation3 + $0x228] sm:$0xff]
          %v3307 = vld [vmem:[#allocation3 + $0x230] sm:$0xff]
          %v3308 = vld [vmem:[#allocation3 + $0x238] sm:$0xff]
          %v3309 = vld [vmem:[#allocation3 + $0x240] sm:$0xff]
          %v3310 = vld [vmem:[#allocation3 + $0x248] sm:$0xff]
          %v3311 = vld [vmem:[#allocation3 + $0x250] sm:$0xff]
          %v3312 = vld [vmem:[#allocation3 + $0x258] sm:$0xff]
          %v3313 = vld [vmem:[#allocation3 + $0x260] sm:$0xff]
          %v3314 = vld [vmem:[#allocation3 + $0x268] sm:$0xff]
          %v3315 = vld [vmem:[#allocation3 + $0x270] sm:$0xff]
          %v3316 = vld [vmem:[#allocation3 + $0x278] sm:$0xff]
          %v3317 = vld [vmem:[#allocation3 + $0x280] sm:$0xff]
          %v3318 = vld [vmem:[#allocation3 + $0x288] sm:$0xff]
          %v3319 = vld [vmem:[#allocation3 + $0x290] sm:$0xff]
          %v3320 = vld [vmem:[#allocation3 + $0x298] sm:$0xff]
          %v3321 = vld [vmem:[#allocation3 + $0x2a0] sm:$0xff]
          %v3322 = vld [vmem:[#allocation3 + $0x2a8] sm:$0xff]
          %v3323 = vld [vmem:[#allocation3 + $0x2b0] sm:$0xff]
          %v3324 = vld [vmem:[#allocation3 + $0x2b8] sm:$0xff]
          %v3325 = vld [vmem:[#allocation3 + $0x2c0] sm:$0xff]
          %v3326 = vld [vmem:[#allocation3 + $0x2c8] sm:$0xff]
          %v3327 = vld [vmem:[#allocation3 + $0x2d0] sm:$0xff]
          %v3328 = vld [vmem:[#allocation3 + $0x2d8] sm:$0xff]
          %v3329 = vld [vmem:[#allocation3 + $0x2e0] sm:$0xff]
          %v3330 = vld [vmem:[#allocation3 + $0x2e8] sm:$0xff]
          %v3331 = vld [vmem:[#allocation3 + $0x2f0] sm:$0xff]
          %v3332 = vld [vmem:[#allocation3 + $0x2f8] sm:$0xff]
          %v3333 = vld [vmem:[#allocation3 + $0x300] sm:$0xff]
          %v3334 = vld [vmem:[#allocation3 + $0x308] sm:$0xff]
          %v3335 = vld [vmem:[#allocation3 + $0x310] sm:$0xff]
          %v3336 = vld [vmem:[#allocation3 + $0x318] sm:$0xff]
          %v3337 = vld [vmem:[#allocation3 + $0x320] sm:$0xff]
          %v3338 = vld [vmem:[#allocation3 + $0x328] sm:$0xff]
          %v3339 = vld [vmem:[#allocation3 + $0x330] sm:$0xff]
          %v3340 = vld [vmem:[#allocation3 + $0x338] sm:$0xff]
          %v3341 = vld [vmem:[#allocation3 + $0x340] sm:$0xff]
          %v3342 = vld [vmem:[#allocation3 + $0x348] sm:$0xff]
          %v3343 = vld [vmem:[#allocation3 + $0x350] sm:$0xff]
          %v3344 = vld [vmem:[#allocation3 + $0x358] sm:$0xff]
          %v3345 = vld [vmem:[#allocation3 + $0x360] sm:$0xff]
          %v3346 = vld [vmem:[#allocation3 + $0x368] sm:$0xff]
          %v3347 = vld [vmem:[#allocation3 + $0x370] sm:$0xff]
          %v3348 = vld [vmem:[#allocation3 + $0x378] sm:$0xff]
          %v3349 = vld [vmem:[#allocation3 + $0x380] sm:$0xff]
          %v3350 = vld [vmem:[#allocation3 + $0x388] sm:$0xff]
          %v3351 = vld [vmem:[#allocation3 + $0x390] sm:$0xff]
          %v3352 = vld [vmem:[#allocation3 + $0x398] sm:$0xff]
          %v3353 = vld [vmem:[#allocation3 + $0x3a0] sm:$0xff]
          %v3354 = vld [vmem:[#allocation3 + $0x3a8] sm:$0xff]
          %v3355 = vld [vmem:[#allocation3 + $0x3b0] sm:$0xff]
          %v3356 = vld [vmem:[#allocation3 + $0x3b8] sm:$0xff]
          %v3357 = vld [vmem:[#allocation3 + $0x3c0] sm:$0xff]
          %v3358 = vld [vmem:[#allocation3 + $0x3c8] sm:$0xff]
          %v3359 = vld [vmem:[#allocation3 + $0x3d0] sm:$0xff]
          %v3360 = vld [vmem:[#allocation3 + $0x3d8] sm:$0xff]
          %v3361 = vld [vmem:[#allocation3 + $0x3e0] sm:$0xff]
          %v3362 = vld [vmem:[#allocation3 + $0x3e8] sm:$0xff]
          %v3363 = vld [vmem:[#allocation3 + $0x3f0] sm:$0xff]
          %v3364 = vld [vmem:[#allocation3 + $0x3f8] sm:$0xff]
          %v3365 = vld [vmem:[#allocation3 + $0x400] sm:$0xff]
          %v3366 = vld [vmem:[#allocation3 + $0x408] sm:$0xff]
          %v3367 = vld [vmem:[#allocation3 + $0x410] sm:$0xff]
          %v3368 = vld [vmem:[#allocation3 + $0x418] sm:$0xff]
          %v3369 = vld [vmem:[#allocation3 + $0x420] sm:$0xff]
          %v3370 = vld [vmem:[#allocation3 + $0x428] sm:$0xff]
          %v3371 = vld [vmem:[#allocation3 + $0x430] sm:$0xff]
          %v3372 = vld [vmem:[#allocation3 + $0x438] sm:$0xff]
          %v3373 = vld [vmem:[#allocation3 + $0x440] sm:$0xff]
          %v3374 = vld [vmem:[#allocation3 + $0x448] sm:$0xff]
          %v3375 = vld [vmem:[#allocation3 + $0x450] sm:$0xff]
          %v3376 = vld [vmem:[#allocation3 + $0x458] sm:$0xff]
          %v3377 = vld [vmem:[#allocation3 + $0x460] sm:$0xff]
          %v3378 = vld [vmem:[#allocation3 + $0x468] sm:$0xff]
          %v3379 = vld [vmem:[#allocation3 + $0x470] sm:$0xff]
          %v3380 = vld [vmem:[#allocation3 + $0x478] sm:$0xff]
          %v3381 = vld [vmem:[#allocation3 + $0x480] sm:$0xff]
          %v3382 = vld [vmem:[#allocation3 + $0x488] sm:$0xff]
          %v3383 = vld [vmem:[#allocation3 + $0x490] sm:$0xff]
          %v3384 = vld [vmem:[#allocation3 + $0x498] sm:$0xff]
          %v3385 = vld [vmem:[#allocation3 + $0x4a0] sm:$0xff]
          %v3386 = vld [vmem:[#allocation3 + $0x4a8] sm:$0xff]
          %v3387 = vld [vmem:[#allocation3 + $0x4b0] sm:$0xff]
          %v3388 = vld [vmem:[#allocation3 + $0x4b8] sm:$0xff]
          %v3389 = vld [vmem:[#allocation3 + $0x4c0] sm:$0xff]
          %v3390 = vld [vmem:[#allocation3 + $0x4c8] sm:$0xff]
          %v3391 = vld [vmem:[#allocation3 + $0x4d0] sm:$0xff]
          %v3392 = vld [vmem:[#allocation3 + $0x4d8] sm:$0xff]
          %v3393 = vld [vmem:[#allocation3 + $0x4e0] sm:$0xff]
          %v3394 = vld [vmem:[#allocation3 + $0x4e8] sm:$0xff]
          %v3395 = vld [vmem:[#allocation3 + $0x4f0] sm:$0xff]
          %v3396 = vld [vmem:[#allocation3 + $0x4f8] sm:$0xff]
          %v3397 = vld [vmem:[#allocation3 + $0x500] sm:$0xff]
          %v3398 = vld [vmem:[#allocation3 + $0x508] sm:$0xff]
          %v3399 = vld [vmem:[#allocation3 + $0x510] sm:$0xff]
          %v3400 = vld [vmem:[#allocation3 + $0x518] sm:$0xff]
          %v3401 = vld [vmem:[#allocation3 + $0x520] sm:$0xff]
          %v3402 = vld [vmem:[#allocation3 + $0x528] sm:$0xff]
          %v3403 = vld [vmem:[#allocation3 + $0x530] sm:$0xff]
          %v3404 = vld [vmem:[#allocation3 + $0x538] sm:$0xff]
          %v3405 = vld [vmem:[#allocation3 + $0x540] sm:$0xff]
          %v3406 = vld [vmem:[#allocation3 + $0x548] sm:$0xff]
          %v3407 = vld [vmem:[#allocation3 + $0x550] sm:$0xff]
          %v3408 = vld [vmem:[#allocation3 + $0x558] sm:$0xff]
          %v3409 = vld [vmem:[#allocation3 + $0x560] sm:$0xff]
          %v3410 = vld [vmem:[#allocation3 + $0x568] sm:$0xff]
          %v3411 = vld [vmem:[#allocation3 + $0x570] sm:$0xff]
          %v3412 = vld [vmem:[#allocation3 + $0x578] sm:$0xff]
          %v3413 = vld [vmem:[#allocation3 + $0x580] sm:$0xff]
          %v3414 = vld [vmem:[#allocation3 + $0x588] sm:$0xff]
          %v3415 = vld [vmem:[#allocation3 + $0x590] sm:$0xff]
          %v3416 = vld [vmem:[#allocation3 + $0x598] sm:$0xff]
          %v3417 = vld [vmem:[#allocation3 + $0x5a0] sm:$0xff]
          %v3418 = vld [vmem:[#allocation3 + $0x5a8] sm:$0xff]
          %v3419 = vld [vmem:[#allocation3 + $0x5b0] sm:$0xff]
          %v3420 = vld [vmem:[#allocation3 + $0x5b8] sm:$0xff]
          %v3421 = vld [vmem:[#allocation3 + $0x5c0] sm:$0xff]
          %v3422 = vld [vmem:[#allocation3 + $0x5c8] sm:$0xff]
          %v3423 = vld [vmem:[#allocation3 + $0x5d0] sm:$0xff]
          %v3424 = vld [vmem:[#allocation3 + $0x5d8] sm:$0xff]
          %v3425 = vld [vmem:[#allocation3 + $0x5e0] sm:$0xff]
          %v3426 = vld [vmem:[#allocation3 + $0x5e8] sm:$0xff]
          %v3427 = vld [vmem:[#allocation3 + $0x5f0] sm:$0xff]
          %v3428 = vld [vmem:[#allocation3 + $0x5f8] sm:$0xff]
          %v3429 = vld [vmem:[#allocation3 + $0x600] sm:$0xff]
          %v3430 = vld [vmem:[#allocation3 + $0x608] sm:$0xff]
          %v3431 = vld [vmem:[#allocation3 + $0x610] sm:$0xff]
          %v3432 = vld [vmem:[#allocation3 + $0x618] sm:$0xff]
          %v3433 = vld [vmem:[#allocation3 + $0x620] sm:$0xff]
          %v3434 = vld [vmem:[#allocation3 + $0x628] sm:$0xff]
          %v3435 = vld [vmem:[#allocation3 + $0x630] sm:$0xff]
          %v3436 = vld [vmem:[#allocation3 + $0x638] sm:$0xff]
          %v3437 = vld [vmem:[#allocation3 + $0x640] sm:$0xff]
          %v3438 = vld [vmem:[#allocation3 + $0x648] sm:$0xff]
          %v3439 = vld [vmem:[#allocation3 + $0x650] sm:$0xff]
          %v3440 = vld [vmem:[#allocation3 + $0x658] sm:$0xff]
          %v3441 = vld [vmem:[#allocation3 + $0x660] sm:$0xff]
          %v3442 = vld [vmem:[#allocation3 + $0x668] sm:$0xff]
          %v3443 = vld [vmem:[#allocation3 + $0x670] sm:$0xff]
          %v3444 = vld [vmem:[#allocation3 + $0x678] sm:$0xff]
          %v3445 = vld [vmem:[#allocation3 + $0x680] sm:$0xff]
          %v3446 = vld [vmem:[#allocation3 + $0x688] sm:$0xff]
          %v3447 = vld [vmem:[#allocation3 + $0x690] sm:$0xff]
          %v3448 = vld [vmem:[#allocation3 + $0x698] sm:$0xff]
          %v3449 = vld [vmem:[#allocation3 + $0x6a0] sm:$0xff]
          %v3450 = vld [vmem:[#allocation3 + $0x6a8] sm:$0xff]
          %v3451 = vld [vmem:[#allocation3 + $0x6b0] sm:$0xff]
          %v3452 = vld [vmem:[#allocation3 + $0x6b8] sm:$0xff]
          %v3453 = vld [vmem:[#allocation3 + $0x6c0] sm:$0xff]
          %v3454 = vld [vmem:[#allocation3 + $0x6c8] sm:$0xff]
          %v3455 = vld [vmem:[#allocation3 + $0x6d0] sm:$0xff]
          %v3456 = vld [vmem:[#allocation3 + $0x6d8] sm:$0xff]
          %v3457 = vld [vmem:[#allocation3 + $0x6e0] sm:$0xff]
          %v3458 = vld [vmem:[#allocation3 + $0x6e8] sm:$0xff]
          %v3459 = vld [vmem:[#allocation3 + $0x6f0] sm:$0xff]
          %v3460 = vld [vmem:[#allocation3 + $0x6f8] sm:$0xff]
          %v3461 = vld [vmem:[#allocation3 + $0x700] sm:$0xff]
          %v3462 = vld [vmem:[#allocation3 + $0x708] sm:$0xff]
          %v3463 = vld [vmem:[#allocation3 + $0x710] sm:$0xff]
          %v3464 = vld [vmem:[#allocation3 + $0x718] sm:$0xff]
          %v3465 = vld [vmem:[#allocation3 + $0x720] sm:$0xff]
          %v3466 = vld [vmem:[#allocation3 + $0x728] sm:$0xff]
          %v3467 = vld [vmem:[#allocation3 + $0x730] sm:$0xff]
          %v3468 = vld [vmem:[#allocation3 + $0x738] sm:$0xff]
          %v3469 = vld [vmem:[#allocation3 + $0x740] sm:$0xff]
          %v3470 = vld [vmem:[#allocation3 + $0x748] sm:$0xff]
          %v3471 = vld [vmem:[#allocation3 + $0x750] sm:$0xff]
          %v3472 = vld [vmem:[#allocation3 + $0x758] sm:$0xff]
          %v3473 = vld [vmem:[#allocation3 + $0x760] sm:$0xff]
          %v3474 = vld [vmem:[#allocation3 + $0x768] sm:$0xff]
          %v3475 = vld [vmem:[#allocation3 + $0x770] sm:$0xff]
          %v3476 = vld [vmem:[#allocation3 + $0x778] sm:$0xff]
          %v3477 = vld [vmem:[#allocation3 + $0x780] sm:$0xff]
          %v3478 = vld [vmem:[#allocation3 + $0x788] sm:$0xff]
          %v3479 = vld [vmem:[#allocation3 + $0x790] sm:$0xff]
          %v3480 = vld [vmem:[#allocation3 + $0x798] sm:$0xff]
          %v3481 = vld [vmem:[#allocation3 + $0x7a0] sm:$0xff]
          %v3482 = vld [vmem:[#allocation3 + $0x7a8] sm:$0xff]
          %v3483 = vld [vmem:[#allocation3 + $0x7b0] sm:$0xff]
          %v3484 = vld [vmem:[#allocation3 + $0x7b8] sm:$0xff]
          %v3485 = vld [vmem:[#allocation3 + $0x7c0] sm:$0xff]
          %v3486 = vld [vmem:[#allocation3 + $0x7c8] sm:$0xff]
          %v3487 = vld [vmem:[#allocation3 + $0x7d0] sm:$0xff]
          %v3488 = vld [vmem:[#allocation3 + $0x7d8] sm:$0xff]
          %v3489 = vld [vmem:[#allocation3 + $0x7e0] sm:$0xff]
          %v3490 = vld [vmem:[#allocation3 + $0x7e8] sm:$0xff]
          %v3491 = vld [vmem:[#allocation3 + $0x7f0] sm:$0xff]
          %v3492 = vld [vmem:[#allocation3 + $0x7f8] sm:$0xff]
          %v3493 = vld [vmem:[%s8] sm:$0xf]
          %v3750 = vunpack.c.l.b16 %v3237
          %v3751 = vunpack.c.h.b16 %v3237
          %v3752 = vunpack.c.l.b16 %v3238
          %v3753 = vunpack.c.h.b16 %v3238
          %v3754 = vunpack.c.l.b16 %v3239
          %v3755 = vunpack.c.h.b16 %v3239
          %v3756 = vunpack.c.l.b16 %v3240
          %v3757 = vunpack.c.h.b16 %v3240
          %v3758 = vunpack.c.l.b16 %v3241
          %v3759 = vunpack.c.h.b16 %v3241
          %v3760 = vunpack.c.l.b16 %v3242
          %v3761 = vunpack.c.h.b16 %v3242
          %v3762 = vunpack.c.l.b16 %v3243
          %v3763 = vunpack.c.h.b16 %v3243
          %v3764 = vunpack.c.l.b16 %v3244
          %v3765 = vunpack.c.h.b16 %v3244
          %v3766 = vunpack.c.l.b16 %v3245
          %v3767 = vunpack.c.h.b16 %v3245
          %v3768 = vunpack.c.l.b16 %v3246
          %v3769 = vunpack.c.h.b16 %v3246
          %v3770 = vunpack.c.l.b16 %v3247
          %v3771 = vunpack.c.h.b16 %v3247
          %v3772 = vunpack.c.l.b16 %v3248
          %v3773 = vunpack.c.h.b16 %v3248
          %v3774 = vunpack.c.l.b16 %v3249
          %v3775 = vunpack.c.h.b16 %v3249
          %v3776 = vunpack.c.l.b16 %v3250
          %v3777 = vunpack.c.h.b16 %v3250
          %v3778 = vunpack.c.l.b16 %v3251
          %v3779 = vunpack.c.h.b16 %v3251
          %v3780 = vunpack.c.l.b16 %v3252
          %v3781 = vunpack.c.h.b16 %v3252
          %v3782 = vunpack.c.l.b16 %v3253
          %v3783 = vunpack.c.h.b16 %v3253
          %v3784 = vunpack.c.l.b16 %v3254
          %v3785 = vunpack.c.h.b16 %v3254
          %v3786 = vunpack.c.l.b16 %v3255
          %v3787 = vunpack.c.h.b16 %v3255
          %v3788 = vunpack.c.l.b16 %v3256
          %v3789 = vunpack.c.h.b16 %v3256
          %v3790 = vunpack.c.l.b16 %v3257
          %v3791 = vunpack.c.h.b16 %v3257
          %v3792 = vunpack.c.l.b16 %v3258
          %v3793 = vunpack.c.h.b16 %v3258
          %v3794 = vunpack.c.l.b16 %v3259
          %v3795 = vunpack.c.h.b16 %v3259
          %v3796 = vunpack.c.l.b16 %v3260
          %v3797 = vunpack.c.h.b16 %v3260
          %v3798 = vunpack.c.l.b16 %v3261
          %v3799 = vunpack.c.h.b16 %v3261
          %v3800 = vunpack.c.l.b16 %v3262
          %v3801 = vunpack.c.h.b16 %v3262
          %v3802 = vunpack.c.l.b16 %v3263
          %v3803 = vunpack.c.h.b16 %v3263
          %v3804 = vunpack.c.l.b16 %v3264
          %v3805 = vunpack.c.h.b16 %v3264
          %v3806 = vunpack.c.l.b16 %v3265
          %v3807 = vunpack.c.h.b16 %v3265
          %v3808 = vunpack.c.l.b16 %v3266
          %v3809 = vunpack.c.h.b16 %v3266
          %v3810 = vunpack.c.l.b16 %v3267
          %v3811 = vunpack.c.h.b16 %v3267
          %v3812 = vunpack.c.l.b16 %v3268
          %v3813 = vunpack.c.h.b16 %v3268
          %v3814 = vunpack.c.l.b16 %v3269
          %v3815 = vunpack.c.h.b16 %v3269
          %v3816 = vunpack.c.l.b16 %v3270
          %v3817 = vunpack.c.h.b16 %v3270
          %v3818 = vunpack.c.l.b16 %v3271
          %v3819 = vunpack.c.h.b16 %v3271
          %v3820 = vunpack.c.l.b16 %v3272
          %v3821 = vunpack.c.h.b16 %v3272
          %v3822 = vunpack.c.l.b16 %v3273
          %v3823 = vunpack.c.h.b16 %v3273
          %v3824 = vunpack.c.l.b16 %v3274
          %v3825 = vunpack.c.h.b16 %v3274
          %v3826 = vunpack.c.l.b16 %v3275
          %v3827 = vunpack.c.h.b16 %v3275
          %v3828 = vunpack.c.l.b16 %v3276
          %v3829 = vunpack.c.h.b16 %v3276
          %v3830 = vunpack.c.l.b16 %v3277
          %v3831 = vunpack.c.h.b16 %v3277
          %v3832 = vunpack.c.l.b16 %v3278
          %v3833 = vunpack.c.h.b16 %v3278
          %v3834 = vunpack.c.l.b16 %v3279
          %v3835 = vunpack.c.h.b16 %v3279
          %v3836 = vunpack.c.l.b16 %v3280
          %v3837 = vunpack.c.h.b16 %v3280
          %v3838 = vunpack.c.l.b16 %v3281
          %v3839 = vunpack.c.h.b16 %v3281
          %v3840 = vunpack.c.l.b16 %v3282
          %v3841 = vunpack.c.h.b16 %v3282
          %v3842 = vunpack.c.l.b16 %v3283
          %v3843 = vunpack.c.h.b16 %v3283
          %v3844 = vunpack.c.l.b16 %v3284
          %v3845 = vunpack.c.h.b16 %v3284
          %v3846 = vunpack.c.l.b16 %v3285
          %v3847 = vunpack.c.h.b16 %v3285
          %v3848 = vunpack.c.l.b16 %v3286
          %v3849 = vunpack.c.h.b16 %v3286
          %v3850 = vunpack.c.l.b16 %v3287
          %v3851 = vunpack.c.h.b16 %v3287
          %v3852 = vunpack.c.l.b16 %v3288
          %v3853 = vunpack.c.h.b16 %v3288
          %v3854 = vunpack.c.l.b16 %v3289
          %v3855 = vunpack.c.h.b16 %v3289
          %v3856 = vunpack.c.l.b16 %v3290
          %v3857 = vunpack.c.h.b16 %v3290
          %v3858 = vunpack.c.l.b16 %v3291
          %v3859 = vunpack.c.h.b16 %v3291
          %v3860 = vunpack.c.l.b16 %v3292
          %v3861 = vunpack.c.h.b16 %v3292
          %v3862 = vunpack.c.l.b16 %v3293
          %v3863 = vunpack.c.h.b16 %v3293
          %v3864 = vunpack.c.l.b16 %v3294
          %v3865 = vunpack.c.h.b16 %v3294
          %v3866 = vunpack.c.l.b16 %v3295
          %v3867 = vunpack.c.h.b16 %v3295
          %v3868 = vunpack.c.l.b16 %v3296
          %v3869 = vunpack.c.h.b16 %v3296
          %v3870 = vunpack.c.l.b16 %v3297
          %v3871 = vunpack.c.h.b16 %v3297
          %v3872 = vunpack.c.l.b16 %v3298
          %v3873 = vunpack.c.h.b16 %v3298
          %v3874 = vunpack.c.l.b16 %v3299
          %v3875 = vunpack.c.h.b16 %v3299
          %v3876 = vunpack.c.l.b16 %v3300
          %v3877 = vunpack.c.h.b16 %v3300
          %v3878 = vunpack.c.l.b16 %v3301
          %v3879 = vunpack.c.h.b16 %v3301
          %v3880 = vunpack.c.l.b16 %v3302
          %v3881 = vunpack.c.h.b16 %v3302
          %v3882 = vunpack.c.l.b16 %v3303
          %v3883 = vunpack.c.h.b16 %v3303
          %v3884 = vunpack.c.l.b16 %v3304
          %v3885 = vunpack.c.h.b16 %v3304
          %v3886 = vunpack.c.l.b16 %v3305
          %v3887 = vunpack.c.h.b16 %v3305
          %v3888 = vunpack.c.l.b16 %v3306
          %v3889 = vunpack.c.h.b16 %v3306
          %v3890 = vunpack.c.l.b16 %v3307
          %v3891 = vunpack.c.h.b16 %v3307
          %v3892 = vunpack.c.l.b16 %v3308
          %v3893 = vunpack.c.h.b16 %v3308
          %v3894 = vunpack.c.l.b16 %v3309
          %v3895 = vunpack.c.h.b16 %v3309
          %v3896 = vunpack.c.l.b16 %v3310
          %v3897 = vunpack.c.h.b16 %v3310
          %v3898 = vunpack.c.l.b16 %v3311
          %v3899 = vunpack.c.h.b16 %v3311
          %v3900 = vunpack.c.l.b16 %v3312
          %v3901 = vunpack.c.h.b16 %v3312
          %v3902 = vunpack.c.l.b16 %v3313
          %v3903 = vunpack.c.h.b16 %v3313
          %v3904 = vunpack.c.l.b16 %v3314
          %v3905 = vunpack.c.h.b16 %v3314
          %v3906 = vunpack.c.l.b16 %v3315
          %v3907 = vunpack.c.h.b16 %v3315
          %v3908 = vunpack.c.l.b16 %v3316
          %v3909 = vunpack.c.h.b16 %v3316
          %v3910 = vunpack.c.l.b16 %v3317
          %v3911 = vunpack.c.h.b16 %v3317
          %v3912 = vunpack.c.l.b16 %v3318
          %v3913 = vunpack.c.h.b16 %v3318
          %v3914 = vunpack.c.l.b16 %v3319
          %v3915 = vunpack.c.h.b16 %v3319
          %v3916 = vunpack.c.l.b16 %v3320
          %v3917 = vunpack.c.h.b16 %v3320
          %v3918 = vunpack.c.l.b16 %v3321
          %v3919 = vunpack.c.h.b16 %v3321
          %v3920 = vunpack.c.l.b16 %v3322
          %v3921 = vunpack.c.h.b16 %v3322
          %v3922 = vunpack.c.l.b16 %v3323
          %v3923 = vunpack.c.h.b16 %v3323
          %v3924 = vunpack.c.l.b16 %v3324
          %v3925 = vunpack.c.h.b16 %v3324
          %v3926 = vunpack.c.l.b16 %v3325
          %v3927 = vunpack.c.h.b16 %v3325
          %v3928 = vunpack.c.l.b16 %v3326
          %v3929 = vunpack.c.h.b16 %v3326
          %v3930 = vunpack.c.l.b16 %v3327
          %v3931 = vunpack.c.h.b16 %v3327
          %v3932 = vunpack.c.l.b16 %v3328
          %v3933 = vunpack.c.h.b16 %v3328
          %v3934 = vunpack.c.l.b16 %v3329
          %v3935 = vunpack.c.h.b16 %v3329
          %v3936 = vunpack.c.l.b16 %v3330
          %v3937 = vunpack.c.h.b16 %v3330
          %v3938 = vunpack.c.l.b16 %v3331
          %v3939 = vunpack.c.h.b16 %v3331
          %v3940 = vunpack.c.l.b16 %v3332
          %v3941 = vunpack.c.h.b16 %v3332
          %v3942 = vunpack.c.l.b16 %v3333
          %v3943 = vunpack.c.h.b16 %v3333
          %v3944 = vunpack.c.l.b16 %v3334
          %v3945 = vunpack.c.h.b16 %v3334
          %v3946 = vunpack.c.l.b16 %v3335
          %v3947 = vunpack.c.h.b16 %v3335
          %v3948 = vunpack.c.l.b16 %v3336
          %v3949 = vunpack.c.h.b16 %v3336
          %v3950 = vunpack.c.l.b16 %v3337
          %v3951 = vunpack.c.h.b16 %v3337
          %v3952 = vunpack.c.l.b16 %v3338
          %v3953 = vunpack.c.h.b16 %v3338
          %v3954 = vunpack.c.l.b16 %v3339
          %v3955 = vunpack.c.h.b16 %v3339
          %v3956 = vunpack.c.l.b16 %v3340
          %v3957 = vunpack.c.h.b16 %v3340
          %v3958 = vunpack.c.l.b16 %v3341
          %v3959 = vunpack.c.h.b16 %v3341
          %v3960 = vunpack.c.l.b16 %v3342
          %v3961 = vunpack.c.h.b16 %v3342
          %v3962 = vunpack.c.l.b16 %v3343
          %v3963 = vunpack.c.h.b16 %v3343
          %v3964 = vunpack.c.l.b16 %v3344
          %v3965 = vunpack.c.h.b16 %v3344
          %v3966 = vunpack.c.l.b16 %v3345
          %v3967 = vunpack.c.h.b16 %v3345
          %v3968 = vunpack.c.l.b16 %v3346
          %v3969 = vunpack.c.h.b16 %v3346
          %v3970 = vunpack.c.l.b16 %v3347
          %v3971 = vunpack.c.h.b16 %v3347
          %v3972 = vunpack.c.l.b16 %v3348
          %v3973 = vunpack.c.h.b16 %v3348
          %v3974 = vunpack.c.l.b16 %v3349
          %v3975 = vunpack.c.h.b16 %v3349
          %v3976 = vunpack.c.l.b16 %v3350
          %v3977 = vunpack.c.h.b16 %v3350
          %v3978 = vunpack.c.l.b16 %v3351
          %v3979 = vunpack.c.h.b16 %v3351
          %v3980 = vunpack.c.l.b16 %v3352
          %v3981 = vunpack.c.h.b16 %v3352
          %v3982 = vunpack.c.l.b16 %v3353
          %v3983 = vunpack.c.h.b16 %v3353
          %v3984 = vunpack.c.l.b16 %v3354
          %v3985 = vunpack.c.h.b16 %v3354
          %v3986 = vunpack.c.l.b16 %v3355
          %v3987 = vunpack.c.h.b16 %v3355
          %v3988 = vunpack.c.l.b16 %v3356
          %v3989 = vunpack.c.h.b16 %v3356
          %v3990 = vunpack.c.l.b16 %v3357
          %v3991 = vunpack.c.h.b16 %v3357
          %v3992 = vunpack.c.l.b16 %v3358
          %v3993 = vunpack.c.h.b16 %v3358
          %v3994 = vunpack.c.l.b16 %v3359
          %v3995 = vunpack.c.h.b16 %v3359
          %v3996 = vunpack.c.l.b16 %v3360
          %v3997 = vunpack.c.h.b16 %v3360
          %v3998 = vunpack.c.l.b16 %v3361
          %v3999 = vunpack.c.h.b16 %v3361
          %v4000 = vunpack.c.l.b16 %v3362
          %v4001 = vunpack.c.h.b16 %v3362
          %v4002 = vunpack.c.l.b16 %v3363
          %v4003 = vunpack.c.h.b16 %v3363
          %v4004 = vunpack.c.l.b16 %v3364
          %v4005 = vunpack.c.h.b16 %v3364
          %v4006 = vunpack.c.l.b16 %v3365
          %v4007 = vunpack.c.h.b16 %v3365
          %v4008 = vunpack.c.l.b16 %v3366
          %v4009 = vunpack.c.h.b16 %v3366
          %v4010 = vunpack.c.l.b16 %v3367
          %v4011 = vunpack.c.h.b16 %v3367
          %v4012 = vunpack.c.l.b16 %v3368
          %v4013 = vunpack.c.h.b16 %v3368
          %v4014 = vunpack.c.l.b16 %v3369
          %v4015 = vunpack.c.h.b16 %v3369
          %v4016 = vunpack.c.l.b16 %v3370
          %v4017 = vunpack.c.h.b16 %v3370
          %v4018 = vunpack.c.l.b16 %v3371
          %v4019 = vunpack.c.h.b16 %v3371
          %v4020 = vunpack.c.l.b16 %v3372
          %v4021 = vunpack.c.h.b16 %v3372
          %v4022 = vunpack.c.l.b16 %v3373
          %v4023 = vunpack.c.h.b16 %v3373
          %v4024 = vunpack.c.l.b16 %v3374
          %v4025 = vunpack.c.h.b16 %v3374
          %v4026 = vunpack.c.l.b16 %v3375
          %v4027 = vunpack.c.h.b16 %v3375
          %v4028 = vunpack.c.l.b16 %v3376
          %v4029 = vunpack.c.h.b16 %v3376
          %v4030 = vunpack.c.l.b16 %v3377
          %v4031 = vunpack.c.h.b16 %v3377
          %v4032 = vunpack.c.l.b16 %v3378
          %v4033 = vunpack.c.h.b16 %v3378
          %v4034 = vunpack.c.l.b16 %v3379
          %v4035 = vunpack.c.h.b16 %v3379
          %v4036 = vunpack.c.l.b16 %v3380
          %v4037 = vunpack.c.h.b16 %v3380
          %v4038 = vunpack.c.l.b16 %v3381
          %v4039 = vunpack.c.h.b16 %v3381
          %v4040 = vunpack.c.l.b16 %v3382
          %v4041 = vunpack.c.h.b16 %v3382
          %v4042 = vunpack.c.l.b16 %v3383
          %v4043 = vunpack.c.h.b16 %v3383
          %v4044 = vunpack.c.l.b16 %v3384
          %v4045 = vunpack.c.h.b16 %v3384
          %v4046 = vunpack.c.l.b16 %v3385
          %v4047 = vunpack.c.h.b16 %v3385
          %v4048 = vunpack.c.l.b16 %v3386
          %v4049 = vunpack.c.h.b16 %v3386
          %v4050 = vunpack.c.l.b16 %v3387
          %v4051 = vunpack.c.h.b16 %v3387
          %v4052 = vunpack.c.l.b16 %v3388
          %v4053 = vunpack.c.h.b16 %v3388
          %v4054 = vunpack.c.l.b16 %v3389
          %v4055 = vunpack.c.h.b16 %v3389
          %v4056 = vunpack.c.l.b16 %v3390
          %v4057 = vunpack.c.h.b16 %v3390
          %v4058 = vunpack.c.l.b16 %v3391
          %v4059 = vunpack.c.h.b16 %v3391
          %v4060 = vunpack.c.l.b16 %v3392
          %v4061 = vunpack.c.h.b16 %v3392
          %v4062 = vunpack.c.l.b16 %v3393
          %v4063 = vunpack.c.h.b16 %v3393
          %v4064 = vunpack.c.l.b16 %v3394
          %v4065 = vunpack.c.h.b16 %v3394
          %v4066 = vunpack.c.l.b16 %v3395
          %v4067 = vunpack.c.h.b16 %v3395
          %v4068 = vunpack.c.l.b16 %v3396
          %v4069 = vunpack.c.h.b16 %v3396
          %v4070 = vunpack.c.l.b16 %v3397
          %v4071 = vunpack.c.h.b16 %v3397
          %v4072 = vunpack.c.l.b16 %v3398
          %v4073 = vunpack.c.h.b16 %v3398
          %v4074 = vunpack.c.l.b16 %v3399
          %v4075 = vunpack.c.h.b16 %v3399
          %v4076 = vunpack.c.l.b16 %v3400
          %v4077 = vunpack.c.h.b16 %v3400
          %v4078 = vunpack.c.l.b16 %v3401
          %v4079 = vunpack.c.h.b16 %v3401
          %v4080 = vunpack.c.l.b16 %v3402
          %v4081 = vunpack.c.h.b16 %v3402
          %v4082 = vunpack.c.l.b16 %v3403
          %v4083 = vunpack.c.h.b16 %v3403
          %v4084 = vunpack.c.l.b16 %v3404
          %v4085 = vunpack.c.h.b16 %v3404
          %v4086 = vunpack.c.l.b16 %v3405
          %v4087 = vunpack.c.h.b16 %v3405
          %v4088 = vunpack.c.l.b16 %v3406
          %v4089 = vunpack.c.h.b16 %v3406
          %v4090 = vunpack.c.l.b16 %v3407
          %v4091 = vunpack.c.h.b16 %v3407
          %v4092 = vunpack.c.l.b16 %v3408
          %v4093 = vunpack.c.h.b16 %v3408
          %v4094 = vunpack.c.l.b16 %v3409
          %v4095 = vunpack.c.h.b16 %v3409
          %v4096 = vunpack.c.l.b16 %v3410
          %v4097 = vunpack.c.h.b16 %v3410
          %v4098 = vunpack.c.l.b16 %v3411
          %v4099 = vunpack.c.h.b16 %v3411
          %v4100 = vunpack.c.l.b16 %v3412
          %v4101 = vunpack.c.h.b16 %v3412
          %v4102 = vunpack.c.l.b16 %v3413
          %v4103 = vunpack.c.h.b16 %v3413
          %v4104 = vunpack.c.l.b16 %v3414
          %v4105 = vunpack.c.h.b16 %v3414
          %v4106 = vunpack.c.l.b16 %v3415
          %v4107 = vunpack.c.h.b16 %v3415
          %v4108 = vunpack.c.l.b16 %v3416
          %v4109 = vunpack.c.h.b16 %v3416
          %v4110 = vunpack.c.l.b16 %v3417
          %v4111 = vunpack.c.h.b16 %v3417
          %v4112 = vunpack.c.l.b16 %v3418
          %v4113 = vunpack.c.h.b16 %v3418
          %v4114 = vunpack.c.l.b16 %v3419
          %v4115 = vunpack.c.h.b16 %v3419
          %v4116 = vunpack.c.l.b16 %v3420
          %v4117 = vunpack.c.h.b16 %v3420
          %v4118 = vunpack.c.l.b16 %v3421
          %v4119 = vunpack.c.h.b16 %v3421
          %v4120 = vunpack.c.l.b16 %v3422
          %v4121 = vunpack.c.h.b16 %v3422
          %v4122 = vunpack.c.l.b16 %v3423
          %v4123 = vunpack.c.h.b16 %v3423
          %v4124 = vunpack.c.l.b16 %v3424
          %v4125 = vunpack.c.h.b16 %v3424
          %v4126 = vunpack.c.l.b16 %v3425
          %v4127 = vunpack.c.h.b16 %v3425
          %v4128 = vunpack.c.l.b16 %v3426
          %v4129 = vunpack.c.h.b16 %v3426
          %v4130 = vunpack.c.l.b16 %v3427
          %v4131 = vunpack.c.h.b16 %v3427
          %v4132 = vunpack.c.l.b16 %v3428
          %v4133 = vunpack.c.h.b16 %v3428
          %v4134 = vunpack.c.l.b16 %v3429
          %v4135 = vunpack.c.h.b16 %v3429
          %v4136 = vunpack.c.l.b16 %v3430
          %v4137 = vunpack.c.h.b16 %v3430
          %v4138 = vunpack.c.l.b16 %v3431
          %v4139 = vunpack.c.h.b16 %v3431
          %v4140 = vunpack.c.l.b16 %v3432
          %v4141 = vunpack.c.h.b16 %v3432
          %v4142 = vunpack.c.l.b16 %v3433
          %v4143 = vunpack.c.h.b16 %v3433
          %v4144 = vunpack.c.l.b16 %v3434
          %v4145 = vunpack.c.h.b16 %v3434
          %v4146 = vunpack.c.l.b16 %v3435
          %v4147 = vunpack.c.h.b16 %v3435
          %v4148 = vunpack.c.l.b16 %v3436
          %v4149 = vunpack.c.h.b16 %v3436
          %v4150 = vunpack.c.l.b16 %v3437
          %v4151 = vunpack.c.h.b16 %v3437
          %v4152 = vunpack.c.l.b16 %v3438
          %v4153 = vunpack.c.h.b16 %v3438
          %v4154 = vunpack.c.l.b16 %v3439
          %v4155 = vunpack.c.h.b16 %v3439
          %v4156 = vunpack.c.l.b16 %v3440
          %v4157 = vunpack.c.h.b16 %v3440
          %v4158 = vunpack.c.l.b16 %v3441
          %v4159 = vunpack.c.h.b16 %v3441
          %v4160 = vunpack.c.l.b16 %v3442
          %v4161 = vunpack.c.h.b16 %v3442
          %v4162 = vunpack.c.l.b16 %v3443
          %v4163 = vunpack.c.h.b16 %v3443
          %v4164 = vunpack.c.l.b16 %v3444
          %v4165 = vunpack.c.h.b16 %v3444
          %v4166 = vunpack.c.l.b16 %v3445
          %v4167 = vunpack.c.h.b16 %v3445
          %v4168 = vunpack.c.l.b16 %v3446
          %v4169 = vunpack.c.h.b16 %v3446
          %v4170 = vunpack.c.l.b16 %v3447
          %v4171 = vunpack.c.h.b16 %v3447
          %v4172 = vunpack.c.l.b16 %v3448
          %v4173 = vunpack.c.h.b16 %v3448
          %v4174 = vunpack.c.l.b16 %v3449
          %v4175 = vunpack.c.h.b16 %v3449
          %v4176 = vunpack.c.l.b16 %v3450
          %v4177 = vunpack.c.h.b16 %v3450
          %v4178 = vunpack.c.l.b16 %v3451
          %v4179 = vunpack.c.h.b16 %v3451
          %v4180 = vunpack.c.l.b16 %v3452
          %v4181 = vunpack.c.h.b16 %v3452
          %v4182 = vunpack.c.l.b16 %v3453
          %v4183 = vunpack.c.h.b16 %v3453
          %v4184 = vunpack.c.l.b16 %v3454
          %v4185 = vunpack.c.h.b16 %v3454
          %v4186 = vunpack.c.l.b16 %v3455
          %v4187 = vunpack.c.h.b16 %v3455
          %v4188 = vunpack.c.l.b16 %v3456
          %v4189 = vunpack.c.h.b16 %v3456
          %v4190 = vunpack.c.l.b16 %v3457
          %v4191 = vunpack.c.h.b16 %v3457
          %v4192 = vunpack.c.l.b16 %v3458
          %v4193 = vunpack.c.h.b16 %v3458
          %v4194 = vunpack.c.l.b16 %v3459
          %v4195 = vunpack.c.h.b16 %v3459
          %v4196 = vunpack.c.l.b16 %v3460
          %v4197 = vunpack.c.h.b16 %v3460
          %v4198 = vunpack.c.l.b16 %v3461
          %v4199 = vunpack.c.h.b16 %v3461
          %v4200 = vunpack.c.l.b16 %v3462
          %v4201 = vunpack.c.h.b16 %v3462
          %v4202 = vunpack.c.l.b16 %v3463
          %v4203 = vunpack.c.h.b16 %v3463
          %v4204 = vunpack.c.l.b16 %v3464
          %v4205 = vunpack.c.h.b16 %v3464
          %v4206 = vunpack.c.l.b16 %v3465
          %v4207 = vunpack.c.h.b16 %v3465
          %v4208 = vunpack.c.l.b16 %v3466
          %v4209 = vunpack.c.h.b16 %v3466
          %v4210 = vunpack.c.l.b16 %v3467
          %v4211 = vunpack.c.h.b16 %v3467
          %v4212 = vunpack.c.l.b16 %v3468
          %v4213 = vunpack.c.h.b16 %v3468
          %v4214 = vunpack.c.l.b16 %v3469
          %v4215 = vunpack.c.h.b16 %v3469
          %v4216 = vunpack.c.l.b16 %v3470
          %v4217 = vunpack.c.h.b16 %v3470
          %v4218 = vunpack.c.l.b16 %v3471
          %v4219 = vunpack.c.h.b16 %v3471
          %v4220 = vunpack.c.l.b16 %v3472
          %v4221 = vunpack.c.h.b16 %v3472
          %v4222 = vunpack.c.l.b16 %v3473
          %v4223 = vunpack.c.h.b16 %v3473
          %v4224 = vunpack.c.l.b16 %v3474
          %v4225 = vunpack.c.h.b16 %v3474
          %v4226 = vunpack.c.l.b16 %v3475
          %v4227 = vunpack.c.h.b16 %v3475
          %v4228 = vunpack.c.l.b16 %v3476
          %v4229 = vunpack.c.h.b16 %v3476
          %v4230 = vunpack.c.l.b16 %v3477
          %v4231 = vunpack.c.h.b16 %v3477
          %v4232 = vunpack.c.l.b16 %v3478
          %v4233 = vunpack.c.h.b16 %v3478
          %v4234 = vunpack.c.l.b16 %v3479
          %v4235 = vunpack.c.h.b16 %v3479
          %v4236 = vunpack.c.l.b16 %v3480
          %v4237 = vunpack.c.h.b16 %v3480
          %v4238 = vunpack.c.l.b16 %v3481
          %v4239 = vunpack.c.h.b16 %v3481
          %v4240 = vunpack.c.l.b16 %v3482
          %v4241 = vunpack.c.h.b16 %v3482
          %v4242 = vunpack.c.l.b16 %v3483
          %v4243 = vunpack.c.h.b16 %v3483
          %v4244 = vunpack.c.l.b16 %v3484
          %v4245 = vunpack.c.h.b16 %v3484
          %v4246 = vunpack.c.l.b16 %v3485
          %v4247 = vunpack.c.h.b16 %v3485
          %v4248 = vunpack.c.l.b16 %v3486
          %v4249 = vunpack.c.h.b16 %v3486
          %v4250 = vunpack.c.l.b16 %v3487
          %v4251 = vunpack.c.h.b16 %v3487
          %v4252 = vunpack.c.l.b16 %v3488
          %v4253 = vunpack.c.h.b16 %v3488
          %v4254 = vunpack.c.l.b16 %v3489
          %v4255 = vunpack.c.h.b16 %v3489
          %v4256 = vunpack.c.l.b16 %v3490
          %v4257 = vunpack.c.h.b16 %v3490
          %v4258 = vunpack.c.l.b16 %v3491
          %v4259 = vunpack.c.h.b16 %v3491
          %v4260 = vunpack.c.l.b16 %v3492
          %v4261 = vunpack.c.h.b16 %v3492
          %v4262 = vpack.c.b16 %v3754, %v3750
          %v4263 = vpack.c.b16 %v3755, %v3751
          %v4264 = vpack.c.b16 %v3756, %v3752
          %v4265 = vpack.c.b16 %v3757, %v3753
          %v4266 = vpack.c.b16 %v3762, %v3758
          %v4267 = vpack.c.b16 %v3763, %v3759
          %v4268 = vpack.c.b16 %v3764, %v3760
          %v4269 = vpack.c.b16 %v3765, %v3761
          %v4270 = vpack.c.b16 %v3770, %v3766
          %v4271 = vpack.c.b16 %v3771, %v3767
          %v4272 = vpack.c.b16 %v3772, %v3768
          %v4273 = vpack.c.b16 %v3773, %v3769
          %v4274 = vpack.c.b16 %v3778, %v3774
          %v4275 = vpack.c.b16 %v3779, %v3775
          %v4276 = vpack.c.b16 %v3780, %v3776
          %v4277 = vpack.c.b16 %v3781, %v3777
          %v4278 = vpack.c.b16 %v3786, %v3782
          %v4279 = vpack.c.b16 %v3787, %v3783
          %v4280 = vpack.c.b16 %v3788, %v3784
          %v4281 = vpack.c.b16 %v3789, %v3785
          %v4282 = vpack.c.b16 %v3794, %v3790
          %v4283 = vpack.c.b16 %v3795, %v3791
          %v4284 = vpack.c.b16 %v3796, %v3792
          %v4285 = vpack.c.b16 %v3797, %v3793
          %v4286 = vpack.c.b16 %v3802, %v3798
          %v4287 = vpack.c.b16 %v3803, %v3799
          %v4288 = vpack.c.b16 %v3804, %v3800
          %v4289 = vpack.c.b16 %v3805, %v3801
          %v4290 = vpack.c.b16 %v3810, %v3806
          %v4291 = vpack.c.b16 %v3811, %v3807
          %v4292 = vpack.c.b16 %v3812, %v3808
          %v4293 = vpack.c.b16 %v3813, %v3809
          %v4294 = vpack.c.b16 %v3818, %v3814
          %v4295 = vpack.c.b16 %v3819, %v3815
          %v4296 = vpack.c.b16 %v3820, %v3816
          %v4297 = vpack.c.b16 %v3821, %v3817
          %v4298 = vpack.c.b16 %v3826, %v3822
          %v4299 = vpack.c.b16 %v3827, %v3823
          %v4300 = vpack.c.b16 %v3828, %v3824
          %v4301 = vpack.c.b16 %v3829, %v3825
          %v4302 = vpack.c.b16 %v3834, %v3830
          %v4303 = vpack.c.b16 %v3835, %v3831
          %v4304 = vpack.c.b16 %v3836, %v3832
          %v4305 = vpack.c.b16 %v3837, %v3833
          %v4306 = vpack.c.b16 %v3842, %v3838
          %v4307 = vpack.c.b16 %v3843, %v3839
          %v4308 = vpack.c.b16 %v3844, %v3840
          %v4309 = vpack.c.b16 %v3845, %v3841
          %v4310 = vpack.c.b16 %v3850, %v3846
          %v4311 = vpack.c.b16 %v3851, %v3847
          %v4312 = vpack.c.b16 %v3852, %v3848
          %v4313 = vpack.c.b16 %v3853, %v3849
          %v4314 = vpack.c.b16 %v3858, %v3854
          %v4315 = vpack.c.b16 %v3859, %v3855
          %v4316 = vpack.c.b16 %v3860, %v3856
          %v4317 = vpack.c.b16 %v3861, %v3857
          %v4318 = vpack.c.b16 %v3866, %v3862
          %v4319 = vpack.c.b16 %v3867, %v3863
          %v4320 = vpack.c.b16 %v3868, %v3864
          %v4321 = vpack.c.b16 %v3869, %v3865
          %v4322 = vpack.c.b16 %v3874, %v3870
          %v4323 = vpack.c.b16 %v3875, %v3871
          %v4324 = vpack.c.b16 %v3876, %v3872
          %v4325 = vpack.c.b16 %v3877, %v3873
          %v4326 = vpack.c.b16 %v3882, %v3878
          %v4327 = vpack.c.b16 %v3883, %v3879
          %v4328 = vpack.c.b16 %v3884, %v3880
          %v4329 = vpack.c.b16 %v3885, %v3881
          %v4330 = vpack.c.b16 %v3890, %v3886
          %v4331 = vpack.c.b16 %v3891, %v3887
          %v4332 = vpack.c.b16 %v3892, %v3888
          %v4333 = vpack.c.b16 %v3893, %v3889
          %v4334 = vpack.c.b16 %v3898, %v3894
          %v4335 = vpack.c.b16 %v3899, %v3895
          %v4336 = vpack.c.b16 %v3900, %v3896
          %v4337 = vpack.c.b16 %v3901, %v3897
          %v4338 = vpack.c.b16 %v3906, %v3902
          %v4339 = vpack.c.b16 %v3907, %v3903
          %v4340 = vpack.c.b16 %v3908, %v3904
          %v4341 = vpack.c.b16 %v3909, %v3905
          %v4342 = vpack.c.b16 %v3914, %v3910
          %v4343 = vpack.c.b16 %v3915, %v3911
          %v4344 = vpack.c.b16 %v3916, %v3912
          %v4345 = vpack.c.b16 %v3917, %v3913
          %v4346 = vpack.c.b16 %v3922, %v3918
          %v4347 = vpack.c.b16 %v3923, %v3919
          %v4348 = vpack.c.b16 %v3924, %v3920
          %v4349 = vpack.c.b16 %v3925, %v3921
          %v4350 = vpack.c.b16 %v3930, %v3926
          %v4351 = vpack.c.b16 %v3931, %v3927
          %v4352 = vpack.c.b16 %v3932, %v3928
          %v4353 = vpack.c.b16 %v3933, %v3929
          %v4354 = vpack.c.b16 %v3938, %v3934
          %v4355 = vpack.c.b16 %v3939, %v3935
          %v4356 = vpack.c.b16 %v3940, %v3936
          %v4357 = vpack.c.b16 %v3941, %v3937
          %v4358 = vpack.c.b16 %v3946, %v3942
          %v4359 = vpack.c.b16 %v3947, %v3943
          %v4360 = vpack.c.b16 %v3948, %v3944
          %v4361 = vpack.c.b16 %v3949, %v3945
          %v4362 = vpack.c.b16 %v3954, %v3950
          %v4363 = vpack.c.b16 %v3955, %v3951
          %v4364 = vpack.c.b16 %v3956, %v3952
          %v4365 = vpack.c.b16 %v3957, %v3953
          %v4366 = vpack.c.b16 %v3962, %v3958
          %v4367 = vpack.c.b16 %v3963, %v3959
          %v4368 = vpack.c.b16 %v3964, %v3960
          %v4369 = vpack.c.b16 %v3965, %v3961
          %v4370 = vpack.c.b16 %v3970, %v3966
          %v4371 = vpack.c.b16 %v3971, %v3967
          %v4372 = vpack.c.b16 %v3972, %v3968
          %v4373 = vpack.c.b16 %v3973, %v3969
          %v4374 = vpack.c.b16 %v3978, %v3974
          %v4375 = vpack.c.b16 %v3979, %v3975
          %v4376 = vpack.c.b16 %v3980, %v3976
          %v4377 = vpack.c.b16 %v3981, %v3977
          %v4378 = vpack.c.b16 %v3986, %v3982
          %v4379 = vpack.c.b16 %v3987, %v3983
          %v4380 = vpack.c.b16 %v3988, %v3984
          %v4381 = vpack.c.b16 %v3989, %v3985
          %v4382 = vpack.c.b16 %v3994, %v3990
          %v4383 = vpack.c.b16 %v3995, %v3991
          %v4384 = vpack.c.b16 %v3996, %v3992
          %v4385 = vpack.c.b16 %v3997, %v3993
          %v4386 = vpack.c.b16 %v4002, %v3998
          %v4387 = vpack.c.b16 %v4003, %v3999
          %v4388 = vpack.c.b16 %v4004, %v4000
          %v4389 = vpack.c.b16 %v4005, %v4001
          %v4390 = vpack.c.b16 %v4010, %v4006
          %v4391 = vpack.c.b16 %v4011, %v4007
          %v4392 = vpack.c.b16 %v4012, %v4008
          %v4393 = vpack.c.b16 %v4013, %v4009
          %v4394 = vpack.c.b16 %v4018, %v4014
          %v4395 = vpack.c.b16 %v4019, %v4015
          %v4396 = vpack.c.b16 %v4020, %v4016
          %v4397 = vpack.c.b16 %v4021, %v4017
          %v4398 = vpack.c.b16 %v4026, %v4022
          %v4399 = vpack.c.b16 %v4027, %v4023
          %v4400 = vpack.c.b16 %v4028, %v4024
          %v4401 = vpack.c.b16 %v4029, %v4025
          %v4402 = vpack.c.b16 %v4034, %v4030
          %v4403 = vpack.c.b16 %v4035, %v4031
          %v4404 = vpack.c.b16 %v4036, %v4032
          %v4405 = vpack.c.b16 %v4037, %v4033
          %v4406 = vpack.c.b16 %v4042, %v4038
          %v4407 = vpack.c.b16 %v4043, %v4039
          %v4408 = vpack.c.b16 %v4044, %v4040
          %v4409 = vpack.c.b16 %v4045, %v4041
          %v4410 = vpack.c.b16 %v4050, %v4046
          %v4411 = vpack.c.b16 %v4051, %v4047
          %v4412 = vpack.c.b16 %v4052, %v4048
          %v4413 = vpack.c.b16 %v4053, %v4049
          %v4414 = vpack.c.b16 %v4058, %v4054
          %v4415 = vpack.c.b16 %v4059, %v4055
          %v4416 = vpack.c.b16 %v4060, %v4056
          %v4417 = vpack.c.b16 %v4061, %v4057
          %v4418 = vpack.c.b16 %v4066, %v4062
          %v4419 = vpack.c.b16 %v4067, %v4063
          %v4420 = vpack.c.b16 %v4068, %v4064
          %v4421 = vpack.c.b16 %v4069, %v4065
          %v4422 = vpack.c.b16 %v4074, %v4070
          %v4423 = vpack.c.b16 %v4075, %v4071
          %v4424 = vpack.c.b16 %v4076, %v4072
          %v4425 = vpack.c.b16 %v4077, %v4073
          %v4426 = vpack.c.b16 %v4082, %v4078
          %v4427 = vpack.c.b16 %v4083, %v4079
          %v4428 = vpack.c.b16 %v4084, %v4080
          %v4429 = vpack.c.b16 %v4085, %v4081
          %v4430 = vpack.c.b16 %v4090, %v4086
          %v4431 = vpack.c.b16 %v4091, %v4087
          %v4432 = vpack.c.b16 %v4092, %v4088
          %v4433 = vpack.c.b16 %v4093, %v4089
          %v4434 = vpack.c.b16 %v4098, %v4094
          %v4435 = vpack.c.b16 %v4099, %v4095
          %v4436 = vpack.c.b16 %v4100, %v4096
          %v4437 = vpack.c.b16 %v4101, %v4097
          %v4438 = vpack.c.b16 %v4106, %v4102
          %v4439 = vpack.c.b16 %v4107, %v4103
          %v4440 = vpack.c.b16 %v4108, %v4104
          %v4441 = vpack.c.b16 %v4109, %v4105
          %v4442 = vpack.c.b16 %v4114, %v4110
          %v4443 = vpack.c.b16 %v4115, %v4111
          %v4444 = vpack.c.b16 %v4116, %v4112
          %v4445 = vpack.c.b16 %v4117, %v4113
          %v4446 = vpack.c.b16 %v4122, %v4118
          %v4447 = vpack.c.b16 %v4123, %v4119
          %v4448 = vpack.c.b16 %v4124, %v4120
          %v4449 = vpack.c.b16 %v4125, %v4121
          %v4450 = vpack.c.b16 %v4130, %v4126
          %v4451 = vpack.c.b16 %v4131, %v4127
          %v4452 = vpack.c.b16 %v4132, %v4128
          %v4453 = vpack.c.b16 %v4133, %v4129
          %v4454 = vpack.c.b16 %v4138, %v4134
          %v4455 = vpack.c.b16 %v4139, %v4135
          %v4456 = vpack.c.b16 %v4140, %v4136
          %v4457 = vpack.c.b16 %v4141, %v4137
          %v4458 = vpack.c.b16 %v4146, %v4142
          %v4459 = vpack.c.b16 %v4147, %v4143
          %v4460 = vpack.c.b16 %v4148, %v4144
          %v4461 = vpack.c.b16 %v4149, %v4145
          %v4462 = vpack.c.b16 %v4154, %v4150
          %v4463 = vpack.c.b16 %v4155, %v4151
          %v4464 = vpack.c.b16 %v4156, %v4152
          %v4465 = vpack.c.b16 %v4157, %v4153
          %v4466 = vpack.c.b16 %v4162, %v4158
          %v4467 = vpack.c.b16 %v4163, %v4159
          %v4468 = vpack.c.b16 %v4164, %v4160
          %v4469 = vpack.c.b16 %v4165, %v4161
          %v4470 = vpack.c.b16 %v4170, %v4166
          %v4471 = vpack.c.b16 %v4171, %v4167
          %v4472 = vpack.c.b16 %v4172, %v4168
          %v4473 = vpack.c.b16 %v4173, %v4169
          %v4474 = vpack.c.b16 %v4178, %v4174
          %v4475 = vpack.c.b16 %v4179, %v4175
          %v4476 = vpack.c.b16 %v4180, %v4176
          %v4477 = vpack.c.b16 %v4181, %v4177
          %v4478 = vpack.c.b16 %v4186, %v4182
          %v4479 = vpack.c.b16 %v4187, %v4183
          %v4480 = vpack.c.b16 %v4188, %v4184
          %v4481 = vpack.c.b16 %v4189, %v4185
          %v4482 = vpack.c.b16 %v4194, %v4190
          %v4483 = vpack.c.b16 %v4195, %v4191
          %v4484 = vpack.c.b16 %v4196, %v4192
          %v4485 = vpack.c.b16 %v4197, %v4193
          %v4486 = vpack.c.b16 %v4202, %v4198
          %v4487 = vpack.c.b16 %v4203, %v4199
          %v4488 = vpack.c.b16 %v4204, %v4200
          %v4489 = vpack.c.b16 %v4205, %v4201
          %v4490 = vpack.c.b16 %v4210, %v4206
          %v4491 = vpack.c.b16 %v4211, %v4207
          %v4492 = vpack.c.b16 %v4212, %v4208
          %v4493 = vpack.c.b16 %v4213, %v4209
          %v4494 = vpack.c.b16 %v4218, %v4214
          %v4495 = vpack.c.b16 %v4219, %v4215
          %v4496 = vpack.c.b16 %v4220, %v4216
          %v4497 = vpack.c.b16 %v4221, %v4217
          %v4498 = vpack.c.b16 %v4226, %v4222
          %v4499 = vpack.c.b16 %v4227, %v4223
          %v4500 = vpack.c.b16 %v4228, %v4224
          %v4501 = vpack.c.b16 %v4229, %v4225
          %v4502 = vpack.c.b16 %v4234, %v4230
          %v4503 = vpack.c.b16 %v4235, %v4231
          %v4504 = vpack.c.b16 %v4236, %v4232
          %v4505 = vpack.c.b16 %v4237, %v4233
          %v4506 = vpack.c.b16 %v4242, %v4238
          %v4507 = vpack.c.b16 %v4243, %v4239
          %v4508 = vpack.c.b16 %v4244, %v4240
          %v4509 = vpack.c.b16 %v4245, %v4241
          %v4510 = vpack.c.b16 %v4250, %v4246
          %v4511 = vpack.c.b16 %v4251, %v4247
          %v4512 = vpack.c.b16 %v4252, %v4248
          %v4513 = vpack.c.b16 %v4253, %v4249
          %v4514 = vpack.c.b16 %v4258, %v4254
          %v4515 = vpack.c.b16 %v4259, %v4255
          %v4516 = vpack.c.b16 %v4260, %v4256
          %v4517 = vpack.c.b16 %v4261, %v4257
          %v4775 = vlaneseq
          %v4776 = vshrl.u32 %v4775, 7
          %v4777 = vsub.s32 0, %v4776
          %v4778 = vrot.slane %v3493, %v4777
          %v4779 = vlaneseq
          %v4780 = vshrl.u32 %v4779, 7
          %v4781 = vsub.s32 1, %v4780
          %v4782 = vrot.slane %v3493, %v4781
          %v4783 = vlaneseq
          %v4784 = vshrl.u32 %v4783, 7
          %v4785 = vsub.s32 2, %v4784
          %v4786 = vrot.slane %v3493, %v4785
          %v4787 = vlaneseq
          %v4788 = vshrl.u32 %v4787, 7
          %v4789 = vsub.s32 3, %v4788
          %v4790 = vrot.slane %v3493, %v4789
          %4795 = vmatprep.subr.bf16.mxu0 %v4263
          %4796 = vmatpush1.bf16.msra.mxu0 %v4262
          %4797 = vmatprep.subr.bf16.mxu0 %v4267
          %4798 = vmatpush1.bf16.msra.mxu0 %v4266
          %4799 = vmatprep.subr.bf16.mxu0 %v4271
          %4800 = vmatpush1.bf16.msra.mxu0 %v4270
          %4801 = vmatprep.subr.bf16.mxu0 %v4275
          %4802 = vmatpush1.bf16.msra.mxu0 %v4274
          %4803 = vmatprep.subr.bf16.mxu0 %v4279
          %4804 = vmatpush1.bf16.msra.mxu0 %v4278
          %4805 = vmatprep.subr.bf16.mxu0 %v4283
          %4806 = vmatpush1.bf16.msra.mxu0 %v4282
          %4807 = vmatprep.subr.bf16.mxu0 %v4287
          %4808 = vmatpush1.bf16.msra.mxu0 %v4286
          %4809 = vmatprep.subr.bf16.mxu0 %v4291
          %4810 = vmatpush1.bf16.msra.mxu0 %v4290
          %4811 = vmatprep.subr.bf16.mxu0 %v4295
          %4812 = vmatpush1.bf16.msra.mxu0 %v4294
          %4813 = vmatprep.subr.bf16.mxu0 %v4299
          %4814 = vmatpush1.bf16.msra.mxu0 %v4298
          %4815 = vmatprep.subr.bf16.mxu0 %v4303
          %4816 = vmatpush1.bf16.msra.mxu0 %v4302
          %4817 = vmatprep.subr.bf16.mxu0 %v4307
          %4818 = vmatpush1.bf16.msra.mxu0 %v4306
          %4819 = vmatprep.subr.bf16.mxu0 %v4311
          %4820 = vmatpush1.bf16.msra.mxu0 %v4310
          %4821 = vmatprep.subr.bf16.mxu0 %v4315
          %4822 = vmatpush1.bf16.msra.mxu0 %v4314
          %4823 = vmatprep.subr.bf16.mxu0 %v4319
          %4824 = vmatpush1.bf16.msra.mxu0 %v4318
          %4825 = vmatprep.subr.bf16.mxu0 %v4323
          %4826 = vmatpush1.bf16.msra.mxu0 %v4322
          %4827 = vmatprep.mubr.bf16.mxu0 %v3230
          %4828 = vmatmul.mubr.bf16.gmra.mrb[0].mxu0 %v3229
          %v4829 = vpop.f32.mrb[0].mxu0
          %v4830 = vadd.f32 %v4778, %v4829
          %v4831 = vpop.f32.mrb[0].mxu0
          %v4832 = vadd.f32 %v4782, %v4831
          %v4833 = vpop.f32.mrb[0].mxu0
          %v4834 = vpop.f32.mrb[0].mxu0
          %4835 = vdwg.mxu0
          %4836 = vmatprep.subr.bf16.mxu0 %v4327
          %4837 = vmatpush1.bf16.msra.mxu0 %v4326
          %4838 = vmatprep.subr.bf16.mxu0 %v4331
          %4839 = vmatpush1.bf16.msra.mxu0 %v4330
          %4840 = vmatprep.subr.bf16.mxu0 %v4335
          %4841 = vmatpush1.bf16.msra.mxu0 %v4334
          %4842 = vmatprep.subr.bf16.mxu0 %v4339
          %4843 = vmatpush1.bf16.msra.mxu0 %v4338
          %4844 = vmatprep.subr.bf16.mxu0 %v4343
          %4845 = vmatpush1.bf16.msra.mxu0 %v4342
          %4846 = vmatprep.subr.bf16.mxu0 %v4347
          %4847 = vmatpush1.bf16.msra.mxu0 %v4346
          %4848 = vmatprep.subr.bf16.mxu0 %v4351
          %4849 = vmatpush1.bf16.msra.mxu0 %v4350
          %4850 = vmatprep.subr.bf16.mxu0 %v4355
          %4851 = vmatpush1.bf16.msra.mxu0 %v4354
          %4852 = vmatprep.subr.bf16.mxu0 %v4359
          %4853 = vmatpush1.bf16.msra.mxu0 %v4358
          %4854 = vmatprep.subr.bf16.mxu0 %v4363
          %4855 = vmatpush1.bf16.msra.mxu0 %v4362
          %4856 = vmatprep.subr.bf16.mxu0 %v4367
          %4857 = vmatpush1.bf16.msra.mxu0 %v4366
          %4858 = vmatprep.subr.bf16.mxu0 %v4371
          %4859 = vmatpush1.bf16.msra.mxu0 %v4370
          %4860 = vmatprep.subr.bf16.mxu0 %v4375
          %4861 = vmatpush1.bf16.msra.mxu0 %v4374
          %4862 = vmatprep.subr.bf16.mxu0 %v4379
          %4863 = vmatpush1.bf16.msra.mxu0 %v4378
          %4864 = vmatprep.subr.bf16.mxu0 %v4383
          %4865 = vmatpush1.bf16.msra.mxu0 %v4382
          %4866 = vmatprep.subr.bf16.mxu0 %v4387
          %4867 = vmatpush1.bf16.msra.mxu0 %v4386
          %4868 = vmatprep.mubr.bf16.mxu0 %v3232
          %4869 = vmatmul.mubr.bf16.gmra.mrb[0].mxu0 %v3231
          %v4870 = vpop.f32.mrb[0].mxu0
          %v4871 = vadd.f32 %v4830, %v4870
          %v4872 = vpop.f32.mrb[0].mxu0
          %v4873 = vadd.f32 %v4832, %v4872
          %v4874 = vpop.f32.mrb[0].mxu0
          %v4875 = vpop.f32.mrb[0].mxu0
          %4876 = vdwg.mxu0
          %4877 = vmatprep.subr.bf16.mxu0 %v4391
          %4878 = vmatpush1.bf16.msra.mxu0 %v4390
          %4879 = vmatprep.subr.bf16.mxu0 %v4395
          %4880 = vmatpush1.bf16.msra.mxu0 %v4394
          %4881 = vmatprep.subr.bf16.mxu0 %v4399
          %4882 = vmatpush1.bf16.msra.mxu0 %v4398
          %4883 = vmatprep.subr.bf16.mxu0 %v4403
          %4884 = vmatpush1.bf16.msra.mxu0 %v4402
          %4885 = vmatprep.subr.bf16.mxu0 %v4407
          %4886 = vmatpush1.bf16.msra.mxu0 %v4406
          %4887 = vmatprep.subr.bf16.mxu0 %v4411
          %4888 = vmatpush1.bf16.msra.mxu0 %v4410
          %4889 = vmatprep.subr.bf16.mxu0 %v4415
          %4890 = vmatpush1.bf16.msra.mxu0 %v4414
          %4891 = vmatprep.subr.bf16.mxu0 %v4419
          %4892 = vmatpush1.bf16.msra.mxu0 %v4418
          %4893 = vmatprep.subr.bf16.mxu0 %v4423
          %4894 = vmatpush1.bf16.msra.mxu0 %v4422
          %4895 = vmatprep.subr.bf16.mxu0 %v4427
          %4896 = vmatpush1.bf16.msra.mxu0 %v4426
          %4897 = vmatprep.subr.bf16.mxu0 %v4431
          %4898 = vmatpush1.bf16.msra.mxu0 %v4430
          %4899 = vmatprep.subr.bf16.mxu0 %v4435
          %4900 = vmatpush1.bf16.msra.mxu0 %v4434
          %4901 = vmatprep.subr.bf16.mxu0 %v4439
          %4902 = vmatpush1.bf16.msra.mxu0 %v4438
          %4903 = vmatprep.subr.bf16.mxu0 %v4443
          %4904 = vmatpush1.bf16.msra.mxu0 %v4442
          %4905 = vmatprep.subr.bf16.mxu0 %v4447
          %4906 = vmatpush1.bf16.msra.mxu0 %v4446
          %4907 = vmatprep.subr.bf16.mxu0 %v4451
          %4908 = vmatpush1.bf16.msra.mxu0 %v4450
          %4909 = vmatprep.mubr.bf16.mxu0 %v3234
          %4910 = vmatmul.mubr.bf16.gmra.mrb[0].mxu0 %v3233
          %v4911 = vpop.f32.mrb[0].mxu0
          %v4912 = vadd.f32 %v4871, %v4911
          %v4913 = vpop.f32.mrb[0].mxu0
          %v4914 = vadd.f32 %v4873, %v4913
          %v4915 = vpop.f32.mrb[0].mxu0
          %v4916 = vpop.f32.mrb[0].mxu0
          %4917 = vdwg.mxu0
          %4918 = vmatprep.subr.bf16.mxu0 %v4455
          %4919 = vmatpush1.bf16.msra.mxu0 %v4454
          %4920 = vmatprep.subr.bf16.mxu0 %v4459
          %4921 = vmatpush1.bf16.msra.mxu0 %v4458
          %4922 = vmatprep.subr.bf16.mxu0 %v4463
          %4923 = vmatpush1.bf16.msra.mxu0 %v4462
          %4924 = vmatprep.subr.bf16.mxu0 %v4467
          %4925 = vmatpush1.bf16.msra.mxu0 %v4466
          %4926 = vmatprep.subr.bf16.mxu0 %v4471
          %4927 = vmatpush1.bf16.msra.mxu0 %v4470
          %4928 = vmatprep.subr.bf16.mxu0 %v4475
          %4929 = vmatpush1.bf16.msra.mxu0 %v4474
          %4930 = vmatprep.subr.bf16.mxu0 %v4479
          %4931 = vmatpush1.bf16.msra.mxu0 %v4478
          %4932 = vmatprep.subr.bf16.mxu0 %v4483
          %4933 = vmatpush1.bf16.msra.mxu0 %v4482
          %4934 = vmatprep.subr.bf16.mxu0 %v4487
          %4935 = vmatpush1.bf16.msra.mxu0 %v4486
          %4936 = vmatprep.subr.bf16.mxu0 %v4491
          %4937 = vmatpush1.bf16.msra.mxu0 %v4490
          %4938 = vmatprep.subr.bf16.mxu0 %v4495
          %4939 = vmatpush1.bf16.msra.mxu0 %v4494
          %4940 = vmatprep.subr.bf16.mxu0 %v4499
          %4941 = vmatpush1.bf16.msra.mxu0 %v4498
          %4942 = vmatprep.subr.bf16.mxu0 %v4503
          %4943 = vmatpush1.bf16.msra.mxu0 %v4502
          %4944 = vmatprep.subr.bf16.mxu0 %v4507
          %4945 = vmatpush1.bf16.msra.mxu0 %v4506
          %4946 = vmatprep.subr.bf16.mxu0 %v4511
          %4947 = vmatpush1.bf16.msra.mxu0 %v4510
          %4948 = vmatprep.subr.bf16.mxu0 %v4515
          %4949 = vmatpush1.bf16.msra.mxu0 %v4514
          %4950 = vmatprep.mubr.bf16.mxu0 %v3236
          %4951 = vmatmul.mubr.bf16.gmra.mrb[0].mxu0 %v3235
          %v4952 = vpop.f32.mrb[0].mxu0
          %v4953 = vadd.f32 %v4912, %v4952
          %v4954 = vpop.f32.mrb[0].mxu0
          %v4955 = vadd.f32 %v4914, %v4954
          %v4956 = vpop.f32.mrb[0].mxu0
          %v4957 = vpop.f32.mrb[0].mxu0
          %4958 = vdwg.mxu0
          %4959 = vmatprep.subr.bf16.mxu0 %v4265
          %4960 = vmatpush1.bf16.msra.mxu0 %v4264
          %4961 = vmatprep.subr.bf16.mxu0 %v4269
          %4962 = vmatpush1.bf16.msra.mxu0 %v4268
          %4963 = vmatprep.subr.bf16.mxu0 %v4273
          %4964 = vmatpush1.bf16.msra.mxu0 %v4272
          %4965 = vmatprep.subr.bf16.mxu0 %v4277
          %4966 = vmatpush1.bf16.msra.mxu0 %v4276
          %4967 = vmatprep.subr.bf16.mxu0 %v4281
          %4968 = vmatpush1.bf16.msra.mxu0 %v4280
          %4969 = vmatprep.subr.bf16.mxu0 %v4285
          %4970 = vmatpush1.bf16.msra.mxu0 %v4284
          %4971 = vmatprep.subr.bf16.mxu0 %v4289
          %4972 = vmatpush1.bf16.msra.mxu0 %v4288
          %4973 = vmatprep.subr.bf16.mxu0 %v4293
          %4974 = vmatpush1.bf16.msra.mxu0 %v4292
          %4975 = vmatprep.subr.bf16.mxu0 %v4297
          %4976 = vmatpush1.bf16.msra.mxu0 %v4296
          %4977 = vmatprep.subr.bf16.mxu0 %v4301
          %4978 = vmatpush1.bf16.msra.mxu0 %v4300
          %4979 = vmatprep.subr.bf16.mxu0 %v4305
          %4980 = vmatpush1.bf16.msra.mxu0 %v4304
          %4981 = vmatprep.subr.bf16.mxu0 %v4309
          %4982 = vmatpush1.bf16.msra.mxu0 %v4308
          %4983 = vmatprep.subr.bf16.mxu0 %v4313
          %4984 = vmatpush1.bf16.msra.mxu0 %v4312
          %4985 = vmatprep.subr.bf16.mxu0 %v4317
          %4986 = vmatpush1.bf16.msra.mxu0 %v4316
          %4987 = vmatprep.subr.bf16.mxu0 %v4321
          %4988 = vmatpush1.bf16.msra.mxu0 %v4320
          %4989 = vmatprep.subr.bf16.mxu0 %v4325
          %4990 = vmatpush1.bf16.msra.mxu0 %v4324
          %4991 = vmatprep.mubr.bf16.mxu0 %v3230
          %4992 = vmatmul.mubr.bf16.gmra.mrb[0].mxu0 %v3229
          %v4993 = vpop.f32.mrb[0].mxu0
          %v4994 = vadd.f32 %v4786, %v4993
          %v4995 = vpop.f32.mrb[0].mxu0
          %v4996 = vadd.f32 %v4790, %v4995
          %v4997 = vpop.f32.mrb[0].mxu0
          %v4998 = vpop.f32.mrb[0].mxu0
          %4999 = vdwg.mxu0
          %5000 = vmatprep.subr.bf16.mxu0 %v4329
          %5001 = vmatpush1.bf16.msra.mxu0 %v4328
          %5002 = vmatprep.subr.bf16.mxu0 %v4333
          %5003 = vmatpush1.bf16.msra.mxu0 %v4332
          %5004 = vmatprep.subr.bf16.mxu0 %v4337
          %5005 = vmatpush1.bf16.msra.mxu0 %v4336
          %5006 = vmatprep.subr.bf16.mxu0 %v4341
          %5007 = vmatpush1.bf16.msra.mxu0 %v4340
          %5008 = vmatprep.subr.bf16.mxu0 %v4345
          %5009 = vmatpush1.bf16.msra.mxu0 %v4344
          %5010 = vmatprep.subr.bf16.mxu0 %v4349
          %5011 = vmatpush1.bf16.msra.mxu0 %v4348
          %5012 = vmatprep.subr.bf16.mxu0 %v4353
          %5013 = vmatpush1.bf16.msra.mxu0 %v4352
          %5014 = vmatprep.subr.bf16.mxu0 %v4357
          %5015 = vmatpush1.bf16.msra.mxu0 %v4356
          %5016 = vmatprep.subr.bf16.mxu0 %v4361
          %5017 = vmatpush1.bf16.msra.mxu0 %v4360
          %5018 = vmatprep.subr.bf16.mxu0 %v4365
          %5019 = vmatpush1.bf16.msra.mxu0 %v4364
          %5020 = vmatprep.subr.bf16.mxu0 %v4369
          %5021 = vmatpush1.bf16.msra.mxu0 %v4368
          %5022 = vmatprep.subr.bf16.mxu0 %v4373
          %5023 = vmatpush1.bf16.msra.mxu0 %v4372
          %5024 = vmatprep.subr.bf16.mxu0 %v4377
          %5025 = vmatpush1.bf16.msra.mxu0 %v4376
          %5026 = vmatprep.subr.bf16.mxu0 %v4381
          %5027 = vmatpush1.bf16.msra.mxu0 %v4380
          %5028 = vmatprep.subr.bf16.mxu0 %v4385
          %5029 = vmatpush1.bf16.msra.mxu0 %v4384
          %5030 = vmatprep.subr.bf16.mxu0 %v4389
          %5031 = vmatpush1.bf16.msra.mxu0 %v4388
          %5032 = vmatprep.mubr.bf16.mxu0 %v3232
          %5033 = vmatmul.mubr.bf16.gmra.mrb[0].mxu0 %v3231
          %v5034 = vpop.f32.mrb[0].mxu0
          %v5035 = vadd.f32 %v4994, %v5034
          %v5036 = vpop.f32.mrb[0].mxu0
          %v5037 = vadd.f32 %v4996, %v5036
          %v5038 = vpop.f32.mrb[0].mxu0
          %v5039 = vpop.f32.mrb[0].mxu0
          %5040 = vdwg.mxu0
          %5041 = vmatprep.subr.bf16.mxu0 %v4393
          %5042 = vmatpush1.bf16.msra.mxu0 %v4392
          %5043 = vmatprep.subr.bf16.mxu0 %v4397
          %5044 = vmatpush1.bf16.msra.mxu0 %v4396
          %5045 = vmatprep.subr.bf16.mxu0 %v4401
          %5046 = vmatpush1.bf16.msra.mxu0 %v4400
          %5047 = vmatprep.subr.bf16.mxu0 %v4405
          %5048 = vmatpush1.bf16.msra.mxu0 %v4404
          %5049 = vmatprep.subr.bf16.mxu0 %v4409
          %5050 = vmatpush1.bf16.msra.mxu0 %v4408
          %5051 = vmatprep.subr.bf16.mxu0 %v4413
          %5052 = vmatpush1.bf16.msra.mxu0 %v4412
          %5053 = vmatprep.subr.bf16.mxu0 %v4417
          %5054 = vmatpush1.bf16.msra.mxu0 %v4416
          %5055 = vmatprep.subr.bf16.mxu0 %v4421
          %5056 = vmatpush1.bf16.msra.mxu0 %v4420
          %5057 = vmatprep.subr.bf16.mxu0 %v4425
          %5058 = vmatpush1.bf16.msra.mxu0 %v4424
          %5059 = vmatprep.subr.bf16.mxu0 %v4429
          %5060 = vmatpush1.bf16.msra.mxu0 %v4428
          %5061 = vmatprep.subr.bf16.mxu0 %v4433
          %5062 = vmatpush1.bf16.msra.mxu0 %v4432
          %5063 = vmatprep.subr.bf16.mxu0 %v4437
          %5064 = vmatpush1.bf16.msra.mxu0 %v4436
          %5065 = vmatprep.subr.bf16.mxu0 %v4441
          %5066 = vmatpush1.bf16.msra.mxu0 %v4440
          %5067 = vmatprep.subr.bf16.mxu0 %v4445
          %5068 = vmatpush1.bf16.msra.mxu0 %v4444
          %5069 = vmatprep.subr.bf16.mxu0 %v4449
          %5070 = vmatpush1.bf16.msra.mxu0 %v4448
          %5071 = vmatprep.subr.bf16.mxu0 %v4453
          %5072 = vmatpush1.bf16.msra.mxu0 %v4452
          %5073 = vmatprep.mubr.bf16.mxu0 %v3234
          %5074 = vmatmul.mubr.bf16.gmra.mrb[0].mxu0 %v3233
          %v5075 = vpop.f32.mrb[0].mxu0
          %v5076 = vadd.f32 %v5035, %v5075
          %v5077 = vpop.f32.mrb[0].mxu0
          %v5078 = vadd.f32 %v5037, %v5077
          %v5079 = vpop.f32.mrb[0].mxu0
          %v5080 = vpop.f32.mrb[0].mxu0
          %5081 = vdwg.mxu0
          %5082 = vmatprep.subr.bf16.mxu0 %v4457
          %5083 = vmatpush1.bf16.msra.mxu0 %v4456
          %5084 = vmatprep.subr.bf16.mxu0 %v4461
          %5085 = vmatpush1.bf16.msra.mxu0 %v4460
          %5086 = vmatprep.subr.bf16.mxu0 %v4465
          %5087 = vmatpush1.bf16.msra.mxu0 %v4464
          %5088 = vmatprep.subr.bf16.mxu0 %v4469
          %5089 = vmatpush1.bf16.msra.mxu0 %v4468
          %5090 = vmatprep.subr.bf16.mxu0 %v4473
          %5091 = vmatpush1.bf16.msra.mxu0 %v4472
          %5092 = vmatprep.subr.bf16.mxu0 %v4477
          %5093 = vmatpush1.bf16.msra.mxu0 %v4476
          %5094 = vmatprep.subr.bf16.mxu0 %v4481
          %5095 = vmatpush1.bf16.msra.mxu0 %v4480
          %5096 = vmatprep.subr.bf16.mxu0 %v4485
          %5097 = vmatpush1.bf16.msra.mxu0 %v4484
          %5098 = vmatprep.subr.bf16.mxu0 %v4489
          %5099 = vmatpush1.bf16.msra.mxu0 %v4488
          %5100 = vmatprep.subr.bf16.mxu0 %v4493
          %5101 = vmatpush1.bf16.msra.mxu0 %v4492
          %5102 = vmatprep.subr.bf16.mxu0 %v4497
          %5103 = vmatpush1.bf16.msra.mxu0 %v4496
          %5104 = vmatprep.subr.bf16.mxu0 %v4501
          %5105 = vmatpush1.bf16.msra.mxu0 %v4500
          %5106 = vmatprep.subr.bf16.mxu0 %v4505
          %5107 = vmatpush1.bf16.msra.mxu0 %v4504
          %5108 = vmatprep.subr.bf16.mxu0 %v4509
          %5109 = vmatpush1.bf16.msra.mxu0 %v4508
          %5110 = vmatprep.subr.bf16.mxu0 %v4513
          %5111 = vmatpush1.bf16.msra.mxu0 %v4512
          %5112 = vmatprep.subr.bf16.mxu0 %v4517
          %5113 = vmatpush1.bf16.msra.mxu0 %v4516
          %5114 = vmatprep.mubr.bf16.mxu0 %v3236
          %5115 = vmatmul.mubr.bf16.gmra.mrb[0].mxu0 %v3235
          %v5116 = vpop.f32.mrb[0].mxu0
          %v5117 = vadd.f32 %v5076, %v5116
          %v5118 = vpop.f32.mrb[0].mxu0
          %v5119 = vadd.f32 %v5078, %v5118
          %v5120 = vpop.f32.mrb[0].mxu0
          %v5121 = vpop.f32.mrb[0].mxu0
          %5122 = vdwg.mxu0
          %v5123 = vmax.f32 %v4953, 0.0
          %v5124 = vmax.f32 %v4955, 0.0
          %v5125 = vmax.f32 %v5117, 0.0
          %v5126 = vmax.f32 %v5119, 0.0
          %v5127 = vpack.c.bf16 %v5123, %v5123
          %v5128 = vpack.c.bf16 %v5124, %v5124
          %v5129 = vpack.c.bf16 %v5125, %v5125
          %v5130 = vpack.c.bf16 %v5126, %v5126
          %v5131 = vld [vmem:[#allocation6] sm:$0xff]
          %v5132 = vld [vmem:[#allocation6 + $0x8] sm:$0xff]
          %v5133 = vld [vmem:[#allocation6 + $0x10] sm:$0xff]
          %v5134 = vld [vmem:[#allocation6 + $0x18] sm:$0xff]
          %v5135 = vld [vmem:[#allocation6 + $0x20] sm:$0xff]
          %v5136 = vld [vmem:[#allocation6 + $0x28] sm:$0xff]
          %v5137 = vld [vmem:[#allocation6 + $0x30] sm:$0xff]
          %v5138 = vld [vmem:[#allocation6 + $0x38] sm:$0xff]
          %v5139 = vld [vmem:[#allocation6 + $0x40] sm:$0xff]
          %v5140 = vld [vmem:[#allocation6 + $0x48] sm:$0xff]
          %v5141 = vld [vmem:[#allocation6 + $0x50] sm:$0xff]
          %v5142 = vld [vmem:[#allocation6 + $0x58] sm:$0xff]
          %v5143 = vld [vmem:[#allocation6 + $0x60] sm:$0xff]
          %v5144 = vld [vmem:[#allocation6 + $0x68] sm:$0xff]
          %v5145 = vld [vmem:[#allocation6 + $0x70] sm:$0xff]
          %v5146 = vld [vmem:[#allocation6 + $0x78] sm:$0xff]
          %v5147 = vld [vmem:[#allocation6 + $0x80] sm:$0xff]
          %v5148 = vld [vmem:[#allocation6 + $0x88] sm:$0xff]
          %v5149 = vld [vmem:[#allocation6 + $0x90] sm:$0xff]
          %v5150 = vld [vmem:[#allocation6 + $0x98] sm:$0xff]
          %v5151 = vld [vmem:[#allocation6 + $0xa0] sm:$0xff]
          %v5152 = vld [vmem:[#allocation6 + $0xa8] sm:$0xff]
          %v5153 = vld [vmem:[#allocation6 + $0xb0] sm:$0xff]
          %v5154 = vld [vmem:[#allocation6 + $0xb8] sm:$0xff]
          %v5155 = vld [vmem:[#allocation6 + $0xc0] sm:$0xff]
          %v5156 = vld [vmem:[#allocation6 + $0xc8] sm:$0xff]
          %v5157 = vld [vmem:[#allocation6 + $0xd0] sm:$0xff]
          %v5158 = vld [vmem:[#allocation6 + $0xd8] sm:$0xff]
          %v5159 = vld [vmem:[#allocation6 + $0xe0] sm:$0xff]
          %v5160 = vld [vmem:[#allocation6 + $0xe8] sm:$0xff]
          %v5161 = vld [vmem:[#allocation6 + $0xf0] sm:$0xff]
          %v5162 = vld [vmem:[#allocation6 + $0xf8] sm:$0xff]
          %v5163 = vld [vmem:[#allocation6 + $0x100] sm:$0xff]
          %v5164 = vld [vmem:[#allocation6 + $0x108] sm:$0xff]
          %v5165 = vld [vmem:[#allocation6 + $0x110] sm:$0xff]
          %v5166 = vld [vmem:[#allocation6 + $0x118] sm:$0xff]
          %v5167 = vld [vmem:[#allocation6 + $0x120] sm:$0xff]
          %v5168 = vld [vmem:[#allocation6 + $0x128] sm:$0xff]
          %v5169 = vld [vmem:[#allocation6 + $0x130] sm:$0xff]
          %v5170 = vld [vmem:[#allocation6 + $0x138] sm:$0xff]
          %v5171 = vld [vmem:[#allocation6 + $0x140] sm:$0xff]
          %v5172 = vld [vmem:[#allocation6 + $0x148] sm:$0xff]
          %v5173 = vld [vmem:[#allocation6 + $0x150] sm:$0xff]
          %v5174 = vld [vmem:[#allocation6 + $0x158] sm:$0xff]
          %v5175 = vld [vmem:[#allocation6 + $0x160] sm:$0xff]
          %v5176 = vld [vmem:[#allocation6 + $0x168] sm:$0xff]
          %v5177 = vld [vmem:[#allocation6 + $0x170] sm:$0xff]
          %v5178 = vld [vmem:[#allocation6 + $0x178] sm:$0xff]
          %v5179 = vld [vmem:[#allocation6 + $0x180] sm:$0xff]
          %v5180 = vld [vmem:[#allocation6 + $0x188] sm:$0xff]
          %v5181 = vld [vmem:[#allocation6 + $0x190] sm:$0xff]
          %v5182 = vld [vmem:[#allocation6 + $0x198] sm:$0xff]
          %v5183 = vld [vmem:[#allocation6 + $0x1a0] sm:$0xff]
          %v5184 = vld [vmem:[#allocation6 + $0x1a8] sm:$0xff]
          %v5185 = vld [vmem:[#allocation6 + $0x1b0] sm:$0xff]
          %v5186 = vld [vmem:[#allocation6 + $0x1b8] sm:$0xff]
          %v5187 = vld [vmem:[#allocation6 + $0x1c0] sm:$0xff]
          %v5188 = vld [vmem:[#allocation6 + $0x1c8] sm:$0xff]
          %v5189 = vld [vmem:[#allocation6 + $0x1d0] sm:$0xff]
          %v5190 = vld [vmem:[#allocation6 + $0x1d8] sm:$0xff]
          %v5191 = vld [vmem:[#allocation6 + $0x1e0] sm:$0xff]
          %v5192 = vld [vmem:[#allocation6 + $0x1e8] sm:$0xff]
          %v5193 = vld [vmem:[#allocation6 + $0x1f0] sm:$0xff]
          %v5194 = vld [vmem:[#allocation6 + $0x1f8] sm:$0xff]
          %v5195 = vld [vmem:[%s10] sm:$0x3]
          %v5260 = vunpack.c.l.b16 %v5131
          %v5261 = vunpack.c.h.b16 %v5131
          %v5262 = vunpack.c.l.b16 %v5132
          %v5263 = vunpack.c.h.b16 %v5132
          %v5264 = vunpack.c.l.b16 %v5133
          %v5265 = vunpack.c.h.b16 %v5133
          %v5266 = vunpack.c.l.b16 %v5134
          %v5267 = vunpack.c.h.b16 %v5134
          %v5268 = vunpack.c.l.b16 %v5135
          %v5269 = vunpack.c.h.b16 %v5135
          %v5270 = vunpack.c.l.b16 %v5136
          %v5271 = vunpack.c.h.b16 %v5136
          %v5272 = vunpack.c.l.b16 %v5137
          %v5273 = vunpack.c.h.b16 %v5137
          %v5274 = vunpack.c.l.b16 %v5138
          %v5275 = vunpack.c.h.b16 %v5138
          %v5276 = vunpack.c.l.b16 %v5139
          %v5277 = vunpack.c.h.b16 %v5139
          %v5278 = vunpack.c.l.b16 %v5140
          %v5279 = vunpack.c.h.b16 %v5140
          %v5280 = vunpack.c.l.b16 %v5141
          %v5281 = vunpack.c.h.b16 %v5141
          %v5282 = vunpack.c.l.b16 %v5142
          %v5283 = vunpack.c.h.b16 %v5142
          %v5284 = vunpack.c.l.b16 %v5143
          %v5285 = vunpack.c.h.b16 %v5143
          %v5286 = vunpack.c.l.b16 %v5144
          %v5287 = vunpack.c.h.b16 %v5144
          %v5288 = vunpack.c.l.b16 %v5145
          %v5289 = vunpack.c.h.b16 %v5145
          %v5290 = vunpack.c.l.b16 %v5146
          %v5291 = vunpack.c.h.b16 %v5146
          %v5292 = vunpack.c.l.b16 %v5147
          %v5293 = vunpack.c.h.b16 %v5147
          %v5294 = vunpack.c.l.b16 %v5148
          %v5295 = vunpack.c.h.b16 %v5148
          %v5296 = vunpack.c.l.b16 %v5149
          %v5297 = vunpack.c.h.b16 %v5149
          %v5298 = vunpack.c.l.b16 %v5150
          %v5299 = vunpack.c.h.b16 %v5150
          %v5300 = vunpack.c.l.b16 %v5151
          %v5301 = vunpack.c.h.b16 %v5151
          %v5302 = vunpack.c.l.b16 %v5152
          %v5303 = vunpack.c.h.b16 %v5152
          %v5304 = vunpack.c.l.b16 %v5153
          %v5305 = vunpack.c.h.b16 %v5153
          %v5306 = vunpack.c.l.b16 %v5154
          %v5307 = vunpack.c.h.b16 %v5154
          %v5308 = vunpack.c.l.b16 %v5155
          %v5309 = vunpack.c.h.b16 %v5155
          %v5310 = vunpack.c.l.b16 %v5156
          %v5311 = vunpack.c.h.b16 %v5156
          %v5312 = vunpack.c.l.b16 %v5157
          %v5313 = vunpack.c.h.b16 %v5157
          %v5314 = vunpack.c.l.b16 %v5158
          %v5315 = vunpack.c.h.b16 %v5158
          %v5316 = vunpack.c.l.b16 %v5159
          %v5317 = vunpack.c.h.b16 %v5159
          %v5318 = vunpack.c.l.b16 %v5160
          %v5319 = vunpack.c.h.b16 %v5160
          %v5320 = vunpack.c.l.b16 %v5161
          %v5321 = vunpack.c.h.b16 %v5161
          %v5322 = vunpack.c.l.b16 %v5162
          %v5323 = vunpack.c.h.b16 %v5162
          %v5324 = vunpack.c.l.b16 %v5163
          %v5325 = vunpack.c.h.b16 %v5163
          %v5326 = vunpack.c.l.b16 %v5164
          %v5327 = vunpack.c.h.b16 %v5164
          %v5328 = vunpack.c.l.b16 %v5165
          %v5329 = vunpack.c.h.b16 %v5165
          %v5330 = vunpack.c.l.b16 %v5166
          %v5331 = vunpack.c.h.b16 %v5166
          %v5332 = vunpack.c.l.b16 %v5167
          %v5333 = vunpack.c.h.b16 %v5167
          %v5334 = vunpack.c.l.b16 %v5168
          %v5335 = vunpack.c.h.b16 %v5168
          %v5336 = vunpack.c.l.b16 %v5169
          %v5337 = vunpack.c.h.b16 %v5169
          %v5338 = vunpack.c.l.b16 %v5170
          %v5339 = vunpack.c.h.b16 %v5170
          %v5340 = vunpack.c.l.b16 %v5171
          %v5341 = vunpack.c.h.b16 %v5171
          %v5342 = vunpack.c.l.b16 %v5172
          %v5343 = vunpack.c.h.b16 %v5172
          %v5344 = vunpack.c.l.b16 %v5173
          %v5345 = vunpack.c.h.b16 %v5173
          %v5346 = vunpack.c.l.b16 %v5174
          %v5347 = vunpack.c.h.b16 %v5174
          %v5348 = vunpack.c.l.b16 %v5175
          %v5349 = vunpack.c.h.b16 %v5175
          %v5350 = vunpack.c.l.b16 %v5176
          %v5351 = vunpack.c.h.b16 %v5176
          %v5352 = vunpack.c.l.b16 %v5177
          %v5353 = vunpack.c.h.b16 %v5177
          %v5354 = vunpack.c.l.b16 %v5178
          %v5355 = vunpack.c.h.b16 %v5178
          %v5356 = vunpack.c.l.b16 %v5179
          %v5357 = vunpack.c.h.b16 %v5179
          %v5358 = vunpack.c.l.b16 %v5180
          %v5359 = vunpack.c.h.b16 %v5180
          %v5360 = vunpack.c.l.b16 %v5181
          %v5361 = vunpack.c.h.b16 %v5181
          %v5362 = vunpack.c.l.b16 %v5182
          %v5363 = vunpack.c.h.b16 %v5182
          %v5364 = vunpack.c.l.b16 %v5183
          %v5365 = vunpack.c.h.b16 %v5183
          %v5366 = vunpack.c.l.b16 %v5184
          %v5367 = vunpack.c.h.b16 %v5184
          %v5368 = vunpack.c.l.b16 %v5185
          %v5369 = vunpack.c.h.b16 %v5185
          %v5370 = vunpack.c.l.b16 %v5186
          %v5371 = vunpack.c.h.b16 %v5186
          %v5372 = vunpack.c.l.b16 %v5187
          %v5373 = vunpack.c.h.b16 %v5187
          %v5374 = vunpack.c.l.b16 %v5188
          %v5375 = vunpack.c.h.b16 %v5188
          %v5376 = vunpack.c.l.b16 %v5189
          %v5377 = vunpack.c.h.b16 %v5189
          %v5378 = vunpack.c.l.b16 %v5190
          %v5379 = vunpack.c.h.b16 %v5190
          %v5380 = vunpack.c.l.b16 %v5191
          %v5381 = vunpack.c.h.b16 %v5191
          %v5382 = vunpack.c.l.b16 %v5192
          %v5383 = vunpack.c.h.b16 %v5192
          %v5384 = vunpack.c.l.b16 %v5193
          %v5385 = vunpack.c.h.b16 %v5193
          %v5386 = vunpack.c.l.b16 %v5194
          %v5387 = vunpack.c.h.b16 %v5194
          %v5388 = vpack.c.b16 %v5262, %v5260
          %v5389 = vpack.c.b16 %v5263, %v5261
          %v5390 = vpack.c.b16 %v5266, %v5264
          %v5391 = vpack.c.b16 %v5267, %v5265
          %v5392 = vpack.c.b16 %v5270, %v5268
          %v5393 = vpack.c.b16 %v5271, %v5269
          %v5394 = vpack.c.b16 %v5274, %v5272
          %v5395 = vpack.c.b16 %v5275, %v5273
          %v5396 = vpack.c.b16 %v5278, %v5276
          %v5397 = vpack.c.b16 %v5279, %v5277
          %v5398 = vpack.c.b16 %v5282, %v5280
          %v5399 = vpack.c.b16 %v5283, %v5281
          %v5400 = vpack.c.b16 %v5286, %v5284
          %v5401 = vpack.c.b16 %v5287, %v5285
          %v5402 = vpack.c.b16 %v5290, %v5288
          %v5403 = vpack.c.b16 %v5291, %v5289
          %v5404 = vpack.c.b16 %v5294, %v5292
          %v5405 = vpack.c.b16 %v5295, %v5293
          %v5406 = vpack.c.b16 %v5298, %v5296
          %v5407 = vpack.c.b16 %v5299, %v5297
          %v5408 = vpack.c.b16 %v5302, %v5300
          %v5409 = vpack.c.b16 %v5303, %v5301
          %v5410 = vpack.c.b16 %v5306, %v5304
          %v5411 = vpack.c.b16 %v5307, %v5305
          %v5412 = vpack.c.b16 %v5310, %v5308
          %v5413 = vpack.c.b16 %v5311, %v5309
          %v5414 = vpack.c.b16 %v5314, %v5312
          %v5415 = vpack.c.b16 %v5315, %v5313
          %v5416 = vpack.c.b16 %v5318, %v5316
          %v5417 = vpack.c.b16 %v5319, %v5317
          %v5418 = vpack.c.b16 %v5322, %v5320
          %v5419 = vpack.c.b16 %v5323, %v5321
          %v5420 = vpack.c.b16 %v5326, %v5324
          %v5421 = vpack.c.b16 %v5327, %v5325
          %v5422 = vpack.c.b16 %v5330, %v5328
          %v5423 = vpack.c.b16 %v5331, %v5329
          %v5424 = vpack.c.b16 %v5334, %v5332
          %v5425 = vpack.c.b16 %v5335, %v5333
          %v5426 = vpack.c.b16 %v5338, %v5336
          %v5427 = vpack.c.b16 %v5339, %v5337
          %v5428 = vpack.c.b16 %v5342, %v5340
          %v5429 = vpack.c.b16 %v5343, %v5341
          %v5430 = vpack.c.b16 %v5346, %v5344
          %v5431 = vpack.c.b16 %v5347, %v5345
          %v5432 = vpack.c.b16 %v5350, %v5348
          %v5433 = vpack.c.b16 %v5351, %v5349
          %v5434 = vpack.c.b16 %v5354, %v5352
          %v5435 = vpack.c.b16 %v5355, %v5353
          %v5436 = vpack.c.b16 %v5358, %v5356
          %v5437 = vpack.c.b16 %v5359, %v5357
          %v5438 = vpack.c.b16 %v5362, %v5360
          %v5439 = vpack.c.b16 %v5363, %v5361
          %v5440 = vpack.c.b16 %v5366, %v5364
          %v5441 = vpack.c.b16 %v5367, %v5365
          %v5442 = vpack.c.b16 %v5370, %v5368
          %v5443 = vpack.c.b16 %v5371, %v5369
          %v5444 = vpack.c.b16 %v5374, %v5372
          %v5445 = vpack.c.b16 %v5375, %v5373
          %v5446 = vpack.c.b16 %v5378, %v5376
          %v5447 = vpack.c.b16 %v5379, %v5377
          %v5448 = vpack.c.b16 %v5382, %v5380
          %v5449 = vpack.c.b16 %v5383, %v5381
          %v5450 = vpack.c.b16 %v5386, %v5384
          %v5451 = vpack.c.b16 %v5387, %v5385
          %v5517 = vlaneseq
          %v5518 = vshrl.u32 %v5517, 7
          %v5519 = vsub.s32 0, %v5518
          %v5520 = vrot.slane %v5195, %v5519
          %v5521 = vlaneseq
          %v5522 = vshrl.u32 %v5521, 7
          %v5523 = vsub.s32 1, %v5522
          %v5524 = vrot.slane %v5195, %v5523
          %5527 = vmatprep.subr.bf16.mxu0 %v5389
          %5528 = vmatpush1.bf16.msra.mxu0 %v5388
          %5529 = vmatprep.subr.bf16.mxu0 %v5391
          %5530 = vmatpush1.bf16.msra.mxu0 %v5390
          %5531 = vmatprep.subr.bf16.mxu0 %v5393
          %5532 = vmatpush1.bf16.msra.mxu0 %v5392
          %5533 = vmatprep.subr.bf16.mxu0 %v5395
          %5534 = vmatpush1.bf16.msra.mxu0 %v5394
          %5535 = vmatprep.subr.bf16.mxu0 %v5397
          %5536 = vmatpush1.bf16.msra.mxu0 %v5396
          %5537 = vmatprep.subr.bf16.mxu0 %v5399
          %5538 = vmatpush1.bf16.msra.mxu0 %v5398
          %5539 = vmatprep.subr.bf16.mxu0 %v5401
          %5540 = vmatpush1.bf16.msra.mxu0 %v5400
          %5541 = vmatprep.subr.bf16.mxu0 %v5403
          %5542 = vmatpush1.bf16.msra.mxu0 %v5402
          %5543 = vmatprep.subr.bf16.mxu0 %v5405
          %5544 = vmatpush1.bf16.msra.mxu0 %v5404
          %5545 = vmatprep.subr.bf16.mxu0 %v5407
          %5546 = vmatpush1.bf16.msra.mxu0 %v5406
          %5547 = vmatprep.subr.bf16.mxu0 %v5409
          %5548 = vmatpush1.bf16.msra.mxu0 %v5408
          %5549 = vmatprep.subr.bf16.mxu0 %v5411
          %5550 = vmatpush1.bf16.msra.mxu0 %v5410
          %5551 = vmatprep.subr.bf16.mxu0 %v5413
          %5552 = vmatpush1.bf16.msra.mxu0 %v5412
          %5553 = vmatprep.subr.bf16.mxu0 %v5415
          %5554 = vmatpush1.bf16.msra.mxu0 %v5414
          %5555 = vmatprep.subr.bf16.mxu0 %v5417
          %5556 = vmatpush1.bf16.msra.mxu0 %v5416
          %5557 = vmatprep.subr.bf16.mxu0 %v5419
          %5558 = vmatpush1.bf16.msra.mxu0 %v5418
          %5559 = vmatprep.mubr.bf16.mxu0 %v5128
          %5560 = vmatmul.mubr.bf16.gmra.mrb[0].mxu0 %v5127
          %v5561 = vpop.f32.mrb[0].mxu0
          %v5562 = vadd.f32 %v5520, %v5561
          %v5563 = vpop.f32.mrb[0].mxu0
          %v5564 = vadd.f32 %v5524, %v5563
          %v5565 = vpop.f32.mrb[0].mxu0
          %v5566 = vpop.f32.mrb[0].mxu0
          %5567 = vdwg.mxu0
          %5568 = vmatprep.subr.bf16.mxu0 %v5421
          %5569 = vmatpush1.bf16.msra.mxu0 %v5420
          %5570 = vmatprep.subr.bf16.mxu0 %v5423
          %5571 = vmatpush1.bf16.msra.mxu0 %v5422
          %5572 = vmatprep.subr.bf16.mxu0 %v5425
          %5573 = vmatpush1.bf16.msra.mxu0 %v5424
          %5574 = vmatprep.subr.bf16.mxu0 %v5427
          %5575 = vmatpush1.bf16.msra.mxu0 %v5426
          %5576 = vmatprep.subr.bf16.mxu0 %v5429
          %5577 = vmatpush1.bf16.msra.mxu0 %v5428
          %5578 = vmatprep.subr.bf16.mxu0 %v5431
          %5579 = vmatpush1.bf16.msra.mxu0 %v5430
          %5580 = vmatprep.subr.bf16.mxu0 %v5433
          %5581 = vmatpush1.bf16.msra.mxu0 %v5432
          %5582 = vmatprep.subr.bf16.mxu0 %v5435
          %5583 = vmatpush1.bf16.msra.mxu0 %v5434
          %5584 = vmatprep.subr.bf16.mxu0 %v5437
          %5585 = vmatpush1.bf16.msra.mxu0 %v5436
          %5586 = vmatprep.subr.bf16.mxu0 %v5439
          %5587 = vmatpush1.bf16.msra.mxu0 %v5438
          %5588 = vmatprep.subr.bf16.mxu0 %v5441
          %5589 = vmatpush1.bf16.msra.mxu0 %v5440
          %5590 = vmatprep.subr.bf16.mxu0 %v5443
          %5591 = vmatpush1.bf16.msra.mxu0 %v5442
          %5592 = vmatprep.subr.bf16.mxu0 %v5445
          %5593 = vmatpush1.bf16.msra.mxu0 %v5444
          %5594 = vmatprep.subr.bf16.mxu0 %v5447
          %5595 = vmatpush1.bf16.msra.mxu0 %v5446
          %5596 = vmatprep.subr.bf16.mxu0 %v5449
          %5597 = vmatpush1.bf16.msra.mxu0 %v5448
          %5598 = vmatprep.subr.bf16.mxu0 %v5451
          %5599 = vmatpush1.bf16.msra.mxu0 %v5450
          %5600 = vmatprep.mubr.bf16.mxu0 %v5130
          %5601 = vmatmul.mubr.bf16.gmra.mrb[0].mxu0 %v5129
          %v5602 = vpop.f32.mrb[0].mxu0
          %v5603 = vadd.f32 %v5562, %v5602
          %v5604 = vpop.f32.mrb[0].mxu0
          %v5605 = vadd.f32 %v5564, %v5604
          %v5606 = vpop.f32.mrb[0].mxu0
          %v5607 = vpop.f32.mrb[0].mxu0
          %5608 = vdwg.mxu0
          %v5609 = vmax.f32 %v5603, 0.0
          %v5610 = vmax.f32 %v5605, 0.0
          %v5611 = vld [vmem:[%s11] sm:$0xff]
          %v5612 = vld [vmem:[%s11 + $0x8] sm:$0xff]
          %v5613 = vld [vmem:[%s11 + $0x10] sm:$0xff]
          %v5614 = vld [vmem:[%s11 + $0x18] sm:$0xff]
          %v5615 = vld [vmem:[%s11 + $0x20] sm:$0xff]
          %v5616 = vld [vmem:[%s11 + $0x28] sm:$0xff]
          %v5617 = vld [vmem:[%s11 + $0x30] sm:$0xff]
          %v5618 = vld [vmem:[%s11 + $0x38] sm:$0xff]
          %v5619 = vld [vmem:[%s11 + $0x40] sm:$0xff]
          %v5620 = vld [vmem:[%s11 + $0x48] sm:$0xff]
          %v5621 = vld [vmem:[%s11 + $0x50] sm:$0xff]
          %v5622 = vld [vmem:[%s11 + $0x58] sm:$0xff]
          %v5623 = vld [vmem:[%s11 + $0x60] sm:$0xff]
          %v5624 = vld [vmem:[%s11 + $0x68] sm:$0xff]
          %v5625 = vld [vmem:[%s11 + $0x70] sm:$0xff]
          %v5626 = vld [vmem:[%s11 + $0x78] sm:$0xff]
          %v5627 = vld [vmem:[%s11 + $0x80] sm:$0xff]
          %v5628 = vld [vmem:[%s11 + $0x88] sm:$0xff]
          %v5629 = vld [vmem:[%s11 + $0x90] sm:$0xff]
          %v5630 = vld [vmem:[%s11 + $0x98] sm:$0xff]
          %v5631 = vld [vmem:[%s11 + $0xa0] sm:$0xff]
          %v5632 = vld [vmem:[%s11 + $0xa8] sm:$0xff]
          %v5633 = vld [vmem:[%s11 + $0xb0] sm:$0xff]
          %v5634 = vld [vmem:[%s11 + $0xb8] sm:$0xff]
          %v5635 = vld [vmem:[%s11 + $0xc0] sm:$0xff]
          %v5636 = vld [vmem:[%s11 + $0xc8] sm:$0xff]
          %v5637 = vld [vmem:[%s11 + $0xd0] sm:$0xff]
          %v5638 = vld [vmem:[%s11 + $0xd8] sm:$0xff]
          %v5639 = vld [vmem:[%s11 + $0xe0] sm:$0xff]
          %v5640 = vld [vmem:[%s11 + $0xe8] sm:$0xff]
          %v5641 = vld [vmem:[%s11 + $0xf0] sm:$0xff]
          %v5642 = vld [vmem:[%s11 + $0xf8] sm:$0xff]
          %v5643 = vld [vmem:[%s12] sm:$0x1]
          %5644 = vmatprep.subr.mxu0 0.0
          %5645 = vmatpush1.msra.mxu0 %v5611
          %5646 = vmatprep.subr.mxu0 0.0
          %5647 = vmatpush1.msra.mxu0 %v5612
          %5648 = vmatprep.subr.mxu0 0.0
          %5649 = vmatpush1.msra.mxu0 %v5613
          %5650 = vmatprep.subr.mxu0 0.0
          %5651 = vmatpush1.msra.mxu0 %v5614
          %5652 = vmatprep.subr.mxu0 0.0
          %5653 = vmatpush1.msra.mxu0 %v5615
          %5654 = vmatprep.subr.mxu0 0.0
          %5655 = vmatpush1.msra.mxu0 %v5616
          %5656 = vmatprep.subr.mxu0 0.0
          %5657 = vmatpush1.msra.mxu0 %v5617
          %5658 = vmatprep.subr.mxu0 0.0
          %5659 = vmatpush1.msra.mxu0 %v5618
          %5660 = vmatprep.subr.mxu0 0.0
          %5661 = vmatpush1.msra.mxu0 %v5619
          %5662 = vmatprep.subr.mxu0 0.0
          %5663 = vmatpush1.msra.mxu0 %v5620
          %5664 = vmatprep.subr.mxu0 0.0
          %5665 = vmatpush1.msra.mxu0 %v5621
          %5666 = vmatprep.subr.mxu0 0.0
          %5667 = vmatpush1.msra.mxu0 %v5622
          %5668 = vmatprep.subr.mxu0 0.0
          %5669 = vmatpush1.msra.mxu0 %v5623
          %5670 = vmatprep.subr.mxu0 0.0
          %5671 = vmatpush1.msra.mxu0 %v5624
          %5672 = vmatprep.subr.mxu0 0.0
          %5673 = vmatpush1.msra.mxu0 %v5625
          %5674 = vmatprep.subr.mxu0 0.0
          %5675 = vmatpush1.msra.mxu0 %v5626
          %5676 = vmatprep.subr.mxu0 0.0
          %5677 = vmatpush1.msra.mxu0 %v5627
          %5678 = vmatprep.subr.mxu0 0.0
          %5679 = vmatpush1.msra.mxu0 %v5628
          %5680 = vmatprep.subr.mxu0 0.0
          %5681 = vmatpush1.msra.mxu0 %v5629
          %5682 = vmatprep.subr.mxu0 0.0
          %5683 = vmatpush1.msra.mxu0 %v5630
          %5684 = vmatprep.subr.mxu0 0.0
          %5685 = vmatpush1.msra.mxu0 %v5631
          %5686 = vmatprep.subr.mxu0 0.0
          %5687 = vmatpush1.msra.mxu0 %v5632
          %5688 = vmatprep.subr.mxu0 0.0
          %5689 = vmatpush1.msra.mxu0 %v5633
          %5690 = vmatprep.subr.mxu0 0.0
          %5691 = vmatpush1.msra.mxu0 %v5634
          %5692 = vmatprep.subr.mxu0 0.0
          %5693 = vmatpush1.msra.mxu0 %v5635
          %5694 = vmatprep.subr.mxu0 0.0
          %5695 = vmatpush1.msra.mxu0 %v5636
          %5696 = vmatprep.subr.mxu0 0.0
          %5697 = vmatpush1.msra.mxu0 %v5637
          %5698 = vmatprep.subr.mxu0 0.0
          %5699 = vmatpush1.msra.mxu0 %v5638
          %5700 = vmatprep.subr.mxu0 0.0
          %5701 = vmatpush1.msra.mxu0 %v5639
          %5702 = vmatprep.subr.mxu0 0.0
          %5703 = vmatpush1.msra.mxu0 %v5640
          %5704 = vmatprep.subr.mxu0 0.0
          %5705 = vmatpush1.msra.mxu0 %v5641
          %5706 = vmatprep.subr.mxu0 0.0
          %5707 = vmatpush1.msra.mxu0 %v5642
          %5708 = vmatprep.mubr.f32.mxu0 %v5610
          %5709 = vmatmul.mubr.f32.gmra.mrb[0].mxu0 %v5609
          %v5710 = vpop.f32.mrb[0].mxu0
          %v5711 = vadd.f32 %v5643, %v5710
          %v5712 = vpop.f32.mrb[0].mxu0
          %5713 = vdwg.mxu0
          %vm5714 = vcmask 24576
          %5715 = vst.msk [vmem:[%s485] sm:$0x1] %vm5714, %v5711
        $region92: #{tpu_custom_call.1} parent=71 // pred_fallthru
          _
        %s5716 = sand.u32 %s329, 1
        %s5717 = scalar_lea.sflag [#allocation5], %s5716
        %s5718 = sand.u32 %s329, 1
        %s5719 = scalar_lea.vmem [#allocation8], %s5718
        // Predicated region
        $region93: #{tpu_custom_call.1} parent=71 // pred_check
          %p5720 = pneg %p339
        $region94: #{tpu_custom_call.1} parent=71 // pred_check_branch
          %5722 = sbr.rel (%p5720) target = $region96
        $region95: #{tpu_custom_call.1} parent=71 // pred_region
          %s5724 = ssub.s32 16, 16
          %5725 = vsyncadd %s5717, %s5724
          %s5726 = smul.addr %s33, 16
          %s5727 = scalar_lea.hbm %s13, %s5726
          %s5729 = sshll.u32 %s5719, 4
          %s5730 = int_to_ptr.vmem [resolvable:$true] %s5729
          %5732 = dma.vmem_to_hbm [thread:$0]  %s5730, 16, %s5727, %s5717
        $region96: #{tpu_custom_call.1} parent=71 // pred_fallthru
          _
      $region72: #{tpu_custom_call.1} parent=5 // pred_fallthru
        _
      %p5733 = scmp.le.s32.totalorder 2, %s24
      // Predicated region
      $region97: #{tpu_custom_call.1} parent=5 // pred_check
        %p5734 = pneg %p5733
      $region98: #{tpu_custom_call.1} parent=5 // pred_check_branch
        %5736 = sbr.rel (%p5734) target = $region100
      $region99: #{tpu_custom_call.1} parent=5 // pred_region
        %s5737 = ssub.s32 %s24, 2
        // Predicated region
        $region101: #{tpu_custom_call.1} parent=99 // pred_check
          %p5738 = pneg %p345
        $region102: #{tpu_custom_call.1} parent=99 // pred_check_branch
          %5740 = sbr.rel (%p5738) target = $region104
        $region103: #{tpu_custom_call.1} parent=99 // pred_region
          %s5741 = sand.u32 %s330, 1
          %s5742 = scalar_lea.sflag [#allocation5], %s5741
          %s5743 = sand.u32 %s330, 1
          %s5744 = scalar_lea.vmem [#allocation8], %s5743
          %5745 = dma.done %s5742, 16
        $region104: #{tpu_custom_call.1} parent=99 // pred_fallthru
          _
      $region100: #{tpu_custom_call.1} parent=5 // pred_fallthru
        _
    $region6: #{tpu_custom_call.1} parent=1 // loop_footer
      %s28 = sadd.s32 1, %s24
    $region7: #{tpu_custom_call.1} parent=1 // loop_footer_branch
      %23 = sbr.rel target = $region3
    $region8: #{tpu_custom_call.1} parent=1 // loop_exit
      _
    %5746 = vsyncpa [#allocation4], 1
    %s5747 = scalar_lea.sflag [#allocation4], 1
    %5748 = vsyncpa %s5747, 1
    %5749 = vsyncpa [#allocation7], 1
    %5750 = vsyncpa [#allocation5], 1
    %s5751 = scalar_lea.sflag [#allocation5], 1
    %5752 = vsyncpa %s5751, 1

</llo_original>
